<compile_context>
chip_gen: v7x
topology: tpu7x:2x2x1
jax: 0.10.0
libtpu: 0.0.40
codegen_flags: <defaults>
</compile_context>

<pallas_src>
import functools

import jax
import jax.numpy as jnp
from jax.experimental import pallas as pl
from jax.experimental.pallas import tpu as pltpu


def _round_up(n, m):
    return ((n + m - 1) // m) * m


def lstm_recurrence_kernel(x_ref, bh_ref, wx_ref, wh_ref, b_ref, h_out_ref,
                           c_scr, h_scr, *, t_blk, r_pad):
    """One (batch_block, time_block) grid step of the LSTM recurrence."""

    # First time-block of this batch block: reset the recurrent state.
    @pl.when(pl.program_id(1) == 0)
    def _():
        c_scr[...] = jnp.zeros_like(c_scr)
        h_scr[...] = jnp.zeros_like(h_scr)

    b_blk = c_scr.shape[0]
    wx = wx_ref[...]                                  # (D_in, 4*R)  matmul dtype
    wh = wh_ref[...]                                  # (R,    4*R)  matmul dtype
    b = jnp.broadcast_to(b_ref[...], (b_blk, 4 * r_pad))   # hoisted broadcast

    c = c_scr[...]
    h = h_scr[...]
    # Statically unrolled inner time loop (t_blk <= 16): static slices only.
    for tt in range(t_blk):
        x_t = x_ref[:, tt, :].astype(wx.dtype)        # (B_BLK, D_in)
        gates = (jnp.dot(x_t, wx, preferred_element_type=jnp.float32)
                 + jnp.dot(h.astype(wh.dtype), wh,
                           preferred_element_type=jnp.float32)
                 + b)                                 # (B_BLK, 4*R) f32
        i = jax.nn.sigmoid(gates[:, 0 * r_pad:1 * r_pad])
        o = jax.nn.sigmoid(gates[:, 1 * r_pad:2 * r_pad])
        f = jax.nn.sigmoid(gates[:, 2 * r_pad:3 * r_pad])
        z = jnp.tanh(gates[:, 3 * r_pad:4 * r_pad])
        c = i * z + f * c
        h = o * jnp.tanh(c) + bh_ref[:, tt, :]        # computef(c, 'tanh') + noise
        h_out_ref[:, tt, :] = h
    c_scr[...] = c
    h_scr[...] = h


def _pick_time_block(T):
    for cand in (16, 8):
        if T % cand == 0:
            return cand
    return T          # block == full dim is always layout-legal


def lstm_pallas(x_btf, bh_btf, params, *, matmul_dtype=jnp.bfloat16):
    """Forward of the custom LSTM (nonlinearity='tanh', LEARN_c0h0=False).

    x_btf:  (numtrials, numT, dim_input)
    bh_btf: (numtrials, numT, dim_recurrent)   -- 'bhneverlearn' noise
    Returns (y, hstore) shaped (numtrials, numT, dim_output) /
    (numtrials, numT, dim_recurrent), matching the PyTorch module.
    """
    if x_btf.ndim == 2:                      # match the module's 2-D input path
        x_btf = x_btf[None]
        bh_btf = bh_btf[None]

    wx, wh, b, wy, by = (params["wx"], params["wh"], params["b"],
                         params["wy"], params["by"])
    B, T, D_in = x_btf.shape
    R = wh.shape[0]

    # ---- lane / sublane padding -------------------------------------------
    R_pad = _round_up(R, 128)      # lane-dense gate slices & hstore writebacks
    B_pad = _round_up(B, 8)        # full sublane utilisation
    T_BLK = _pick_time_block(T)

    def pad_gate_cols(w):          # (..., 4R) -> (..., 4R_pad), per-gate pad
        chunks = jnp.split(w, 4, axis=-1)
        pad = [(0, 0)] * (w.ndim - 1) + [(0, R_pad - R)]
        return jnp.concatenate([jnp.pad(chk, pad) for chk in chunks], axis=-1)

    wx_p = pad_gate_cols(wx).astype(matmul_dtype)                # (D_in, 4R_pad)
    wh_p = jnp.pad(pad_gate_cols(wh),
                   ((0, R_pad - R), (0, 0))).astype(matmul_dtype)  # (R_pad, 4R_pad)
    b_p = pad_gate_cols(b).astype(jnp.float32)                   # (1, 4R_pad)

    x_p = jnp.pad(x_btf.astype(jnp.float32), ((0, B_pad - B), (0, 0), (0, 0)))
    bh_p = jnp.pad(bh_btf.astype(jnp.float32),
                   ((0, B_pad - B), (0, 0), (0, R_pad - R)))

    # Batch blocking: split across v7x's two TensorCores when there is enough
    # sublane work per core; single block otherwise (v5e/v6e have one TC).
    B_BLK = B_pad // 2 if (B_pad >= 16 and B_pad % 16 == 0) else B_pad
    grid = (B_pad // B_BLK, T // T_BLK)

    kernel = functools.partial(lstm_recurrence_kernel, t_blk=T_BLK, r_pad=R_pad)

    def make_call(single_buffer_weights):
        # Weights never change across the grid; single-buffer them when the
        # installed Pallas supports pipeline_mode (halves their VMEM).
        wkw = ({"pipeline_mode": pl.Buffered(1)}
               if single_buffer_weights else {})
        grid_spec = pltpu.PrefetchScalarGridSpec(
            num_scalar_prefetch=0,
            grid=grid,
            in_specs=[
                pl.BlockSpec((B_BLK, T_BLK, D_in), lambda bb, tb: (bb, tb, 0)),
                pl.BlockSpec((B_BLK, T_BLK, R_pad), lambda bb, tb: (bb, tb, 0)),
                pl.BlockSpec((D_in, 4 * R_pad), lambda bb, tb: (0, 0), **wkw),
                pl.BlockSpec((R_pad, 4 * R_pad), lambda bb, tb: (0, 0), **wkw),
                pl.BlockSpec((1, 4 * R_pad), lambda bb, tb: (0, 0), **wkw),
            ],
            out_specs=pl.BlockSpec((B_BLK, T_BLK, R_pad),
                                   lambda bb, tb: (bb, tb, 0)),
            scratch_shapes=[
                pltpu.VMEM((B_BLK, R_pad), jnp.float32),   # c
                pltpu.VMEM((B_BLK, R_pad), jnp.float32),   # h
            ],
        )
        return pl.pallas_call(
            kernel,
            out_shape=jax.ShapeDtypeStruct((B_pad, T, R_pad), jnp.float32),
            grid_spec=grid_spec,
            compiler_params=pltpu.CompilerParams(
                dimension_semantics=("parallel", "arbitrary")),
        )

    args = (x_p, bh_p, wx_p, wh_p, b_p)
    try:
        h_pad = make_call(True)(*args)      # single-buffered resident weights
    except Exception:                       # pipeline_mode unsupported -> default
        h_pad = make_call(False)(*args)

    hstore = h_pad[:B, :, :R]               # (B, T, R), drop padding

    # Output projection hoisted out of the recurrence: one large MXU matmul
    # over all T*B rows (plain XLA, as recommended by the perf review).
    y = jnp.einsum("btr,ro->bto",
                   hstore.astype(matmul_dtype), wy.astype(matmul_dtype),
                   preferred_element_type=jnp.float32) + by
    return y, hstore


def lstm_ref(x_btf, bh_btf, params):
    """Pure-JAX reference mirroring the PyTorch forward loop (f32)."""
    wx, wh, b, wy, by = (params["wx"], params["wh"], params["b"],
                         params["wy"], params["by"])
    B, T, _ = x_btf.shape
    R = wh.shape[0]
    c = jnp.zeros((B, R), jnp.float32)
    h = jnp.zeros((B, R), jnp.float32)
    hs = []
    for t in range(T):
        gates = x_btf[:, t] @ wx + h @ wh + b
        i = jax.nn.sigmoid(gates[:, 0 * R:1 * R])
        o = jax.nn.sigmoid(gates[:, 1 * R:2 * R])
        f = jax.nn.sigmoid(gates[:, 2 * R:3 * R])
        z = jnp.tanh(gates[:, 3 * R:4 * R])
        c = i * z + f * c
        h = o * jnp.tanh(c) + bh_btf[:, t]
        hs.append(h)
    hstore = jnp.stack(hs, axis=1)
    y = hstore @ wy + by
    return y, hstore


def make_params(key, dim_input, dim_recurrent, dim_output):
    """Deterministic parameter init matching the module's shapes/bias choices."""
    R, D_in, D_out = dim_recurrent, dim_input, dim_output
    keys = jax.random.split(key, 9)

    def unif(k, shape, fan_in):
        bound = 1.0 / jnp.sqrt(fan_in)
        return jax.random.uniform(k, shape, jnp.float32, -bound, bound)

    # nn.Linear weights: (out, in).  Stored transposed, gate order [i, o, f, z].
    w_i_x = unif(keys[0], (R, D_in), D_in)
    w_o_x = unif(keys[1], (R, D_in), D_in)
    w_f_x = unif(keys[2], (R, D_in), D_in)
    w_z_x = unif(keys[3], (R, D_in), D_in)
    w_i_h = unif(keys[4], (R, R), R)
    w_o_h = unif(keys[5], (R, R), R)
    w_f_h = unif(keys[6], (R, R), R)
    w_z_h = unif(keys[7], (R, R), R)
    w_y = unif(keys[8], (D_out, R), R)

    wx = jnp.concatenate([w_i_x.T, w_o_x.T, w_f_x.T, w_z_x.T], axis=1)  # (D_in, 4R)
    wh = jnp.concatenate([w_i_h.T, w_o_h.T, w_f_h.T, w_z_h.T], axis=1)  # (R, 4R)

    b_i = jnp.linspace(-1.0, -10.0, R)    # fc_i_x2i.bias
    b_o = jnp.zeros((R,))                 # fc_o_x2o.bias
    b_f = jnp.linspace(1.0, 10.0, R)      # fc_f_x2f.bias
    b_z = jnp.zeros((R,))                 # fc_z_x2z.bias
    b = jnp.concatenate([b_i, b_o, b_f, b_z])[None, :].astype(jnp.float32)  # (1, 4R)

    return {
        "wx": wx.astype(jnp.float32),
        "wh": wh.astype(jnp.float32),
        "b": b,
        "wy": w_y.T.astype(jnp.float32),                    # (R, D_out)
        "by": jnp.zeros((1, D_out), jnp.float32),           # fc_y_h2y.bias = 0
    }


if __name__ == "__main__":
    B, T, D_IN, R, D_OUT = 2, 8, 4, 32, 8

    key = jax.random.PRNGKey(0)
    kp, kx, kb = jax.random.split(key, 3)
    params = make_params(kp, D_IN, R, D_OUT)

    x = jax.random.normal(kx, (B, T, D_IN), jnp.float32)
    bhneverlearn = 0.1 * jax.random.normal(kb, (B, T, R), jnp.float32)

    y_ref, hstore_ref = lstm_ref(x, bhneverlearn, params)

    # f32-matmul path: tight numerical check against the pure-JAX reference.
    y32, h32 = lstm_pallas(x, bhneverlearn, params, matmul_dtype=jnp.float32)
    y32 = jax.block_until_ready(y32)
    h32 = jax.block_until_ready(h32)
    assert y32.shape == (B, T, D_OUT) and h32.shape == (B, T, R)
    assert jnp.allclose(h32, hstore_ref, atol=1e-4, rtol=1e-4)
    assert jnp.allclose(y32, y_ref, atol=1e-4, rtol=1e-4)

    # Default bf16-matmul path (full MXU rate): looser tolerance since bf16
    # operand rounding compounds through the recurrence.
    y, hstore = lstm_pallas(x, bhneverlearn, params)
    y = jax.block_until_ready(y)
    hstore = jax.block_until_ready(hstore)
    assert y.shape == (B, T, D_OUT) and hstore.shape == (B, T, R)
    assert jnp.allclose(hstore, hstore_ref, atol=5e-2, rtol=5e-2)
    assert jnp.allclose(y, y_ref, atol=5e-2, rtol=5e-2)

    print("KERNEL_OK")
</pallas_src>

<mosaic_0001>
module attributes {stable_mosaic.version = 11 : i64} {
  func.func @lstm_recurrence_kernel(%arg0: i32, %arg1: i32, %arg2: memref<8x8x4xf32, #tpu.memory_space<vmem>>, %arg3: memref<8x8x128xf32, #tpu.memory_space<vmem>>, %arg4: memref<4x512xf32, #tpu.memory_space<vmem>>, %arg5: memref<128x512xf32, #tpu.memory_space<vmem>>, %arg6: memref<1x512xf32, #tpu.memory_space<vmem>>, %arg7: memref<8x8x128xf32, #tpu.memory_space<vmem>>, %arg8: memref<8x128xf32, #tpu.memory_space<vmem>>, %arg9: memref<8x128xf32, #tpu.memory_space<vmem>>) attributes {dimension_semantics = [#tpu.dimension_semantics<parallel>, #tpu.dimension_semantics<arbitrary>], iteration_bounds = array<i64: 1, 1>, scalar_prefetch = 0 : i64, scratch_operands = 2 : i64, tpu.core_type = #tpu.core_type<tc>, window_params = [{transform_indices = @transform_0, window_bounds = array<i64: 8, 8, 4>}, {transform_indices = @transform_1, window_bounds = array<i64: 8, 8, 128>}, {pipeline_mode = #tpu.pipeline_mode<synchronous>, transform_indices = @transform_2, window_bounds = array<i64: 4, 512>}, {pipeline_mode = #tpu.pipeline_mode<synchronous>, transform_indices = @transform_3, window_bounds = array<i64: 128, 512>}, {pipeline_mode = #tpu.pipeline_mode<synchronous>, transform_indices = @transform_4, window_bounds = array<i64: 1, 512>}, {transform_indices = @transform_5, window_bounds = array<i64: 8, 8, 128>}]} {
    %c0_i32 = arith.constant 0 : i32
    %0 = arith.cmpi eq, %arg1, %c0_i32 : i32
    %1 = arith.extui %0 : i1 to i32
    %c0_i32_0 = arith.constant 0 : i32
    %2 = arith.cmpi ne, %1, %c0_i32_0 : i32
    scf.if %2 {
      %cst_118 = arith.constant 0.000000e+00 : f32
      %308 = vector.broadcast %cst_118 : f32 to vector<8x128xf32>
      %c0_119 = arith.constant 0 : index
      %c0_120 = arith.constant 0 : index
      %309 = vector.load %arg8[%c0_119, %c0_120] : memref<8x128xf32, #tpu.memory_space<vmem>>, vector<8x128xf32>
      tpu.vector_store %arg8[%c0_119, %c0_120], %308 {strides = array<i32>} : memref<8x128xf32, #tpu.memory_space<vmem>>, vector<8x128xf32>,
      %cst_121 = arith.constant 0.000000e+00 : f32
      %310 = vector.broadcast %cst_121 : f32 to vector<8x128xf32>
      %c0_122 = arith.constant 0 : index
      %c0_123 = arith.constant 0 : index
      %311 = vector.load %arg9[%c0_122, %c0_123] : memref<8x128xf32, #tpu.memory_space<vmem>>, vector<8x128xf32>
      tpu.vector_store %arg9[%c0_122, %c0_123], %310 {strides = array<i32>} : memref<8x128xf32, #tpu.memory_space<vmem>>, vector<8x128xf32>,
    } else {
    }
    %c0 = arith.constant 0 : index
    %c0_1 = arith.constant 0 : index
    %3 = vector.load %arg4[%c0, %c0_1] : memref<4x512xf32, #tpu.memory_space<vmem>>, vector<4x512xf32>
    %c0_2 = arith.constant 0 : index
    %c0_3 = arith.constant 0 : index
    %4 = vector.load %arg5[%c0_2, %c0_3] : memref<128x512xf32, #tpu.memory_space<vmem>>, vector<128x512xf32>
    %c0_4 = arith.constant 0 : index
    %c0_5 = arith.constant 0 : index
    %5 = vector.load %arg6[%c0_4, %c0_5] : memref<1x512xf32, #tpu.memory_space<vmem>>, vector<1x512xf32>
    %6 = vector.shape_cast %5 : vector<1x512xf32> to vector<1x512xf32>
    %7 = vector.broadcast %6 : vector<1x512xf32> to vector<8x512xf32>
    %c0_6 = arith.constant 0 : index
    %c0_7 = arith.constant 0 : index
    %8 = vector.load %arg8[%c0_6, %c0_7] : memref<8x128xf32, #tpu.memory_space<vmem>>, vector<8x128xf32>
    %c0_8 = arith.constant 0 : index
    %c0_9 = arith.constant 0 : index
    %9 = vector.load %arg9[%c0_8, %c0_9] : memref<8x128xf32, #tpu.memory_space<vmem>>, vector<8x128xf32>
    %c0_10 = arith.constant 0 : index
    %c0_11 = arith.constant 0 : index
    %c0_12 = arith.constant 0 : index
    %10 = vector.load %arg2[%c0_10, %c0_11, %c0_12] : memref<8x8x4xf32, #tpu.memory_space<vmem>>, vector<8x1x4xf32>
    %11 = vector.shape_cast %10 : vector<8x1x4xf32> to vector<8x4xf32>
    %cst = arith.constant dense<0.000000e+00> : vector<8x512xf32>
    %12 = tpu.matmul %11, %3, %cst {dimension_numbers = #tpu.dot_dimension_numbers<[1], [0], [0], [1], [0, 0, 1, 1], [], []>} : vector<8x4xf32>, vector<4x512xf32>, vector<8x512xf32> -> vector<8x512xf32>
    %cst_13 = arith.constant dense<0.000000e+00> : vector<8x512xf32>
    %13 = tpu.matmul %9, %4, %cst_13 {dimension_numbers = #tpu.dot_dimension_numbers<[1], [0], [0], [1], [0, 0, 1, 1], [], []>} : vector<8x128xf32>, vector<128x512xf32>, vector<8x512xf32> -> vector<8x512xf32>
    %14 = arith.addf %12, %13 : vector<8x512xf32>
    %15 = arith.addf %14, %7 : vector<8x512xf32>
    %16 = vector.extract_strided_slice %15 {offsets = [0, 0], sizes = [8, 128], strides = [1, 1]} : vector<8x512xf32> to vector<8x128xf32>
    %17 = arith.negf %16 : vector<8x128xf32>
    %18 = math.exp %17 : vector<8x128xf32>
    %cst_14 = arith.constant 1.000000e+00 : f32
    %19 = vector.broadcast %cst_14 : f32 to vector<8x128xf32>
    %20 = arith.addf %19, %18 : vector<8x128xf32>
    %21 = arith.divf %19, %20 : vector<8x128xf32>
    %22 = vector.extract_strided_slice %15 {offsets = [0, 128], sizes = [8, 128], strides = [1, 1]} : vector<8x512xf32> to vector<8x128xf32>
    %23 = arith.negf %22 : vector<8x128xf32>
    %24 = math.exp %23 : vector<8x128xf32>
    %cst_15 = arith.constant 1.000000e+00 : f32
    %25 = vector.broadcast %cst_15 : f32 to vector<8x128xf32>
    %26 = arith.addf %25, %24 : vector<8x128xf32>
    %27 = arith.divf %25, %26 : vector<8x128xf32>
    %28 = vector.extract_strided_slice %15 {offsets = [0, 256], sizes = [8, 128], strides = [1, 1]} : vector<8x512xf32> to vector<8x128xf32>
    %29 = arith.negf %28 : vector<8x128xf32>
    %30 = math.exp %29 : vector<8x128xf32>
    %cst_16 = arith.constant 1.000000e+00 : f32
    %31 = vector.broadcast %cst_16 : f32 to vector<8x128xf32>
    %32 = arith.addf %31, %30 : vector<8x128xf32>
    %33 = arith.divf %31, %32 : vector<8x128xf32>
    %34 = vector.extract_strided_slice %15 {offsets = [0, 384], sizes = [8, 128], strides = [1, 1]} : vector<8x512xf32> to vector<8x128xf32>
    %35 = math.tanh %34 : vector<8x128xf32>
    %36 = arith.mulf %21, %35 : vector<8x128xf32>
    %37 = arith.mulf %33, %8 : vector<8x128xf32>
    %38 = arith.addf %36, %37 : vector<8x128xf32>
    %39 = math.tanh %38 : vector<8x128xf32>
    %40 = arith.mulf %27, %39 : vector<8x128xf32>
    %c0_17 = arith.constant 0 : index
    %c0_18 = arith.constant 0 : index
    %c0_19 = arith.constant 0 : index
    %41 = vector.load %arg3[%c0_17, %c0_18, %c0_19] : memref<8x8x128xf32, #tpu.memory_space<vmem>>, vector<8x1x128xf32>
    %42 = vector.shape_cast %41 : vector<8x1x128xf32> to vector<8x128xf32>
    %43 = arith.addf %40, %42 : vector<8x128xf32>
    %c0_20 = arith.constant 0 : index
    %c0_21 = arith.constant 0 : index
    %c0_22 = arith.constant 0 : index
    %44 = vector.load %arg7[%c0_20, %c0_21, %c0_22] : memref<8x8x128xf32, #tpu.memory_space<vmem>>, vector<8x1x128xf32>
    %45 = vector.shape_cast %44 : vector<8x1x128xf32> to vector<8x128xf32>
    %46 = vector.shape_cast %43 : vector<8x128xf32> to vector<8x1x128xf32>
    tpu.vector_store %arg7[%c0_20, %c0_21, %c0_22], %46 {strides = array<i32>} : memref<8x8x128xf32, #tpu.memory_space<vmem>>, vector<8x1x128xf32>,
    %c0_23 = arith.constant 0 : index
    %c1 = arith.constant 1 : index
    %c0_24 = arith.constant 0 : index
    %47 = vector.load %arg2[%c0_23, %c1, %c0_24] : memref<8x8x4xf32, #tpu.memory_space<vmem>>, vector<8x1x4xf32>
    %48 = vector.shape_cast %47 : vector<8x1x4xf32> to vector<8x4xf32>
    %cst_25 = arith.constant dense<0.000000e+00> : vector<8x512xf32>
    %49 = tpu.matmul %48, %3, %cst_25 {dimension_numbers = #tpu.dot_dimension_numbers<[1], [0], [0], [1], [0, 0, 1, 1], [], []>} : vector<8x4xf32>, vector<4x512xf32>, vector<8x512xf32> -> vector<8x512xf32>
    %cst_26 = arith.constant dense<0.000000e+00> : vector<8x512xf32>
    %50 = tpu.matmul %43, %4, %cst_26 {dimension_numbers = #tpu.dot_dimension_numbers<[1], [0], [0], [1], [0, 0, 1, 1], [], []>} : vector<8x128xf32>, vector<128x512xf32>, vector<8x512xf32> -> vector<8x512xf32>
    %51 = arith.addf %49, %50 : vector<8x512xf32>
    %52 = arith.addf %51, %7 : vector<8x512xf32>
    %53 = vector.extract_strided_slice %52 {offsets = [0, 0], sizes = [8, 128], strides = [1, 1]} : vector<8x512xf32> to vector<8x128xf32>
    %54 = arith.negf %53 : vector<8x128xf32>
    %55 = math.exp %54 : vector<8x128xf32>
    %cst_27 = arith.constant 1.000000e+00 : f32
    %56 = vector.broadcast %cst_27 : f32 to vector<8x128xf32>
    %57 = arith.addf %56, %55 : vector<8x128xf32>
    %58 = arith.divf %56, %57 : vector<8x128xf32>
    %59 = vector.extract_strided_slice %52 {offsets = [0, 128], sizes = [8, 128], strides = [1, 1]} : vector<8x512xf32> to vector<8x128xf32>
    %60 = arith.negf %59 : vector<8x128xf32>
    %61 = math.exp %60 : vector<8x128xf32>
    %cst_28 = arith.constant 1.000000e+00 : f32
    %62 = vector.broadcast %cst_28 : f32 to vector<8x128xf32>
    %63 = arith.addf %62, %61 : vector<8x128xf32>
    %64 = arith.divf %62, %63 : vector<8x128xf32>
    %65 = vector.extract_strided_slice %52 {offsets = [0, 256], sizes = [8, 128], strides = [1, 1]} : vector<8x512xf32> to vector<8x128xf32>
    %66 = arith.negf %65 : vector<8x128xf32>
    %67 = math.exp %66 : vector<8x128xf32>
    %cst_29 = arith.constant 1.000000e+00 : f32
    %68 = vector.broadcast %cst_29 : f32 to vector<8x128xf32>
    %69 = arith.addf %68, %67 : vector<8x128xf32>
    %70 = arith.divf %68, %69 : vector<8x128xf32>
    %71 = vector.extract_strided_slice %52 {offsets = [0, 384], sizes = [8, 128], strides = [1, 1]} : vector<8x512xf32> to vector<8x128xf32>
    %72 = math.tanh %71 : vector<8x128xf32>
    %73 = arith.mulf %58, %72 : vector<8x128xf32>
    %74 = arith.mulf %70, %38 : vector<8x128xf32>
    %75 = arith.addf %73, %74 : vector<8x128xf32>
    %76 = math.tanh %75 : vector<8x128xf32>
    %77 = arith.mulf %64, %76 : vector<8x128xf32>
    %c0_30 = arith.constant 0 : index
    %c1_31 = arith.constant 1 : index
    %c0_32 = arith.constant 0 : index
    %78 = vector.load %arg3[%c0_30, %c1_31, %c0_32] : memref<8x8x128xf32, #tpu.memory_space<vmem>>, vector<8x1x128xf32>
    %79 = vector.shape_cast %78 : vector<8x1x128xf32> to vector<8x128xf32>
    %80 = arith.addf %77, %79 : vector<8x128xf32>
    %c0_33 = arith.constant 0 : index
    %c1_34 = arith.constant 1 : index
    %c0_35 = arith.constant 0 : index
    %81 = vector.load %arg7[%c0_33, %c1_34, %c0_35] : memref<8x8x128xf32, #tpu.memory_space<vmem>>, vector<8x1x128xf32>
    %82 = vector.shape_cast %81 : vector<8x1x128xf32> to vector<8x128xf32>
    %83 = vector.shape_cast %80 : vector<8x128xf32> to vector<8x1x128xf32>
    tpu.vector_store %arg7[%c0_33, %c1_34, %c0_35], %83 {strides = array<i32>} : memref<8x8x128xf32, #tpu.memory_space<vmem>>, vector<8x1x128xf32>,
    %c0_36 = arith.constant 0 : index
    %c2 = arith.constant 2 : index
    %c0_37 = arith.constant 0 : index
    %84 = vector.load %arg2[%c0_36, %c2, %c0_37] : memref<8x8x4xf32, #tpu.memory_space<vmem>>, vector<8x1x4xf32>
    %85 = vector.shape_cast %84 : vector<8x1x4xf32> to vector<8x4xf32>
    %cst_38 = arith.constant dense<0.000000e+00> : vector<8x512xf32>
    %86 = tpu.matmul %85, %3, %cst_38 {dimension_numbers = #tpu.dot_dimension_numbers<[1], [0], [0], [1], [0, 0, 1, 1], [], []>} : vector<8x4xf32>, vector<4x512xf32>, vector<8x512xf32> -> vector<8x512xf32>
    %cst_39 = arith.constant dense<0.000000e+00> : vector<8x512xf32>
    %87 = tpu.matmul %80, %4, %cst_39 {dimension_numbers = #tpu.dot_dimension_numbers<[1], [0], [0], [1], [0, 0, 1, 1], [], []>} : vector<8x128xf32>, vector<128x512xf32>, vector<8x512xf32> -> vector<8x512xf32>
    %88 = arith.addf %86, %87 : vector<8x512xf32>
    %89 = arith.addf %88, %7 : vector<8x512xf32>
    %90 = vector.extract_strided_slice %89 {offsets = [0, 0], sizes = [8, 128], strides = [1, 1]} : vector<8x512xf32> to vector<8x128xf32>
    %91 = arith.negf %90 : vector<8x128xf32>
    %92 = math.exp %91 : vector<8x128xf32>
    %cst_40 = arith.constant 1.000000e+00 : f32
    %93 = vector.broadcast %cst_40 : f32 to vector<8x128xf32>
    %94 = arith.addf %93, %92 : vector<8x128xf32>
    %95 = arith.divf %93, %94 : vector<8x128xf32>
    %96 = vector.extract_strided_slice %89 {offsets = [0, 128], sizes = [8, 128], strides = [1, 1]} : vector<8x512xf32> to vector<8x128xf32>
    %97 = arith.negf %96 : vector<8x128xf32>
    %98 = math.exp %97 : vector<8x128xf32>
    %cst_41 = arith.constant 1.000000e+00 : f32
    %99 = vector.broadcast %cst_41 : f32 to vector<8x128xf32>
    %100 = arith.addf %99, %98 : vector<8x128xf32>
    %101 = arith.divf %99, %100 : vector<8x128xf32>
    %102 = vector.extract_strided_slice %89 {offsets = [0, 256], sizes = [8, 128], strides = [1, 1]} : vector<8x512xf32> to vector<8x128xf32>
    %103 = arith.negf %102 : vector<8x128xf32>
    %104 = math.exp %103 : vector<8x128xf32>
    %cst_42 = arith.constant 1.000000e+00 : f32
    %105 = vector.broadcast %cst_42 : f32 to vector<8x128xf32>
    %106 = arith.addf %105, %104 : vector<8x128xf32>
    %107 = arith.divf %105, %106 : vector<8x128xf32>
    %108 = vector.extract_strided_slice %89 {offsets = [0, 384], sizes = [8, 128], strides = [1, 1]} : vector<8x512xf32> to vector<8x128xf32>
    %109 = math.tanh %108 : vector<8x128xf32>
    %110 = arith.mulf %95, %109 : vector<8x128xf32>
    %111 = arith.mulf %107, %75 : vector<8x128xf32>
    %112 = arith.addf %110, %111 : vector<8x128xf32>
    %113 = math.tanh %112 : vector<8x128xf32>
    %114 = arith.mulf %101, %113 : vector<8x128xf32>
    %c0_43 = arith.constant 0 : index
    %c2_44 = arith.constant 2 : index
    %c0_45 = arith.constant 0 : index
    %115 = vector.load %arg3[%c0_43, %c2_44, %c0_45] : memref<8x8x128xf32, #tpu.memory_space<vmem>>, vector<8x1x128xf32>
    %116 = vector.shape_cast %115 : vector<8x1x128xf32> to vector<8x128xf32>
    %117 = arith.addf %114, %116 : vector<8x128xf32>
    %c0_46 = arith.constant 0 : index
    %c2_47 = arith.constant 2 : index
    %c0_48 = arith.constant 0 : index
    %118 = vector.load %arg7[%c0_46, %c2_47, %c0_48] : memref<8x8x128xf32, #tpu.memory_space<vmem>>, vector<8x1x128xf32>
    %119 = vector.shape_cast %118 : vector<8x1x128xf32> to vector<8x128xf32>
    %120 = vector.shape_cast %117 : vector<8x128xf32> to vector<8x1x128xf32>
    tpu.vector_store %arg7[%c0_46, %c2_47, %c0_48], %120 {strides = array<i32>} : memref<8x8x128xf32, #tpu.memory_space<vmem>>, vector<8x1x128xf32>,
    %c0_49 = arith.constant 0 : index
    %c3 = arith.constant 3 : index
    %c0_50 = arith.constant 0 : index
    %121 = vector.load %arg2[%c0_49, %c3, %c0_50] : memref<8x8x4xf32, #tpu.memory_space<vmem>>, vector<8x1x4xf32>
    %122 = vector.shape_cast %121 : vector<8x1x4xf32> to vector<8x4xf32>
    %cst_51 = arith.constant dense<0.000000e+00> : vector<8x512xf32>
    %123 = tpu.matmul %122, %3, %cst_51 {dimension_numbers = #tpu.dot_dimension_numbers<[1], [0], [0], [1], [0, 0, 1, 1], [], []>} : vector<8x4xf32>, vector<4x512xf32>, vector<8x512xf32> -> vector<8x512xf32>
    %cst_52 = arith.constant dense<0.000000e+00> : vector<8x512xf32>
    %124 = tpu.matmul %117, %4, %cst_52 {dimension_numbers = #tpu.dot_dimension_numbers<[1], [0], [0], [1], [0, 0, 1, 1], [], []>} : vector<8x128xf32>, vector<128x512xf32>, vector<8x512xf32> -> vector<8x512xf32>
    %125 = arith.addf %123, %124 : vector<8x512xf32>
    %126 = arith.addf %125, %7 : vector<8x512xf32>
    %127 = vector.extract_strided_slice %126 {offsets = [0, 0], sizes = [8, 128], strides = [1, 1]} : vector<8x512xf32> to vector<8x128xf32>
    %128 = arith.negf %127 : vector<8x128xf32>
    %129 = math.exp %128 : vector<8x128xf32>
    %cst_53 = arith.constant 1.000000e+00 : f32
    %130 = vector.broadcast %cst_53 : f32 to vector<8x128xf32>
    %131 = arith.addf %130, %129 : vector<8x128xf32>
    %132 = arith.divf %130, %131 : vector<8x128xf32>
    %133 = vector.extract_strided_slice %126 {offsets = [0, 128], sizes = [8, 128], strides = [1, 1]} : vector<8x512xf32> to vector<8x128xf32>
    %134 = arith.negf %133 : vector<8x128xf32>
    %135 = math.exp %134 : vector<8x128xf32>
    %cst_54 = arith.constant 1.000000e+00 : f32
    %136 = vector.broadcast %cst_54 : f32 to vector<8x128xf32>
    %137 = arith.addf %136, %135 : vector<8x128xf32>
    %138 = arith.divf %136, %137 : vector<8x128xf32>
    %139 = vector.extract_strided_slice %126 {offsets = [0, 256], sizes = [8, 128], strides = [1, 1]} : vector<8x512xf32> to vector<8x128xf32>
    %140 = arith.negf %139 : vector<8x128xf32>
    %141 = math.exp %140 : vector<8x128xf32>
    %cst_55 = arith.constant 1.000000e+00 : f32
    %142 = vector.broadcast %cst_55 : f32 to vector<8x128xf32>
    %143 = arith.addf %142, %141 : vector<8x128xf32>
    %144 = arith.divf %142, %143 : vector<8x128xf32>
    %145 = vector.extract_strided_slice %126 {offsets = [0, 384], sizes = [8, 128], strides = [1, 1]} : vector<8x512xf32> to vector<8x128xf32>
    %146 = math.tanh %145 : vector<8x128xf32>
    %147 = arith.mulf %132, %146 : vector<8x128xf32>
    %148 = arith.mulf %144, %112 : vector<8x128xf32>
    %149 = arith.addf %147, %148 : vector<8x128xf32>
    %150 = math.tanh %149 : vector<8x128xf32>
    %151 = arith.mulf %138, %150 : vector<8x128xf32>
    %c0_56 = arith.constant 0 : index
    %c3_57 = arith.constant 3 : index
    %c0_58 = arith.constant 0 : index
    %152 = vector.load %arg3[%c0_56, %c3_57, %c0_58] : memref<8x8x128xf32, #tpu.memory_space<vmem>>, vector<8x1x128xf32>
    %153 = vector.shape_cast %152 : vector<8x1x128xf32> to vector<8x128xf32>
    %154 = arith.addf %151, %153 : vector<8x128xf32>
    %c0_59 = arith.constant 0 : index
    %c3_60 = arith.constant 3 : index
    %c0_61 = arith.constant 0 : index
    %155 = vector.load %arg7[%c0_59, %c3_60, %c0_61] : memref<8x8x128xf32, #tpu.memory_space<vmem>>, vector<8x1x128xf32>
    %156 = vector.shape_cast %155 : vector<8x1x128xf32> to vector<8x128xf32>
    %157 = vector.shape_cast %154 : vector<8x128xf32> to vector<8x1x128xf32>
    tpu.vector_store %arg7[%c0_59, %c3_60, %c0_61], %157 {strides = array<i32>} : memref<8x8x128xf32, #tpu.memory_space<vmem>>, vector<8x1x128xf32>,
    %c0_62 = arith.constant 0 : index
    %c4 = arith.constant 4 : index
    %c0_63 = arith.constant 0 : index
    %158 = vector.load %arg2[%c0_62, %c4, %c0_63] : memref<8x8x4xf32, #tpu.memory_space<vmem>>, vector<8x1x4xf32>
    %159 = vector.shape_cast %158 : vector<8x1x4xf32> to vector<8x4xf32>
    %cst_64 = arith.constant dense<0.000000e+00> : vector<8x512xf32>
    %160 = tpu.matmul %159, %3, %cst_64 {dimension_numbers = #tpu.dot_dimension_numbers<[1], [0], [0], [1], [0, 0, 1, 1], [], []>} : vector<8x4xf32>, vector<4x512xf32>, vector<8x512xf32> -> vector<8x512xf32>
    %cst_65 = arith.constant dense<0.000000e+00> : vector<8x512xf32>
    %161 = tpu.matmul %154, %4, %cst_65 {dimension_numbers = #tpu.dot_dimension_numbers<[1], [0], [0], [1], [0, 0, 1, 1], [], []>} : vector<8x128xf32>, vector<128x512xf32>, vector<8x512xf32> -> vector<8x512xf32>
    %162 = arith.addf %160, %161 : vector<8x512xf32>
    %163 = arith.addf %162, %7 : vector<8x512xf32>
    %164 = vector.extract_strided_slice %163 {offsets = [0, 0], sizes = [8, 128], strides = [1, 1]} : vector<8x512xf32> to vector<8x128xf32>
    %165 = arith.negf %164 : vector<8x128xf32>
    %166 = math.exp %165 : vector<8x128xf32>
    %cst_66 = arith.constant 1.000000e+00 : f32
    %167 = vector.broadcast %cst_66 : f32 to vector<8x128xf32>
    %168 = arith.addf %167, %166 : vector<8x128xf32>
    %169 = arith.divf %167, %168 : vector<8x128xf32>
    %170 = vector.extract_strided_slice %163 {offsets = [0, 128], sizes = [8, 128], strides = [1, 1]} : vector<8x512xf32> to vector<8x128xf32>
    %171 = arith.negf %170 : vector<8x128xf32>
    %172 = math.exp %171 : vector<8x128xf32>
    %cst_67 = arith.constant 1.000000e+00 : f32
    %173 = vector.broadcast %cst_67 : f32 to vector<8x128xf32>
    %174 = arith.addf %173, %172 : vector<8x128xf32>
    %175 = arith.divf %173, %174 : vector<8x128xf32>
    %176 = vector.extract_strided_slice %163 {offsets = [0, 256], sizes = [8, 128], strides = [1, 1]} : vector<8x512xf32> to vector<8x128xf32>
    %177 = arith.negf %176 : vector<8x128xf32>
    %178 = math.exp %177 : vector<8x128xf32>
    %cst_68 = arith.constant 1.000000e+00 : f32
    %179 = vector.broadcast %cst_68 : f32 to vector<8x128xf32>
    %180 = arith.addf %179, %178 : vector<8x128xf32>
    %181 = arith.divf %179, %180 : vector<8x128xf32>
    %182 = vector.extract_strided_slice %163 {offsets = [0, 384], sizes = [8, 128], strides = [1, 1]} : vector<8x512xf32> to vector<8x128xf32>
    %183 = math.tanh %182 : vector<8x128xf32>
    %184 = arith.mulf %169, %183 : vector<8x128xf32>
    %185 = arith.mulf %181, %149 : vector<8x128xf32>
    %186 = arith.addf %184, %185 : vector<8x128xf32>
    %187 = math.tanh %186 : vector<8x128xf32>
    %188 = arith.mulf %175, %187 : vector<8x128xf32>
    %c0_69 = arith.constant 0 : index
    %c4_70 = arith.constant 4 : index
    %c0_71 = arith.constant 0 : index
    %189 = vector.load %arg3[%c0_69, %c4_70, %c0_71] : memref<8x8x128xf32, #tpu.memory_space<vmem>>, vector<8x1x128xf32>
    %190 = vector.shape_cast %189 : vector<8x1x128xf32> to vector<8x128xf32>
    %191 = arith.addf %188, %190 : vector<8x128xf32>
    %c0_72 = arith.constant 0 : index
    %c4_73 = arith.constant 4 : index
    %c0_74 = arith.constant 0 : index
    %192 = vector.load %arg7[%c0_72, %c4_73, %c0_74] : memref<8x8x128xf32, #tpu.memory_space<vmem>>, vector<8x1x128xf32>
    %193 = vector.shape_cast %192 : vector<8x1x128xf32> to vector<8x128xf32>
    %194 = vector.shape_cast %191 : vector<8x128xf32> to vector<8x1x128xf32>
    tpu.vector_store %arg7[%c0_72, %c4_73, %c0_74], %194 {strides = array<i32>} : memref<8x8x128xf32, #tpu.memory_space<vmem>>, vector<8x1x128xf32>,
    %c0_75 = arith.constant 0 : index
    %c5 = arith.constant 5 : index
    %c0_76 = arith.constant 0 : index
    %195 = vector.load %arg2[%c0_75, %c5, %c0_76] : memref<8x8x4xf32, #tpu.memory_space<vmem>>, vector<8x1x4xf32>
    %196 = vector.shape_cast %195 : vector<8x1x4xf32> to vector<8x4xf32>
    %cst_77 = arith.constant dense<0.000000e+00> : vector<8x512xf32>
    %197 = tpu.matmul %196, %3, %cst_77 {dimension_numbers = #tpu.dot_dimension_numbers<[1], [0], [0], [1], [0, 0, 1, 1], [], []>} : vector<8x4xf32>, vector<4x512xf32>, vector<8x512xf32> -> vector<8x512xf32>
    %cst_78 = arith.constant dense<0.000000e+00> : vector<8x512xf32>
    %198 = tpu.matmul %191, %4, %cst_78 {dimension_numbers = #tpu.dot_dimension_numbers<[1], [0], [0], [1], [0, 0, 1, 1], [], []>} : vector<8x128xf32>, vector<128x512xf32>, vector<8x512xf32> -> vector<8x512xf32>
    %199 = arith.addf %197, %198 : vector<8x512xf32>
    %200 = arith.addf %199, %7 : vector<8x512xf32>
    %201 = vector.extract_strided_slice %200 {offsets = [0, 0], sizes = [8, 128], strides = [1, 1]} : vector<8x512xf32> to vector<8x128xf32>
    %202 = arith.negf %201 : vector<8x128xf32>
    %203 = math.exp %202 : vector<8x128xf32>
    %cst_79 = arith.constant 1.000000e+00 : f32
    %204 = vector.broadcast %cst_79 : f32 to vector<8x128xf32>
    %205 = arith.addf %204, %203 : vector<8x128xf32>
    %206 = arith.divf %204, %205 : vector<8x128xf32>
    %207 = vector.extract_strided_slice %200 {offsets = [0, 128], sizes = [8, 128], strides = [1, 1]} : vector<8x512xf32> to vector<8x128xf32>
    %208 = arith.negf %207 : vector<8x128xf32>
    %209 = math.exp %208 : vector<8x128xf32>
    %cst_80 = arith.constant 1.000000e+00 : f32
    %210 = vector.broadcast %cst_80 : f32 to vector<8x128xf32>
    %211 = arith.addf %210, %209 : vector<8x128xf32>
    %212 = arith.divf %210, %211 : vector<8x128xf32>
    %213 = vector.extract_strided_slice %200 {offsets = [0, 256], sizes = [8, 128], strides = [1, 1]} : vector<8x512xf32> to vector<8x128xf32>
    %214 = arith.negf %213 : vector<8x128xf32>
    %215 = math.exp %214 : vector<8x128xf32>
    %cst_81 = arith.constant 1.000000e+00 : f32
    %216 = vector.broadcast %cst_81 : f32 to vector<8x128xf32>
    %217 = arith.addf %216, %215 : vector<8x128xf32>
    %218 = arith.divf %216, %217 : vector<8x128xf32>
    %219 = vector.extract_strided_slice %200 {offsets = [0, 384], sizes = [8, 128], strides = [1, 1]} : vector<8x512xf32> to vector<8x128xf32>
    %220 = math.tanh %219 : vector<8x128xf32>
    %221 = arith.mulf %206, %220 : vector<8x128xf32>
    %222 = arith.mulf %218, %186 : vector<8x128xf32>
    %223 = arith.addf %221, %222 : vector<8x128xf32>
    %224 = math.tanh %223 : vector<8x128xf32>
    %225 = arith.mulf %212, %224 : vector<8x128xf32>
    %c0_82 = arith.constant 0 : index
    %c5_83 = arith.constant 5 : index
    %c0_84 = arith.constant 0 : index
    %226 = vector.load %arg3[%c0_82, %c5_83, %c0_84] : memref<8x8x128xf32, #tpu.memory_space<vmem>>, vector<8x1x128xf32>
    %227 = vector.shape_cast %226 : vector<8x1x128xf32> to vector<8x128xf32>
    %228 = arith.addf %225, %227 : vector<8x128xf32>
    %c0_85 = arith.constant 0 : index
    %c5_86 = arith.constant 5 : index
    %c0_87 = arith.constant 0 : index
    %229 = vector.load %arg7[%c0_85, %c5_86, %c0_87] : memref<8x8x128xf32, #tpu.memory_space<vmem>>, vector<8x1x128xf32>
    %230 = vector.shape_cast %229 : vector<8x1x128xf32> to vector<8x128xf32>
    %231 = vector.shape_cast %228 : vector<8x128xf32> to vector<8x1x128xf32>
    tpu.vector_store %arg7[%c0_85, %c5_86, %c0_87], %231 {strides = array<i32>} : memref<8x8x128xf32, #tpu.memory_space<vmem>>, vector<8x1x128xf32>,
    %c0_88 = arith.constant 0 : index
    %c6 = arith.constant 6 : index
    %c0_89 = arith.constant 0 : index
    %232 = vector.load %arg2[%c0_88, %c6, %c0_89] : memref<8x8x4xf32, #tpu.memory_space<vmem>>, vector<8x1x4xf32>
    %233 = vector.shape_cast %232 : vector<8x1x4xf32> to vector<8x4xf32>
    %cst_90 = arith.constant dense<0.000000e+00> : vector<8x512xf32>
    %234 = tpu.matmul %233, %3, %cst_90 {dimension_numbers = #tpu.dot_dimension_numbers<[1], [0], [0], [1], [0, 0, 1, 1], [], []>} : vector<8x4xf32>, vector<4x512xf32>, vector<8x512xf32> -> vector<8x512xf32>
    %cst_91 = arith.constant dense<0.000000e+00> : vector<8x512xf32>
    %235 = tpu.matmul %228, %4, %cst_91 {dimension_numbers = #tpu.dot_dimension_numbers<[1], [0], [0], [1], [0, 0, 1, 1], [], []>} : vector<8x128xf32>, vector<128x512xf32>, vector<8x512xf32> -> vector<8x512xf32>
    %236 = arith.addf %234, %235 : vector<8x512xf32>
    %237 = arith.addf %236, %7 : vector<8x512xf32>
    %238 = vector.extract_strided_slice %237 {offsets = [0, 0], sizes = [8, 128], strides = [1, 1]} : vector<8x512xf32> to vector<8x128xf32>
    %239 = arith.negf %238 : vector<8x128xf32>
    %240 = math.exp %239 : vector<8x128xf32>
    %cst_92 = arith.constant 1.000000e+00 : f32
    %241 = vector.broadcast %cst_92 : f32 to vector<8x128xf32>
    %242 = arith.addf %241, %240 : vector<8x128xf32>
    %243 = arith.divf %241, %242 : vector<8x128xf32>
    %244 = vector.extract_strided_slice %237 {offsets = [0, 128], sizes = [8, 128], strides = [1, 1]} : vector<8x512xf32> to vector<8x128xf32>
    %245 = arith.negf %244 : vector<8x128xf32>
    %246 = math.exp %245 : vector<8x128xf32>
    %cst_93 = arith.constant 1.000000e+00 : f32
    %247 = vector.broadcast %cst_93 : f32 to vector<8x128xf32>
    %248 = arith.addf %247, %246 : vector<8x128xf32>
    %249 = arith.divf %247, %248 : vector<8x128xf32>
    %250 = vector.extract_strided_slice %237 {offsets = [0, 256], sizes = [8, 128], strides = [1, 1]} : vector<8x512xf32> to vector<8x128xf32>
    %251 = arith.negf %250 : vector<8x128xf32>
    %252 = math.exp %251 : vector<8x128xf32>
    %cst_94 = arith.constant 1.000000e+00 : f32
    %253 = vector.broadcast %cst_94 : f32 to vector<8x128xf32>
    %254 = arith.addf %253, %252 : vector<8x128xf32>
    %255 = arith.divf %253, %254 : vector<8x128xf32>
    %256 = vector.extract_strided_slice %237 {offsets = [0, 384], sizes = [8, 128], strides = [1, 1]} : vector<8x512xf32> to vector<8x128xf32>
    %257 = math.tanh %256 : vector<8x128xf32>
    %258 = arith.mulf %243, %257 : vector<8x128xf32>
    %259 = arith.mulf %255, %223 : vector<8x128xf32>
    %260 = arith.addf %258, %259 : vector<8x128xf32>
    %261 = math.tanh %260 : vector<8x128xf32>
    %262 = arith.mulf %249, %261 : vector<8x128xf32>
    %c0_95 = arith.constant 0 : index
    %c6_96 = arith.constant 6 : index
    %c0_97 = arith.constant 0 : index
    %263 = vector.load %arg3[%c0_95, %c6_96, %c0_97] : memref<8x8x128xf32, #tpu.memory_space<vmem>>, vector<8x1x128xf32>
    %264 = vector.shape_cast %263 : vector<8x1x128xf32> to vector<8x128xf32>
    %265 = arith.addf %262, %264 : vector<8x128xf32>
    %c0_98 = arith.constant 0 : index
    %c6_99 = arith.constant 6 : index
    %c0_100 = arith.constant 0 : index
    %266 = vector.load %arg7[%c0_98, %c6_99, %c0_100] : memref<8x8x128xf32, #tpu.memory_space<vmem>>, vector<8x1x128xf32>
    %267 = vector.shape_cast %266 : vector<8x1x128xf32> to vector<8x128xf32>
    %268 = vector.shape_cast %265 : vector<8x128xf32> to vector<8x1x128xf32>
    tpu.vector_store %arg7[%c0_98, %c6_99, %c0_100], %268 {strides = array<i32>} : memref<8x8x128xf32, #tpu.memory_space<vmem>>, vector<8x1x128xf32>,
    %c0_101 = arith.constant 0 : index
    %c7 = arith.constant 7 : index
    %c0_102 = arith.constant 0 : index
    %269 = vector.load %arg2[%c0_101, %c7, %c0_102] : memref<8x8x4xf32, #tpu.memory_space<vmem>>, vector<8x1x4xf32>
    %270 = vector.shape_cast %269 : vector<8x1x4xf32> to vector<8x4xf32>
    %cst_103 = arith.constant dense<0.000000e+00> : vector<8x512xf32>
    %271 = tpu.matmul %270, %3, %cst_103 {dimension_numbers = #tpu.dot_dimension_numbers<[1], [0], [0], [1], [0, 0, 1, 1], [], []>} : vector<8x4xf32>, vector<4x512xf32>, vector<8x512xf32> -> vector<8x512xf32>
    %cst_104 = arith.constant dense<0.000000e+00> : vector<8x512xf32>
    %272 = tpu.matmul %265, %4, %cst_104 {dimension_numbers = #tpu.dot_dimension_numbers<[1], [0], [0], [1], [0, 0, 1, 1], [], []>} : vector<8x128xf32>, vector<128x512xf32>, vector<8x512xf32> -> vector<8x512xf32>
    %273 = arith.addf %271, %272 : vector<8x512xf32>
    %274 = arith.addf %273, %7 : vector<8x512xf32>
    %275 = vector.extract_strided_slice %274 {offsets = [0, 0], sizes = [8, 128], strides = [1, 1]} : vector<8x512xf32> to vector<8x128xf32>
    %276 = arith.negf %275 : vector<8x128xf32>
    %277 = math.exp %276 : vector<8x128xf32>
    %cst_105 = arith.constant 1.000000e+00 : f32
    %278 = vector.broadcast %cst_105 : f32 to vector<8x128xf32>
    %279 = arith.addf %278, %277 : vector<8x128xf32>
    %280 = arith.divf %278, %279 : vector<8x128xf32>
    %281 = vector.extract_strided_slice %274 {offsets = [0, 128], sizes = [8, 128], strides = [1, 1]} : vector<8x512xf32> to vector<8x128xf32>
    %282 = arith.negf %281 : vector<8x128xf32>
    %283 = math.exp %282 : vector<8x128xf32>
    %cst_106 = arith.constant 1.000000e+00 : f32
    %284 = vector.broadcast %cst_106 : f32 to vector<8x128xf32>
    %285 = arith.addf %284, %283 : vector<8x128xf32>
    %286 = arith.divf %284, %285 : vector<8x128xf32>
    %287 = vector.extract_strided_slice %274 {offsets = [0, 256], sizes = [8, 128], strides = [1, 1]} : vector<8x512xf32> to vector<8x128xf32>
    %288 = arith.negf %287 : vector<8x128xf32>
    %289 = math.exp %288 : vector<8x128xf32>
    %cst_107 = arith.constant 1.000000e+00 : f32
    %290 = vector.broadcast %cst_107 : f32 to vector<8x128xf32>
    %291 = arith.addf %290, %289 : vector<8x128xf32>
    %292 = arith.divf %290, %291 : vector<8x128xf32>
    %293 = vector.extract_strided_slice %274 {offsets = [0, 384], sizes = [8, 128], strides = [1, 1]} : vector<8x512xf32> to vector<8x128xf32>
    %294 = math.tanh %293 : vector<8x128xf32>
    %295 = arith.mulf %280, %294 : vector<8x128xf32>
    %296 = arith.mulf %292, %260 : vector<8x128xf32>
    %297 = arith.addf %295, %296 : vector<8x128xf32>
    %298 = math.tanh %297 : vector<8x128xf32>
    %299 = arith.mulf %286, %298 : vector<8x128xf32>
    %c0_108 = arith.constant 0 : index
    %c7_109 = arith.constant 7 : index
    %c0_110 = arith.constant 0 : index
    %300 = vector.load %arg3[%c0_108, %c7_109, %c0_110] : memref<8x8x128xf32, #tpu.memory_space<vmem>>, vector<8x1x128xf32>
    %301 = vector.shape_cast %300 : vector<8x1x128xf32> to vector<8x128xf32>
    %302 = arith.addf %299, %301 : vector<8x128xf32>
    %c0_111 = arith.constant 0 : index
    %c7_112 = arith.constant 7 : index
    %c0_113 = arith.constant 0 : index
    %303 = vector.load %arg7[%c0_111, %c7_112, %c0_113] : memref<8x8x128xf32, #tpu.memory_space<vmem>>, vector<8x1x128xf32>
    %304 = vector.shape_cast %303 : vector<8x1x128xf32> to vector<8x128xf32>
    %305 = vector.shape_cast %302 : vector<8x128xf32> to vector<8x1x128xf32>
    tpu.vector_store %arg7[%c0_111, %c7_112, %c0_113], %305 {strides = array<i32>} : memref<8x8x128xf32, #tpu.memory_space<vmem>>, vector<8x1x128xf32>,
    %c0_114 = arith.constant 0 : index
    %c0_115 = arith.constant 0 : index
    %306 = vector.load %arg8[%c0_114, %c0_115] : memref<8x128xf32, #tpu.memory_space<vmem>>, vector<8x128xf32>
    tpu.vector_store %arg8[%c0_114, %c0_115], %297 {strides = array<i32>} : memref<8x128xf32, #tpu.memory_space<vmem>>, vector<8x128xf32>,
    %c0_116 = arith.constant 0 : index
    %c0_117 = arith.constant 0 : index
    %307 = vector.load %arg9[%c0_116, %c0_117] : memref<8x128xf32, #tpu.memory_space<vmem>>, vector<8x128xf32>
    tpu.vector_store %arg9[%c0_116, %c0_117], %302 {strides = array<i32>} : memref<8x128xf32, #tpu.memory_space<vmem>>, vector<8x128xf32>,
    return
  }
  func.func @transform_0(%arg0: i32, %arg1: i32) -> (i32, i32, i32) {
    %c0_i32 = arith.constant 0 : i32
    %c0_i32_0 = arith.constant 0 : i32
    return %arg0, %arg1, %c0_i32 : i32, i32, i32
  }
  func.func @transform_1(%arg0: i32, %arg1: i32) -> (i32, i32, i32) {
    %c0_i32 = arith.constant 0 : i32
    %c0_i32_0 = arith.constant 0 : i32
    return %arg0, %arg1, %c0_i32 : i32, i32, i32
  }
  func.func @transform_2(%arg0: i32, %arg1: i32) -> (i32, i32) {
    %c0_i32 = arith.constant 0 : i32
    %c0_i32_0 = arith.constant 0 : i32
    %c0_i32_1 = arith.constant 0 : i32
    return %c0_i32, %c0_i32_0 : i32, i32
  }
  func.func @transform_3(%arg0: i32, %arg1: i32) -> (i32, i32) {
    %c0_i32 = arith.constant 0 : i32
    %c0_i32_0 = arith.constant 0 : i32
    %c0_i32_1 = arith.constant 0 : i32
    return %c0_i32, %c0_i32_0 : i32, i32
  }
  func.func @transform_4(%arg0: i32, %arg1: i32) -> (i32, i32) {
    %c0_i32 = arith.constant 0 : i32
    %c0_i32_0 = arith.constant 0 : i32
    %c0_i32_1 = arith.constant 0 : i32
    return %c0_i32, %c0_i32_0 : i32, i32
  }
  func.func @transform_5(%arg0: i32, %arg1: i32) -> (i32, i32, i32) {
    %c0_i32 = arith.constant 0 : i32
    %c0_i32_0 = arith.constant 0 : i32
    return %arg0, %arg1, %c0_i32 : i32, i32, i32
  }
}

module attributes {stable_mosaic.version = 11 : i64} {
  func.func @lstm_recurrence_kernel(%arg0: i32, %arg1: i32, %arg2: memref<8x8x4xf32, #tpu.memory_space<vmem>>, %arg3: memref<8x8x128xf32, #tpu.memory_space<vmem>>, %arg4: memref<4x512xf32, #tpu.memory_space<vmem>>, %arg5: memref<128x512xf32, #tpu.memory_space<vmem>>, %arg6: memref<1x512xf32, #tpu.memory_space<vmem>>, %arg7: memref<8x8x128xf32, #tpu.memory_space<vmem>>, %arg8: memref<8x128xf32, #tpu.memory_space<vmem>>, %arg9: memref<8x128xf32, #tpu.memory_space<vmem>>) attributes {dimension_semantics = [#tpu.dimension_semantics<parallel>, #tpu.dimension_semantics<arbitrary>], iteration_bounds = array<i64: 1, 1>, scalar_prefetch = 0 : i64, scratch_operands = 2 : i64, tpu.core_type = #tpu.core_type<tc>, window_params = [{transform_indices = @transform_0, window_bounds = array<i64: 8, 8, 4>}, {transform_indices = @transform_1, window_bounds = array<i64: 8, 8, 128>}, {pipeline_mode = #tpu.pipeline_mode<synchronous>, transform_indices = @transform_2, window_bounds = array<i64: 4, 512>}, {pipeline_mode = #tpu.pipeline_mode<synchronous>, transform_indices = @transform_3, window_bounds = array<i64: 128, 512>}, {pipeline_mode = #tpu.pipeline_mode<synchronous>, transform_indices = @transform_4, window_bounds = array<i64: 1, 512>}, {transform_indices = @transform_5, window_bounds = array<i64: 8, 8, 128>}]} {
    %c0_i32 = arith.constant 0 : i32
    %0 = arith.cmpi eq, %arg1, %c0_i32 : i32
    %1 = arith.extui %0 : i1 to i32
    %c0_i32_0 = arith.constant 0 : i32
    %2 = arith.cmpi ne, %1, %c0_i32_0 : i32
    scf.if %2 {
      %cst_118 = arith.constant 0.000000e+00 : f32
      %308 = vector.broadcast %cst_118 : f32 to vector<8x128xf32>
      %c0_119 = arith.constant 0 : index
      %c0_120 = arith.constant 0 : index
      %309 = vector.load %arg8[%c0_119, %c0_120] : memref<8x128xf32, #tpu.memory_space<vmem>>, vector<8x128xf32>
      tpu.vector_store %arg8[%c0_119, %c0_120], %308 {strides = array<i32>} : memref<8x128xf32, #tpu.memory_space<vmem>>, vector<8x128xf32>,
      %cst_121 = arith.constant 0.000000e+00 : f32
      %310 = vector.broadcast %cst_121 : f32 to vector<8x128xf32>
      %c0_122 = arith.constant 0 : index
      %c0_123 = arith.constant 0 : index
      %311 = vector.load %arg9[%c0_122, %c0_123] : memref<8x128xf32, #tpu.memory_space<vmem>>, vector<8x128xf32>
      tpu.vector_store %arg9[%c0_122, %c0_123], %310 {strides = array<i32>} : memref<8x128xf32, #tpu.memory_space<vmem>>, vector<8x128xf32>,
    } else {
    }
    %c0 = arith.constant 0 : index
    %c0_1 = arith.constant 0 : index
    %3 = vector.load %arg4[%c0, %c0_1] : memref<4x512xf32, #tpu.memory_space<vmem>>, vector<4x512xf32>
    %c0_2 = arith.constant 0 : index
    %c0_3 = arith.constant 0 : index
    %4 = vector.load %arg5[%c0_2, %c0_3] : memref<128x512xf32, #tpu.memory_space<vmem>>, vector<128x512xf32>
    %c0_4 = arith.constant 0 : index
    %c0_5 = arith.constant 0 : index
    %5 = vector.load %arg6[%c0_4, %c0_5] : memref<1x512xf32, #tpu.memory_space<vmem>>, vector<1x512xf32>
    %6 = vector.shape_cast %5 : vector<1x512xf32> to vector<1x512xf32>
    %7 = vector.broadcast %6 : vector<1x512xf32> to vector<8x512xf32>
    %c0_6 = arith.constant 0 : index
    %c0_7 = arith.constant 0 : index
    %8 = vector.load %arg8[%c0_6, %c0_7] : memref<8x128xf32, #tpu.memory_space<vmem>>, vector<8x128xf32>
    %c0_8 = arith.constant 0 : index
    %c0_9 = arith.constant 0 : index
    %9 = vector.load %arg9[%c0_8, %c0_9] : memref<8x128xf32, #tpu.memory_space<vmem>>, vector<8x128xf32>
    %c0_10 = arith.constant 0 : index
    %c0_11 = arith.constant 0 : index
    %c0_12 = arith.constant 0 : index
    %10 = vector.load %arg2[%c0_10, %c0_11, %c0_12] : memref<8x8x4xf32, #tpu.memory_space<vmem>>, vector<8x1x4xf32>
    %11 = vector.shape_cast %10 : vector<8x1x4xf32> to vector<8x4xf32>
    %cst = arith.constant dense<0.000000e+00> : vector<8x512xf32>
    %12 = tpu.matmul %11, %3, %cst {dimension_numbers = #tpu.dot_dimension_numbers<[1], [0], [0], [1], [0, 0, 1, 1], [], []>} : vector<8x4xf32>, vector<4x512xf32>, vector<8x512xf32> -> vector<8x512xf32>
    %cst_13 = arith.constant dense<0.000000e+00> : vector<8x512xf32>
    %13 = tpu.matmul %9, %4, %cst_13 {dimension_numbers = #tpu.dot_dimension_numbers<[1], [0], [0], [1], [0, 0, 1, 1], [], []>} : vector<8x128xf32>, vector<128x512xf32>, vector<8x512xf32> -> vector<8x512xf32>
    %14 = arith.addf %12, %13 : vector<8x512xf32>
    %15 = arith.addf %14, %7 : vector<8x512xf32>
    %16 = vector.extract_strided_slice %15 {offsets = [0, 0], sizes = [8, 128], strides = [1, 1]} : vector<8x512xf32> to vector<8x128xf32>
    %17 = arith.negf %16 : vector<8x128xf32>
    %18 = math.exp %17 : vector<8x128xf32>
    %cst_14 = arith.constant 1.000000e+00 : f32
    %19 = vector.broadcast %cst_14 : f32 to vector<8x128xf32>
    %20 = arith.addf %19, %18 : vector<8x128xf32>
    %21 = arith.divf %19, %20 : vector<8x128xf32>
    %22 = vector.extract_strided_slice %15 {offsets = [0, 128], sizes = [8, 128], strides = [1, 1]} : vector<8x512xf32> to vector<8x128xf32>
    %23 = arith.negf %22 : vector<8x128xf32>
    %24 = math.exp %23 : vector<8x128xf32>
    %cst_15 = arith.constant 1.000000e+00 : f32
    %25 = vector.broadcast %cst_15 : f32 to vector<8x128xf32>
    %26 = arith.addf %25, %24 : vector<8x128xf32>
    %27 = arith.divf %25, %26 : vector<8x128xf32>
    %28 = vector.extract_strided_slice %15 {offsets = [0, 256], sizes = [8, 128], strides = [1, 1]} : vector<8x512xf32> to vector<8x128xf32>
    %29 = arith.negf %28 : vector<8x128xf32>
    %30 = math.exp %29 : vector<8x128xf32>
    %cst_16 = arith.constant 1.000000e+00 : f32
    %31 = vector.broadcast %cst_16 : f32 to vector<8x128xf32>
    %32 = arith.addf %31, %30 : vector<8x128xf32>
    %33 = arith.divf %31, %32 : vector<8x128xf32>
    %34 = vector.extract_strided_slice %15 {offsets = [0, 384], sizes = [8, 128], strides = [1, 1]} : vector<8x512xf32> to vector<8x128xf32>
    %35 = math.tanh %34 : vector<8x128xf32>
    %36 = arith.mulf %21, %35 : vector<8x128xf32>
    %37 = arith.mulf %33, %8 : vector<8x128xf32>
    %38 = arith.addf %36, %37 : vector<8x128xf32>
    %39 = math.tanh %38 : vector<8x128xf32>
    %40 = arith.mulf %27, %39 : vector<8x128xf32>
    %c0_17 = arith.constant 0 : index
    %c0_18 = arith.constant 0 : index
    %c0_19 = arith.constant 0 : index
    %41 = vector.load %arg3[%c0_17, %c0_18, %c0_19] : memref<8x8x128xf32, #tpu.memory_space<vmem>>, vector<8x1x128xf32>
    %42 = vector.shape_cast %41 : vector<8x1x128xf32> to vector<8x128xf32>
    %43 = arith.addf %40, %42 : vector<8x128xf32>
    %c0_20 = arith.constant 0 : index
    %c0_21 = arith.constant 0 : index
    %c0_22 = arith.constant 0 : index
    %44 = vector.load %arg7[%c0_20, %c0_21, %c0_22] : memref<8x8x128xf32, #tpu.memory_space<vmem>>, vector<8x1x128xf32>
    %45 = vector.shape_cast %44 : vector<8x1x128xf32> to vector<8x128xf32>
    %46 = vector.shape_cast %43 : vector<8x128xf32> to vector<8x1x128xf32>
    tpu.vector_store %arg7[%c0_20, %c0_21, %c0_22], %46 {strides = array<i32>} : memref<8x8x128xf32, #tpu.memory_space<vmem>>, vector<8x1x128xf32>,
    %c0_23 = arith.constant 0 : index
    %c1 = arith.constant 1 : index
    %c0_24 = arith.constant 0 : index
    %47 = vector.load %arg2[%c0_23, %c1, %c0_24] : memref<8x8x4xf32, #tpu.memory_space<vmem>>, vector<8x1x4xf32>
    %48 = vector.shape_cast %47 : vector<8x1x4xf32> to vector<8x4xf32>
    %cst_25 = arith.constant dense<0.000000e+00> : vector<8x512xf32>
    %49 = tpu.matmul %48, %3, %cst_25 {dimension_numbers = #tpu.dot_dimension_numbers<[1], [0], [0], [1], [0, 0, 1, 1], [], []>} : vector<8x4xf32>, vector<4x512xf32>, vector<8x512xf32> -> vector<8x512xf32>
    %cst_26 = arith.constant dense<0.000000e+00> : vector<8x512xf32>
    %50 = tpu.matmul %43, %4, %cst_26 {dimension_numbers = #tpu.dot_dimension_numbers<[1], [0], [0], [1], [0, 0, 1, 1], [], []>} : vector<8x128xf32>, vector<128x512xf32>, vector<8x512xf32> -> vector<8x512xf32>
    %51 = arith.addf %49, %50 : vector<8x512xf32>
    %52 = arith.addf %51, %7 : vector<8x512xf32>
    %53 = vector.extract_strided_slice %52 {offsets = [0, 0], sizes = [8, 128], strides = [1, 1]} : vector<8x512xf32> to vector<8x128xf32>
    %54 = arith.negf %53 : vector<8x128xf32>
    %55 = math.exp %54 : vector<8x128xf32>
    %cst_27 = arith.constant 1.000000e+00 : f32
    %56 = vector.broadcast %cst_27 : f32 to vector<8x128xf32>
    %57 = arith.addf %56, %55 : vector<8x128xf32>
    %58 = arith.divf %56, %57 : vector<8x128xf32>
    %59 = vector.extract_strided_slice %52 {offsets = [0, 128], sizes = [8, 128], strides = [1, 1]} : vector<8x512xf32> to vector<8x128xf32>
    %60 = arith.negf %59 : vector<8x128xf32>
    %61 = math.exp %60 : vector<8x128xf32>
    %cst_28 = arith.constant 1.000000e+00 : f32
    %62 = vector.broadcast %cst_28 : f32 to vector<8x128xf32>
    %63 = arith.addf %62, %61 : vector<8x128xf32>
    %64 = arith.divf %62, %63 : vector<8x128xf32>
    %65 = vector.extract_strided_slice %52 {offsets = [0, 256], sizes = [8, 128], strides = [1, 1]} : vector<8x512xf32> to vector<8x128xf32>
    %66 = arith.negf %65 : vector<8x128xf32>
    %67 = math.exp %66 : vector<8x128xf32>
    %cst_29 = arith.constant 1.000000e+00 : f32
    %68 = vector.broadcast %cst_29 : f32 to vector<8x128xf32>
    %69 = arith.addf %68, %67 : vector<8x128xf32>
    %70 = arith.divf %68, %69 : vector<8x128xf32>
    %71 = vector.extract_strided_slice %52 {offsets = [0, 384], sizes = [8, 128], strides = [1, 1]} : vector<8x512xf32> to vector<8x128xf32>
    %72 = math.tanh %71 : vector<8x128xf32>
    %73 = arith.mulf %58, %72 : vector<8x128xf32>
    %74 = arith.mulf %70, %38 : vector<8x128xf32>
    %75 = arith.addf %73, %74 : vector<8x128xf32>
    %76 = math.tanh %75 : vector<8x128xf32>
    %77 = arith.mulf %64, %76 : vector<8x128xf32>
    %c0_30 = arith.constant 0 : index
    %c1_31 = arith.constant 1 : index
    %c0_32 = arith.constant 0 : index
    %78 = vector.load %arg3[%c0_30, %c1_31, %c0_32] : memref<8x8x128xf32, #tpu.memory_space<vmem>>, vector<8x1x128xf32>
    %79 = vector.shape_cast %78 : vector<8x1x128xf32> to vector<8x128xf32>
    %80 = arith.addf %77, %79 : vector<8x128xf32>
    %c0_33 = arith.constant 0 : index
    %c1_34 = arith.constant 1 : index
    %c0_35 = arith.constant 0 : index
    %81 = vector.load %arg7[%c0_33, %c1_34, %c0_35] : memref<8x8x128xf32, #tpu.memory_space<vmem>>, vector<8x1x128xf32>
    %82 = vector.shape_cast %81 : vector<8x1x128xf32> to vector<8x128xf32>
    %83 = vector.shape_cast %80 : vector<8x128xf32> to vector<8x1x128xf32>
    tpu.vector_store %arg7[%c0_33, %c1_34, %c0_35], %83 {strides = array<i32>} : memref<8x8x128xf32, #tpu.memory_space<vmem>>, vector<8x1x128xf32>,
    %c0_36 = arith.constant 0 : index
    %c2 = arith.constant 2 : index
    %c0_37 = arith.constant 0 : index
    %84 = vector.load %arg2[%c0_36, %c2, %c0_37] : memref<8x8x4xf32, #tpu.memory_space<vmem>>, vector<8x1x4xf32>
    %85 = vector.shape_cast %84 : vector<8x1x4xf32> to vector<8x4xf32>
    %cst_38 = arith.constant dense<0.000000e+00> : vector<8x512xf32>
    %86 = tpu.matmul %85, %3, %cst_38 {dimension_numbers = #tpu.dot_dimension_numbers<[1], [0], [0], [1], [0, 0, 1, 1], [], []>} : vector<8x4xf32>, vector<4x512xf32>, vector<8x512xf32> -> vector<8x512xf32>
    %cst_39 = arith.constant dense<0.000000e+00> : vector<8x512xf32>
    %87 = tpu.matmul %80, %4, %cst_39 {dimension_numbers = #tpu.dot_dimension_numbers<[1], [0], [0], [1], [0, 0, 1, 1], [], []>} : vector<8x128xf32>, vector<128x512xf32>, vector<8x512xf32> -> vector<8x512xf32>
    %88 = arith.addf %86, %87 : vector<8x512xf32>
    %89 = arith.addf %88, %7 : vector<8x512xf32>
    %90 = vector.extract_strided_slice %89 {offsets = [0, 0], sizes = [8, 128], strides = [1, 1]} : vector<8x512xf32> to vector<8x128xf32>
    %91 = arith.negf %90 : vector<8x128xf32>
    %92 = math.exp %91 : vector<8x128xf32>
    %cst_40 = arith.constant 1.000000e+00 : f32
    %93 = vector.broadcast %cst_40 : f32 to vector<8x128xf32>
    %94 = arith.addf %93, %92 : vector<8x128xf32>
    %95 = arith.divf %93, %94 : vector<8x128xf32>
    %96 = vector.extract_strided_slice %89 {offsets = [0, 128], sizes = [8, 128], strides = [1, 1]} : vector<8x512xf32> to vector<8x128xf32>
    %97 = arith.negf %96 : vector<8x128xf32>
    %98 = math.exp %97 : vector<8x128xf32>
    %cst_41 = arith.constant 1.000000e+00 : f32
    %99 = vector.broadcast %cst_41 : f32 to vector<8x128xf32>
    %100 = arith.addf %99, %98 : vector<8x128xf32>
    %101 = arith.divf %99, %100 : vector<8x128xf32>
    %102 = vector.extract_strided_slice %89 {offsets = [0, 256], sizes = [8, 128], strides = [1, 1]} : vector<8x512xf32> to vector<8x128xf32>
    %103 = arith.negf %102 : vector<8x128xf32>
    %104 = math.exp %103 : vector<8x128xf32>
    %cst_42 = arith.constant 1.000000e+00 : f32
    %105 = vector.broadcast %cst_42 : f32 to vector<8x128xf32>
    %106 = arith.addf %105, %104 : vector<8x128xf32>
    %107 = arith.divf %105, %106 : vector<8x128xf32>
    %108 = vector.extract_strided_slice %89 {offsets = [0, 384], sizes = [8, 128], strides = [1, 1]} : vector<8x512xf32> to vector<8x128xf32>
    %109 = math.tanh %108 : vector<8x128xf32>
    %110 = arith.mulf %95, %109 : vector<8x128xf32>
    %111 = arith.mulf %107, %75 : vector<8x128xf32>
    %112 = arith.addf %110, %111 : vector<8x128xf32>
    %113 = math.tanh %112 : vector<8x128xf32>
    %114 = arith.mulf %101, %113 : vector<8x128xf32>
    %c0_43 = arith.constant 0 : index
    %c2_44 = arith.constant 2 : index
    %c0_45 = arith.constant 0 : index
    %115 = vector.load %arg3[%c0_43, %c2_44, %c0_45] : memref<8x8x128xf32, #tpu.memory_space<vmem>>, vector<8x1x128xf32>
    %116 = vector.shape_cast %115 : vector<8x1x128xf32> to vector<8x128xf32>
    %117 = arith.addf %114, %116 : vector<8x128xf32>
    %c0_46 = arith.constant 0 : index
    %c2_47 = arith.constant 2 : index
    %c0_48 = arith.constant 0 : index
    %118 = vector.load %arg7[%c0_46, %c2_47, %c0_48] : memref<8x8x128xf32, #tpu.memory_space<vmem>>, vector<8x1x128xf32>
    %119 = vector.shape_cast %118 : vector<8x1x128xf32> to vector<8x128xf32>
    %120 = vector.shape_cast %117 : vector<8x128xf32> to vector<8x1x128xf32>
    tpu.vector_store %arg7[%c0_46, %c2_47, %c0_48], %120 {strides = array<i32>} : memref<8x8x128xf32, #tpu.memory_space<vmem>>, vector<8x1x128xf32>,
    %c0_49 = arith.constant 0 : index
    %c3 = arith.constant 3 : index
    %c0_50 = arith.constant 0 : index
    %121 = vector.load %arg2[%c0_49, %c3, %c0_50] : memref<8x8x4xf32, #tpu.memory_space<vmem>>, vector<8x1x4xf32>
    %122 = vector.shape_cast %121 : vector<8x1x4xf32> to vector<8x4xf32>
    %cst_51 = arith.constant dense<0.000000e+00> : vector<8x512xf32>
    %123 = tpu.matmul %122, %3, %cst_51 {dimension_numbers = #tpu.dot_dimension_numbers<[1], [0], [0], [1], [0, 0, 1, 1], [], []>} : vector<8x4xf32>, vector<4x512xf32>, vector<8x512xf32> -> vector<8x512xf32>
    %cst_52 = arith.constant dense<0.000000e+00> : vector<8x512xf32>
    %124 = tpu.matmul %117, %4, %cst_52 {dimension_numbers = #tpu.dot_dimension_numbers<[1], [0], [0], [1], [0, 0, 1, 1], [], []>} : vector<8x128xf32>, vector<128x512xf32>, vector<8x512xf32> -> vector<8x512xf32>
    %125 = arith.addf %123, %124 : vector<8x512xf32>
    %126 = arith.addf %125, %7 : vector<8x512xf32>
    %127 = vector.extract_strided_slice %126 {offsets = [0, 0], sizes = [8, 128], strides = [1, 1]} : vector<8x512xf32> to vector<8x128xf32>
    %128 = arith.negf %127 : vector<8x128xf32>
    %129 = math.exp %128 : vector<8x128xf32>
    %cst_53 = arith.constant 1.000000e+00 : f32
    %130 = vector.broadcast %cst_53 : f32 to vector<8x128xf32>
    %131 = arith.addf %130, %129 : vector<8x128xf32>
    %132 = arith.divf %130, %131 : vector<8x128xf32>
    %133 = vector.extract_strided_slice %126 {offsets = [0, 128], sizes = [8, 128], strides = [1, 1]} : vector<8x512xf32> to vector<8x128xf32>
    %134 = arith.negf %133 : vector<8x128xf32>
    %135 = math.exp %134 : vector<8x128xf32>
    %cst_54 = arith.constant 1.000000e+00 : f32
    %136 = vector.broadcast %cst_54 : f32 to vector<8x128xf32>
    %137 = arith.addf %136, %135 : vector<8x128xf32>
    %138 = arith.divf %136, %137 : vector<8x128xf32>
    %139 = vector.extract_strided_slice %126 {offsets = [0, 256], sizes = [8, 128], strides = [1, 1]} : vector<8x512xf32> to vector<8x128xf32>
    %140 = arith.negf %139 : vector<8x128xf32>
    %141 = math.exp %140 : vector<8x128xf32>
    %cst_55 = arith.constant 1.000000e+00 : f32
    %142 = vector.broadcast %cst_55 : f32 to vector<8x128xf32>
    %143 = arith.addf %142, %141 : vector<8x128xf32>
    %144 = arith.divf %142, %143 : vector<8x128xf32>
    %145 = vector.extract_strided_slice %126 {offsets = [0, 384], sizes = [8, 128], strides = [1, 1]} : vector<8x512xf32> to vector<8x128xf32>
    %146 = math.tanh %145 : vector<8x128xf32>
    %147 = arith.mulf %132, %146 : vector<8x128xf32>
    %148 = arith.mulf %144, %112 : vector<8x128xf32>
    %149 = arith.addf %147, %148 : vector<8x128xf32>
    %150 = math.tanh %149 : vector<8x128xf32>
    %151 = arith.mulf %138, %150 : vector<8x128xf32>
    %c0_56 = arith.constant 0 : index
    %c3_57 = arith.constant 3 : index
    %c0_58 = arith.constant 0 : index
    %152 = vector.load %arg3[%c0_56, %c3_57, %c0_58] : memref<8x8x128xf32, #tpu.memory_space<vmem>>, vector<8x1x128xf32>
    %153 = vector.shape_cast %152 : vector<8x1x128xf32> to vector<8x128xf32>
    %154 = arith.addf %151, %153 : vector<8x128xf32>
    %c0_59 = arith.constant 0 : index
    %c3_60 = arith.constant 3 : index
    %c0_61 = arith.constant 0 : index
    %155 = vector.load %arg7[%c0_59, %c3_60, %c0_61] : memref<8x8x128xf32, #tpu.memory_space<vmem>>, vector<8x1x128xf32>
    %156 = vector.shape_cast %155 : vector<8x1x128xf32> to vector<8x128xf32>
    %157 = vector.shape_cast %154 : vector<8x128xf32> to vector<8x1x128xf32>
    tpu.vector_store %arg7[%c0_59, %c3_60, %c0_61], %157 {strides = array<i32>} : memref<8x8x128xf32, #tpu.memory_space<vmem>>, vector<8x1x128xf32>,
    %c0_62 = arith.constant 0 : index
    %c4 = arith.constant 4 : index
    %c0_63 = arith.constant 0 : index
    %158 = vector.load %arg2[%c0_62, %c4, %c0_63] : memref<8x8x4xf32, #tpu.memory_space<vmem>>, vector<8x1x4xf32>
    %159 = vector.shape_cast %158 : vector<8x1x4xf32> to vector<8x4xf32>
    %cst_64 = arith.constant dense<0.000000e+00> : vector<8x512xf32>
    %160 = tpu.matmul %159, %3, %cst_64 {dimension_numbers = #tpu.dot_dimension_numbers<[1], [0], [0], [1], [0, 0, 1, 1], [], []>} : vector<8x4xf32>, vector<4x512xf32>, vector<8x512xf32> -> vector<8x512xf32>
    %cst_65 = arith.constant dense<0.000000e+00> : vector<8x512xf32>
    %161 = tpu.matmul %154, %4, %cst_65 {dimension_numbers = #tpu.dot_dimension_numbers<[1], [0], [0], [1], [0, 0, 1, 1], [], []>} : vector<8x128xf32>, vector<128x512xf32>, vector<8x512xf32> -> vector<8x512xf32>
    %162 = arith.addf %160, %161 : vector<8x512xf32>
    %163 = arith.addf %162, %7 : vector<8x512xf32>
    %164 = vector.extract_strided_slice %163 {offsets = [0, 0], sizes = [8, 128], strides = [1, 1]} : vector<8x512xf32> to vector<8x128xf32>
    %165 = arith.negf %164 : vector<8x128xf32>
    %166 = math.exp %165 : vector<8x128xf32>
    %cst_66 = arith.constant 1.000000e+00 : f32
    %167 = vector.broadcast %cst_66 : f32 to vector<8x128xf32>
    %168 = arith.addf %167, %166 : vector<8x128xf32>
    %169 = arith.divf %167, %168 : vector<8x128xf32>
    %170 = vector.extract_strided_slice %163 {offsets = [0, 128], sizes = [8, 128], strides = [1, 1]} : vector<8x512xf32> to vector<8x128xf32>
    %171 = arith.negf %170 : vector<8x128xf32>
    %172 = math.exp %171 : vector<8x128xf32>
    %cst_67 = arith.constant 1.000000e+00 : f32
    %173 = vector.broadcast %cst_67 : f32 to vector<8x128xf32>
    %174 = arith.addf %173, %172 : vector<8x128xf32>
    %175 = arith.divf %173, %174 : vector<8x128xf32>
    %176 = vector.extract_strided_slice %163 {offsets = [0, 256], sizes = [8, 128], strides = [1, 1]} : vector<8x512xf32> to vector<8x128xf32>
    %177 = arith.negf %176 : vector<8x128xf32>
    %178 = math.exp %177 : vector<8x128xf32>
    %cst_68 = arith.constant 1.000000e+00 : f32
    %179 = vector.broadcast %cst_68 : f32 to vector<8x128xf32>
    %180 = arith.addf %179, %178 : vector<8x128xf32>
    %181 = arith.divf %179, %180 : vector<8x128xf32>
    %182 = vector.extract_strided_slice %163 {offsets = [0, 384], sizes = [8, 128], strides = [1, 1]} : vector<8x512xf32> to vector<8x128xf32>
    %183 = math.tanh %182 : vector<8x128xf32>
    %184 = arith.mulf %169, %183 : vector<8x128xf32>
    %185 = arith.mulf %181, %149 : vector<8x128xf32>
    %186 = arith.addf %184, %185 : vector<8x128xf32>
    %187 = math.tanh %186 : vector<8x128xf32>
    %188 = arith.mulf %175, %187 : vector<8x128xf32>
    %c0_69 = arith.constant 0 : index
    %c4_70 = arith.constant 4 : index
    %c0_71 = arith.constant 0 : index
    %189 = vector.load %arg3[%c0_69, %c4_70, %c0_71] : memref<8x8x128xf32, #tpu.memory_space<vmem>>, vector<8x1x128xf32>
    %190 = vector.shape_cast %189 : vector<8x1x128xf32> to vector<8x128xf32>
    %191 = arith.addf %188, %190 : vector<8x128xf32>
    %c0_72 = arith.constant 0 : index
    %c4_73 = arith.constant 4 : index
    %c0_74 = arith.constant 0 : index
    %192 = vector.load %arg7[%c0_72, %c4_73, %c0_74] : memref<8x8x128xf32, #tpu.memory_space<vmem>>, vector<8x1x128xf32>
    %193 = vector.shape_cast %192 : vector<8x1x128xf32> to vector<8x128xf32>
    %194 = vector.shape_cast %191 : vector<8x128xf32> to vector<8x1x128xf32>
    tpu.vector_store %arg7[%c0_72, %c4_73, %c0_74], %194 {strides = array<i32>} : memref<8x8x128xf32, #tpu.memory_space<vmem>>, vector<8x1x128xf32>,
    %c0_75 = arith.constant 0 : index
    %c5 = arith.constant 5 : index
    %c0_76 = arith.constant 0 : index
    %195 = vector.load %arg2[%c0_75, %c5, %c0_76] : memref<8x8x4xf32, #tpu.memory_space<vmem>>, vector<8x1x4xf32>
    %196 = vector.shape_cast %195 : vector<8x1x4xf32> to vector<8x4xf32>
    %cst_77 = arith.constant dense<0.000000e+00> : vector<8x512xf32>
    %197 = tpu.matmul %196, %3, %cst_77 {dimension_numbers = #tpu.dot_dimension_numbers<[1], [0], [0], [1], [0, 0, 1, 1], [], []>} : vector<8x4xf32>, vector<4x512xf32>, vector<8x512xf32> -> vector<8x512xf32>
    %cst_78 = arith.constant dense<0.000000e+00> : vector<8x512xf32>
    %198 = tpu.matmul %191, %4, %cst_78 {dimension_numbers = #tpu.dot_dimension_numbers<[1], [0], [0], [1], [0, 0, 1, 1], [], []>} : vector<8x128xf32>, vector<128x512xf32>, vector<8x512xf32> -> vector<8x512xf32>
    %199 = arith.addf %197, %198 : vector<8x512xf32>
    %200 = arith.addf %199, %7 : vector<8x512xf32>
    %201 = vector.extract_strided_slice %200 {offsets = [0, 0], sizes = [8, 128], strides = [1, 1]} : vector<8x512xf32> to vector<8x128xf32>
    %202 = arith.negf %201 : vector<8x128xf32>
    %203 = math.exp %202 : vector<8x128xf32>
    %cst_79 = arith.constant 1.000000e+00 : f32
    %204 = vector.broadcast %cst_79 : f32 to vector<8x128xf32>
    %205 = arith.addf %204, %203 : vector<8x128xf32>
    %206 = arith.divf %204, %205 : vector<8x128xf32>
    %207 = vector.extract_strided_slice %200 {offsets = [0, 128], sizes = [8, 128], strides = [1, 1]} : vector<8x512xf32> to vector<8x128xf32>
    %208 = arith.negf %207 : vector<8x128xf32>
    %209 = math.exp %208 : vector<8x128xf32>
    %cst_80 = arith.constant 1.000000e+00 : f32
    %210 = vector.broadcast %cst_80 : f32 to vector<8x128xf32>
    %211 = arith.addf %210, %209 : vector<8x128xf32>
    %212 = arith.divf %210, %211 : vector<8x128xf32>
    %213 = vector.extract_strided_slice %200 {offsets = [0, 256], sizes = [8, 128], strides = [1, 1]} : vector<8x512xf32> to vector<8x128xf32>
    %214 = arith.negf %213 : vector<8x128xf32>
    %215 = math.exp %214 : vector<8x128xf32>
    %cst_81 = arith.constant 1.000000e+00 : f32
    %216 = vector.broadcast %cst_81 : f32 to vector<8x128xf32>
    %217 = arith.addf %216, %215 : vector<8x128xf32>
    %218 = arith.divf %216, %217 : vector<8x128xf32>
    %219 = vector.extract_strided_slice %200 {offsets = [0, 384], sizes = [8, 128], strides = [1, 1]} : vector<8x512xf32> to vector<8x128xf32>
    %220 = math.tanh %219 : vector<8x128xf32>
    %221 = arith.mulf %206, %220 : vector<8x128xf32>
    %222 = arith.mulf %218, %186 : vector<8x128xf32>
    %223 = arith.addf %221, %222 : vector<8x128xf32>
    %224 = math.tanh %223 : vector<8x128xf32>
    %225 = arith.mulf %212, %224 : vector<8x128xf32>
    %c0_82 = arith.constant 0 : index
    %c5_83 = arith.constant 5 : index
    %c0_84 = arith.constant 0 : index
    %226 = vector.load %arg3[%c0_82, %c5_83, %c0_84] : memref<8x8x128xf32, #tpu.memory_space<vmem>>, vector<8x1x128xf32>
    %227 = vector.shape_cast %226 : vector<8x1x128xf32> to vector<8x128xf32>
    %228 = arith.addf %225, %227 : vector<8x128xf32>
    %c0_85 = arith.constant 0 : index
    %c5_86 = arith.constant 5 : index
    %c0_87 = arith.constant 0 : index
    %229 = vector.load %arg7[%c0_85, %c5_86, %c0_87] : memref<8x8x128xf32, #tpu.memory_space<vmem>>, vector<8x1x128xf32>
    %230 = vector.shape_cast %229 : vector<8x1x128xf32> to vector<8x128xf32>
    %231 = vector.shape_cast %228 : vector<8x128xf32> to vector<8x1x128xf32>
    tpu.vector_store %arg7[%c0_85, %c5_86, %c0_87], %231 {strides = array<i32>} : memref<8x8x128xf32, #tpu.memory_space<vmem>>, vector<8x1x128xf32>,
    %c0_88 = arith.constant 0 : index
    %c6 = arith.constant 6 : index
    %c0_89 = arith.constant 0 : index
    %232 = vector.load %arg2[%c0_88, %c6, %c0_89] : memref<8x8x4xf32, #tpu.memory_space<vmem>>, vector<8x1x4xf32>
    %233 = vector.shape_cast %232 : vector<8x1x4xf32> to vector<8x4xf32>
    %cst_90 = arith.constant dense<0.000000e+00> : vector<8x512xf32>
    %234 = tpu.matmul %233, %3, %cst_90 {dimension_numbers = #tpu.dot_dimension_numbers<[1], [0], [0], [1], [0, 0, 1, 1], [], []>} : vector<8x4xf32>, vector<4x512xf32>, vector<8x512xf32> -> vector<8x512xf32>
    %cst_91 = arith.constant dense<0.000000e+00> : vector<8x512xf32>
    %235 = tpu.matmul %228, %4, %cst_91 {dimension_numbers = #tpu.dot_dimension_numbers<[1], [0], [0], [1], [0, 0, 1, 1], [], []>} : vector<8x128xf32>, vector<128x512xf32>, vector<8x512xf32> -> vector<8x512xf32>
    %236 = arith.addf %234, %235 : vector<8x512xf32>
    %237 = arith.addf %236, %7 : vector<8x512xf32>
    %238 = vector.extract_strided_slice %237 {offsets = [0, 0], sizes = [8, 128], strides = [1, 1]} : vector<8x512xf32> to vector<8x128xf32>
    %239 = arith.negf %238 : vector<8x128xf32>
    %240 = math.exp %239 : vector<8x128xf32>
    %cst_92 = arith.constant 1.000000e+00 : f32
    %241 = vector.broadcast %cst_92 : f32 to vector<8x128xf32>
    %242 = arith.addf %241, %240 : vector<8x128xf32>
    %243 = arith.divf %241, %242 : vector<8x128xf32>
    %244 = vector.extract_strided_slice %237 {offsets = [0, 128], sizes = [8, 128], strides = [1, 1]} : vector<8x512xf32> to vector<8x128xf32>
    %245 = arith.negf %244 : vector<8x128xf32>
    %246 = math.exp %245 : vector<8x128xf32>
    %cst_93 = arith.constant 1.000000e+00 : f32
    %247 = vector.broadcast %cst_93 : f32 to vector<8x128xf32>
    %248 = arith.addf %247, %246 : vector<8x128xf32>
    %249 = arith.divf %247, %248 : vector<8x128xf32>
    %250 = vector.extract_strided_slice %237 {offsets = [0, 256], sizes = [8, 128], strides = [1, 1]} : vector<8x512xf32> to vector<8x128xf32>
    %251 = arith.negf %250 : vector<8x128xf32>
    %252 = math.exp %251 : vector<8x128xf32>
    %cst_94 = arith.constant 1.000000e+00 : f32
    %253 = vector.broadcast %cst_94 : f32 to vector<8x128xf32>
    %254 = arith.addf %253, %252 : vector<8x128xf32>
    %255 = arith.divf %253, %254 : vector<8x128xf32>
    %256 = vector.extract_strided_slice %237 {offsets = [0, 384], sizes = [8, 128], strides = [1, 1]} : vector<8x512xf32> to vector<8x128xf32>
    %257 = math.tanh %256 : vector<8x128xf32>
    %258 = arith.mulf %243, %257 : vector<8x128xf32>
    %259 = arith.mulf %255, %223 : vector<8x128xf32>
    %260 = arith.addf %258, %259 : vector<8x128xf32>
    %261 = math.tanh %260 : vector<8x128xf32>
    %262 = arith.mulf %249, %261 : vector<8x128xf32>
    %c0_95 = arith.constant 0 : index
    %c6_96 = arith.constant 6 : index
    %c0_97 = arith.constant 0 : index
    %263 = vector.load %arg3[%c0_95, %c6_96, %c0_97] : memref<8x8x128xf32, #tpu.memory_space<vmem>>, vector<8x1x128xf32>
    %264 = vector.shape_cast %263 : vector<8x1x128xf32> to vector<8x128xf32>
    %265 = arith.addf %262, %264 : vector<8x128xf32>
    %c0_98 = arith.constant 0 : index
    %c6_99 = arith.constant 6 : index
    %c0_100 = arith.constant 0 : index
    %266 = vector.load %arg7[%c0_98, %c6_99, %c0_100] : memref<8x8x128xf32, #tpu.memory_space<vmem>>, vector<8x1x128xf32>
    %267 = vector.shape_cast %266 : vector<8x1x128xf32> to vector<8x128xf32>
    %268 = vector.shape_cast %265 : vector<8x128xf32> to vector<8x1x128xf32>
    tpu.vector_store %arg7[%c0_98, %c6_99, %c0_100], %268 {strides = array<i32>} : memref<8x8x128xf32, #tpu.memory_space<vmem>>, vector<8x1x128xf32>,
    %c0_101 = arith.constant 0 : index
    %c7 = arith.constant 7 : index
    %c0_102 = arith.constant 0 : index
    %269 = vector.load %arg2[%c0_101, %c7, %c0_102] : memref<8x8x4xf32, #tpu.memory_space<vmem>>, vector<8x1x4xf32>
    %270 = vector.shape_cast %269 : vector<8x1x4xf32> to vector<8x4xf32>
    %cst_103 = arith.constant dense<0.000000e+00> : vector<8x512xf32>
    %271 = tpu.matmul %270, %3, %cst_103 {dimension_numbers = #tpu.dot_dimension_numbers<[1], [0], [0], [1], [0, 0, 1, 1], [], []>} : vector<8x4xf32>, vector<4x512xf32>, vector<8x512xf32> -> vector<8x512xf32>
    %cst_104 = arith.constant dense<0.000000e+00> : vector<8x512xf32>
    %272 = tpu.matmul %265, %4, %cst_104 {dimension_numbers = #tpu.dot_dimension_numbers<[1], [0], [0], [1], [0, 0, 1, 1], [], []>} : vector<8x128xf32>, vector<128x512xf32>, vector<8x512xf32> -> vector<8x512xf32>
    %273 = arith.addf %271, %272 : vector<8x512xf32>
    %274 = arith.addf %273, %7 : vector<8x512xf32>
    %275 = vector.extract_strided_slice %274 {offsets = [0, 0], sizes = [8, 128], strides = [1, 1]} : vector<8x512xf32> to vector<8x128xf32>
    %276 = arith.negf %275 : vector<8x128xf32>
    %277 = math.exp %276 : vector<8x128xf32>
    %cst_105 = arith.constant 1.000000e+00 : f32
    %278 = vector.broadcast %cst_105 : f32 to vector<8x128xf32>
    %279 = arith.addf %278, %277 : vector<8x128xf32>
    %280 = arith.divf %278, %279 : vector<8x128xf32>
    %281 = vector.extract_strided_slice %274 {offsets = [0, 128], sizes = [8, 128], strides = [1, 1]} : vector<8x512xf32> to vector<8x128xf32>
    %282 = arith.negf %281 : vector<8x128xf32>
    %283 = math.exp %282 : vector<8x128xf32>
    %cst_106 = arith.constant 1.000000e+00 : f32
    %284 = vector.broadcast %cst_106 : f32 to vector<8x128xf32>
    %285 = arith.addf %284, %283 : vector<8x128xf32>
    %286 = arith.divf %284, %285 : vector<8x128xf32>
    %287 = vector.extract_strided_slice %274 {offsets = [0, 256], sizes = [8, 128], strides = [1, 1]} : vector<8x512xf32> to vector<8x128xf32>
    %288 = arith.negf %287 : vector<8x128xf32>
    %289 = math.exp %288 : vector<8x128xf32>
    %cst_107 = arith.constant 1.000000e+00 : f32
    %290 = vector.broadcast %cst_107 : f32 to vector<8x128xf32>
    %291 = arith.addf %290, %289 : vector<8x128xf32>
    %292 = arith.divf %290, %291 : vector<8x128xf32>
    %293 = vector.extract_strided_slice %274 {offsets = [0, 384], sizes = [8, 128], strides = [1, 1]} : vector<8x512xf32> to vector<8x128xf32>
    %294 = math.tanh %293 : vector<8x128xf32>
    %295 = arith.mulf %280, %294 : vector<8x128xf32>
    %296 = arith.mulf %292, %260 : vector<8x128xf32>
    %297 = arith.addf %295, %296 : vector<8x128xf32>
    %298 = math.tanh %297 : vector<8x128xf32>
    %299 = arith.mulf %286, %298 : vector<8x128xf32>
    %c0_108 = arith.constant 0 : index
    %c7_109 = arith.constant 7 : index
    %c0_110 = arith.constant 0 : index
    %300 = vector.load %arg3[%c0_108, %c7_109, %c0_110] : memref<8x8x128xf32, #tpu.memory_space<vmem>>, vector<8x1x128xf32>
    %301 = vector.shape_cast %300 : vector<8x1x128xf32> to vector<8x128xf32>
    %302 = arith.addf %299, %301 : vector<8x128xf32>
    %c0_111 = arith.constant 0 : index
    %c7_112 = arith.constant 7 : index
    %c0_113 = arith.constant 0 : index
    %303 = vector.load %arg7[%c0_111, %c7_112, %c0_113] : memref<8x8x128xf32, #tpu.memory_space<vmem>>, vector<8x1x128xf32>
    %304 = vector.shape_cast %303 : vector<8x1x128xf32> to vector<8x128xf32>
    %305 = vector.shape_cast %302 : vector<8x128xf32> to vector<8x1x128xf32>
    tpu.vector_store %arg7[%c0_111, %c7_112, %c0_113], %305 {strides = array<i32>} : memref<8x8x128xf32, #tpu.memory_space<vmem>>, vector<8x1x128xf32>,
    %c0_114 = arith.constant 0 : index
    %c0_115 = arith.constant 0 : index
    %306 = vector.load %arg8[%c0_114, %c0_115] : memref<8x128xf32, #tpu.memory_space<vmem>>, vector<8x128xf32>
    tpu.vector_store %arg8[%c0_114, %c0_115], %297 {strides = array<i32>} : memref<8x128xf32, #tpu.memory_space<vmem>>, vector<8x128xf32>,
    %c0_116 = arith.constant 0 : index
    %c0_117 = arith.constant 0 : index
    %307 = vector.load %arg9[%c0_116, %c0_117] : memref<8x128xf32, #tpu.memory_space<vmem>>, vector<8x128xf32>
    tpu.vector_store %arg9[%c0_116, %c0_117], %302 {strides = array<i32>} : memref<8x128xf32, #tpu.memory_space<vmem>>, vector<8x128xf32>,
    return
  }
  func.func @transform_0(%arg0: i32, %arg1: i32) -> (i32, i32, i32) {
    %c0_i32 = arith.constant 0 : i32
    %c0_i32_0 = arith.constant 0 : i32
    return %arg0, %arg1, %c0_i32 : i32, i32, i32
  }
  func.func @transform_1(%arg0: i32, %arg1: i32) -> (i32, i32, i32) {
    %c0_i32 = arith.constant 0 : i32
    %c0_i32_0 = arith.constant 0 : i32
    return %arg0, %arg1, %c0_i32 : i32, i32, i32
  }
  func.func @transform_2(%arg0: i32, %arg1: i32) -> (i32, i32) {
    %c0_i32 = arith.constant 0 : i32
    %c0_i32_0 = arith.constant 0 : i32
    %c0_i32_1 = arith.constant 0 : i32
    return %c0_i32, %c0_i32_0 : i32, i32
  }
  func.func @transform_3(%arg0: i32, %arg1: i32) -> (i32, i32) {
    %c0_i32 = arith.constant 0 : i32
    %c0_i32_0 = arith.constant 0 : i32
    %c0_i32_1 = arith.constant 0 : i32
    return %c0_i32, %c0_i32_0 : i32, i32
  }
  func.func @transform_4(%arg0: i32, %arg1: i32) -> (i32, i32) {
    %c0_i32 = arith.constant 0 : i32
    %c0_i32_0 = arith.constant 0 : i32
    %c0_i32_1 = arith.constant 0 : i32
    return %c0_i32, %c0_i32_0 : i32, i32
  }
  func.func @transform_5(%arg0: i32, %arg1: i32) -> (i32, i32, i32) {
    %c0_i32 = arith.constant 0 : i32
    %c0_i32_0 = arith.constant 0 : i32
    return %arg0, %arg1, %c0_i32 : i32, i32, i32
  }
}

</mosaic_0001>

<llo_original>
// kernel: tpu_custom_call.1
$region0: #{tpu_custom_call.1}
  #allocation0 [shape = 'u32[]', space=smem, size = 0x4, offset = 0x4, fixed_abs, tag = 'smem constant byte address 0x4 - core index']
  #allocation1 [shape = 'u32[144,128]{1,0:T(1,128)}', space=vmem, size = 0x12000, scoped, tag = 'internal scratch']
  #allocation2 [shape = 'f32[8,128]{1,0:T(8,128)}', space=vmem, size = 0x1000, scoped, tag = 'scratch operand']
  #allocation3 [shape = 'f32[8,128]{1,0:T(8,128)}', space=vmem, size = 0x1000, scoped, tag = 'scratch operand']
  %s0 = inlined_call_operand.vmem [shape: f32[8,8,4], index: 0, kind: input, shape index: {}]
  %s1 = inlined_call_operand.vmem [shape: f32[8,8,128], index: 1, kind: input, shape index: {}]
  %s2 = inlined_call_operand.vmem [shape: f32[4,512], index: 2, kind: input, shape index: {}]
  %s3 = inlined_call_operand.hbm [shape: f32[128,512], index: 3, kind: input, shape index: {}]
  %s4 = inlined_call_operand.vmem [shape: f32[1,512], index: 4, kind: input, shape index: {}]
  %s5 = inlined_call_operand.hbm [shape: f32[8,8,128], index: 5, kind: output, shape index: {}]
  %s6 = sld [smem:[#allocation0]]
  $region38: #{tpu_custom_call.1} parent=0
    _
  %s8 = ssub.s32 1, %s6
  %s9 = scalar_select 0, %s8, %s6
  $region1: #{tpu_custom_call.1} parent=0
    #allocation4 [shape = 'u8[262144]{0}', space=vmem, size = 0x40000, scoped, tag = 'input window, operand 3, single buffered']
    #allocation5 [shape = 's32[1]{0}', space=sflag, size = 0x4, scoped, tag = 'scoped memory for tpu_custom_call.1']
    #allocation6 [shape = 's32[1]{0}', space=sflag, size = 0x4, scoped, tag = 'scoped memory for tpu_custom_call.1']
    #allocation7 [shape = 'u8[32768]{0}', space=vmem, size = 0x8000, scoped, tag = 'output window, operand 0, single buffered']
    %10 = vsyncpa [#allocation5], 0
    %11 = vsyncpa [#allocation6], 0
    // Predicated region
    $region2: #{tpu_custom_call.1} parent=1 // pred_check
      _
    $region3: #{tpu_custom_call.1} parent=1 // pred_check_branch
      %13 = sbr.rel (0) target = $region5
    $region4: #{tpu_custom_call.1} parent=1 // pred_region
      _
    $region5: #{tpu_custom_call.1} parent=1 // pred_fallthru
      _
    // Predicated region
    $region6: #{tpu_custom_call.1} parent=1 // pred_check
      _
    $region7: #{tpu_custom_call.1} parent=1 // pred_check_branch
      %15 = sbr.rel (0) target = $region9
    $region8: #{tpu_custom_call.1} parent=1 // pred_region
      _
    $region9: #{tpu_custom_call.1} parent=1 // pred_fallthru
      _
    // Predicated region
    $region10: #{tpu_custom_call.1} parent=1 // pred_check
      _
    $region11: #{tpu_custom_call.1} parent=1 // pred_check_branch
      %17 = sbr.rel (0) target = $region13
    $region12: #{tpu_custom_call.1} parent=1 // pred_region
      _
    $region13: #{tpu_custom_call.1} parent=1 // pred_fallthru
      _
    // Predicated region
    $region14: #{tpu_custom_call.1} parent=1 // pred_check
      _
    $region15: #{tpu_custom_call.1} parent=1 // pred_check_branch
      %19 = sbr.rel (0) target = $region17
    $region16: #{tpu_custom_call.1} parent=1 // pred_region
      %s21 = ssub.s32 8192, 8192
      %22 = vsyncadd [#allocation5], %s21
      %s23 = sshll.u32 [#allocation4], 4
      %s24 = int_to_ptr.vmem [resolvable:$true] %s23
      %29 = dma.hbm_to_vmem [thread:$0]  %s3, 8192, %s24, [#allocation5], 512, 512, 32
    $region17: #{tpu_custom_call.1} parent=1 // pred_fallthru
      _
    // Predicated region
    $region18: #{tpu_custom_call.1} parent=1 // pred_check
      _
    $region19: #{tpu_custom_call.1} parent=1 // pred_check_branch
      %31 = sbr.rel (0) target = $region21
    $region20: #{tpu_custom_call.1} parent=1 // pred_region
      _
    $region21: #{tpu_custom_call.1} parent=1 // pred_fallthru
      _
    // Predicated region
    $region22: #{tpu_custom_call.1} parent=1 // pred_check
      _
    $region23: #{tpu_custom_call.1} parent=1 // pred_check_branch
      %33 = sbr.rel (0) target = $region25
    $region24: #{tpu_custom_call.1} parent=1 // pred_region
      %34 = dma.done [#allocation5], 8192
    $region25: #{tpu_custom_call.1} parent=1 // pred_fallthru
      _
    %p35 = scmp.eq.s32.totalorder 0, 0
    // Predicated region
    $region26: #{tpu_custom_call.1} parent=1 // pred_check
      %p36 = pneg %p35
    $region27: #{tpu_custom_call.1} parent=1 // pred_check_branch
      %38 = sbr.rel (%p36) target = $region29
    $region28: #{tpu_custom_call.1} parent=1 // pred_region
      %39 = vst [vmem:[#allocation2] sm:$0xff] 0.0
      %40 = vst [vmem:[#allocation3] sm:$0xff] 0.0
    $region29: #{tpu_custom_call.1} parent=1 // pred_fallthru
      _
    %v41 = vld [vmem:[%s2] sm:$0xff]
    %v42 = vld [vmem:[%s2 + $0x8] sm:$0xff]
    %v43 = vld [vmem:[#allocation4] sm:$0xff]
    %v44 = vld [vmem:[#allocation4 + $0x8] sm:$0xff]
    %v45 = vld [vmem:[#allocation4 + $0x10] sm:$0xff]
    %v46 = vld [vmem:[#allocation4 + $0x18] sm:$0xff]
    %v47 = vld [vmem:[#allocation4 + $0x20] sm:$0xff]
    %v48 = vld [vmem:[#allocation4 + $0x28] sm:$0xff]
    %v49 = vld [vmem:[#allocation4 + $0x30] sm:$0xff]
    %v50 = vld [vmem:[#allocation4 + $0x38] sm:$0xff]
    %v51 = vld [vmem:[#allocation4 + $0x40] sm:$0xff]
    %v52 = vld [vmem:[#allocation4 + $0x48] sm:$0xff]
    %v53 = vld [vmem:[#allocation4 + $0x50] sm:$0xff]
    %v54 = vld [vmem:[#allocation4 + $0x58] sm:$0xff]
    %v55 = vld [vmem:[#allocation4 + $0x60] sm:$0xff]
    %v56 = vld [vmem:[#allocation4 + $0x68] sm:$0xff]
    %v57 = vld [vmem:[#allocation4 + $0x70] sm:$0xff]
    %v58 = vld [vmem:[#allocation4 + $0x78] sm:$0xff]
    %v59 = vld [vmem:[#allocation4 + $0x80] sm:$0xff]
    %v60 = vld [vmem:[#allocation4 + $0x88] sm:$0xff]
    %v61 = vld [vmem:[#allocation4 + $0x90] sm:$0xff]
    %v62 = vld [vmem:[#allocation4 + $0x98] sm:$0xff]
    %v63 = vld [vmem:[#allocation4 + $0xa0] sm:$0xff]
    %v64 = vld [vmem:[#allocation4 + $0xa8] sm:$0xff]
    %v65 = vld [vmem:[#allocation4 + $0xb0] sm:$0xff]
    %v66 = vld [vmem:[#allocation4 + $0xb8] sm:$0xff]
    %v67 = vld [vmem:[#allocation4 + $0xc0] sm:$0xff]
    %v68 = vld [vmem:[#allocation4 + $0xc8] sm:$0xff]
    %v69 = vld [vmem:[#allocation4 + $0xd0] sm:$0xff]
    %v70 = vld [vmem:[#allocation4 + $0xd8] sm:$0xff]
    %v71 = vld [vmem:[#allocation4 + $0xe0] sm:$0xff]
    %v72 = vld [vmem:[#allocation4 + $0xe8] sm:$0xff]
    %v73 = vld [vmem:[#allocation4 + $0xf0] sm:$0xff]
    %v74 = vld [vmem:[#allocation4 + $0xf8] sm:$0xff]
    %v75 = vld [vmem:[#allocation4 + $0x100] sm:$0xff]
    %v76 = vld [vmem:[#allocation4 + $0x108] sm:$0xff]
    %v77 = vld [vmem:[#allocation4 + $0x110] sm:$0xff]
    %v78 = vld [vmem:[#allocation4 + $0x118] sm:$0xff]
    %v79 = vld [vmem:[#allocation4 + $0x120] sm:$0xff]
    %v80 = vld [vmem:[#allocation4 + $0x128] sm:$0xff]
    %v81 = vld [vmem:[#allocation4 + $0x130] sm:$0xff]
    %v82 = vld [vmem:[#allocation4 + $0x138] sm:$0xff]
    %v83 = vld [vmem:[#allocation4 + $0x140] sm:$0xff]
    %v84 = vld [vmem:[#allocation4 + $0x148] sm:$0xff]
    %v85 = vld [vmem:[#allocation4 + $0x150] sm:$0xff]
    %v86 = vld [vmem:[#allocation4 + $0x158] sm:$0xff]
    %v87 = vld [vmem:[#allocation4 + $0x160] sm:$0xff]
    %v88 = vld [vmem:[#allocation4 + $0x168] sm:$0xff]
    %v89 = vld [vmem:[#allocation4 + $0x170] sm:$0xff]
    %v90 = vld [vmem:[#allocation4 + $0x178] sm:$0xff]
    %v91 = vld [vmem:[#allocation4 + $0x180] sm:$0xff]
    %v92 = vld [vmem:[#allocation4 + $0x188] sm:$0xff]
    %v93 = vld [vmem:[#allocation4 + $0x190] sm:$0xff]
    %v94 = vld [vmem:[#allocation4 + $0x198] sm:$0xff]
    %v95 = vld [vmem:[#allocation4 + $0x1a0] sm:$0xff]
    %v96 = vld [vmem:[#allocation4 + $0x1a8] sm:$0xff]
    %v97 = vld [vmem:[#allocation4 + $0x1b0] sm:$0xff]
    %v98 = vld [vmem:[#allocation4 + $0x1b8] sm:$0xff]
    %v99 = vld [vmem:[#allocation4 + $0x1c0] sm:$0xff]
    %v100 = vld [vmem:[#allocation4 + $0x1c8] sm:$0xff]
    %v101 = vld [vmem:[#allocation4 + $0x1d0] sm:$0xff]
    %v102 = vld [vmem:[#allocation4 + $0x1d8] sm:$0xff]
    %v103 = vld [vmem:[#allocation4 + $0x1e0] sm:$0xff]
    %v104 = vld [vmem:[#allocation4 + $0x1e8] sm:$0xff]
    %v105 = vld [vmem:[#allocation4 + $0x1f0] sm:$0xff]
    %v106 = vld [vmem:[#allocation4 + $0x1f8] sm:$0xff]
    %v107 = vld [vmem:[%s4] sm:$0xf]
    %v109 = vlaneseq
    %v110 = vshrl.u32 %v109, 7
    %v111 = vsub.s32 0, %v110
    %v112 = vrot.slane %v107, %v111
    %v113 = vlaneseq
    %v114 = vshrl.u32 %v113, 7
    %v115 = vsub.s32 1, %v114
    %v116 = vrot.slane %v107, %v115
    %v117 = vlaneseq
    %v118 = vshrl.u32 %v117, 7
    %v119 = vsub.s32 2, %v118
    %v120 = vrot.slane %v107, %v119
    %v121 = vlaneseq
    %v122 = vshrl.u32 %v121, 7
    %v123 = vsub.s32 3, %v122
    %v124 = vrot.slane %v107, %v123
    %v129 = vld [vmem:[#allocation2] sm:$0xff]
    %v130 = vld [vmem:[#allocation3] sm:$0xff]
    %v131 = vld [vmem:[%s0] sm:$0x1]
    %v132 = vld [vmem:[%s0 + $0x8] sm:$0x1]
    %v133 = vld [vmem:[%s0 + $0x10] sm:$0x1]
    %v134 = vld [vmem:[%s0 + $0x18] sm:$0x1]
    %v135 = vld [vmem:[%s0 + $0x20] sm:$0x1]
    %v136 = vld [vmem:[%s0 + $0x28] sm:$0x1]
    %v137 = vld [vmem:[%s0 + $0x30] sm:$0x1]
    %v138 = vld [vmem:[%s0 + $0x38] sm:$0x1]
    %139 = vmatprep.subr.mxu0 %v44
    %140 = vmatpush1.msra.mxu0 %v43
    %141 = vmatprep.subr.mxu0 %v48
    %142 = vmatpush1.msra.mxu0 %v47
    %143 = vmatprep.subr.mxu0 %v52
    %144 = vmatpush1.msra.mxu0 %v51
    %145 = vmatprep.subr.mxu0 %v56
    %146 = vmatpush1.msra.mxu0 %v55
    %147 = vmatprep.subr.mxu0 %v60
    %148 = vmatpush1.msra.mxu0 %v59
    %149 = vmatprep.subr.mxu0 %v64
    %150 = vmatpush1.msra.mxu0 %v63
    %151 = vmatprep.subr.mxu0 %v68
    %152 = vmatpush1.msra.mxu0 %v67
    %153 = vmatprep.subr.mxu0 %v72
    %154 = vmatpush1.msra.mxu0 %v71
    %155 = vmatprep.subr.mxu0 %v76
    %156 = vmatpush1.msra.mxu0 %v75
    %157 = vmatprep.subr.mxu0 %v80
    %158 = vmatpush1.msra.mxu0 %v79
    %159 = vmatprep.subr.mxu0 %v84
    %160 = vmatpush1.msra.mxu0 %v83
    %161 = vmatprep.subr.mxu0 %v88
    %162 = vmatpush1.msra.mxu0 %v87
    %163 = vmatprep.subr.mxu0 %v92
    %164 = vmatpush1.msra.mxu0 %v91
    %165 = vmatprep.subr.mxu0 %v96
    %166 = vmatpush1.msra.mxu0 %v95
    %167 = vmatprep.subr.mxu0 %v100
    %168 = vmatpush1.msra.mxu0 %v99
    %169 = vmatprep.subr.mxu0 %v104
    %170 = vmatpush1.msra.mxu0 %v103
    %171 = vmatprep.subr.mxu0 0.0
    %172 = vmatpush1.msra.mxu0 0.0
    %173 = vmatprep.subr.mxu0 0.0
    %174 = vmatpush1.msra.mxu0 0.0
    %175 = vmatprep.subr.mxu0 0.0
    %176 = vmatpush1.msra.mxu0 0.0
    %177 = vmatprep.subr.mxu0 0.0
    %178 = vmatpush1.msra.mxu0 0.0
    %179 = vmatprep.subr.mxu0 0.0
    %180 = vmatpush1.msra.mxu0 0.0
    %181 = vmatprep.subr.mxu0 0.0
    %182 = vmatpush1.msra.mxu0 0.0
    %183 = vmatprep.subr.mxu0 0.0
    %184 = vmatpush1.msra.mxu0 0.0
    %185 = vmatprep.subr.mxu0 0.0
    %186 = vmatpush1.msra.mxu0 0.0
    %187 = vmatprep.subr.mxu0 0.0
    %188 = vmatpush1.msra.mxu0 0.0
    %189 = vmatprep.subr.mxu0 0.0
    %190 = vmatpush1.msra.mxu0 0.0
    %191 = vmatprep.subr.mxu0 0.0
    %192 = vmatpush1.msra.mxu0 0.0
    %193 = vmatprep.subr.mxu0 0.0
    %194 = vmatpush1.msra.mxu0 0.0
    %195 = vmatprep.subr.mxu0 0.0
    %196 = vmatpush1.msra.mxu0 0.0
    %197 = vmatprep.subr.mxu0 0.0
    %198 = vmatpush1.msra.mxu0 0.0
    %199 = vmatprep.subr.mxu0 0.0
    %200 = vmatpush1.msra.mxu0 0.0
    %201 = vmatprep.subr.mxu0 0.0
    %202 = vmatpush1.msra.mxu0 0.0
    %203 = vmatprep.mubr.f32.mxu0 0.0
    %204 = vmatmul.mubr.f32.gmra.mrb[0].mxu0 %v130
    %v205 = vpop.f32.mrb[0].mxu0
    %v206 = vadd.f32 0.0, %v205
    %v207 = vpop.f32.mrb[0].mxu0
    %v208 = vadd.f32 0.0, %v207
    %209 = vdwg.mxu0
    %210 = vmatprep.subr.mxu0 %v46
    %211 = vmatpush1.msra.mxu0 %v45
    %212 = vmatprep.subr.mxu0 %v50
    %213 = vmatpush1.msra.mxu0 %v49
    %214 = vmatprep.subr.mxu0 %v54
    %215 = vmatpush1.msra.mxu0 %v53
    %216 = vmatprep.subr.mxu0 %v58
    %217 = vmatpush1.msra.mxu0 %v57
    %218 = vmatprep.subr.mxu0 %v62
    %219 = vmatpush1.msra.mxu0 %v61
    %220 = vmatprep.subr.mxu0 %v66
    %221 = vmatpush1.msra.mxu0 %v65
    %222 = vmatprep.subr.mxu0 %v70
    %223 = vmatpush1.msra.mxu0 %v69
    %224 = vmatprep.subr.mxu0 %v74
    %225 = vmatpush1.msra.mxu0 %v73
    %226 = vmatprep.subr.mxu0 %v78
    %227 = vmatpush1.msra.mxu0 %v77
    %228 = vmatprep.subr.mxu0 %v82
    %229 = vmatpush1.msra.mxu0 %v81
    %230 = vmatprep.subr.mxu0 %v86
    %231 = vmatpush1.msra.mxu0 %v85
    %232 = vmatprep.subr.mxu0 %v90
    %233 = vmatpush1.msra.mxu0 %v89
    %234 = vmatprep.subr.mxu0 %v94
    %235 = vmatpush1.msra.mxu0 %v93
    %236 = vmatprep.subr.mxu0 %v98
    %237 = vmatpush1.msra.mxu0 %v97
    %238 = vmatprep.subr.mxu0 %v102
    %239 = vmatpush1.msra.mxu0 %v101
    %240 = vmatprep.subr.mxu0 %v106
    %241 = vmatpush1.msra.mxu0 %v105
    %242 = vmatprep.subr.mxu0 0.0
    %243 = vmatpush1.msra.mxu0 0.0
    %244 = vmatprep.subr.mxu0 0.0
    %245 = vmatpush1.msra.mxu0 0.0
    %246 = vmatprep.subr.mxu0 0.0
    %247 = vmatpush1.msra.mxu0 0.0
    %248 = vmatprep.subr.mxu0 0.0
    %249 = vmatpush1.msra.mxu0 0.0
    %250 = vmatprep.subr.mxu0 0.0
    %251 = vmatpush1.msra.mxu0 0.0
    %252 = vmatprep.subr.mxu0 0.0
    %253 = vmatpush1.msra.mxu0 0.0
    %254 = vmatprep.subr.mxu0 0.0
    %255 = vmatpush1.msra.mxu0 0.0
    %256 = vmatprep.subr.mxu0 0.0
    %257 = vmatpush1.msra.mxu0 0.0
    %258 = vmatprep.subr.mxu0 0.0
    %259 = vmatpush1.msra.mxu0 0.0
    %260 = vmatprep.subr.mxu0 0.0
    %261 = vmatpush1.msra.mxu0 0.0
    %262 = vmatprep.subr.mxu0 0.0
    %263 = vmatpush1.msra.mxu0 0.0
    %264 = vmatprep.subr.mxu0 0.0
    %265 = vmatpush1.msra.mxu0 0.0
    %266 = vmatprep.subr.mxu0 0.0
    %267 = vmatpush1.msra.mxu0 0.0
    %268 = vmatprep.subr.mxu0 0.0
    %269 = vmatpush1.msra.mxu0 0.0
    %270 = vmatprep.subr.mxu0 0.0
    %271 = vmatpush1.msra.mxu0 0.0
    %272 = vmatprep.subr.mxu0 0.0
    %273 = vmatpush1.msra.mxu0 0.0
    %274 = vmatprep.mubr.f32.mxu0 0.0
    %275 = vmatmul.mubr.f32.gmra.mrb[0].mxu0 %v130
    %v276 = vpop.f32.mrb[0].mxu0
    %v277 = vadd.f32 0.0, %v276
    %v278 = vpop.f32.mrb[0].mxu0
    %v279 = vadd.f32 0.0, %v278
    %280 = vdwg.mxu0
    %v289 = vrot.slane %v132, 7
    %vm290 = vcmask 1041409
    %v291 = vsel %vm290, %v289, %v131
    %v292 = vrot.slane %v133, 6
    %vm293 = vcmask 1042434
    %v294 = vsel %vm293, %v292, %v291
    %v295 = vrot.slane %v134, 5
    %vm296 = vcmask 1043459
    %v297 = vsel %vm296, %v295, %v294
    %v298 = vrot.slane %v135, 4
    %vm299 = vcmask 1044484
    %v300 = vsel %vm299, %v298, %v297
    %v301 = vrot.slane %v136, 3
    %vm302 = vcmask 1045509
    %v303 = vsel %vm302, %v301, %v300
    %v304 = vrot.slane %v137, 2
    %vm305 = vcmask 1046534
    %v306 = vsel %vm305, %v304, %v303
    %v307 = vrot.slane %v138, 1
    %vm308 = vcmask 1047559
    %v309 = vsel %vm308, %v307, %v306
    %v312 = vcombine.high %v41, %v41
    %v313 = vcombine.high %v42, %v42
    %vm314 = vcmask 31744
    %v315 = vsel %vm314, %v309, 0
    %vm317 = vcmask 1043456
    %v318 = vsel %vm317, %v41, 0
    %v320 = vsel %vm317, %v312, 0
    %v322 = vsel %vm317, %v42, 0
    %v324 = vsel %vm317, %v313, 0
    %326 = vmatprep.subr.mxu0 %v320
    %327 = vmatpush1.msra.mxu0 %v318
    %328 = vmatprep.subr.mxu0 0.0
    %329 = vmatpush1.msra.mxu0 0.0
    %330 = vmatprep.subr.mxu0 0.0
    %331 = vmatpush1.msra.mxu0 0.0
    %332 = vmatprep.subr.mxu0 0.0
    %333 = vmatpush1.msra.mxu0 0.0
    %334 = vmatprep.subr.mxu0 0.0
    %335 = vmatpush1.msra.mxu0 0.0
    %336 = vmatprep.subr.mxu0 0.0
    %337 = vmatpush1.msra.mxu0 0.0
    %338 = vmatprep.subr.mxu0 0.0
    %339 = vmatpush1.msra.mxu0 0.0
    %340 = vmatprep.subr.mxu0 0.0
    %341 = vmatpush1.msra.mxu0 0.0
    %342 = vmatprep.subr.mxu0 0.0
    %343 = vmatpush1.msra.mxu0 0.0
    %344 = vmatprep.subr.mxu0 0.0
    %345 = vmatpush1.msra.mxu0 0.0
    %346 = vmatprep.subr.mxu0 0.0
    %347 = vmatpush1.msra.mxu0 0.0
    %348 = vmatprep.subr.mxu0 0.0
    %349 = vmatpush1.msra.mxu0 0.0
    %350 = vmatprep.subr.mxu0 0.0
    %351 = vmatpush1.msra.mxu0 0.0
    %352 = vmatprep.subr.mxu0 0.0
    %353 = vmatpush1.msra.mxu0 0.0
    %354 = vmatprep.subr.mxu0 0.0
    %355 = vmatpush1.msra.mxu0 0.0
    %356 = vmatprep.subr.mxu0 0.0
    %357 = vmatpush1.msra.mxu0 0.0
    %358 = vmatprep.subr.mxu0 0.0
    %359 = vmatpush1.msra.mxu0 0.0
    %360 = vmatprep.subr.mxu0 0.0
    %361 = vmatpush1.msra.mxu0 0.0
    %362 = vmatprep.subr.mxu0 0.0
    %363 = vmatpush1.msra.mxu0 0.0
    %364 = vmatprep.subr.mxu0 0.0
    %365 = vmatpush1.msra.mxu0 0.0
    %366 = vmatprep.subr.mxu0 0.0
    %367 = vmatpush1.msra.mxu0 0.0
    %368 = vmatprep.subr.mxu0 0.0
    %369 = vmatpush1.msra.mxu0 0.0
    %370 = vmatprep.subr.mxu0 0.0
    %371 = vmatpush1.msra.mxu0 0.0
    %372 = vmatprep.subr.mxu0 0.0
    %373 = vmatpush1.msra.mxu0 0.0
    %374 = vmatprep.subr.mxu0 0.0
    %375 = vmatpush1.msra.mxu0 0.0
    %376 = vmatprep.subr.mxu0 0.0
    %377 = vmatpush1.msra.mxu0 0.0
    %378 = vmatprep.subr.mxu0 0.0
    %379 = vmatpush1.msra.mxu0 0.0
    %380 = vmatprep.subr.mxu0 0.0
    %381 = vmatpush1.msra.mxu0 0.0
    %382 = vmatprep.subr.mxu0 0.0
    %383 = vmatpush1.msra.mxu0 0.0
    %384 = vmatprep.subr.mxu0 0.0
    %385 = vmatpush1.msra.mxu0 0.0
    %386 = vmatprep.subr.mxu0 0.0
    %387 = vmatpush1.msra.mxu0 0.0
    %388 = vmatprep.subr.mxu0 0.0
    %389 = vmatpush1.msra.mxu0 0.0
    %390 = vmatprep.mubr.f32.mxu0 0.0
    %391 = vmatmul.mubr.f32.gmra.mrb[0].mxu0 %v315
    %v392 = vpop.f32.mrb[0].mxu0
    %v393 = vadd.f32 %v206, %v392
    %v394 = vpop.f32.mrb[0].mxu0
    %v395 = vadd.f32 %v208, %v394
    %396 = vdwg.mxu0
    %397 = vmatprep.subr.mxu0 %v324
    %398 = vmatpush1.msra.mxu0 %v322
    %399 = vmatprep.subr.mxu0 0.0
    %400 = vmatpush1.msra.mxu0 0.0
    %401 = vmatprep.subr.mxu0 0.0
    %402 = vmatpush1.msra.mxu0 0.0
    %403 = vmatprep.subr.mxu0 0.0
    %404 = vmatpush1.msra.mxu0 0.0
    %405 = vmatprep.subr.mxu0 0.0
    %406 = vmatpush1.msra.mxu0 0.0
    %407 = vmatprep.subr.mxu0 0.0
    %408 = vmatpush1.msra.mxu0 0.0
    %409 = vmatprep.subr.mxu0 0.0
    %410 = vmatpush1.msra.mxu0 0.0
    %411 = vmatprep.subr.mxu0 0.0
    %412 = vmatpush1.msra.mxu0 0.0
    %413 = vmatprep.subr.mxu0 0.0
    %414 = vmatpush1.msra.mxu0 0.0
    %415 = vmatprep.subr.mxu0 0.0
    %416 = vmatpush1.msra.mxu0 0.0
    %417 = vmatprep.subr.mxu0 0.0
    %418 = vmatpush1.msra.mxu0 0.0
    %419 = vmatprep.subr.mxu0 0.0
    %420 = vmatpush1.msra.mxu0 0.0
    %421 = vmatprep.subr.mxu0 0.0
    %422 = vmatpush1.msra.mxu0 0.0
    %423 = vmatprep.subr.mxu0 0.0
    %424 = vmatpush1.msra.mxu0 0.0
    %425 = vmatprep.subr.mxu0 0.0
    %426 = vmatpush1.msra.mxu0 0.0
    %427 = vmatprep.subr.mxu0 0.0
    %428 = vmatpush1.msra.mxu0 0.0
    %429 = vmatprep.subr.mxu0 0.0
    %430 = vmatpush1.msra.mxu0 0.0
    %431 = vmatprep.subr.mxu0 0.0
    %432 = vmatpush1.msra.mxu0 0.0
    %433 = vmatprep.subr.mxu0 0.0
    %434 = vmatpush1.msra.mxu0 0.0
    %435 = vmatprep.subr.mxu0 0.0
    %436 = vmatpush1.msra.mxu0 0.0
    %437 = vmatprep.subr.mxu0 0.0
    %438 = vmatpush1.msra.mxu0 0.0
    %439 = vmatprep.subr.mxu0 0.0
    %440 = vmatpush1.msra.mxu0 0.0
    %441 = vmatprep.subr.mxu0 0.0
    %442 = vmatpush1.msra.mxu0 0.0
    %443 = vmatprep.subr.mxu0 0.0
    %444 = vmatpush1.msra.mxu0 0.0
    %445 = vmatprep.subr.mxu0 0.0
    %446 = vmatpush1.msra.mxu0 0.0
    %447 = vmatprep.subr.mxu0 0.0
    %448 = vmatpush1.msra.mxu0 0.0
    %449 = vmatprep.subr.mxu0 0.0
    %450 = vmatpush1.msra.mxu0 0.0
    %451 = vmatprep.subr.mxu0 0.0
    %452 = vmatpush1.msra.mxu0 0.0
    %453 = vmatprep.subr.mxu0 0.0
    %454 = vmatpush1.msra.mxu0 0.0
    %455 = vmatprep.subr.mxu0 0.0
    %456 = vmatpush1.msra.mxu0 0.0
    %457 = vmatprep.subr.mxu0 0.0
    %458 = vmatpush1.msra.mxu0 0.0
    %459 = vmatprep.subr.mxu0 0.0
    %460 = vmatpush1.msra.mxu0 0.0
    %461 = vmatprep.mubr.f32.mxu0 0.0
    %462 = vmatmul.mubr.f32.gmra.mrb[0].mxu0 %v315
    %v463 = vpop.f32.mrb[0].mxu0
    %v464 = vadd.f32 %v277, %v463
    %v465 = vpop.f32.mrb[0].mxu0
    %v466 = vadd.f32 %v279, %v465
    %467 = vdwg.mxu0
    %v468 = vadd.f32 %v393, %v112
    %v469 = vadd.f32 %v395, %v116
    %v470 = vadd.f32 %v464, %v120
    %v471 = vadd.f32 %v466, %v124
    %v472 = vxor.u32 %v468, 2147483648
    %v473 = vmul.f32 %v472, 1.442695
    %v474 = vpow.pop %v473
    %v475 = vadd.f32 %v474, 1.0
    %v476 = vrcp.pop %v475
    %v477 = vmul.f32 1.0, %v476
    %v478 = vxor.u32 %v469, 2147483648
    %v479 = vmul.f32 %v478, 1.442695
    %v480 = vpow.pop %v479
    %v481 = vadd.f32 %v480, 1.0
    %v482 = vrcp.pop %v481
    %v483 = vmul.f32 1.0, %v482
    %v484 = vxor.u32 %v470, 2147483648
    %v485 = vmul.f32 %v484, 1.442695
    %v486 = vpow.pop %v485
    %v487 = vadd.f32 %v486, 1.0
    %v488 = vrcp.pop %v487
    %v489 = vmul.f32 1.0, %v488
    %v490 = vtanh.pop %v471
    %v491 = vmul.f32 %v477, %v490
    %v492 = vmul.f32 %v489, %v129
    %v493 = vadd.f32 %v491, %v492
    %v494 = vtanh.pop %v493
    %v495 = vmul.f32 %v483, %v494
    %v496 = vld [vmem:[%s1] sm:$0x1]
    %v497 = vld [vmem:[%s1 + $0x8] sm:$0x1]
    %v498 = vld [vmem:[%s1 + $0x10] sm:$0x1]
    %v499 = vld [vmem:[%s1 + $0x18] sm:$0x1]
    %v500 = vld [vmem:[%s1 + $0x20] sm:$0x1]
    %v501 = vld [vmem:[%s1 + $0x28] sm:$0x1]
    %v502 = vld [vmem:[%s1 + $0x30] sm:$0x1]
    %v503 = vld [vmem:[%s1 + $0x38] sm:$0x1]
    %v512 = vrot.slane %v497, 7
    %v513 = vsel %vm290, %v512, %v496
    %v514 = vrot.slane %v498, 6
    %v515 = vsel %vm293, %v514, %v513
    %v516 = vrot.slane %v499, 5
    %v517 = vsel %vm296, %v516, %v515
    %v518 = vrot.slane %v500, 4
    %v519 = vsel %vm299, %v518, %v517
    %v520 = vrot.slane %v501, 3
    %v521 = vsel %vm302, %v520, %v519
    %v522 = vrot.slane %v502, 2
    %v523 = vsel %vm305, %v522, %v521
    %v524 = vrot.slane %v503, 1
    %v525 = vsel %vm308, %v524, %v523
    %v527 = vadd.f32 %v495, %v525
    %v529 = vcombine.high %v527, %v527
    %v531 = vunpack.c.l.s4 1966171168
    %v532 = vunpack.c.0.s8 %v531
    %v533 = vlaneseq
    %v534 = vshrl.u32 %v533, 7
    %v535 = vsub.s32 %v532, %v534
    %v536 = vrot.slane %v527, %v535
    %v538 = vunpack.c.l.s4 1966171168
    %v539 = vunpack.c.0.s8 %v538
    %v540 = vlaneseq
    %v541 = vshrl.u32 %v540, 7
    %v542 = vsub.s32 %v539, %v541
    %v543 = vrot.slane %v529, %v542
    %v544 = vcombine.high %v536, %v536
    %v545 = vcombine.high %v543, %v543
    %v547 = vunpack.c.l.s4 1966171168
    %v548 = vunpack.c.0.s8 %v547
    %v549 = vlaneseq
    %v550 = vshrl.u32 %v549, 7
    %v551 = vsub.s32 %v548, %v550
    %v552 = vrot.slane %v536, %v551
    %v554 = vunpack.c.l.s4 1966171168
    %v555 = vunpack.c.0.s8 %v554
    %v556 = vlaneseq
    %v557 = vshrl.u32 %v556, 7
    %v558 = vsub.s32 %v555, %v557
    %v559 = vrot.slane %v543, %v558
    %v561 = vunpack.c.l.s4 1966171168
    %v562 = vunpack.c.0.s8 %v561
    %v563 = vlaneseq
    %v564 = vshrl.u32 %v563, 7
    %v565 = vsub.s32 %v562, %v564
    %v566 = vrot.slane %v544, %v565
    %v568 = vunpack.c.l.s4 1966171168
    %v569 = vunpack.c.0.s8 %v568
    %v570 = vlaneseq
    %v571 = vshrl.u32 %v570, 7
    %v572 = vsub.s32 %v569, %v571
    %v573 = vrot.slane %v545, %v572
    %v574 = vcombine.high %v552, %v552
    %v575 = vcombine.high %v559, %v559
    %v576 = vcombine.high %v566, %v566
    %v577 = vcombine.high %v573, %v573
    %586 = vst [vmem:[#allocation7] sm:$0x1] %v552
    %587 = vst [vmem:[#allocation7 + $0x8] sm:$0x1] %v566
    %588 = vst [vmem:[#allocation7 + $0x10] sm:$0x1] %v574
    %589 = vst [vmem:[#allocation7 + $0x18] sm:$0x1] %v576
    %590 = vst [vmem:[#allocation7 + $0x20] sm:$0x1] %v559
    %591 = vst [vmem:[#allocation7 + $0x28] sm:$0x1] %v573
    %592 = vst [vmem:[#allocation7 + $0x30] sm:$0x1] %v575
    %593 = vst [vmem:[#allocation7 + $0x38] sm:$0x1] %v577
    %v594 = vld [vmem:[%s0 + $0x1] sm:$0x1]
    %v595 = vld [vmem:[%s0 + $0x9] sm:$0x1]
    %v596 = vld [vmem:[%s0 + $0x11] sm:$0x1]
    %v597 = vld [vmem:[%s0 + $0x19] sm:$0x1]
    %v598 = vld [vmem:[%s0 + $0x21] sm:$0x1]
    %v599 = vld [vmem:[%s0 + $0x29] sm:$0x1]
    %v600 = vld [vmem:[%s0 + $0x31] sm:$0x1]
    %v601 = vld [vmem:[%s0 + $0x39] sm:$0x1]
    %602 = vmatprep.subr.mxu0 %v44
    %603 = vmatpush1.msra.mxu0 %v43
    %604 = vmatprep.subr.mxu0 %v48
    %605 = vmatpush1.msra.mxu0 %v47
    %606 = vmatprep.subr.mxu0 %v52
    %607 = vmatpush1.msra.mxu0 %v51
    %608 = vmatprep.subr.mxu0 %v56
    %609 = vmatpush1.msra.mxu0 %v55
    %610 = vmatprep.subr.mxu0 %v60
    %611 = vmatpush1.msra.mxu0 %v59
    %612 = vmatprep.subr.mxu0 %v64
    %613 = vmatpush1.msra.mxu0 %v63
    %614 = vmatprep.subr.mxu0 %v68
    %615 = vmatpush1.msra.mxu0 %v67
    %616 = vmatprep.subr.mxu0 %v72
    %617 = vmatpush1.msra.mxu0 %v71
    %618 = vmatprep.subr.mxu0 %v76
    %619 = vmatpush1.msra.mxu0 %v75
    %620 = vmatprep.subr.mxu0 %v80
    %621 = vmatpush1.msra.mxu0 %v79
    %622 = vmatprep.subr.mxu0 %v84
    %623 = vmatpush1.msra.mxu0 %v83
    %624 = vmatprep.subr.mxu0 %v88
    %625 = vmatpush1.msra.mxu0 %v87
    %626 = vmatprep.subr.mxu0 %v92
    %627 = vmatpush1.msra.mxu0 %v91
    %628 = vmatprep.subr.mxu0 %v96
    %629 = vmatpush1.msra.mxu0 %v95
    %630 = vmatprep.subr.mxu0 %v100
    %631 = vmatpush1.msra.mxu0 %v99
    %632 = vmatprep.subr.mxu0 %v104
    %633 = vmatpush1.msra.mxu0 %v103
    %634 = vmatprep.subr.mxu0 0.0
    %635 = vmatpush1.msra.mxu0 0.0
    %636 = vmatprep.subr.mxu0 0.0
    %637 = vmatpush1.msra.mxu0 0.0
    %638 = vmatprep.subr.mxu0 0.0
    %639 = vmatpush1.msra.mxu0 0.0
    %640 = vmatprep.subr.mxu0 0.0
    %641 = vmatpush1.msra.mxu0 0.0
    %642 = vmatprep.subr.mxu0 0.0
    %643 = vmatpush1.msra.mxu0 0.0
    %644 = vmatprep.subr.mxu0 0.0
    %645 = vmatpush1.msra.mxu0 0.0
    %646 = vmatprep.subr.mxu0 0.0
    %647 = vmatpush1.msra.mxu0 0.0
    %648 = vmatprep.subr.mxu0 0.0
    %649 = vmatpush1.msra.mxu0 0.0
    %650 = vmatprep.subr.mxu0 0.0
    %651 = vmatpush1.msra.mxu0 0.0
    %652 = vmatprep.subr.mxu0 0.0
    %653 = vmatpush1.msra.mxu0 0.0
    %654 = vmatprep.subr.mxu0 0.0
    %655 = vmatpush1.msra.mxu0 0.0
    %656 = vmatprep.subr.mxu0 0.0
    %657 = vmatpush1.msra.mxu0 0.0
    %658 = vmatprep.subr.mxu0 0.0
    %659 = vmatpush1.msra.mxu0 0.0
    %660 = vmatprep.subr.mxu0 0.0
    %661 = vmatpush1.msra.mxu0 0.0
    %662 = vmatprep.subr.mxu0 0.0
    %663 = vmatpush1.msra.mxu0 0.0
    %664 = vmatprep.subr.mxu0 0.0
    %665 = vmatpush1.msra.mxu0 0.0
    %666 = vmatprep.mubr.f32.mxu0 0.0
    %667 = vmatmul.mubr.f32.gmra.mrb[0].mxu0 %v527
    %v668 = vpop.f32.mrb[0].mxu0
    %v669 = vadd.f32 0.0, %v668
    %v670 = vpop.f32.mrb[0].mxu0
    %v671 = vadd.f32 0.0, %v670
    %672 = vdwg.mxu0
    %673 = vmatprep.subr.mxu0 %v46
    %674 = vmatpush1.msra.mxu0 %v45
    %675 = vmatprep.subr.mxu0 %v50
    %676 = vmatpush1.msra.mxu0 %v49
    %677 = vmatprep.subr.mxu0 %v54
    %678 = vmatpush1.msra.mxu0 %v53
    %679 = vmatprep.subr.mxu0 %v58
    %680 = vmatpush1.msra.mxu0 %v57
    %681 = vmatprep.subr.mxu0 %v62
    %682 = vmatpush1.msra.mxu0 %v61
    %683 = vmatprep.subr.mxu0 %v66
    %684 = vmatpush1.msra.mxu0 %v65
    %685 = vmatprep.subr.mxu0 %v70
    %686 = vmatpush1.msra.mxu0 %v69
    %687 = vmatprep.subr.mxu0 %v74
    %688 = vmatpush1.msra.mxu0 %v73
    %689 = vmatprep.subr.mxu0 %v78
    %690 = vmatpush1.msra.mxu0 %v77
    %691 = vmatprep.subr.mxu0 %v82
    %692 = vmatpush1.msra.mxu0 %v81
    %693 = vmatprep.subr.mxu0 %v86
    %694 = vmatpush1.msra.mxu0 %v85
    %695 = vmatprep.subr.mxu0 %v90
    %696 = vmatpush1.msra.mxu0 %v89
    %697 = vmatprep.subr.mxu0 %v94
    %698 = vmatpush1.msra.mxu0 %v93
    %699 = vmatprep.subr.mxu0 %v98
    %700 = vmatpush1.msra.mxu0 %v97
    %701 = vmatprep.subr.mxu0 %v102
    %702 = vmatpush1.msra.mxu0 %v101
    %703 = vmatprep.subr.mxu0 %v106
    %704 = vmatpush1.msra.mxu0 %v105
    %705 = vmatprep.subr.mxu0 0.0
    %706 = vmatpush1.msra.mxu0 0.0
    %707 = vmatprep.subr.mxu0 0.0
    %708 = vmatpush1.msra.mxu0 0.0
    %709 = vmatprep.subr.mxu0 0.0
    %710 = vmatpush1.msra.mxu0 0.0
    %711 = vmatprep.subr.mxu0 0.0
    %712 = vmatpush1.msra.mxu0 0.0
    %713 = vmatprep.subr.mxu0 0.0
    %714 = vmatpush1.msra.mxu0 0.0
    %715 = vmatprep.subr.mxu0 0.0
    %716 = vmatpush1.msra.mxu0 0.0
    %717 = vmatprep.subr.mxu0 0.0
    %718 = vmatpush1.msra.mxu0 0.0
    %719 = vmatprep.subr.mxu0 0.0
    %720 = vmatpush1.msra.mxu0 0.0
    %721 = vmatprep.subr.mxu0 0.0
    %722 = vmatpush1.msra.mxu0 0.0
    %723 = vmatprep.subr.mxu0 0.0
    %724 = vmatpush1.msra.mxu0 0.0
    %725 = vmatprep.subr.mxu0 0.0
    %726 = vmatpush1.msra.mxu0 0.0
    %727 = vmatprep.subr.mxu0 0.0
    %728 = vmatpush1.msra.mxu0 0.0
    %729 = vmatprep.subr.mxu0 0.0
    %730 = vmatpush1.msra.mxu0 0.0
    %731 = vmatprep.subr.mxu0 0.0
    %732 = vmatpush1.msra.mxu0 0.0
    %733 = vmatprep.subr.mxu0 0.0
    %734 = vmatpush1.msra.mxu0 0.0
    %735 = vmatprep.subr.mxu0 0.0
    %736 = vmatpush1.msra.mxu0 0.0
    %737 = vmatprep.mubr.f32.mxu0 0.0
    %738 = vmatmul.mubr.f32.gmra.mrb[0].mxu0 %v527
    %v739 = vpop.f32.mrb[0].mxu0
    %v740 = vadd.f32 0.0, %v739
    %v741 = vpop.f32.mrb[0].mxu0
    %v742 = vadd.f32 0.0, %v741
    %743 = vdwg.mxu0
    %v752 = vrot.slane %v595, 7
    %v753 = vsel %vm290, %v752, %v594
    %v754 = vrot.slane %v596, 6
    %v755 = vsel %vm293, %v754, %v753
    %v756 = vrot.slane %v597, 5
    %v757 = vsel %vm296, %v756, %v755
    %v758 = vrot.slane %v598, 4
    %v759 = vsel %vm299, %v758, %v757
    %v760 = vrot.slane %v599, 3
    %v761 = vsel %vm302, %v760, %v759
    %v762 = vrot.slane %v600, 2
    %v763 = vsel %vm305, %v762, %v761
    %v764 = vrot.slane %v601, 1
    %v765 = vsel %vm308, %v764, %v763
    %v766 = vsel %vm314, %v765, 0
    %768 = vmatprep.subr.mxu0 %v320
    %769 = vmatpush1.msra.mxu0 %v318
    %770 = vmatprep.subr.mxu0 0.0
    %771 = vmatpush1.msra.mxu0 0.0
    %772 = vmatprep.subr.mxu0 0.0
    %773 = vmatpush1.msra.mxu0 0.0
    %774 = vmatprep.subr.mxu0 0.0
    %775 = vmatpush1.msra.mxu0 0.0
    %776 = vmatprep.subr.mxu0 0.0
    %777 = vmatpush1.msra.mxu0 0.0
    %778 = vmatprep.subr.mxu0 0.0
    %779 = vmatpush1.msra.mxu0 0.0
    %780 = vmatprep.subr.mxu0 0.0
    %781 = vmatpush1.msra.mxu0 0.0
    %782 = vmatprep.subr.mxu0 0.0
    %783 = vmatpush1.msra.mxu0 0.0
    %784 = vmatprep.subr.mxu0 0.0
    %785 = vmatpush1.msra.mxu0 0.0
    %786 = vmatprep.subr.mxu0 0.0
    %787 = vmatpush1.msra.mxu0 0.0
    %788 = vmatprep.subr.mxu0 0.0
    %789 = vmatpush1.msra.mxu0 0.0
    %790 = vmatprep.subr.mxu0 0.0
    %791 = vmatpush1.msra.mxu0 0.0
    %792 = vmatprep.subr.mxu0 0.0
    %793 = vmatpush1.msra.mxu0 0.0
    %794 = vmatprep.subr.mxu0 0.0
    %795 = vmatpush1.msra.mxu0 0.0
    %796 = vmatprep.subr.mxu0 0.0
    %797 = vmatpush1.msra.mxu0 0.0
    %798 = vmatprep.subr.mxu0 0.0
    %799 = vmatpush1.msra.mxu0 0.0
    %800 = vmatprep.subr.mxu0 0.0
    %801 = vmatpush1.msra.mxu0 0.0
    %802 = vmatprep.subr.mxu0 0.0
    %803 = vmatpush1.msra.mxu0 0.0
    %804 = vmatprep.subr.mxu0 0.0
    %805 = vmatpush1.msra.mxu0 0.0
    %806 = vmatprep.subr.mxu0 0.0
    %807 = vmatpush1.msra.mxu0 0.0
    %808 = vmatprep.subr.mxu0 0.0
    %809 = vmatpush1.msra.mxu0 0.0
    %810 = vmatprep.subr.mxu0 0.0
    %811 = vmatpush1.msra.mxu0 0.0
    %812 = vmatprep.subr.mxu0 0.0
    %813 = vmatpush1.msra.mxu0 0.0
    %814 = vmatprep.subr.mxu0 0.0
    %815 = vmatpush1.msra.mxu0 0.0
    %816 = vmatprep.subr.mxu0 0.0
    %817 = vmatpush1.msra.mxu0 0.0
    %818 = vmatprep.subr.mxu0 0.0
    %819 = vmatpush1.msra.mxu0 0.0
    %820 = vmatprep.subr.mxu0 0.0
    %821 = vmatpush1.msra.mxu0 0.0
    %822 = vmatprep.subr.mxu0 0.0
    %823 = vmatpush1.msra.mxu0 0.0
    %824 = vmatprep.subr.mxu0 0.0
    %825 = vmatpush1.msra.mxu0 0.0
    %826 = vmatprep.subr.mxu0 0.0
    %827 = vmatpush1.msra.mxu0 0.0
    %828 = vmatprep.subr.mxu0 0.0
    %829 = vmatpush1.msra.mxu0 0.0
    %830 = vmatprep.subr.mxu0 0.0
    %831 = vmatpush1.msra.mxu0 0.0
    %832 = vmatprep.mubr.f32.mxu0 0.0
    %833 = vmatmul.mubr.f32.gmra.mrb[0].mxu0 %v766
    %v834 = vpop.f32.mrb[0].mxu0
    %v835 = vadd.f32 %v669, %v834
    %v836 = vpop.f32.mrb[0].mxu0
    %v837 = vadd.f32 %v671, %v836
    %838 = vdwg.mxu0
    %839 = vmatprep.subr.mxu0 %v324
    %840 = vmatpush1.msra.mxu0 %v322
    %841 = vmatprep.subr.mxu0 0.0
    %842 = vmatpush1.msra.mxu0 0.0
    %843 = vmatprep.subr.mxu0 0.0
    %844 = vmatpush1.msra.mxu0 0.0
    %845 = vmatprep.subr.mxu0 0.0
    %846 = vmatpush1.msra.mxu0 0.0
    %847 = vmatprep.subr.mxu0 0.0
    %848 = vmatpush1.msra.mxu0 0.0
    %849 = vmatprep.subr.mxu0 0.0
    %850 = vmatpush1.msra.mxu0 0.0
    %851 = vmatprep.subr.mxu0 0.0
    %852 = vmatpush1.msra.mxu0 0.0
    %853 = vmatprep.subr.mxu0 0.0
    %854 = vmatpush1.msra.mxu0 0.0
    %855 = vmatprep.subr.mxu0 0.0
    %856 = vmatpush1.msra.mxu0 0.0
    %857 = vmatprep.subr.mxu0 0.0
    %858 = vmatpush1.msra.mxu0 0.0
    %859 = vmatprep.subr.mxu0 0.0
    %860 = vmatpush1.msra.mxu0 0.0
    %861 = vmatprep.subr.mxu0 0.0
    %862 = vmatpush1.msra.mxu0 0.0
    %863 = vmatprep.subr.mxu0 0.0
    %864 = vmatpush1.msra.mxu0 0.0
    %865 = vmatprep.subr.mxu0 0.0
    %866 = vmatpush1.msra.mxu0 0.0
    %867 = vmatprep.subr.mxu0 0.0
    %868 = vmatpush1.msra.mxu0 0.0
    %869 = vmatprep.subr.mxu0 0.0
    %870 = vmatpush1.msra.mxu0 0.0
    %871 = vmatprep.subr.mxu0 0.0
    %872 = vmatpush1.msra.mxu0 0.0
    %873 = vmatprep.subr.mxu0 0.0
    %874 = vmatpush1.msra.mxu0 0.0
    %875 = vmatprep.subr.mxu0 0.0
    %876 = vmatpush1.msra.mxu0 0.0
    %877 = vmatprep.subr.mxu0 0.0
    %878 = vmatpush1.msra.mxu0 0.0
    %879 = vmatprep.subr.mxu0 0.0
    %880 = vmatpush1.msra.mxu0 0.0
    %881 = vmatprep.subr.mxu0 0.0
    %882 = vmatpush1.msra.mxu0 0.0
    %883 = vmatprep.subr.mxu0 0.0
    %884 = vmatpush1.msra.mxu0 0.0
    %885 = vmatprep.subr.mxu0 0.0
    %886 = vmatpush1.msra.mxu0 0.0
    %887 = vmatprep.subr.mxu0 0.0
    %888 = vmatpush1.msra.mxu0 0.0
    %889 = vmatprep.subr.mxu0 0.0
    %890 = vmatpush1.msra.mxu0 0.0
    %891 = vmatprep.subr.mxu0 0.0
    %892 = vmatpush1.msra.mxu0 0.0
    %893 = vmatprep.subr.mxu0 0.0
    %894 = vmatpush1.msra.mxu0 0.0
    %895 = vmatprep.subr.mxu0 0.0
    %896 = vmatpush1.msra.mxu0 0.0
    %897 = vmatprep.subr.mxu0 0.0
    %898 = vmatpush1.msra.mxu0 0.0
    %899 = vmatprep.subr.mxu0 0.0
    %900 = vmatpush1.msra.mxu0 0.0
    %901 = vmatprep.subr.mxu0 0.0
    %902 = vmatpush1.msra.mxu0 0.0
    %903 = vmatprep.mubr.f32.mxu0 0.0
    %904 = vmatmul.mubr.f32.gmra.mrb[0].mxu0 %v766
    %v905 = vpop.f32.mrb[0].mxu0
    %v906 = vadd.f32 %v740, %v905
    %v907 = vpop.f32.mrb[0].mxu0
    %v908 = vadd.f32 %v742, %v907
    %909 = vdwg.mxu0
    %v910 = vadd.f32 %v835, %v112
    %v911 = vadd.f32 %v837, %v116
    %v912 = vadd.f32 %v906, %v120
    %v913 = vadd.f32 %v908, %v124
    %v914 = vxor.u32 %v910, 2147483648
    %v915 = vmul.f32 %v914, 1.442695
    %v916 = vpow.pop %v915
    %v917 = vadd.f32 %v916, 1.0
    %v918 = vrcp.pop %v917
    %v919 = vmul.f32 1.0, %v918
    %v920 = vxor.u32 %v911, 2147483648
    %v921 = vmul.f32 %v920, 1.442695
    %v922 = vpow.pop %v921
    %v923 = vadd.f32 %v922, 1.0
    %v924 = vrcp.pop %v923
    %v925 = vmul.f32 1.0, %v924
    %v926 = vxor.u32 %v912, 2147483648
    %v927 = vmul.f32 %v926, 1.442695
    %v928 = vpow.pop %v927
    %v929 = vadd.f32 %v928, 1.0
    %v930 = vrcp.pop %v929
    %v931 = vmul.f32 1.0, %v930
    %v932 = vtanh.pop %v913
    %v933 = vmul.f32 %v919, %v932
    %v934 = vmul.f32 %v931, %v493
    %v935 = vadd.f32 %v933, %v934
    %v936 = vtanh.pop %v935
    %v937 = vmul.f32 %v925, %v936
    %v938 = vld [vmem:[%s1 + $0x1] sm:$0x1]
    %v939 = vld [vmem:[%s1 + $0x9] sm:$0x1]
    %v940 = vld [vmem:[%s1 + $0x11] sm:$0x1]
    %v941 = vld [vmem:[%s1 + $0x19] sm:$0x1]
    %v942 = vld [vmem:[%s1 + $0x21] sm:$0x1]
    %v943 = vld [vmem:[%s1 + $0x29] sm:$0x1]
    %v944 = vld [vmem:[%s1 + $0x31] sm:$0x1]
    %v945 = vld [vmem:[%s1 + $0x39] sm:$0x1]
    %v954 = vrot.slane %v939, 7
    %v955 = vsel %vm290, %v954, %v938
    %v956 = vrot.slane %v940, 6
    %v957 = vsel %vm293, %v956, %v955
    %v958 = vrot.slane %v941, 5
    %v959 = vsel %vm296, %v958, %v957
    %v960 = vrot.slane %v942, 4
    %v961 = vsel %vm299, %v960, %v959
    %v962 = vrot.slane %v943, 3
    %v963 = vsel %vm302, %v962, %v961
    %v964 = vrot.slane %v944, 2
    %v965 = vsel %vm305, %v964, %v963
    %v966 = vrot.slane %v945, 1
    %v967 = vsel %vm308, %v966, %v965
    %v969 = vadd.f32 %v937, %v967
    %v971 = vcombine.high %v969, %v969
    %v973 = vunpack.c.l.s4 1966171168
    %v974 = vunpack.c.0.s8 %v973
    %v975 = vlaneseq
    %v976 = vshrl.u32 %v975, 7
    %v977 = vsub.s32 %v974, %v976
    %v978 = vrot.slane %v969, %v977
    %v980 = vunpack.c.l.s4 1966171168
    %v981 = vunpack.c.0.s8 %v980
    %v982 = vlaneseq
    %v983 = vshrl.u32 %v982, 7
    %v984 = vsub.s32 %v981, %v983
    %v985 = vrot.slane %v971, %v984
    %v986 = vcombine.high %v978, %v978
    %v987 = vcombine.high %v985, %v985
    %v989 = vunpack.c.l.s4 1966171168
    %v990 = vunpack.c.0.s8 %v989
    %v991 = vlaneseq
    %v992 = vshrl.u32 %v991, 7
    %v993 = vsub.s32 %v990, %v992
    %v994 = vrot.slane %v978, %v993
    %v996 = vunpack.c.l.s4 1966171168
    %v997 = vunpack.c.0.s8 %v996
    %v998 = vlaneseq
    %v999 = vshrl.u32 %v998, 7
    %v1000 = vsub.s32 %v997, %v999
    %v1001 = vrot.slane %v985, %v1000
    %v1003 = vunpack.c.l.s4 1966171168
    %v1004 = vunpack.c.0.s8 %v1003
    %v1005 = vlaneseq
    %v1006 = vshrl.u32 %v1005, 7
    %v1007 = vsub.s32 %v1004, %v1006
    %v1008 = vrot.slane %v986, %v1007
    %v1010 = vunpack.c.l.s4 1966171168
    %v1011 = vunpack.c.0.s8 %v1010
    %v1012 = vlaneseq
    %v1013 = vshrl.u32 %v1012, 7
    %v1014 = vsub.s32 %v1011, %v1013
    %v1015 = vrot.slane %v987, %v1014
    %v1016 = vcombine.high %v994, %v994
    %v1017 = vcombine.high %v1001, %v1001
    %v1018 = vcombine.high %v1008, %v1008
    %v1019 = vcombine.high %v1015, %v1015
    %1028 = vst [vmem:[#allocation7 + $0x1] sm:$0x1] %v994
    %1029 = vst [vmem:[#allocation7 + $0x9] sm:$0x1] %v1008
    %1030 = vst [vmem:[#allocation7 + $0x11] sm:$0x1] %v1016
    %1031 = vst [vmem:[#allocation7 + $0x19] sm:$0x1] %v1018
    %1032 = vst [vmem:[#allocation7 + $0x21] sm:$0x1] %v1001
    %1033 = vst [vmem:[#allocation7 + $0x29] sm:$0x1] %v1015
    %1034 = vst [vmem:[#allocation7 + $0x31] sm:$0x1] %v1017
    %1035 = vst [vmem:[#allocation7 + $0x39] sm:$0x1] %v1019
    %v1036 = vld [vmem:[%s0 + $0x2] sm:$0x1]
    %v1037 = vld [vmem:[%s0 + $0xa] sm:$0x1]
    %v1038 = vld [vmem:[%s0 + $0x12] sm:$0x1]
    %v1039 = vld [vmem:[%s0 + $0x1a] sm:$0x1]
    %v1040 = vld [vmem:[%s0 + $0x22] sm:$0x1]
    %v1041 = vld [vmem:[%s0 + $0x2a] sm:$0x1]
    %v1042 = vld [vmem:[%s0 + $0x32] sm:$0x1]
    %v1043 = vld [vmem:[%s0 + $0x3a] sm:$0x1]
    %1044 = vmatprep.subr.mxu0 %v44
    %1045 = vmatpush1.msra.mxu0 %v43
    %1046 = vmatprep.subr.mxu0 %v48
    %1047 = vmatpush1.msra.mxu0 %v47
    %1048 = vmatprep.subr.mxu0 %v52
    %1049 = vmatpush1.msra.mxu0 %v51
    %1050 = vmatprep.subr.mxu0 %v56
    %1051 = vmatpush1.msra.mxu0 %v55
    %1052 = vmatprep.subr.mxu0 %v60
    %1053 = vmatpush1.msra.mxu0 %v59
    %1054 = vmatprep.subr.mxu0 %v64
    %1055 = vmatpush1.msra.mxu0 %v63
    %1056 = vmatprep.subr.mxu0 %v68
    %1057 = vmatpush1.msra.mxu0 %v67
    %1058 = vmatprep.subr.mxu0 %v72
    %1059 = vmatpush1.msra.mxu0 %v71
    %1060 = vmatprep.subr.mxu0 %v76
    %1061 = vmatpush1.msra.mxu0 %v75
    %1062 = vmatprep.subr.mxu0 %v80
    %1063 = vmatpush1.msra.mxu0 %v79
    %1064 = vmatprep.subr.mxu0 %v84
    %1065 = vmatpush1.msra.mxu0 %v83
    %1066 = vmatprep.subr.mxu0 %v88
    %1067 = vmatpush1.msra.mxu0 %v87
    %1068 = vmatprep.subr.mxu0 %v92
    %1069 = vmatpush1.msra.mxu0 %v91
    %1070 = vmatprep.subr.mxu0 %v96
    %1071 = vmatpush1.msra.mxu0 %v95
    %1072 = vmatprep.subr.mxu0 %v100
    %1073 = vmatpush1.msra.mxu0 %v99
    %1074 = vmatprep.subr.mxu0 %v104
    %1075 = vmatpush1.msra.mxu0 %v103
    %1076 = vmatprep.subr.mxu0 0.0
    %1077 = vmatpush1.msra.mxu0 0.0
    %1078 = vmatprep.subr.mxu0 0.0
    %1079 = vmatpush1.msra.mxu0 0.0
    %1080 = vmatprep.subr.mxu0 0.0
    %1081 = vmatpush1.msra.mxu0 0.0
    %1082 = vmatprep.subr.mxu0 0.0
    %1083 = vmatpush1.msra.mxu0 0.0
    %1084 = vmatprep.subr.mxu0 0.0
    %1085 = vmatpush1.msra.mxu0 0.0
    %1086 = vmatprep.subr.mxu0 0.0
    %1087 = vmatpush1.msra.mxu0 0.0
    %1088 = vmatprep.subr.mxu0 0.0
    %1089 = vmatpush1.msra.mxu0 0.0
    %1090 = vmatprep.subr.mxu0 0.0
    %1091 = vmatpush1.msra.mxu0 0.0
    %1092 = vmatprep.subr.mxu0 0.0
    %1093 = vmatpush1.msra.mxu0 0.0
    %1094 = vmatprep.subr.mxu0 0.0
    %1095 = vmatpush1.msra.mxu0 0.0
    %1096 = vmatprep.subr.mxu0 0.0
    %1097 = vmatpush1.msra.mxu0 0.0
    %1098 = vmatprep.subr.mxu0 0.0
    %1099 = vmatpush1.msra.mxu0 0.0
    %1100 = vmatprep.subr.mxu0 0.0
    %1101 = vmatpush1.msra.mxu0 0.0
    %1102 = vmatprep.subr.mxu0 0.0
    %1103 = vmatpush1.msra.mxu0 0.0
    %1104 = vmatprep.subr.mxu0 0.0
    %1105 = vmatpush1.msra.mxu0 0.0
    %1106 = vmatprep.subr.mxu0 0.0
    %1107 = vmatpush1.msra.mxu0 0.0
    %1108 = vmatprep.mubr.f32.mxu0 0.0
    %1109 = vmatmul.mubr.f32.gmra.mrb[0].mxu0 %v969
    %v1110 = vpop.f32.mrb[0].mxu0
    %v1111 = vadd.f32 0.0, %v1110
    %v1112 = vpop.f32.mrb[0].mxu0
    %v1113 = vadd.f32 0.0, %v1112
    %1114 = vdwg.mxu0
    %1115 = vmatprep.subr.mxu0 %v46
    %1116 = vmatpush1.msra.mxu0 %v45
    %1117 = vmatprep.subr.mxu0 %v50
    %1118 = vmatpush1.msra.mxu0 %v49
    %1119 = vmatprep.subr.mxu0 %v54
    %1120 = vmatpush1.msra.mxu0 %v53
    %1121 = vmatprep.subr.mxu0 %v58
    %1122 = vmatpush1.msra.mxu0 %v57
    %1123 = vmatprep.subr.mxu0 %v62
    %1124 = vmatpush1.msra.mxu0 %v61
    %1125 = vmatprep.subr.mxu0 %v66
    %1126 = vmatpush1.msra.mxu0 %v65
    %1127 = vmatprep.subr.mxu0 %v70
    %1128 = vmatpush1.msra.mxu0 %v69
    %1129 = vmatprep.subr.mxu0 %v74
    %1130 = vmatpush1.msra.mxu0 %v73
    %1131 = vmatprep.subr.mxu0 %v78
    %1132 = vmatpush1.msra.mxu0 %v77
    %1133 = vmatprep.subr.mxu0 %v82
    %1134 = vmatpush1.msra.mxu0 %v81
    %1135 = vmatprep.subr.mxu0 %v86
    %1136 = vmatpush1.msra.mxu0 %v85
    %1137 = vmatprep.subr.mxu0 %v90
    %1138 = vmatpush1.msra.mxu0 %v89
    %1139 = vmatprep.subr.mxu0 %v94
    %1140 = vmatpush1.msra.mxu0 %v93
    %1141 = vmatprep.subr.mxu0 %v98
    %1142 = vmatpush1.msra.mxu0 %v97
    %1143 = vmatprep.subr.mxu0 %v102
    %1144 = vmatpush1.msra.mxu0 %v101
    %1145 = vmatprep.subr.mxu0 %v106
    %1146 = vmatpush1.msra.mxu0 %v105
    %1147 = vmatprep.subr.mxu0 0.0
    %1148 = vmatpush1.msra.mxu0 0.0
    %1149 = vmatprep.subr.mxu0 0.0
    %1150 = vmatpush1.msra.mxu0 0.0
    %1151 = vmatprep.subr.mxu0 0.0
    %1152 = vmatpush1.msra.mxu0 0.0
    %1153 = vmatprep.subr.mxu0 0.0
    %1154 = vmatpush1.msra.mxu0 0.0
    %1155 = vmatprep.subr.mxu0 0.0
    %1156 = vmatpush1.msra.mxu0 0.0
    %1157 = vmatprep.subr.mxu0 0.0
    %1158 = vmatpush1.msra.mxu0 0.0
    %1159 = vmatprep.subr.mxu0 0.0
    %1160 = vmatpush1.msra.mxu0 0.0
    %1161 = vmatprep.subr.mxu0 0.0
    %1162 = vmatpush1.msra.mxu0 0.0
    %1163 = vmatprep.subr.mxu0 0.0
    %1164 = vmatpush1.msra.mxu0 0.0
    %1165 = vmatprep.subr.mxu0 0.0
    %1166 = vmatpush1.msra.mxu0 0.0
    %1167 = vmatprep.subr.mxu0 0.0
    %1168 = vmatpush1.msra.mxu0 0.0
    %1169 = vmatprep.subr.mxu0 0.0
    %1170 = vmatpush1.msra.mxu0 0.0
    %1171 = vmatprep.subr.mxu0 0.0
    %1172 = vmatpush1.msra.mxu0 0.0
    %1173 = vmatprep.subr.mxu0 0.0
    %1174 = vmatpush1.msra.mxu0 0.0
    %1175 = vmatprep.subr.mxu0 0.0
    %1176 = vmatpush1.msra.mxu0 0.0
    %1177 = vmatprep.subr.mxu0 0.0
    %1178 = vmatpush1.msra.mxu0 0.0
    %1179 = vmatprep.mubr.f32.mxu0 0.0
    %1180 = vmatmul.mubr.f32.gmra.mrb[0].mxu0 %v969
    %v1181 = vpop.f32.mrb[0].mxu0
    %v1182 = vadd.f32 0.0, %v1181
    %v1183 = vpop.f32.mrb[0].mxu0
    %v1184 = vadd.f32 0.0, %v1183
    %1185 = vdwg.mxu0
    %v1194 = vrot.slane %v1037, 7
    %v1195 = vsel %vm290, %v1194, %v1036
    %v1196 = vrot.slane %v1038, 6
    %v1197 = vsel %vm293, %v1196, %v1195
    %v1198 = vrot.slane %v1039, 5
    %v1199 = vsel %vm296, %v1198, %v1197
    %v1200 = vrot.slane %v1040, 4
    %v1201 = vsel %vm299, %v1200, %v1199
    %v1202 = vrot.slane %v1041, 3
    %v1203 = vsel %vm302, %v1202, %v1201
    %v1204 = vrot.slane %v1042, 2
    %v1205 = vsel %vm305, %v1204, %v1203
    %v1206 = vrot.slane %v1043, 1
    %v1207 = vsel %vm308, %v1206, %v1205
    %v1208 = vsel %vm314, %v1207, 0
    %1210 = vmatprep.subr.mxu0 %v320
    %1211 = vmatpush1.msra.mxu0 %v318
    %1212 = vmatprep.subr.mxu0 0.0
    %1213 = vmatpush1.msra.mxu0 0.0
    %1214 = vmatprep.subr.mxu0 0.0
    %1215 = vmatpush1.msra.mxu0 0.0
    %1216 = vmatprep.subr.mxu0 0.0
    %1217 = vmatpush1.msra.mxu0 0.0
    %1218 = vmatprep.subr.mxu0 0.0
    %1219 = vmatpush1.msra.mxu0 0.0
    %1220 = vmatprep.subr.mxu0 0.0
    %1221 = vmatpush1.msra.mxu0 0.0
    %1222 = vmatprep.subr.mxu0 0.0
    %1223 = vmatpush1.msra.mxu0 0.0
    %1224 = vmatprep.subr.mxu0 0.0
    %1225 = vmatpush1.msra.mxu0 0.0
    %1226 = vmatprep.subr.mxu0 0.0
    %1227 = vmatpush1.msra.mxu0 0.0
    %1228 = vmatprep.subr.mxu0 0.0
    %1229 = vmatpush1.msra.mxu0 0.0
    %1230 = vmatprep.subr.mxu0 0.0
    %1231 = vmatpush1.msra.mxu0 0.0
    %1232 = vmatprep.subr.mxu0 0.0
    %1233 = vmatpush1.msra.mxu0 0.0
    %1234 = vmatprep.subr.mxu0 0.0
    %1235 = vmatpush1.msra.mxu0 0.0
    %1236 = vmatprep.subr.mxu0 0.0
    %1237 = vmatpush1.msra.mxu0 0.0
    %1238 = vmatprep.subr.mxu0 0.0
    %1239 = vmatpush1.msra.mxu0 0.0
    %1240 = vmatprep.subr.mxu0 0.0
    %1241 = vmatpush1.msra.mxu0 0.0
    %1242 = vmatprep.subr.mxu0 0.0
    %1243 = vmatpush1.msra.mxu0 0.0
    %1244 = vmatprep.subr.mxu0 0.0
    %1245 = vmatpush1.msra.mxu0 0.0
    %1246 = vmatprep.subr.mxu0 0.0
    %1247 = vmatpush1.msra.mxu0 0.0
    %1248 = vmatprep.subr.mxu0 0.0
    %1249 = vmatpush1.msra.mxu0 0.0
    %1250 = vmatprep.subr.mxu0 0.0
    %1251 = vmatpush1.msra.mxu0 0.0
    %1252 = vmatprep.subr.mxu0 0.0
    %1253 = vmatpush1.msra.mxu0 0.0
    %1254 = vmatprep.subr.mxu0 0.0
    %1255 = vmatpush1.msra.mxu0 0.0
    %1256 = vmatprep.subr.mxu0 0.0
    %1257 = vmatpush1.msra.mxu0 0.0
    %1258 = vmatprep.subr.mxu0 0.0
    %1259 = vmatpush1.msra.mxu0 0.0
    %1260 = vmatprep.subr.mxu0 0.0
    %1261 = vmatpush1.msra.mxu0 0.0
    %1262 = vmatprep.subr.mxu0 0.0
    %1263 = vmatpush1.msra.mxu0 0.0
    %1264 = vmatprep.subr.mxu0 0.0
    %1265 = vmatpush1.msra.mxu0 0.0
    %1266 = vmatprep.subr.mxu0 0.0
    %1267 = vmatpush1.msra.mxu0 0.0
    %1268 = vmatprep.subr.mxu0 0.0
    %1269 = vmatpush1.msra.mxu0 0.0
    %1270 = vmatprep.subr.mxu0 0.0
    %1271 = vmatpush1.msra.mxu0 0.0
    %1272 = vmatprep.subr.mxu0 0.0
    %1273 = vmatpush1.msra.mxu0 0.0
    %1274 = vmatprep.mubr.f32.mxu0 0.0
    %1275 = vmatmul.mubr.f32.gmra.mrb[0].mxu0 %v1208
    %v1276 = vpop.f32.mrb[0].mxu0
    %v1277 = vadd.f32 %v1111, %v1276
    %v1278 = vpop.f32.mrb[0].mxu0
    %v1279 = vadd.f32 %v1113, %v1278
    %1280 = vdwg.mxu0
    %1281 = vmatprep.subr.mxu0 %v324
    %1282 = vmatpush1.msra.mxu0 %v322
    %1283 = vmatprep.subr.mxu0 0.0
    %1284 = vmatpush1.msra.mxu0 0.0
    %1285 = vmatprep.subr.mxu0 0.0
    %1286 = vmatpush1.msra.mxu0 0.0
    %1287 = vmatprep.subr.mxu0 0.0
    %1288 = vmatpush1.msra.mxu0 0.0
    %1289 = vmatprep.subr.mxu0 0.0
    %1290 = vmatpush1.msra.mxu0 0.0
    %1291 = vmatprep.subr.mxu0 0.0
    %1292 = vmatpush1.msra.mxu0 0.0
    %1293 = vmatprep.subr.mxu0 0.0
    %1294 = vmatpush1.msra.mxu0 0.0
    %1295 = vmatprep.subr.mxu0 0.0
    %1296 = vmatpush1.msra.mxu0 0.0
    %1297 = vmatprep.subr.mxu0 0.0
    %1298 = vmatpush1.msra.mxu0 0.0
    %1299 = vmatprep.subr.mxu0 0.0
    %1300 = vmatpush1.msra.mxu0 0.0
    %1301 = vmatprep.subr.mxu0 0.0
    %1302 = vmatpush1.msra.mxu0 0.0
    %1303 = vmatprep.subr.mxu0 0.0
    %1304 = vmatpush1.msra.mxu0 0.0
    %1305 = vmatprep.subr.mxu0 0.0
    %1306 = vmatpush1.msra.mxu0 0.0
    %1307 = vmatprep.subr.mxu0 0.0
    %1308 = vmatpush1.msra.mxu0 0.0
    %1309 = vmatprep.subr.mxu0 0.0
    %1310 = vmatpush1.msra.mxu0 0.0
    %1311 = vmatprep.subr.mxu0 0.0
    %1312 = vmatpush1.msra.mxu0 0.0
    %1313 = vmatprep.subr.mxu0 0.0
    %1314 = vmatpush1.msra.mxu0 0.0
    %1315 = vmatprep.subr.mxu0 0.0
    %1316 = vmatpush1.msra.mxu0 0.0
    %1317 = vmatprep.subr.mxu0 0.0
    %1318 = vmatpush1.msra.mxu0 0.0
    %1319 = vmatprep.subr.mxu0 0.0
    %1320 = vmatpush1.msra.mxu0 0.0
    %1321 = vmatprep.subr.mxu0 0.0
    %1322 = vmatpush1.msra.mxu0 0.0
    %1323 = vmatprep.subr.mxu0 0.0
    %1324 = vmatpush1.msra.mxu0 0.0
    %1325 = vmatprep.subr.mxu0 0.0
    %1326 = vmatpush1.msra.mxu0 0.0
    %1327 = vmatprep.subr.mxu0 0.0
    %1328 = vmatpush1.msra.mxu0 0.0
    %1329 = vmatprep.subr.mxu0 0.0
    %1330 = vmatpush1.msra.mxu0 0.0
    %1331 = vmatprep.subr.mxu0 0.0
    %1332 = vmatpush1.msra.mxu0 0.0
    %1333 = vmatprep.subr.mxu0 0.0
    %1334 = vmatpush1.msra.mxu0 0.0
    %1335 = vmatprep.subr.mxu0 0.0
    %1336 = vmatpush1.msra.mxu0 0.0
    %1337 = vmatprep.subr.mxu0 0.0
    %1338 = vmatpush1.msra.mxu0 0.0
    %1339 = vmatprep.subr.mxu0 0.0
    %1340 = vmatpush1.msra.mxu0 0.0
    %1341 = vmatprep.subr.mxu0 0.0
    %1342 = vmatpush1.msra.mxu0 0.0
    %1343 = vmatprep.subr.mxu0 0.0
    %1344 = vmatpush1.msra.mxu0 0.0
    %1345 = vmatprep.mubr.f32.mxu0 0.0
    %1346 = vmatmul.mubr.f32.gmra.mrb[0].mxu0 %v1208
    %v1347 = vpop.f32.mrb[0].mxu0
    %v1348 = vadd.f32 %v1182, %v1347
    %v1349 = vpop.f32.mrb[0].mxu0
    %v1350 = vadd.f32 %v1184, %v1349
    %1351 = vdwg.mxu0
    %v1352 = vadd.f32 %v1277, %v112
    %v1353 = vadd.f32 %v1279, %v116
    %v1354 = vadd.f32 %v1348, %v120
    %v1355 = vadd.f32 %v1350, %v124
    %v1356 = vxor.u32 %v1352, 2147483648
    %v1357 = vmul.f32 %v1356, 1.442695
    %v1358 = vpow.pop %v1357
    %v1359 = vadd.f32 %v1358, 1.0
    %v1360 = vrcp.pop %v1359
    %v1361 = vmul.f32 1.0, %v1360
    %v1362 = vxor.u32 %v1353, 2147483648
    %v1363 = vmul.f32 %v1362, 1.442695
    %v1364 = vpow.pop %v1363
    %v1365 = vadd.f32 %v1364, 1.0
    %v1366 = vrcp.pop %v1365
    %v1367 = vmul.f32 1.0, %v1366
    %v1368 = vxor.u32 %v1354, 2147483648
    %v1369 = vmul.f32 %v1368, 1.442695
    %v1370 = vpow.pop %v1369
    %v1371 = vadd.f32 %v1370, 1.0
    %v1372 = vrcp.pop %v1371
    %v1373 = vmul.f32 1.0, %v1372
    %v1374 = vtanh.pop %v1355
    %v1375 = vmul.f32 %v1361, %v1374
    %v1376 = vmul.f32 %v1373, %v935
    %v1377 = vadd.f32 %v1375, %v1376
    %v1378 = vtanh.pop %v1377
    %v1379 = vmul.f32 %v1367, %v1378
    %v1380 = vld [vmem:[%s1 + $0x2] sm:$0x1]
    %v1381 = vld [vmem:[%s1 + $0xa] sm:$0x1]
    %v1382 = vld [vmem:[%s1 + $0x12] sm:$0x1]
    %v1383 = vld [vmem:[%s1 + $0x1a] sm:$0x1]
    %v1384 = vld [vmem:[%s1 + $0x22] sm:$0x1]
    %v1385 = vld [vmem:[%s1 + $0x2a] sm:$0x1]
    %v1386 = vld [vmem:[%s1 + $0x32] sm:$0x1]
    %v1387 = vld [vmem:[%s1 + $0x3a] sm:$0x1]
    %v1396 = vrot.slane %v1381, 7
    %v1397 = vsel %vm290, %v1396, %v1380
    %v1398 = vrot.slane %v1382, 6
    %v1399 = vsel %vm293, %v1398, %v1397
    %v1400 = vrot.slane %v1383, 5
    %v1401 = vsel %vm296, %v1400, %v1399
    %v1402 = vrot.slane %v1384, 4
    %v1403 = vsel %vm299, %v1402, %v1401
    %v1404 = vrot.slane %v1385, 3
    %v1405 = vsel %vm302, %v1404, %v1403
    %v1406 = vrot.slane %v1386, 2
    %v1407 = vsel %vm305, %v1406, %v1405
    %v1408 = vrot.slane %v1387, 1
    %v1409 = vsel %vm308, %v1408, %v1407
    %v1411 = vadd.f32 %v1379, %v1409
    %v1413 = vcombine.high %v1411, %v1411
    %v1415 = vunpack.c.l.s4 1966171168
    %v1416 = vunpack.c.0.s8 %v1415
    %v1417 = vlaneseq
    %v1418 = vshrl.u32 %v1417, 7
    %v1419 = vsub.s32 %v1416, %v1418
    %v1420 = vrot.slane %v1411, %v1419
    %v1422 = vunpack.c.l.s4 1966171168
    %v1423 = vunpack.c.0.s8 %v1422
    %v1424 = vlaneseq
    %v1425 = vshrl.u32 %v1424, 7
    %v1426 = vsub.s32 %v1423, %v1425
    %v1427 = vrot.slane %v1413, %v1426
    %v1428 = vcombine.high %v1420, %v1420
    %v1429 = vcombine.high %v1427, %v1427
    %v1431 = vunpack.c.l.s4 1966171168
    %v1432 = vunpack.c.0.s8 %v1431
    %v1433 = vlaneseq
    %v1434 = vshrl.u32 %v1433, 7
    %v1435 = vsub.s32 %v1432, %v1434
    %v1436 = vrot.slane %v1420, %v1435
    %v1438 = vunpack.c.l.s4 1966171168
    %v1439 = vunpack.c.0.s8 %v1438
    %v1440 = vlaneseq
    %v1441 = vshrl.u32 %v1440, 7
    %v1442 = vsub.s32 %v1439, %v1441
    %v1443 = vrot.slane %v1427, %v1442
    %v1445 = vunpack.c.l.s4 1966171168
    %v1446 = vunpack.c.0.s8 %v1445
    %v1447 = vlaneseq
    %v1448 = vshrl.u32 %v1447, 7
    %v1449 = vsub.s32 %v1446, %v1448
    %v1450 = vrot.slane %v1428, %v1449
    %v1452 = vunpack.c.l.s4 1966171168
    %v1453 = vunpack.c.0.s8 %v1452
    %v1454 = vlaneseq
    %v1455 = vshrl.u32 %v1454, 7
    %v1456 = vsub.s32 %v1453, %v1455
    %v1457 = vrot.slane %v1429, %v1456
    %v1458 = vcombine.high %v1436, %v1436
    %v1459 = vcombine.high %v1443, %v1443
    %v1460 = vcombine.high %v1450, %v1450
    %v1461 = vcombine.high %v1457, %v1457
    %1470 = vst [vmem:[#allocation7 + $0x2] sm:$0x1] %v1436
    %1471 = vst [vmem:[#allocation7 + $0xa] sm:$0x1] %v1450
    %1472 = vst [vmem:[#allocation7 + $0x12] sm:$0x1] %v1458
    %1473 = vst [vmem:[#allocation7 + $0x1a] sm:$0x1] %v1460
    %1474 = vst [vmem:[#allocation7 + $0x22] sm:$0x1] %v1443
    %1475 = vst [vmem:[#allocation7 + $0x2a] sm:$0x1] %v1457
    %1476 = vst [vmem:[#allocation7 + $0x32] sm:$0x1] %v1459
    %1477 = vst [vmem:[#allocation7 + $0x3a] sm:$0x1] %v1461
    %v1478 = vld [vmem:[%s0 + $0x3] sm:$0x1]
    %v1479 = vld [vmem:[%s0 + $0xb] sm:$0x1]
    %v1480 = vld [vmem:[%s0 + $0x13] sm:$0x1]
    %v1481 = vld [vmem:[%s0 + $0x1b] sm:$0x1]
    %v1482 = vld [vmem:[%s0 + $0x23] sm:$0x1]
    %v1483 = vld [vmem:[%s0 + $0x2b] sm:$0x1]
    %v1484 = vld [vmem:[%s0 + $0x33] sm:$0x1]
    %v1485 = vld [vmem:[%s0 + $0x3b] sm:$0x1]
    %1486 = vmatprep.subr.mxu0 %v44
    %1487 = vmatpush1.msra.mxu0 %v43
    %1488 = vmatprep.subr.mxu0 %v48
    %1489 = vmatpush1.msra.mxu0 %v47
    %1490 = vmatprep.subr.mxu0 %v52
    %1491 = vmatpush1.msra.mxu0 %v51
    %1492 = vmatprep.subr.mxu0 %v56
    %1493 = vmatpush1.msra.mxu0 %v55
    %1494 = vmatprep.subr.mxu0 %v60
    %1495 = vmatpush1.msra.mxu0 %v59
    %1496 = vmatprep.subr.mxu0 %v64
    %1497 = vmatpush1.msra.mxu0 %v63
    %1498 = vmatprep.subr.mxu0 %v68
    %1499 = vmatpush1.msra.mxu0 %v67
    %1500 = vmatprep.subr.mxu0 %v72
    %1501 = vmatpush1.msra.mxu0 %v71
    %1502 = vmatprep.subr.mxu0 %v76
    %1503 = vmatpush1.msra.mxu0 %v75
    %1504 = vmatprep.subr.mxu0 %v80
    %1505 = vmatpush1.msra.mxu0 %v79
    %1506 = vmatprep.subr.mxu0 %v84
    %1507 = vmatpush1.msra.mxu0 %v83
    %1508 = vmatprep.subr.mxu0 %v88
    %1509 = vmatpush1.msra.mxu0 %v87
    %1510 = vmatprep.subr.mxu0 %v92
    %1511 = vmatpush1.msra.mxu0 %v91
    %1512 = vmatprep.subr.mxu0 %v96
    %1513 = vmatpush1.msra.mxu0 %v95
    %1514 = vmatprep.subr.mxu0 %v100
    %1515 = vmatpush1.msra.mxu0 %v99
    %1516 = vmatprep.subr.mxu0 %v104
    %1517 = vmatpush1.msra.mxu0 %v103
    %1518 = vmatprep.subr.mxu0 0.0
    %1519 = vmatpush1.msra.mxu0 0.0
    %1520 = vmatprep.subr.mxu0 0.0
    %1521 = vmatpush1.msra.mxu0 0.0
    %1522 = vmatprep.subr.mxu0 0.0
    %1523 = vmatpush1.msra.mxu0 0.0
    %1524 = vmatprep.subr.mxu0 0.0
    %1525 = vmatpush1.msra.mxu0 0.0
    %1526 = vmatprep.subr.mxu0 0.0
    %1527 = vmatpush1.msra.mxu0 0.0
    %1528 = vmatprep.subr.mxu0 0.0
    %1529 = vmatpush1.msra.mxu0 0.0
    %1530 = vmatprep.subr.mxu0 0.0
    %1531 = vmatpush1.msra.mxu0 0.0
    %1532 = vmatprep.subr.mxu0 0.0
    %1533 = vmatpush1.msra.mxu0 0.0
    %1534 = vmatprep.subr.mxu0 0.0
    %1535 = vmatpush1.msra.mxu0 0.0
    %1536 = vmatprep.subr.mxu0 0.0
    %1537 = vmatpush1.msra.mxu0 0.0
    %1538 = vmatprep.subr.mxu0 0.0
    %1539 = vmatpush1.msra.mxu0 0.0
    %1540 = vmatprep.subr.mxu0 0.0
    %1541 = vmatpush1.msra.mxu0 0.0
    %1542 = vmatprep.subr.mxu0 0.0
    %1543 = vmatpush1.msra.mxu0 0.0
    %1544 = vmatprep.subr.mxu0 0.0
    %1545 = vmatpush1.msra.mxu0 0.0
    %1546 = vmatprep.subr.mxu0 0.0
    %1547 = vmatpush1.msra.mxu0 0.0
    %1548 = vmatprep.subr.mxu0 0.0
    %1549 = vmatpush1.msra.mxu0 0.0
    %1550 = vmatprep.mubr.f32.mxu0 0.0
    %1551 = vmatmul.mubr.f32.gmra.mrb[0].mxu0 %v1411
    %v1552 = vpop.f32.mrb[0].mxu0
    %v1553 = vadd.f32 0.0, %v1552
    %v1554 = vpop.f32.mrb[0].mxu0
    %v1555 = vadd.f32 0.0, %v1554
    %1556 = vdwg.mxu0
    %1557 = vmatprep.subr.mxu0 %v46
    %1558 = vmatpush1.msra.mxu0 %v45
    %1559 = vmatprep.subr.mxu0 %v50
    %1560 = vmatpush1.msra.mxu0 %v49
    %1561 = vmatprep.subr.mxu0 %v54
    %1562 = vmatpush1.msra.mxu0 %v53
    %1563 = vmatprep.subr.mxu0 %v58
    %1564 = vmatpush1.msra.mxu0 %v57
    %1565 = vmatprep.subr.mxu0 %v62
    %1566 = vmatpush1.msra.mxu0 %v61
    %1567 = vmatprep.subr.mxu0 %v66
    %1568 = vmatpush1.msra.mxu0 %v65
    %1569 = vmatprep.subr.mxu0 %v70
    %1570 = vmatpush1.msra.mxu0 %v69
    %1571 = vmatprep.subr.mxu0 %v74
    %1572 = vmatpush1.msra.mxu0 %v73
    %1573 = vmatprep.subr.mxu0 %v78
    %1574 = vmatpush1.msra.mxu0 %v77
    %1575 = vmatprep.subr.mxu0 %v82
    %1576 = vmatpush1.msra.mxu0 %v81
    %1577 = vmatprep.subr.mxu0 %v86
    %1578 = vmatpush1.msra.mxu0 %v85
    %1579 = vmatprep.subr.mxu0 %v90
    %1580 = vmatpush1.msra.mxu0 %v89
    %1581 = vmatprep.subr.mxu0 %v94
    %1582 = vmatpush1.msra.mxu0 %v93
    %1583 = vmatprep.subr.mxu0 %v98
    %1584 = vmatpush1.msra.mxu0 %v97
    %1585 = vmatprep.subr.mxu0 %v102
    %1586 = vmatpush1.msra.mxu0 %v101
    %1587 = vmatprep.subr.mxu0 %v106
    %1588 = vmatpush1.msra.mxu0 %v105
    %1589 = vmatprep.subr.mxu0 0.0
    %1590 = vmatpush1.msra.mxu0 0.0
    %1591 = vmatprep.subr.mxu0 0.0
    %1592 = vmatpush1.msra.mxu0 0.0
    %1593 = vmatprep.subr.mxu0 0.0
    %1594 = vmatpush1.msra.mxu0 0.0
    %1595 = vmatprep.subr.mxu0 0.0
    %1596 = vmatpush1.msra.mxu0 0.0
    %1597 = vmatprep.subr.mxu0 0.0
    %1598 = vmatpush1.msra.mxu0 0.0
    %1599 = vmatprep.subr.mxu0 0.0
    %1600 = vmatpush1.msra.mxu0 0.0
    %1601 = vmatprep.subr.mxu0 0.0
    %1602 = vmatpush1.msra.mxu0 0.0
    %1603 = vmatprep.subr.mxu0 0.0
    %1604 = vmatpush1.msra.mxu0 0.0
    %1605 = vmatprep.subr.mxu0 0.0
    %1606 = vmatpush1.msra.mxu0 0.0
    %1607 = vmatprep.subr.mxu0 0.0
    %1608 = vmatpush1.msra.mxu0 0.0
    %1609 = vmatprep.subr.mxu0 0.0
    %1610 = vmatpush1.msra.mxu0 0.0
    %1611 = vmatprep.subr.mxu0 0.0
    %1612 = vmatpush1.msra.mxu0 0.0
    %1613 = vmatprep.subr.mxu0 0.0
    %1614 = vmatpush1.msra.mxu0 0.0
    %1615 = vmatprep.subr.mxu0 0.0
    %1616 = vmatpush1.msra.mxu0 0.0
    %1617 = vmatprep.subr.mxu0 0.0
    %1618 = vmatpush1.msra.mxu0 0.0
    %1619 = vmatprep.subr.mxu0 0.0
    %1620 = vmatpush1.msra.mxu0 0.0
    %1621 = vmatprep.mubr.f32.mxu0 0.0
    %1622 = vmatmul.mubr.f32.gmra.mrb[0].mxu0 %v1411
    %v1623 = vpop.f32.mrb[0].mxu0
    %v1624 = vadd.f32 0.0, %v1623
    %v1625 = vpop.f32.mrb[0].mxu0
    %v1626 = vadd.f32 0.0, %v1625
    %1627 = vdwg.mxu0
    %v1636 = vrot.slane %v1479, 7
    %v1637 = vsel %vm290, %v1636, %v1478
    %v1638 = vrot.slane %v1480, 6
    %v1639 = vsel %vm293, %v1638, %v1637
    %v1640 = vrot.slane %v1481, 5
    %v1641 = vsel %vm296, %v1640, %v1639
    %v1642 = vrot.slane %v1482, 4
    %v1643 = vsel %vm299, %v1642, %v1641
    %v1644 = vrot.slane %v1483, 3
    %v1645 = vsel %vm302, %v1644, %v1643
    %v1646 = vrot.slane %v1484, 2
    %v1647 = vsel %vm305, %v1646, %v1645
    %v1648 = vrot.slane %v1485, 1
    %v1649 = vsel %vm308, %v1648, %v1647
    %v1650 = vsel %vm314, %v1649, 0
    %1652 = vmatprep.subr.mxu0 %v320
    %1653 = vmatpush1.msra.mxu0 %v318
    %1654 = vmatprep.subr.mxu0 0.0
    %1655 = vmatpush1.msra.mxu0 0.0
    %1656 = vmatprep.subr.mxu0 0.0
    %1657 = vmatpush1.msra.mxu0 0.0
    %1658 = vmatprep.subr.mxu0 0.0
    %1659 = vmatpush1.msra.mxu0 0.0
    %1660 = vmatprep.subr.mxu0 0.0
    %1661 = vmatpush1.msra.mxu0 0.0
    %1662 = vmatprep.subr.mxu0 0.0
    %1663 = vmatpush1.msra.mxu0 0.0
    %1664 = vmatprep.subr.mxu0 0.0
    %1665 = vmatpush1.msra.mxu0 0.0
    %1666 = vmatprep.subr.mxu0 0.0
    %1667 = vmatpush1.msra.mxu0 0.0
    %1668 = vmatprep.subr.mxu0 0.0
    %1669 = vmatpush1.msra.mxu0 0.0
    %1670 = vmatprep.subr.mxu0 0.0
    %1671 = vmatpush1.msra.mxu0 0.0
    %1672 = vmatprep.subr.mxu0 0.0
    %1673 = vmatpush1.msra.mxu0 0.0
    %1674 = vmatprep.subr.mxu0 0.0
    %1675 = vmatpush1.msra.mxu0 0.0
    %1676 = vmatprep.subr.mxu0 0.0
    %1677 = vmatpush1.msra.mxu0 0.0
    %1678 = vmatprep.subr.mxu0 0.0
    %1679 = vmatpush1.msra.mxu0 0.0
    %1680 = vmatprep.subr.mxu0 0.0
    %1681 = vmatpush1.msra.mxu0 0.0
    %1682 = vmatprep.subr.mxu0 0.0
    %1683 = vmatpush1.msra.mxu0 0.0
    %1684 = vmatprep.subr.mxu0 0.0
    %1685 = vmatpush1.msra.mxu0 0.0
    %1686 = vmatprep.subr.mxu0 0.0
    %1687 = vmatpush1.msra.mxu0 0.0
    %1688 = vmatprep.subr.mxu0 0.0
    %1689 = vmatpush1.msra.mxu0 0.0
    %1690 = vmatprep.subr.mxu0 0.0
    %1691 = vmatpush1.msra.mxu0 0.0
    %1692 = vmatprep.subr.mxu0 0.0
    %1693 = vmatpush1.msra.mxu0 0.0
    %1694 = vmatprep.subr.mxu0 0.0
    %1695 = vmatpush1.msra.mxu0 0.0
    %1696 = vmatprep.subr.mxu0 0.0
    %1697 = vmatpush1.msra.mxu0 0.0
    %1698 = vmatprep.subr.mxu0 0.0
    %1699 = vmatpush1.msra.mxu0 0.0
    %1700 = vmatprep.subr.mxu0 0.0
    %1701 = vmatpush1.msra.mxu0 0.0
    %1702 = vmatprep.subr.mxu0 0.0
    %1703 = vmatpush1.msra.mxu0 0.0
    %1704 = vmatprep.subr.mxu0 0.0
    %1705 = vmatpush1.msra.mxu0 0.0
    %1706 = vmatprep.subr.mxu0 0.0
    %1707 = vmatpush1.msra.mxu0 0.0
    %1708 = vmatprep.subr.mxu0 0.0
    %1709 = vmatpush1.msra.mxu0 0.0
    %1710 = vmatprep.subr.mxu0 0.0
    %1711 = vmatpush1.msra.mxu0 0.0
    %1712 = vmatprep.subr.mxu0 0.0
    %1713 = vmatpush1.msra.mxu0 0.0
    %1714 = vmatprep.subr.mxu0 0.0
    %1715 = vmatpush1.msra.mxu0 0.0
    %1716 = vmatprep.mubr.f32.mxu0 0.0
    %1717 = vmatmul.mubr.f32.gmra.mrb[0].mxu0 %v1650
    %v1718 = vpop.f32.mrb[0].mxu0
    %v1719 = vadd.f32 %v1553, %v1718
    %v1720 = vpop.f32.mrb[0].mxu0
    %v1721 = vadd.f32 %v1555, %v1720
    %1722 = vdwg.mxu0
    %1723 = vmatprep.subr.mxu0 %v324
    %1724 = vmatpush1.msra.mxu0 %v322
    %1725 = vmatprep.subr.mxu0 0.0
    %1726 = vmatpush1.msra.mxu0 0.0
    %1727 = vmatprep.subr.mxu0 0.0
    %1728 = vmatpush1.msra.mxu0 0.0
    %1729 = vmatprep.subr.mxu0 0.0
    %1730 = vmatpush1.msra.mxu0 0.0
    %1731 = vmatprep.subr.mxu0 0.0
    %1732 = vmatpush1.msra.mxu0 0.0
    %1733 = vmatprep.subr.mxu0 0.0
    %1734 = vmatpush1.msra.mxu0 0.0
    %1735 = vmatprep.subr.mxu0 0.0
    %1736 = vmatpush1.msra.mxu0 0.0
    %1737 = vmatprep.subr.mxu0 0.0
    %1738 = vmatpush1.msra.mxu0 0.0
    %1739 = vmatprep.subr.mxu0 0.0
    %1740 = vmatpush1.msra.mxu0 0.0
    %1741 = vmatprep.subr.mxu0 0.0
    %1742 = vmatpush1.msra.mxu0 0.0
    %1743 = vmatprep.subr.mxu0 0.0
    %1744 = vmatpush1.msra.mxu0 0.0
    %1745 = vmatprep.subr.mxu0 0.0
    %1746 = vmatpush1.msra.mxu0 0.0
    %1747 = vmatprep.subr.mxu0 0.0
    %1748 = vmatpush1.msra.mxu0 0.0
    %1749 = vmatprep.subr.mxu0 0.0
    %1750 = vmatpush1.msra.mxu0 0.0
    %1751 = vmatprep.subr.mxu0 0.0
    %1752 = vmatpush1.msra.mxu0 0.0
    %1753 = vmatprep.subr.mxu0 0.0
    %1754 = vmatpush1.msra.mxu0 0.0
    %1755 = vmatprep.subr.mxu0 0.0
    %1756 = vmatpush1.msra.mxu0 0.0
    %1757 = vmatprep.subr.mxu0 0.0
    %1758 = vmatpush1.msra.mxu0 0.0
    %1759 = vmatprep.subr.mxu0 0.0
    %1760 = vmatpush1.msra.mxu0 0.0
    %1761 = vmatprep.subr.mxu0 0.0
    %1762 = vmatpush1.msra.mxu0 0.0
    %1763 = vmatprep.subr.mxu0 0.0
    %1764 = vmatpush1.msra.mxu0 0.0
    %1765 = vmatprep.subr.mxu0 0.0
    %1766 = vmatpush1.msra.mxu0 0.0
    %1767 = vmatprep.subr.mxu0 0.0
    %1768 = vmatpush1.msra.mxu0 0.0
    %1769 = vmatprep.subr.mxu0 0.0
    %1770 = vmatpush1.msra.mxu0 0.0
    %1771 = vmatprep.subr.mxu0 0.0
    %1772 = vmatpush1.msra.mxu0 0.0
    %1773 = vmatprep.subr.mxu0 0.0
    %1774 = vmatpush1.msra.mxu0 0.0
    %1775 = vmatprep.subr.mxu0 0.0
    %1776 = vmatpush1.msra.mxu0 0.0
    %1777 = vmatprep.subr.mxu0 0.0
    %1778 = vmatpush1.msra.mxu0 0.0
    %1779 = vmatprep.subr.mxu0 0.0
    %1780 = vmatpush1.msra.mxu0 0.0
    %1781 = vmatprep.subr.mxu0 0.0
    %1782 = vmatpush1.msra.mxu0 0.0
    %1783 = vmatprep.subr.mxu0 0.0
    %1784 = vmatpush1.msra.mxu0 0.0
    %1785 = vmatprep.subr.mxu0 0.0
    %1786 = vmatpush1.msra.mxu0 0.0
    %1787 = vmatprep.mubr.f32.mxu0 0.0
    %1788 = vmatmul.mubr.f32.gmra.mrb[0].mxu0 %v1650
    %v1789 = vpop.f32.mrb[0].mxu0
    %v1790 = vadd.f32 %v1624, %v1789
    %v1791 = vpop.f32.mrb[0].mxu0
    %v1792 = vadd.f32 %v1626, %v1791
    %1793 = vdwg.mxu0
    %v1794 = vadd.f32 %v1719, %v112
    %v1795 = vadd.f32 %v1721, %v116
    %v1796 = vadd.f32 %v1790, %v120
    %v1797 = vadd.f32 %v1792, %v124
    %v1798 = vxor.u32 %v1794, 2147483648
    %v1799 = vmul.f32 %v1798, 1.442695
    %v1800 = vpow.pop %v1799
    %v1801 = vadd.f32 %v1800, 1.0
    %v1802 = vrcp.pop %v1801
    %v1803 = vmul.f32 1.0, %v1802
    %v1804 = vxor.u32 %v1795, 2147483648
    %v1805 = vmul.f32 %v1804, 1.442695
    %v1806 = vpow.pop %v1805
    %v1807 = vadd.f32 %v1806, 1.0
    %v1808 = vrcp.pop %v1807
    %v1809 = vmul.f32 1.0, %v1808
    %v1810 = vxor.u32 %v1796, 2147483648
    %v1811 = vmul.f32 %v1810, 1.442695
    %v1812 = vpow.pop %v1811
    %v1813 = vadd.f32 %v1812, 1.0
    %v1814 = vrcp.pop %v1813
    %v1815 = vmul.f32 1.0, %v1814
    %v1816 = vtanh.pop %v1797
    %v1817 = vmul.f32 %v1803, %v1816
    %v1818 = vmul.f32 %v1815, %v1377
    %v1819 = vadd.f32 %v1817, %v1818
    %v1820 = vtanh.pop %v1819
    %v1821 = vmul.f32 %v1809, %v1820
    %v1822 = vld [vmem:[%s1 + $0x3] sm:$0x1]
    %v1823 = vld [vmem:[%s1 + $0xb] sm:$0x1]
    %v1824 = vld [vmem:[%s1 + $0x13] sm:$0x1]
    %v1825 = vld [vmem:[%s1 + $0x1b] sm:$0x1]
    %v1826 = vld [vmem:[%s1 + $0x23] sm:$0x1]
    %v1827 = vld [vmem:[%s1 + $0x2b] sm:$0x1]
    %v1828 = vld [vmem:[%s1 + $0x33] sm:$0x1]
    %v1829 = vld [vmem:[%s1 + $0x3b] sm:$0x1]
    %v1838 = vrot.slane %v1823, 7
    %v1839 = vsel %vm290, %v1838, %v1822
    %v1840 = vrot.slane %v1824, 6
    %v1841 = vsel %vm293, %v1840, %v1839
    %v1842 = vrot.slane %v1825, 5
    %v1843 = vsel %vm296, %v1842, %v1841
    %v1844 = vrot.slane %v1826, 4
    %v1845 = vsel %vm299, %v1844, %v1843
    %v1846 = vrot.slane %v1827, 3
    %v1847 = vsel %vm302, %v1846, %v1845
    %v1848 = vrot.slane %v1828, 2
    %v1849 = vsel %vm305, %v1848, %v1847
    %v1850 = vrot.slane %v1829, 1
    %v1851 = vsel %vm308, %v1850, %v1849
    %v1853 = vadd.f32 %v1821, %v1851
    %v1855 = vcombine.high %v1853, %v1853
    %v1857 = vunpack.c.l.s4 1966171168
    %v1858 = vunpack.c.0.s8 %v1857
    %v1859 = vlaneseq
    %v1860 = vshrl.u32 %v1859, 7
    %v1861 = vsub.s32 %v1858, %v1860
    %v1862 = vrot.slane %v1853, %v1861
    %v1864 = vunpack.c.l.s4 1966171168
    %v1865 = vunpack.c.0.s8 %v1864
    %v1866 = vlaneseq
    %v1867 = vshrl.u32 %v1866, 7
    %v1868 = vsub.s32 %v1865, %v1867
    %v1869 = vrot.slane %v1855, %v1868
    %v1870 = vcombine.high %v1862, %v1862
    %v1871 = vcombine.high %v1869, %v1869
    %v1873 = vunpack.c.l.s4 1966171168
    %v1874 = vunpack.c.0.s8 %v1873
    %v1875 = vlaneseq
    %v1876 = vshrl.u32 %v1875, 7
    %v1877 = vsub.s32 %v1874, %v1876
    %v1878 = vrot.slane %v1862, %v1877
    %v1880 = vunpack.c.l.s4 1966171168
    %v1881 = vunpack.c.0.s8 %v1880
    %v1882 = vlaneseq
    %v1883 = vshrl.u32 %v1882, 7
    %v1884 = vsub.s32 %v1881, %v1883
    %v1885 = vrot.slane %v1869, %v1884
    %v1887 = vunpack.c.l.s4 1966171168
    %v1888 = vunpack.c.0.s8 %v1887
    %v1889 = vlaneseq
    %v1890 = vshrl.u32 %v1889, 7
    %v1891 = vsub.s32 %v1888, %v1890
    %v1892 = vrot.slane %v1870, %v1891
    %v1894 = vunpack.c.l.s4 1966171168
    %v1895 = vunpack.c.0.s8 %v1894
    %v1896 = vlaneseq
    %v1897 = vshrl.u32 %v1896, 7
    %v1898 = vsub.s32 %v1895, %v1897
    %v1899 = vrot.slane %v1871, %v1898
    %v1900 = vcombine.high %v1878, %v1878
    %v1901 = vcombine.high %v1885, %v1885
    %v1902 = vcombine.high %v1892, %v1892
    %v1903 = vcombine.high %v1899, %v1899
    %1912 = vst [vmem:[#allocation7 + $0x3] sm:$0x1] %v1878
    %1913 = vst [vmem:[#allocation7 + $0xb] sm:$0x1] %v1892
    %1914 = vst [vmem:[#allocation7 + $0x13] sm:$0x1] %v1900
    %1915 = vst [vmem:[#allocation7 + $0x1b] sm:$0x1] %v1902
    %1916 = vst [vmem:[#allocation7 + $0x23] sm:$0x1] %v1885
    %1917 = vst [vmem:[#allocation7 + $0x2b] sm:$0x1] %v1899
    %1918 = vst [vmem:[#allocation7 + $0x33] sm:$0x1] %v1901
    %1919 = vst [vmem:[#allocation7 + $0x3b] sm:$0x1] %v1903
    %v1920 = vld [vmem:[%s0 + $0x4] sm:$0x1]
    %v1921 = vld [vmem:[%s0 + $0xc] sm:$0x1]
    %v1922 = vld [vmem:[%s0 + $0x14] sm:$0x1]
    %v1923 = vld [vmem:[%s0 + $0x1c] sm:$0x1]
    %v1924 = vld [vmem:[%s0 + $0x24] sm:$0x1]
    %v1925 = vld [vmem:[%s0 + $0x2c] sm:$0x1]
    %v1926 = vld [vmem:[%s0 + $0x34] sm:$0x1]
    %v1927 = vld [vmem:[%s0 + $0x3c] sm:$0x1]
    %1928 = vmatprep.subr.mxu0 %v44
    %1929 = vmatpush1.msra.mxu0 %v43
    %1930 = vmatprep.subr.mxu0 %v48
    %1931 = vmatpush1.msra.mxu0 %v47
    %1932 = vmatprep.subr.mxu0 %v52
    %1933 = vmatpush1.msra.mxu0 %v51
    %1934 = vmatprep.subr.mxu0 %v56
    %1935 = vmatpush1.msra.mxu0 %v55
    %1936 = vmatprep.subr.mxu0 %v60
    %1937 = vmatpush1.msra.mxu0 %v59
    %1938 = vmatprep.subr.mxu0 %v64
    %1939 = vmatpush1.msra.mxu0 %v63
    %1940 = vmatprep.subr.mxu0 %v68
    %1941 = vmatpush1.msra.mxu0 %v67
    %1942 = vmatprep.subr.mxu0 %v72
    %1943 = vmatpush1.msra.mxu0 %v71
    %1944 = vmatprep.subr.mxu0 %v76
    %1945 = vmatpush1.msra.mxu0 %v75
    %1946 = vmatprep.subr.mxu0 %v80
    %1947 = vmatpush1.msra.mxu0 %v79
    %1948 = vmatprep.subr.mxu0 %v84
    %1949 = vmatpush1.msra.mxu0 %v83
    %1950 = vmatprep.subr.mxu0 %v88
    %1951 = vmatpush1.msra.mxu0 %v87
    %1952 = vmatprep.subr.mxu0 %v92
    %1953 = vmatpush1.msra.mxu0 %v91
    %1954 = vmatprep.subr.mxu0 %v96
    %1955 = vmatpush1.msra.mxu0 %v95
    %1956 = vmatprep.subr.mxu0 %v100
    %1957 = vmatpush1.msra.mxu0 %v99
    %1958 = vmatprep.subr.mxu0 %v104
    %1959 = vmatpush1.msra.mxu0 %v103
    %1960 = vmatprep.subr.mxu0 0.0
    %1961 = vmatpush1.msra.mxu0 0.0
    %1962 = vmatprep.subr.mxu0 0.0
    %1963 = vmatpush1.msra.mxu0 0.0
    %1964 = vmatprep.subr.mxu0 0.0
    %1965 = vmatpush1.msra.mxu0 0.0
    %1966 = vmatprep.subr.mxu0 0.0
    %1967 = vmatpush1.msra.mxu0 0.0
    %1968 = vmatprep.subr.mxu0 0.0
    %1969 = vmatpush1.msra.mxu0 0.0
    %1970 = vmatprep.subr.mxu0 0.0
    %1971 = vmatpush1.msra.mxu0 0.0
    %1972 = vmatprep.subr.mxu0 0.0
    %1973 = vmatpush1.msra.mxu0 0.0
    %1974 = vmatprep.subr.mxu0 0.0
    %1975 = vmatpush1.msra.mxu0 0.0
    %1976 = vmatprep.subr.mxu0 0.0
    %1977 = vmatpush1.msra.mxu0 0.0
    %1978 = vmatprep.subr.mxu0 0.0
    %1979 = vmatpush1.msra.mxu0 0.0
    %1980 = vmatprep.subr.mxu0 0.0
    %1981 = vmatpush1.msra.mxu0 0.0
    %1982 = vmatprep.subr.mxu0 0.0
    %1983 = vmatpush1.msra.mxu0 0.0
    %1984 = vmatprep.subr.mxu0 0.0
    %1985 = vmatpush1.msra.mxu0 0.0
    %1986 = vmatprep.subr.mxu0 0.0
    %1987 = vmatpush1.msra.mxu0 0.0
    %1988 = vmatprep.subr.mxu0 0.0
    %1989 = vmatpush1.msra.mxu0 0.0
    %1990 = vmatprep.subr.mxu0 0.0
    %1991 = vmatpush1.msra.mxu0 0.0
    %1992 = vmatprep.mubr.f32.mxu0 0.0
    %1993 = vmatmul.mubr.f32.gmra.mrb[0].mxu0 %v1853
    %v1994 = vpop.f32.mrb[0].mxu0
    %v1995 = vadd.f32 0.0, %v1994
    %v1996 = vpop.f32.mrb[0].mxu0
    %v1997 = vadd.f32 0.0, %v1996
    %1998 = vdwg.mxu0
    %1999 = vmatprep.subr.mxu0 %v46
    %2000 = vmatpush1.msra.mxu0 %v45
    %2001 = vmatprep.subr.mxu0 %v50
    %2002 = vmatpush1.msra.mxu0 %v49
    %2003 = vmatprep.subr.mxu0 %v54
    %2004 = vmatpush1.msra.mxu0 %v53
    %2005 = vmatprep.subr.mxu0 %v58
    %2006 = vmatpush1.msra.mxu0 %v57
    %2007 = vmatprep.subr.mxu0 %v62
    %2008 = vmatpush1.msra.mxu0 %v61
    %2009 = vmatprep.subr.mxu0 %v66
    %2010 = vmatpush1.msra.mxu0 %v65
    %2011 = vmatprep.subr.mxu0 %v70
    %2012 = vmatpush1.msra.mxu0 %v69
    %2013 = vmatprep.subr.mxu0 %v74
    %2014 = vmatpush1.msra.mxu0 %v73
    %2015 = vmatprep.subr.mxu0 %v78
    %2016 = vmatpush1.msra.mxu0 %v77
    %2017 = vmatprep.subr.mxu0 %v82
    %2018 = vmatpush1.msra.mxu0 %v81
    %2019 = vmatprep.subr.mxu0 %v86
    %2020 = vmatpush1.msra.mxu0 %v85
    %2021 = vmatprep.subr.mxu0 %v90
    %2022 = vmatpush1.msra.mxu0 %v89
    %2023 = vmatprep.subr.mxu0 %v94
    %2024 = vmatpush1.msra.mxu0 %v93
    %2025 = vmatprep.subr.mxu0 %v98
    %2026 = vmatpush1.msra.mxu0 %v97
    %2027 = vmatprep.subr.mxu0 %v102
    %2028 = vmatpush1.msra.mxu0 %v101
    %2029 = vmatprep.subr.mxu0 %v106
    %2030 = vmatpush1.msra.mxu0 %v105
    %2031 = vmatprep.subr.mxu0 0.0
    %2032 = vmatpush1.msra.mxu0 0.0
    %2033 = vmatprep.subr.mxu0 0.0
    %2034 = vmatpush1.msra.mxu0 0.0
    %2035 = vmatprep.subr.mxu0 0.0
    %2036 = vmatpush1.msra.mxu0 0.0
    %2037 = vmatprep.subr.mxu0 0.0
    %2038 = vmatpush1.msra.mxu0 0.0
    %2039 = vmatprep.subr.mxu0 0.0
    %2040 = vmatpush1.msra.mxu0 0.0
    %2041 = vmatprep.subr.mxu0 0.0
    %2042 = vmatpush1.msra.mxu0 0.0
    %2043 = vmatprep.subr.mxu0 0.0
    %2044 = vmatpush1.msra.mxu0 0.0
    %2045 = vmatprep.subr.mxu0 0.0
    %2046 = vmatpush1.msra.mxu0 0.0
    %2047 = vmatprep.subr.mxu0 0.0
    %2048 = vmatpush1.msra.mxu0 0.0
    %2049 = vmatprep.subr.mxu0 0.0
    %2050 = vmatpush1.msra.mxu0 0.0
    %2051 = vmatprep.subr.mxu0 0.0
    %2052 = vmatpush1.msra.mxu0 0.0
    %2053 = vmatprep.subr.mxu0 0.0
    %2054 = vmatpush1.msra.mxu0 0.0
    %2055 = vmatprep.subr.mxu0 0.0
    %2056 = vmatpush1.msra.mxu0 0.0
    %2057 = vmatprep.subr.mxu0 0.0
    %2058 = vmatpush1.msra.mxu0 0.0
    %2059 = vmatprep.subr.mxu0 0.0
    %2060 = vmatpush1.msra.mxu0 0.0
    %2061 = vmatprep.subr.mxu0 0.0
    %2062 = vmatpush1.msra.mxu0 0.0
    %2063 = vmatprep.mubr.f32.mxu0 0.0
    %2064 = vmatmul.mubr.f32.gmra.mrb[0].mxu0 %v1853
    %v2065 = vpop.f32.mrb[0].mxu0
    %v2066 = vadd.f32 0.0, %v2065
    %v2067 = vpop.f32.mrb[0].mxu0
    %v2068 = vadd.f32 0.0, %v2067
    %2069 = vdwg.mxu0
    %v2078 = vrot.slane %v1921, 7
    %v2079 = vsel %vm290, %v2078, %v1920
    %v2080 = vrot.slane %v1922, 6
    %v2081 = vsel %vm293, %v2080, %v2079
    %v2082 = vrot.slane %v1923, 5
    %v2083 = vsel %vm296, %v2082, %v2081
    %v2084 = vrot.slane %v1924, 4
    %v2085 = vsel %vm299, %v2084, %v2083
    %v2086 = vrot.slane %v1925, 3
    %v2087 = vsel %vm302, %v2086, %v2085
    %v2088 = vrot.slane %v1926, 2
    %v2089 = vsel %vm305, %v2088, %v2087
    %v2090 = vrot.slane %v1927, 1
    %v2091 = vsel %vm308, %v2090, %v2089
    %v2092 = vsel %vm314, %v2091, 0
    %2094 = vmatprep.subr.mxu0 %v320
    %2095 = vmatpush1.msra.mxu0 %v318
    %2096 = vmatprep.subr.mxu0 0.0
    %2097 = vmatpush1.msra.mxu0 0.0
    %2098 = vmatprep.subr.mxu0 0.0
    %2099 = vmatpush1.msra.mxu0 0.0
    %2100 = vmatprep.subr.mxu0 0.0
    %2101 = vmatpush1.msra.mxu0 0.0
    %2102 = vmatprep.subr.mxu0 0.0
    %2103 = vmatpush1.msra.mxu0 0.0
    %2104 = vmatprep.subr.mxu0 0.0
    %2105 = vmatpush1.msra.mxu0 0.0
    %2106 = vmatprep.subr.mxu0 0.0
    %2107 = vmatpush1.msra.mxu0 0.0
    %2108 = vmatprep.subr.mxu0 0.0
    %2109 = vmatpush1.msra.mxu0 0.0
    %2110 = vmatprep.subr.mxu0 0.0
    %2111 = vmatpush1.msra.mxu0 0.0
    %2112 = vmatprep.subr.mxu0 0.0
    %2113 = vmatpush1.msra.mxu0 0.0
    %2114 = vmatprep.subr.mxu0 0.0
    %2115 = vmatpush1.msra.mxu0 0.0
    %2116 = vmatprep.subr.mxu0 0.0
    %2117 = vmatpush1.msra.mxu0 0.0
    %2118 = vmatprep.subr.mxu0 0.0
    %2119 = vmatpush1.msra.mxu0 0.0
    %2120 = vmatprep.subr.mxu0 0.0
    %2121 = vmatpush1.msra.mxu0 0.0
    %2122 = vmatprep.subr.mxu0 0.0
    %2123 = vmatpush1.msra.mxu0 0.0
    %2124 = vmatprep.subr.mxu0 0.0
    %2125 = vmatpush1.msra.mxu0 0.0
    %2126 = vmatprep.subr.mxu0 0.0
    %2127 = vmatpush1.msra.mxu0 0.0
    %2128 = vmatprep.subr.mxu0 0.0
    %2129 = vmatpush1.msra.mxu0 0.0
    %2130 = vmatprep.subr.mxu0 0.0
    %2131 = vmatpush1.msra.mxu0 0.0
    %2132 = vmatprep.subr.mxu0 0.0
    %2133 = vmatpush1.msra.mxu0 0.0
    %2134 = vmatprep.subr.mxu0 0.0
    %2135 = vmatpush1.msra.mxu0 0.0
    %2136 = vmatprep.subr.mxu0 0.0
    %2137 = vmatpush1.msra.mxu0 0.0
    %2138 = vmatprep.subr.mxu0 0.0
    %2139 = vmatpush1.msra.mxu0 0.0
    %2140 = vmatprep.subr.mxu0 0.0
    %2141 = vmatpush1.msra.mxu0 0.0
    %2142 = vmatprep.subr.mxu0 0.0
    %2143 = vmatpush1.msra.mxu0 0.0
    %2144 = vmatprep.subr.mxu0 0.0
    %2145 = vmatpush1.msra.mxu0 0.0
    %2146 = vmatprep.subr.mxu0 0.0
    %2147 = vmatpush1.msra.mxu0 0.0
    %2148 = vmatprep.subr.mxu0 0.0
    %2149 = vmatpush1.msra.mxu0 0.0
    %2150 = vmatprep.subr.mxu0 0.0
    %2151 = vmatpush1.msra.mxu0 0.0
    %2152 = vmatprep.subr.mxu0 0.0
    %2153 = vmatpush1.msra.mxu0 0.0
    %2154 = vmatprep.subr.mxu0 0.0
    %2155 = vmatpush1.msra.mxu0 0.0
    %2156 = vmatprep.subr.mxu0 0.0
    %2157 = vmatpush1.msra.mxu0 0.0
    %2158 = vmatprep.mubr.f32.mxu0 0.0
    %2159 = vmatmul.mubr.f32.gmra.mrb[0].mxu0 %v2092
    %v2160 = vpop.f32.mrb[0].mxu0
    %v2161 = vadd.f32 %v1995, %v2160
    %v2162 = vpop.f32.mrb[0].mxu0
    %v2163 = vadd.f32 %v1997, %v2162
    %2164 = vdwg.mxu0
    %2165 = vmatprep.subr.mxu0 %v324
    %2166 = vmatpush1.msra.mxu0 %v322
    %2167 = vmatprep.subr.mxu0 0.0
    %2168 = vmatpush1.msra.mxu0 0.0
    %2169 = vmatprep.subr.mxu0 0.0
    %2170 = vmatpush1.msra.mxu0 0.0
    %2171 = vmatprep.subr.mxu0 0.0
    %2172 = vmatpush1.msra.mxu0 0.0
    %2173 = vmatprep.subr.mxu0 0.0
    %2174 = vmatpush1.msra.mxu0 0.0
    %2175 = vmatprep.subr.mxu0 0.0
    %2176 = vmatpush1.msra.mxu0 0.0
    %2177 = vmatprep.subr.mxu0 0.0
    %2178 = vmatpush1.msra.mxu0 0.0
    %2179 = vmatprep.subr.mxu0 0.0
    %2180 = vmatpush1.msra.mxu0 0.0
    %2181 = vmatprep.subr.mxu0 0.0
    %2182 = vmatpush1.msra.mxu0 0.0
    %2183 = vmatprep.subr.mxu0 0.0
    %2184 = vmatpush1.msra.mxu0 0.0
    %2185 = vmatprep.subr.mxu0 0.0
    %2186 = vmatpush1.msra.mxu0 0.0
    %2187 = vmatprep.subr.mxu0 0.0
    %2188 = vmatpush1.msra.mxu0 0.0
    %2189 = vmatprep.subr.mxu0 0.0
    %2190 = vmatpush1.msra.mxu0 0.0
    %2191 = vmatprep.subr.mxu0 0.0
    %2192 = vmatpush1.msra.mxu0 0.0
    %2193 = vmatprep.subr.mxu0 0.0
    %2194 = vmatpush1.msra.mxu0 0.0
    %2195 = vmatprep.subr.mxu0 0.0
    %2196 = vmatpush1.msra.mxu0 0.0
    %2197 = vmatprep.subr.mxu0 0.0
    %2198 = vmatpush1.msra.mxu0 0.0
    %2199 = vmatprep.subr.mxu0 0.0
    %2200 = vmatpush1.msra.mxu0 0.0
    %2201 = vmatprep.subr.mxu0 0.0
    %2202 = vmatpush1.msra.mxu0 0.0
    %2203 = vmatprep.subr.mxu0 0.0
    %2204 = vmatpush1.msra.mxu0 0.0
    %2205 = vmatprep.subr.mxu0 0.0
    %2206 = vmatpush1.msra.mxu0 0.0
    %2207 = vmatprep.subr.mxu0 0.0
    %2208 = vmatpush1.msra.mxu0 0.0
    %2209 = vmatprep.subr.mxu0 0.0
    %2210 = vmatpush1.msra.mxu0 0.0
    %2211 = vmatprep.subr.mxu0 0.0
    %2212 = vmatpush1.msra.mxu0 0.0
    %2213 = vmatprep.subr.mxu0 0.0
    %2214 = vmatpush1.msra.mxu0 0.0
    %2215 = vmatprep.subr.mxu0 0.0
    %2216 = vmatpush1.msra.mxu0 0.0
    %2217 = vmatprep.subr.mxu0 0.0
    %2218 = vmatpush1.msra.mxu0 0.0
    %2219 = vmatprep.subr.mxu0 0.0
    %2220 = vmatpush1.msra.mxu0 0.0
    %2221 = vmatprep.subr.mxu0 0.0
    %2222 = vmatpush1.msra.mxu0 0.0
    %2223 = vmatprep.subr.mxu0 0.0
    %2224 = vmatpush1.msra.mxu0 0.0
    %2225 = vmatprep.subr.mxu0 0.0
    %2226 = vmatpush1.msra.mxu0 0.0
    %2227 = vmatprep.subr.mxu0 0.0
    %2228 = vmatpush1.msra.mxu0 0.0
    %2229 = vmatprep.mubr.f32.mxu0 0.0
    %2230 = vmatmul.mubr.f32.gmra.mrb[0].mxu0 %v2092
    %v2231 = vpop.f32.mrb[0].mxu0
    %v2232 = vadd.f32 %v2066, %v2231
    %v2233 = vpop.f32.mrb[0].mxu0
    %v2234 = vadd.f32 %v2068, %v2233
    %2235 = vdwg.mxu0
    %v2236 = vadd.f32 %v2161, %v112
    %v2237 = vadd.f32 %v2163, %v116
    %v2238 = vadd.f32 %v2232, %v120
    %v2239 = vadd.f32 %v2234, %v124
    %v2240 = vxor.u32 %v2236, 2147483648
    %v2241 = vmul.f32 %v2240, 1.442695
    %v2242 = vpow.pop %v2241
    %v2243 = vadd.f32 %v2242, 1.0
    %v2244 = vrcp.pop %v2243
    %v2245 = vmul.f32 1.0, %v2244
    %v2246 = vxor.u32 %v2237, 2147483648
    %v2247 = vmul.f32 %v2246, 1.442695
    %v2248 = vpow.pop %v2247
    %v2249 = vadd.f32 %v2248, 1.0
    %v2250 = vrcp.pop %v2249
    %v2251 = vmul.f32 1.0, %v2250
    %v2252 = vxor.u32 %v2238, 2147483648
    %v2253 = vmul.f32 %v2252, 1.442695
    %v2254 = vpow.pop %v2253
    %v2255 = vadd.f32 %v2254, 1.0
    %v2256 = vrcp.pop %v2255
    %v2257 = vmul.f32 1.0, %v2256
    %v2258 = vtanh.pop %v2239
    %v2259 = vmul.f32 %v2245, %v2258
    %v2260 = vmul.f32 %v2257, %v1819
    %v2261 = vadd.f32 %v2259, %v2260
    %v2262 = vtanh.pop %v2261
    %v2263 = vmul.f32 %v2251, %v2262
    %v2264 = vld [vmem:[%s1 + $0x4] sm:$0x1]
    %v2265 = vld [vmem:[%s1 + $0xc] sm:$0x1]
    %v2266 = vld [vmem:[%s1 + $0x14] sm:$0x1]
    %v2267 = vld [vmem:[%s1 + $0x1c] sm:$0x1]
    %v2268 = vld [vmem:[%s1 + $0x24] sm:$0x1]
    %v2269 = vld [vmem:[%s1 + $0x2c] sm:$0x1]
    %v2270 = vld [vmem:[%s1 + $0x34] sm:$0x1]
    %v2271 = vld [vmem:[%s1 + $0x3c] sm:$0x1]
    %v2280 = vrot.slane %v2265, 7
    %v2281 = vsel %vm290, %v2280, %v2264
    %v2282 = vrot.slane %v2266, 6
    %v2283 = vsel %vm293, %v2282, %v2281
    %v2284 = vrot.slane %v2267, 5
    %v2285 = vsel %vm296, %v2284, %v2283
    %v2286 = vrot.slane %v2268, 4
    %v2287 = vsel %vm299, %v2286, %v2285
    %v2288 = vrot.slane %v2269, 3
    %v2289 = vsel %vm302, %v2288, %v2287
    %v2290 = vrot.slane %v2270, 2
    %v2291 = vsel %vm305, %v2290, %v2289
    %v2292 = vrot.slane %v2271, 1
    %v2293 = vsel %vm308, %v2292, %v2291
    %v2295 = vadd.f32 %v2263, %v2293
    %v2297 = vcombine.high %v2295, %v2295
    %v2299 = vunpack.c.l.s4 1966171168
    %v2300 = vunpack.c.0.s8 %v2299
    %v2301 = vlaneseq
    %v2302 = vshrl.u32 %v2301, 7
    %v2303 = vsub.s32 %v2300, %v2302
    %v2304 = vrot.slane %v2295, %v2303
    %v2306 = vunpack.c.l.s4 1966171168
    %v2307 = vunpack.c.0.s8 %v2306
    %v2308 = vlaneseq
    %v2309 = vshrl.u32 %v2308, 7
    %v2310 = vsub.s32 %v2307, %v2309
    %v2311 = vrot.slane %v2297, %v2310
    %v2312 = vcombine.high %v2304, %v2304
    %v2313 = vcombine.high %v2311, %v2311
    %v2315 = vunpack.c.l.s4 1966171168
    %v2316 = vunpack.c.0.s8 %v2315
    %v2317 = vlaneseq
    %v2318 = vshrl.u32 %v2317, 7
    %v2319 = vsub.s32 %v2316, %v2318
    %v2320 = vrot.slane %v2304, %v2319
    %v2322 = vunpack.c.l.s4 1966171168
    %v2323 = vunpack.c.0.s8 %v2322
    %v2324 = vlaneseq
    %v2325 = vshrl.u32 %v2324, 7
    %v2326 = vsub.s32 %v2323, %v2325
    %v2327 = vrot.slane %v2311, %v2326
    %v2329 = vunpack.c.l.s4 1966171168
    %v2330 = vunpack.c.0.s8 %v2329
    %v2331 = vlaneseq
    %v2332 = vshrl.u32 %v2331, 7
    %v2333 = vsub.s32 %v2330, %v2332
    %v2334 = vrot.slane %v2312, %v2333
    %v2336 = vunpack.c.l.s4 1966171168
    %v2337 = vunpack.c.0.s8 %v2336
    %v2338 = vlaneseq
    %v2339 = vshrl.u32 %v2338, 7
    %v2340 = vsub.s32 %v2337, %v2339
    %v2341 = vrot.slane %v2313, %v2340
    %v2342 = vcombine.high %v2320, %v2320
    %v2343 = vcombine.high %v2327, %v2327
    %v2344 = vcombine.high %v2334, %v2334
    %v2345 = vcombine.high %v2341, %v2341
    %2354 = vst [vmem:[#allocation7 + $0x4] sm:$0x1] %v2320
    %2355 = vst [vmem:[#allocation7 + $0xc] sm:$0x1] %v2334
    %2356 = vst [vmem:[#allocation7 + $0x14] sm:$0x1] %v2342
    %2357 = vst [vmem:[#allocation7 + $0x1c] sm:$0x1] %v2344
    %2358 = vst [vmem:[#allocation7 + $0x24] sm:$0x1] %v2327
    %2359 = vst [vmem:[#allocation7 + $0x2c] sm:$0x1] %v2341
    %2360 = vst [vmem:[#allocation7 + $0x34] sm:$0x1] %v2343
    %2361 = vst [vmem:[#allocation7 + $0x3c] sm:$0x1] %v2345
    %v2362 = vld [vmem:[%s0 + $0x5] sm:$0x1]
    %v2363 = vld [vmem:[%s0 + $0xd] sm:$0x1]
    %v2364 = vld [vmem:[%s0 + $0x15] sm:$0x1]
    %v2365 = vld [vmem:[%s0 + $0x1d] sm:$0x1]
    %v2366 = vld [vmem:[%s0 + $0x25] sm:$0x1]
    %v2367 = vld [vmem:[%s0 + $0x2d] sm:$0x1]
    %v2368 = vld [vmem:[%s0 + $0x35] sm:$0x1]
    %v2369 = vld [vmem:[%s0 + $0x3d] sm:$0x1]
    %2370 = vmatprep.subr.mxu0 %v44
    %2371 = vmatpush1.msra.mxu0 %v43
    %2372 = vmatprep.subr.mxu0 %v48
    %2373 = vmatpush1.msra.mxu0 %v47
    %2374 = vmatprep.subr.mxu0 %v52
    %2375 = vmatpush1.msra.mxu0 %v51
    %2376 = vmatprep.subr.mxu0 %v56
    %2377 = vmatpush1.msra.mxu0 %v55
    %2378 = vmatprep.subr.mxu0 %v60
    %2379 = vmatpush1.msra.mxu0 %v59
    %2380 = vmatprep.subr.mxu0 %v64
    %2381 = vmatpush1.msra.mxu0 %v63
    %2382 = vmatprep.subr.mxu0 %v68
    %2383 = vmatpush1.msra.mxu0 %v67
    %2384 = vmatprep.subr.mxu0 %v72
    %2385 = vmatpush1.msra.mxu0 %v71
    %2386 = vmatprep.subr.mxu0 %v76
    %2387 = vmatpush1.msra.mxu0 %v75
    %2388 = vmatprep.subr.mxu0 %v80
    %2389 = vmatpush1.msra.mxu0 %v79
    %2390 = vmatprep.subr.mxu0 %v84
    %2391 = vmatpush1.msra.mxu0 %v83
    %2392 = vmatprep.subr.mxu0 %v88
    %2393 = vmatpush1.msra.mxu0 %v87
    %2394 = vmatprep.subr.mxu0 %v92
    %2395 = vmatpush1.msra.mxu0 %v91
    %2396 = vmatprep.subr.mxu0 %v96
    %2397 = vmatpush1.msra.mxu0 %v95
    %2398 = vmatprep.subr.mxu0 %v100
    %2399 = vmatpush1.msra.mxu0 %v99
    %2400 = vmatprep.subr.mxu0 %v104
    %2401 = vmatpush1.msra.mxu0 %v103
    %2402 = vmatprep.subr.mxu0 0.0
    %2403 = vmatpush1.msra.mxu0 0.0
    %2404 = vmatprep.subr.mxu0 0.0
    %2405 = vmatpush1.msra.mxu0 0.0
    %2406 = vmatprep.subr.mxu0 0.0
    %2407 = vmatpush1.msra.mxu0 0.0
    %2408 = vmatprep.subr.mxu0 0.0
    %2409 = vmatpush1.msra.mxu0 0.0
    %2410 = vmatprep.subr.mxu0 0.0
    %2411 = vmatpush1.msra.mxu0 0.0
    %2412 = vmatprep.subr.mxu0 0.0
    %2413 = vmatpush1.msra.mxu0 0.0
    %2414 = vmatprep.subr.mxu0 0.0
    %2415 = vmatpush1.msra.mxu0 0.0
    %2416 = vmatprep.subr.mxu0 0.0
    %2417 = vmatpush1.msra.mxu0 0.0
    %2418 = vmatprep.subr.mxu0 0.0
    %2419 = vmatpush1.msra.mxu0 0.0
    %2420 = vmatprep.subr.mxu0 0.0
    %2421 = vmatpush1.msra.mxu0 0.0
    %2422 = vmatprep.subr.mxu0 0.0
    %2423 = vmatpush1.msra.mxu0 0.0
    %2424 = vmatprep.subr.mxu0 0.0
    %2425 = vmatpush1.msra.mxu0 0.0
    %2426 = vmatprep.subr.mxu0 0.0
    %2427 = vmatpush1.msra.mxu0 0.0
    %2428 = vmatprep.subr.mxu0 0.0
    %2429 = vmatpush1.msra.mxu0 0.0
    %2430 = vmatprep.subr.mxu0 0.0
    %2431 = vmatpush1.msra.mxu0 0.0
    %2432 = vmatprep.subr.mxu0 0.0
    %2433 = vmatpush1.msra.mxu0 0.0
    %2434 = vmatprep.mubr.f32.mxu0 0.0
    %2435 = vmatmul.mubr.f32.gmra.mrb[0].mxu0 %v2295
    %v2436 = vpop.f32.mrb[0].mxu0
    %v2437 = vadd.f32 0.0, %v2436
    %v2438 = vpop.f32.mrb[0].mxu0
    %v2439 = vadd.f32 0.0, %v2438
    %2440 = vdwg.mxu0
    %2441 = vmatprep.subr.mxu0 %v46
    %2442 = vmatpush1.msra.mxu0 %v45
    %2443 = vmatprep.subr.mxu0 %v50
    %2444 = vmatpush1.msra.mxu0 %v49
    %2445 = vmatprep.subr.mxu0 %v54
    %2446 = vmatpush1.msra.mxu0 %v53
    %2447 = vmatprep.subr.mxu0 %v58
    %2448 = vmatpush1.msra.mxu0 %v57
    %2449 = vmatprep.subr.mxu0 %v62
    %2450 = vmatpush1.msra.mxu0 %v61
    %2451 = vmatprep.subr.mxu0 %v66
    %2452 = vmatpush1.msra.mxu0 %v65
    %2453 = vmatprep.subr.mxu0 %v70
    %2454 = vmatpush1.msra.mxu0 %v69
    %2455 = vmatprep.subr.mxu0 %v74
    %2456 = vmatpush1.msra.mxu0 %v73
    %2457 = vmatprep.subr.mxu0 %v78
    %2458 = vmatpush1.msra.mxu0 %v77
    %2459 = vmatprep.subr.mxu0 %v82
    %2460 = vmatpush1.msra.mxu0 %v81
    %2461 = vmatprep.subr.mxu0 %v86
    %2462 = vmatpush1.msra.mxu0 %v85
    %2463 = vmatprep.subr.mxu0 %v90
    %2464 = vmatpush1.msra.mxu0 %v89
    %2465 = vmatprep.subr.mxu0 %v94
    %2466 = vmatpush1.msra.mxu0 %v93
    %2467 = vmatprep.subr.mxu0 %v98
    %2468 = vmatpush1.msra.mxu0 %v97
    %2469 = vmatprep.subr.mxu0 %v102
    %2470 = vmatpush1.msra.mxu0 %v101
    %2471 = vmatprep.subr.mxu0 %v106
    %2472 = vmatpush1.msra.mxu0 %v105
    %2473 = vmatprep.subr.mxu0 0.0
    %2474 = vmatpush1.msra.mxu0 0.0
    %2475 = vmatprep.subr.mxu0 0.0
    %2476 = vmatpush1.msra.mxu0 0.0
    %2477 = vmatprep.subr.mxu0 0.0
    %2478 = vmatpush1.msra.mxu0 0.0
    %2479 = vmatprep.subr.mxu0 0.0
    %2480 = vmatpush1.msra.mxu0 0.0
    %2481 = vmatprep.subr.mxu0 0.0
    %2482 = vmatpush1.msra.mxu0 0.0
    %2483 = vmatprep.subr.mxu0 0.0
    %2484 = vmatpush1.msra.mxu0 0.0
    %2485 = vmatprep.subr.mxu0 0.0
    %2486 = vmatpush1.msra.mxu0 0.0
    %2487 = vmatprep.subr.mxu0 0.0
    %2488 = vmatpush1.msra.mxu0 0.0
    %2489 = vmatprep.subr.mxu0 0.0
    %2490 = vmatpush1.msra.mxu0 0.0
    %2491 = vmatprep.subr.mxu0 0.0
    %2492 = vmatpush1.msra.mxu0 0.0
    %2493 = vmatprep.subr.mxu0 0.0
    %2494 = vmatpush1.msra.mxu0 0.0
    %2495 = vmatprep.subr.mxu0 0.0
    %2496 = vmatpush1.msra.mxu0 0.0
    %2497 = vmatprep.subr.mxu0 0.0
    %2498 = vmatpush1.msra.mxu0 0.0
    %2499 = vmatprep.subr.mxu0 0.0
    %2500 = vmatpush1.msra.mxu0 0.0
    %2501 = vmatprep.subr.mxu0 0.0
    %2502 = vmatpush1.msra.mxu0 0.0
    %2503 = vmatprep.subr.mxu0 0.0
    %2504 = vmatpush1.msra.mxu0 0.0
    %2505 = vmatprep.mubr.f32.mxu0 0.0
    %2506 = vmatmul.mubr.f32.gmra.mrb[0].mxu0 %v2295
    %v2507 = vpop.f32.mrb[0].mxu0
    %v2508 = vadd.f32 0.0, %v2507
    %v2509 = vpop.f32.mrb[0].mxu0
    %v2510 = vadd.f32 0.0, %v2509
    %2511 = vdwg.mxu0
    %v2520 = vrot.slane %v2363, 7
    %v2521 = vsel %vm290, %v2520, %v2362
    %v2522 = vrot.slane %v2364, 6
    %v2523 = vsel %vm293, %v2522, %v2521
    %v2524 = vrot.slane %v2365, 5
    %v2525 = vsel %vm296, %v2524, %v2523
    %v2526 = vrot.slane %v2366, 4
    %v2527 = vsel %vm299, %v2526, %v2525
    %v2528 = vrot.slane %v2367, 3
    %v2529 = vsel %vm302, %v2528, %v2527
    %v2530 = vrot.slane %v2368, 2
    %v2531 = vsel %vm305, %v2530, %v2529
    %v2532 = vrot.slane %v2369, 1
    %v2533 = vsel %vm308, %v2532, %v2531
    %v2534 = vsel %vm314, %v2533, 0
    %2536 = vmatprep.subr.mxu0 %v320
    %2537 = vmatpush1.msra.mxu0 %v318
    %2538 = vmatprep.subr.mxu0 0.0
    %2539 = vmatpush1.msra.mxu0 0.0
    %2540 = vmatprep.subr.mxu0 0.0
    %2541 = vmatpush1.msra.mxu0 0.0
    %2542 = vmatprep.subr.mxu0 0.0
    %2543 = vmatpush1.msra.mxu0 0.0
    %2544 = vmatprep.subr.mxu0 0.0
    %2545 = vmatpush1.msra.mxu0 0.0
    %2546 = vmatprep.subr.mxu0 0.0
    %2547 = vmatpush1.msra.mxu0 0.0
    %2548 = vmatprep.subr.mxu0 0.0
    %2549 = vmatpush1.msra.mxu0 0.0
    %2550 = vmatprep.subr.mxu0 0.0
    %2551 = vmatpush1.msra.mxu0 0.0
    %2552 = vmatprep.subr.mxu0 0.0
    %2553 = vmatpush1.msra.mxu0 0.0
    %2554 = vmatprep.subr.mxu0 0.0
    %2555 = vmatpush1.msra.mxu0 0.0
    %2556 = vmatprep.subr.mxu0 0.0
    %2557 = vmatpush1.msra.mxu0 0.0
    %2558 = vmatprep.subr.mxu0 0.0
    %2559 = vmatpush1.msra.mxu0 0.0
    %2560 = vmatprep.subr.mxu0 0.0
    %2561 = vmatpush1.msra.mxu0 0.0
    %2562 = vmatprep.subr.mxu0 0.0
    %2563 = vmatpush1.msra.mxu0 0.0
    %2564 = vmatprep.subr.mxu0 0.0
    %2565 = vmatpush1.msra.mxu0 0.0
    %2566 = vmatprep.subr.mxu0 0.0
    %2567 = vmatpush1.msra.mxu0 0.0
    %2568 = vmatprep.subr.mxu0 0.0
    %2569 = vmatpush1.msra.mxu0 0.0
    %2570 = vmatprep.subr.mxu0 0.0
    %2571 = vmatpush1.msra.mxu0 0.0
    %2572 = vmatprep.subr.mxu0 0.0
    %2573 = vmatpush1.msra.mxu0 0.0
    %2574 = vmatprep.subr.mxu0 0.0
    %2575 = vmatpush1.msra.mxu0 0.0
    %2576 = vmatprep.subr.mxu0 0.0
    %2577 = vmatpush1.msra.mxu0 0.0
    %2578 = vmatprep.subr.mxu0 0.0
    %2579 = vmatpush1.msra.mxu0 0.0
    %2580 = vmatprep.subr.mxu0 0.0
    %2581 = vmatpush1.msra.mxu0 0.0
    %2582 = vmatprep.subr.mxu0 0.0
    %2583 = vmatpush1.msra.mxu0 0.0
    %2584 = vmatprep.subr.mxu0 0.0
    %2585 = vmatpush1.msra.mxu0 0.0
    %2586 = vmatprep.subr.mxu0 0.0
    %2587 = vmatpush1.msra.mxu0 0.0
    %2588 = vmatprep.subr.mxu0 0.0
    %2589 = vmatpush1.msra.mxu0 0.0
    %2590 = vmatprep.subr.mxu0 0.0
    %2591 = vmatpush1.msra.mxu0 0.0
    %2592 = vmatprep.subr.mxu0 0.0
    %2593 = vmatpush1.msra.mxu0 0.0
    %2594 = vmatprep.subr.mxu0 0.0
    %2595 = vmatpush1.msra.mxu0 0.0
    %2596 = vmatprep.subr.mxu0 0.0
    %2597 = vmatpush1.msra.mxu0 0.0
    %2598 = vmatprep.subr.mxu0 0.0
    %2599 = vmatpush1.msra.mxu0 0.0
    %2600 = vmatprep.mubr.f32.mxu0 0.0
    %2601 = vmatmul.mubr.f32.gmra.mrb[0].mxu0 %v2534
    %v2602 = vpop.f32.mrb[0].mxu0
    %v2603 = vadd.f32 %v2437, %v2602
    %v2604 = vpop.f32.mrb[0].mxu0
    %v2605 = vadd.f32 %v2439, %v2604
    %2606 = vdwg.mxu0
    %2607 = vmatprep.subr.mxu0 %v324
    %2608 = vmatpush1.msra.mxu0 %v322
    %2609 = vmatprep.subr.mxu0 0.0
    %2610 = vmatpush1.msra.mxu0 0.0
    %2611 = vmatprep.subr.mxu0 0.0
    %2612 = vmatpush1.msra.mxu0 0.0
    %2613 = vmatprep.subr.mxu0 0.0
    %2614 = vmatpush1.msra.mxu0 0.0
    %2615 = vmatprep.subr.mxu0 0.0
    %2616 = vmatpush1.msra.mxu0 0.0
    %2617 = vmatprep.subr.mxu0 0.0
    %2618 = vmatpush1.msra.mxu0 0.0
    %2619 = vmatprep.subr.mxu0 0.0
    %2620 = vmatpush1.msra.mxu0 0.0
    %2621 = vmatprep.subr.mxu0 0.0
    %2622 = vmatpush1.msra.mxu0 0.0
    %2623 = vmatprep.subr.mxu0 0.0
    %2624 = vmatpush1.msra.mxu0 0.0
    %2625 = vmatprep.subr.mxu0 0.0
    %2626 = vmatpush1.msra.mxu0 0.0
    %2627 = vmatprep.subr.mxu0 0.0
    %2628 = vmatpush1.msra.mxu0 0.0
    %2629 = vmatprep.subr.mxu0 0.0
    %2630 = vmatpush1.msra.mxu0 0.0
    %2631 = vmatprep.subr.mxu0 0.0
    %2632 = vmatpush1.msra.mxu0 0.0
    %2633 = vmatprep.subr.mxu0 0.0
    %2634 = vmatpush1.msra.mxu0 0.0
    %2635 = vmatprep.subr.mxu0 0.0
    %2636 = vmatpush1.msra.mxu0 0.0
    %2637 = vmatprep.subr.mxu0 0.0
    %2638 = vmatpush1.msra.mxu0 0.0
    %2639 = vmatprep.subr.mxu0 0.0
    %2640 = vmatpush1.msra.mxu0 0.0
    %2641 = vmatprep.subr.mxu0 0.0
    %2642 = vmatpush1.msra.mxu0 0.0
    %2643 = vmatprep.subr.mxu0 0.0
    %2644 = vmatpush1.msra.mxu0 0.0
    %2645 = vmatprep.subr.mxu0 0.0
    %2646 = vmatpush1.msra.mxu0 0.0
    %2647 = vmatprep.subr.mxu0 0.0
    %2648 = vmatpush1.msra.mxu0 0.0
    %2649 = vmatprep.subr.mxu0 0.0
    %2650 = vmatpush1.msra.mxu0 0.0
    %2651 = vmatprep.subr.mxu0 0.0
    %2652 = vmatpush1.msra.mxu0 0.0
    %2653 = vmatprep.subr.mxu0 0.0
    %2654 = vmatpush1.msra.mxu0 0.0
    %2655 = vmatprep.subr.mxu0 0.0
    %2656 = vmatpush1.msra.mxu0 0.0
    %2657 = vmatprep.subr.mxu0 0.0
    %2658 = vmatpush1.msra.mxu0 0.0
    %2659 = vmatprep.subr.mxu0 0.0
    %2660 = vmatpush1.msra.mxu0 0.0
    %2661 = vmatprep.subr.mxu0 0.0
    %2662 = vmatpush1.msra.mxu0 0.0
    %2663 = vmatprep.subr.mxu0 0.0
    %2664 = vmatpush1.msra.mxu0 0.0
    %2665 = vmatprep.subr.mxu0 0.0
    %2666 = vmatpush1.msra.mxu0 0.0
    %2667 = vmatprep.subr.mxu0 0.0
    %2668 = vmatpush1.msra.mxu0 0.0
    %2669 = vmatprep.subr.mxu0 0.0
    %2670 = vmatpush1.msra.mxu0 0.0
    %2671 = vmatprep.mubr.f32.mxu0 0.0
    %2672 = vmatmul.mubr.f32.gmra.mrb[0].mxu0 %v2534
    %v2673 = vpop.f32.mrb[0].mxu0
    %v2674 = vadd.f32 %v2508, %v2673
    %v2675 = vpop.f32.mrb[0].mxu0
    %v2676 = vadd.f32 %v2510, %v2675
    %2677 = vdwg.mxu0
    %v2678 = vadd.f32 %v2603, %v112
    %v2679 = vadd.f32 %v2605, %v116
    %v2680 = vadd.f32 %v2674, %v120
    %v2681 = vadd.f32 %v2676, %v124
    %v2682 = vxor.u32 %v2678, 2147483648
    %v2683 = vmul.f32 %v2682, 1.442695
    %v2684 = vpow.pop %v2683
    %v2685 = vadd.f32 %v2684, 1.0
    %v2686 = vrcp.pop %v2685
    %v2687 = vmul.f32 1.0, %v2686
    %v2688 = vxor.u32 %v2679, 2147483648
    %v2689 = vmul.f32 %v2688, 1.442695
    %v2690 = vpow.pop %v2689
    %v2691 = vadd.f32 %v2690, 1.0
    %v2692 = vrcp.pop %v2691
    %v2693 = vmul.f32 1.0, %v2692
    %v2694 = vxor.u32 %v2680, 2147483648
    %v2695 = vmul.f32 %v2694, 1.442695
    %v2696 = vpow.pop %v2695
    %v2697 = vadd.f32 %v2696, 1.0
    %v2698 = vrcp.pop %v2697
    %v2699 = vmul.f32 1.0, %v2698
    %v2700 = vtanh.pop %v2681
    %v2701 = vmul.f32 %v2687, %v2700
    %v2702 = vmul.f32 %v2699, %v2261
    %v2703 = vadd.f32 %v2701, %v2702
    %v2704 = vtanh.pop %v2703
    %v2705 = vmul.f32 %v2693, %v2704
    %v2706 = vld [vmem:[%s1 + $0x5] sm:$0x1]
    %v2707 = vld [vmem:[%s1 + $0xd] sm:$0x1]
    %v2708 = vld [vmem:[%s1 + $0x15] sm:$0x1]
    %v2709 = vld [vmem:[%s1 + $0x1d] sm:$0x1]
    %v2710 = vld [vmem:[%s1 + $0x25] sm:$0x1]
    %v2711 = vld [vmem:[%s1 + $0x2d] sm:$0x1]
    %v2712 = vld [vmem:[%s1 + $0x35] sm:$0x1]
    %v2713 = vld [vmem:[%s1 + $0x3d] sm:$0x1]
    %v2722 = vrot.slane %v2707, 7
    %v2723 = vsel %vm290, %v2722, %v2706
    %v2724 = vrot.slane %v2708, 6
    %v2725 = vsel %vm293, %v2724, %v2723
    %v2726 = vrot.slane %v2709, 5
    %v2727 = vsel %vm296, %v2726, %v2725
    %v2728 = vrot.slane %v2710, 4
    %v2729 = vsel %vm299, %v2728, %v2727
    %v2730 = vrot.slane %v2711, 3
    %v2731 = vsel %vm302, %v2730, %v2729
    %v2732 = vrot.slane %v2712, 2
    %v2733 = vsel %vm305, %v2732, %v2731
    %v2734 = vrot.slane %v2713, 1
    %v2735 = vsel %vm308, %v2734, %v2733
    %v2737 = vadd.f32 %v2705, %v2735
    %v2739 = vcombine.high %v2737, %v2737
    %v2741 = vunpack.c.l.s4 1966171168
    %v2742 = vunpack.c.0.s8 %v2741
    %v2743 = vlaneseq
    %v2744 = vshrl.u32 %v2743, 7
    %v2745 = vsub.s32 %v2742, %v2744
    %v2746 = vrot.slane %v2737, %v2745
    %v2748 = vunpack.c.l.s4 1966171168
    %v2749 = vunpack.c.0.s8 %v2748
    %v2750 = vlaneseq
    %v2751 = vshrl.u32 %v2750, 7
    %v2752 = vsub.s32 %v2749, %v2751
    %v2753 = vrot.slane %v2739, %v2752
    %v2754 = vcombine.high %v2746, %v2746
    %v2755 = vcombine.high %v2753, %v2753
    %v2757 = vunpack.c.l.s4 1966171168
    %v2758 = vunpack.c.0.s8 %v2757
    %v2759 = vlaneseq
    %v2760 = vshrl.u32 %v2759, 7
    %v2761 = vsub.s32 %v2758, %v2760
    %v2762 = vrot.slane %v2746, %v2761
    %v2764 = vunpack.c.l.s4 1966171168
    %v2765 = vunpack.c.0.s8 %v2764
    %v2766 = vlaneseq
    %v2767 = vshrl.u32 %v2766, 7
    %v2768 = vsub.s32 %v2765, %v2767
    %v2769 = vrot.slane %v2753, %v2768
    %v2771 = vunpack.c.l.s4 1966171168
    %v2772 = vunpack.c.0.s8 %v2771
    %v2773 = vlaneseq
    %v2774 = vshrl.u32 %v2773, 7
    %v2775 = vsub.s32 %v2772, %v2774
    %v2776 = vrot.slane %v2754, %v2775
    %v2778 = vunpack.c.l.s4 1966171168
    %v2779 = vunpack.c.0.s8 %v2778
    %v2780 = vlaneseq
    %v2781 = vshrl.u32 %v2780, 7
    %v2782 = vsub.s32 %v2779, %v2781
    %v2783 = vrot.slane %v2755, %v2782
    %v2784 = vcombine.high %v2762, %v2762
    %v2785 = vcombine.high %v2769, %v2769
    %v2786 = vcombine.high %v2776, %v2776
    %v2787 = vcombine.high %v2783, %v2783
    %2796 = vst [vmem:[#allocation7 + $0x5] sm:$0x1] %v2762
    %2797 = vst [vmem:[#allocation7 + $0xd] sm:$0x1] %v2776
    %2798 = vst [vmem:[#allocation7 + $0x15] sm:$0x1] %v2784
    %2799 = vst [vmem:[#allocation7 + $0x1d] sm:$0x1] %v2786
    %2800 = vst [vmem:[#allocation7 + $0x25] sm:$0x1] %v2769
    %2801 = vst [vmem:[#allocation7 + $0x2d] sm:$0x1] %v2783
    %2802 = vst [vmem:[#allocation7 + $0x35] sm:$0x1] %v2785
    %2803 = vst [vmem:[#allocation7 + $0x3d] sm:$0x1] %v2787
    %v2804 = vld [vmem:[%s0 + $0x6] sm:$0x1]
    %v2805 = vld [vmem:[%s0 + $0xe] sm:$0x1]
    %v2806 = vld [vmem:[%s0 + $0x16] sm:$0x1]
    %v2807 = vld [vmem:[%s0 + $0x1e] sm:$0x1]
    %v2808 = vld [vmem:[%s0 + $0x26] sm:$0x1]
    %v2809 = vld [vmem:[%s0 + $0x2e] sm:$0x1]
    %v2810 = vld [vmem:[%s0 + $0x36] sm:$0x1]
    %v2811 = vld [vmem:[%s0 + $0x3e] sm:$0x1]
    %2812 = vmatprep.subr.mxu0 %v44
    %2813 = vmatpush1.msra.mxu0 %v43
    %2814 = vmatprep.subr.mxu0 %v48
    %2815 = vmatpush1.msra.mxu0 %v47
    %2816 = vmatprep.subr.mxu0 %v52
    %2817 = vmatpush1.msra.mxu0 %v51
    %2818 = vmatprep.subr.mxu0 %v56
    %2819 = vmatpush1.msra.mxu0 %v55
    %2820 = vmatprep.subr.mxu0 %v60
    %2821 = vmatpush1.msra.mxu0 %v59
    %2822 = vmatprep.subr.mxu0 %v64
    %2823 = vmatpush1.msra.mxu0 %v63
    %2824 = vmatprep.subr.mxu0 %v68
    %2825 = vmatpush1.msra.mxu0 %v67
    %2826 = vmatprep.subr.mxu0 %v72
    %2827 = vmatpush1.msra.mxu0 %v71
    %2828 = vmatprep.subr.mxu0 %v76
    %2829 = vmatpush1.msra.mxu0 %v75
    %2830 = vmatprep.subr.mxu0 %v80
    %2831 = vmatpush1.msra.mxu0 %v79
    %2832 = vmatprep.subr.mxu0 %v84
    %2833 = vmatpush1.msra.mxu0 %v83
    %2834 = vmatprep.subr.mxu0 %v88
    %2835 = vmatpush1.msra.mxu0 %v87
    %2836 = vmatprep.subr.mxu0 %v92
    %2837 = vmatpush1.msra.mxu0 %v91
    %2838 = vmatprep.subr.mxu0 %v96
    %2839 = vmatpush1.msra.mxu0 %v95
    %2840 = vmatprep.subr.mxu0 %v100
    %2841 = vmatpush1.msra.mxu0 %v99
    %2842 = vmatprep.subr.mxu0 %v104
    %2843 = vmatpush1.msra.mxu0 %v103
    %2844 = vmatprep.subr.mxu0 0.0
    %2845 = vmatpush1.msra.mxu0 0.0
    %2846 = vmatprep.subr.mxu0 0.0
    %2847 = vmatpush1.msra.mxu0 0.0
    %2848 = vmatprep.subr.mxu0 0.0
    %2849 = vmatpush1.msra.mxu0 0.0
    %2850 = vmatprep.subr.mxu0 0.0
    %2851 = vmatpush1.msra.mxu0 0.0
    %2852 = vmatprep.subr.mxu0 0.0
    %2853 = vmatpush1.msra.mxu0 0.0
    %2854 = vmatprep.subr.mxu0 0.0
    %2855 = vmatpush1.msra.mxu0 0.0
    %2856 = vmatprep.subr.mxu0 0.0
    %2857 = vmatpush1.msra.mxu0 0.0
    %2858 = vmatprep.subr.mxu0 0.0
    %2859 = vmatpush1.msra.mxu0 0.0
    %2860 = vmatprep.subr.mxu0 0.0
    %2861 = vmatpush1.msra.mxu0 0.0
    %2862 = vmatprep.subr.mxu0 0.0
    %2863 = vmatpush1.msra.mxu0 0.0
    %2864 = vmatprep.subr.mxu0 0.0
    %2865 = vmatpush1.msra.mxu0 0.0
    %2866 = vmatprep.subr.mxu0 0.0
    %2867 = vmatpush1.msra.mxu0 0.0
    %2868 = vmatprep.subr.mxu0 0.0
    %2869 = vmatpush1.msra.mxu0 0.0
    %2870 = vmatprep.subr.mxu0 0.0
    %2871 = vmatpush1.msra.mxu0 0.0
    %2872 = vmatprep.subr.mxu0 0.0
    %2873 = vmatpush1.msra.mxu0 0.0
    %2874 = vmatprep.subr.mxu0 0.0
    %2875 = vmatpush1.msra.mxu0 0.0
    %2876 = vmatprep.mubr.f32.mxu0 0.0
    %2877 = vmatmul.mubr.f32.gmra.mrb[0].mxu0 %v2737
    %v2878 = vpop.f32.mrb[0].mxu0
    %v2879 = vadd.f32 0.0, %v2878
    %v2880 = vpop.f32.mrb[0].mxu0
    %v2881 = vadd.f32 0.0, %v2880
    %2882 = vdwg.mxu0
    %2883 = vmatprep.subr.mxu0 %v46
    %2884 = vmatpush1.msra.mxu0 %v45
    %2885 = vmatprep.subr.mxu0 %v50
    %2886 = vmatpush1.msra.mxu0 %v49
    %2887 = vmatprep.subr.mxu0 %v54
    %2888 = vmatpush1.msra.mxu0 %v53
    %2889 = vmatprep.subr.mxu0 %v58
    %2890 = vmatpush1.msra.mxu0 %v57
    %2891 = vmatprep.subr.mxu0 %v62
    %2892 = vmatpush1.msra.mxu0 %v61
    %2893 = vmatprep.subr.mxu0 %v66
    %2894 = vmatpush1.msra.mxu0 %v65
    %2895 = vmatprep.subr.mxu0 %v70
    %2896 = vmatpush1.msra.mxu0 %v69
    %2897 = vmatprep.subr.mxu0 %v74
    %2898 = vmatpush1.msra.mxu0 %v73
    %2899 = vmatprep.subr.mxu0 %v78
    %2900 = vmatpush1.msra.mxu0 %v77
    %2901 = vmatprep.subr.mxu0 %v82
    %2902 = vmatpush1.msra.mxu0 %v81
    %2903 = vmatprep.subr.mxu0 %v86
    %2904 = vmatpush1.msra.mxu0 %v85
    %2905 = vmatprep.subr.mxu0 %v90
    %2906 = vmatpush1.msra.mxu0 %v89
    %2907 = vmatprep.subr.mxu0 %v94
    %2908 = vmatpush1.msra.mxu0 %v93
    %2909 = vmatprep.subr.mxu0 %v98
    %2910 = vmatpush1.msra.mxu0 %v97
    %2911 = vmatprep.subr.mxu0 %v102
    %2912 = vmatpush1.msra.mxu0 %v101
    %2913 = vmatprep.subr.mxu0 %v106
    %2914 = vmatpush1.msra.mxu0 %v105
    %2915 = vmatprep.subr.mxu0 0.0
    %2916 = vmatpush1.msra.mxu0 0.0
    %2917 = vmatprep.subr.mxu0 0.0
    %2918 = vmatpush1.msra.mxu0 0.0
    %2919 = vmatprep.subr.mxu0 0.0
    %2920 = vmatpush1.msra.mxu0 0.0
    %2921 = vmatprep.subr.mxu0 0.0
    %2922 = vmatpush1.msra.mxu0 0.0
    %2923 = vmatprep.subr.mxu0 0.0
    %2924 = vmatpush1.msra.mxu0 0.0
    %2925 = vmatprep.subr.mxu0 0.0
    %2926 = vmatpush1.msra.mxu0 0.0
    %2927 = vmatprep.subr.mxu0 0.0
    %2928 = vmatpush1.msra.mxu0 0.0
    %2929 = vmatprep.subr.mxu0 0.0
    %2930 = vmatpush1.msra.mxu0 0.0
    %2931 = vmatprep.subr.mxu0 0.0
    %2932 = vmatpush1.msra.mxu0 0.0
    %2933 = vmatprep.subr.mxu0 0.0
    %2934 = vmatpush1.msra.mxu0 0.0
    %2935 = vmatprep.subr.mxu0 0.0
    %2936 = vmatpush1.msra.mxu0 0.0
    %2937 = vmatprep.subr.mxu0 0.0
    %2938 = vmatpush1.msra.mxu0 0.0
    %2939 = vmatprep.subr.mxu0 0.0
    %2940 = vmatpush1.msra.mxu0 0.0
    %2941 = vmatprep.subr.mxu0 0.0
    %2942 = vmatpush1.msra.mxu0 0.0
    %2943 = vmatprep.subr.mxu0 0.0
    %2944 = vmatpush1.msra.mxu0 0.0
    %2945 = vmatprep.subr.mxu0 0.0
    %2946 = vmatpush1.msra.mxu0 0.0
    %2947 = vmatprep.mubr.f32.mxu0 0.0
    %2948 = vmatmul.mubr.f32.gmra.mrb[0].mxu0 %v2737
    %v2949 = vpop.f32.mrb[0].mxu0
    %v2950 = vadd.f32 0.0, %v2949
    %v2951 = vpop.f32.mrb[0].mxu0
    %v2952 = vadd.f32 0.0, %v2951
    %2953 = vdwg.mxu0
    %v2962 = vrot.slane %v2805, 7
    %v2963 = vsel %vm290, %v2962, %v2804
    %v2964 = vrot.slane %v2806, 6
    %v2965 = vsel %vm293, %v2964, %v2963
    %v2966 = vrot.slane %v2807, 5
    %v2967 = vsel %vm296, %v2966, %v2965
    %v2968 = vrot.slane %v2808, 4
    %v2969 = vsel %vm299, %v2968, %v2967
    %v2970 = vrot.slane %v2809, 3
    %v2971 = vsel %vm302, %v2970, %v2969
    %v2972 = vrot.slane %v2810, 2
    %v2973 = vsel %vm305, %v2972, %v2971
    %v2974 = vrot.slane %v2811, 1
    %v2975 = vsel %vm308, %v2974, %v2973
    %v2976 = vsel %vm314, %v2975, 0
    %2978 = vmatprep.subr.mxu0 %v320
    %2979 = vmatpush1.msra.mxu0 %v318
    %2980 = vmatprep.subr.mxu0 0.0
    %2981 = vmatpush1.msra.mxu0 0.0
    %2982 = vmatprep.subr.mxu0 0.0
    %2983 = vmatpush1.msra.mxu0 0.0
    %2984 = vmatprep.subr.mxu0 0.0
    %2985 = vmatpush1.msra.mxu0 0.0
    %2986 = vmatprep.subr.mxu0 0.0
    %2987 = vmatpush1.msra.mxu0 0.0
    %2988 = vmatprep.subr.mxu0 0.0
    %2989 = vmatpush1.msra.mxu0 0.0
    %2990 = vmatprep.subr.mxu0 0.0
    %2991 = vmatpush1.msra.mxu0 0.0
    %2992 = vmatprep.subr.mxu0 0.0
    %2993 = vmatpush1.msra.mxu0 0.0
    %2994 = vmatprep.subr.mxu0 0.0
    %2995 = vmatpush1.msra.mxu0 0.0
    %2996 = vmatprep.subr.mxu0 0.0
    %2997 = vmatpush1.msra.mxu0 0.0
    %2998 = vmatprep.subr.mxu0 0.0
    %2999 = vmatpush1.msra.mxu0 0.0
    %3000 = vmatprep.subr.mxu0 0.0
    %3001 = vmatpush1.msra.mxu0 0.0
    %3002 = vmatprep.subr.mxu0 0.0
    %3003 = vmatpush1.msra.mxu0 0.0
    %3004 = vmatprep.subr.mxu0 0.0
    %3005 = vmatpush1.msra.mxu0 0.0
    %3006 = vmatprep.subr.mxu0 0.0
    %3007 = vmatpush1.msra.mxu0 0.0
    %3008 = vmatprep.subr.mxu0 0.0
    %3009 = vmatpush1.msra.mxu0 0.0
    %3010 = vmatprep.subr.mxu0 0.0
    %3011 = vmatpush1.msra.mxu0 0.0
    %3012 = vmatprep.subr.mxu0 0.0
    %3013 = vmatpush1.msra.mxu0 0.0
    %3014 = vmatprep.subr.mxu0 0.0
    %3015 = vmatpush1.msra.mxu0 0.0
    %3016 = vmatprep.subr.mxu0 0.0
    %3017 = vmatpush1.msra.mxu0 0.0
    %3018 = vmatprep.subr.mxu0 0.0
    %3019 = vmatpush1.msra.mxu0 0.0
    %3020 = vmatprep.subr.mxu0 0.0
    %3021 = vmatpush1.msra.mxu0 0.0
    %3022 = vmatprep.subr.mxu0 0.0
    %3023 = vmatpush1.msra.mxu0 0.0
    %3024 = vmatprep.subr.mxu0 0.0
    %3025 = vmatpush1.msra.mxu0 0.0
    %3026 = vmatprep.subr.mxu0 0.0
    %3027 = vmatpush1.msra.mxu0 0.0
    %3028 = vmatprep.subr.mxu0 0.0
    %3029 = vmatpush1.msra.mxu0 0.0
    %3030 = vmatprep.subr.mxu0 0.0
    %3031 = vmatpush1.msra.mxu0 0.0
    %3032 = vmatprep.subr.mxu0 0.0
    %3033 = vmatpush1.msra.mxu0 0.0
    %3034 = vmatprep.subr.mxu0 0.0
    %3035 = vmatpush1.msra.mxu0 0.0
    %3036 = vmatprep.subr.mxu0 0.0
    %3037 = vmatpush1.msra.mxu0 0.0
    %3038 = vmatprep.subr.mxu0 0.0
    %3039 = vmatpush1.msra.mxu0 0.0
    %3040 = vmatprep.subr.mxu0 0.0
    %3041 = vmatpush1.msra.mxu0 0.0
    %3042 = vmatprep.mubr.f32.mxu0 0.0
    %3043 = vmatmul.mubr.f32.gmra.mrb[0].mxu0 %v2976
    %v3044 = vpop.f32.mrb[0].mxu0
    %v3045 = vadd.f32 %v2879, %v3044
    %v3046 = vpop.f32.mrb[0].mxu0
    %v3047 = vadd.f32 %v2881, %v3046
    %3048 = vdwg.mxu0
    %3049 = vmatprep.subr.mxu0 %v324
    %3050 = vmatpush1.msra.mxu0 %v322
    %3051 = vmatprep.subr.mxu0 0.0
    %3052 = vmatpush1.msra.mxu0 0.0
    %3053 = vmatprep.subr.mxu0 0.0
    %3054 = vmatpush1.msra.mxu0 0.0
    %3055 = vmatprep.subr.mxu0 0.0
    %3056 = vmatpush1.msra.mxu0 0.0
    %3057 = vmatprep.subr.mxu0 0.0
    %3058 = vmatpush1.msra.mxu0 0.0
    %3059 = vmatprep.subr.mxu0 0.0
    %3060 = vmatpush1.msra.mxu0 0.0
    %3061 = vmatprep.subr.mxu0 0.0
    %3062 = vmatpush1.msra.mxu0 0.0
    %3063 = vmatprep.subr.mxu0 0.0
    %3064 = vmatpush1.msra.mxu0 0.0
    %3065 = vmatprep.subr.mxu0 0.0
    %3066 = vmatpush1.msra.mxu0 0.0
    %3067 = vmatprep.subr.mxu0 0.0
    %3068 = vmatpush1.msra.mxu0 0.0
    %3069 = vmatprep.subr.mxu0 0.0
    %3070 = vmatpush1.msra.mxu0 0.0
    %3071 = vmatprep.subr.mxu0 0.0
    %3072 = vmatpush1.msra.mxu0 0.0
    %3073 = vmatprep.subr.mxu0 0.0
    %3074 = vmatpush1.msra.mxu0 0.0
    %3075 = vmatprep.subr.mxu0 0.0
    %3076 = vmatpush1.msra.mxu0 0.0
    %3077 = vmatprep.subr.mxu0 0.0
    %3078 = vmatpush1.msra.mxu0 0.0
    %3079 = vmatprep.subr.mxu0 0.0
    %3080 = vmatpush1.msra.mxu0 0.0
    %3081 = vmatprep.subr.mxu0 0.0
    %3082 = vmatpush1.msra.mxu0 0.0
    %3083 = vmatprep.subr.mxu0 0.0
    %3084 = vmatpush1.msra.mxu0 0.0
    %3085 = vmatprep.subr.mxu0 0.0
    %3086 = vmatpush1.msra.mxu0 0.0
    %3087 = vmatprep.subr.mxu0 0.0
    %3088 = vmatpush1.msra.mxu0 0.0
    %3089 = vmatprep.subr.mxu0 0.0
    %3090 = vmatpush1.msra.mxu0 0.0
    %3091 = vmatprep.subr.mxu0 0.0
    %3092 = vmatpush1.msra.mxu0 0.0
    %3093 = vmatprep.subr.mxu0 0.0
    %3094 = vmatpush1.msra.mxu0 0.0
    %3095 = vmatprep.subr.mxu0 0.0
    %3096 = vmatpush1.msra.mxu0 0.0
    %3097 = vmatprep.subr.mxu0 0.0
    %3098 = vmatpush1.msra.mxu0 0.0
    %3099 = vmatprep.subr.mxu0 0.0
    %3100 = vmatpush1.msra.mxu0 0.0
    %3101 = vmatprep.subr.mxu0 0.0
    %3102 = vmatpush1.msra.mxu0 0.0
    %3103 = vmatprep.subr.mxu0 0.0
    %3104 = vmatpush1.msra.mxu0 0.0
    %3105 = vmatprep.subr.mxu0 0.0
    %3106 = vmatpush1.msra.mxu0 0.0
    %3107 = vmatprep.subr.mxu0 0.0
    %3108 = vmatpush1.msra.mxu0 0.0
    %3109 = vmatprep.subr.mxu0 0.0
    %3110 = vmatpush1.msra.mxu0 0.0
    %3111 = vmatprep.subr.mxu0 0.0
    %3112 = vmatpush1.msra.mxu0 0.0
    %3113 = vmatprep.mubr.f32.mxu0 0.0
    %3114 = vmatmul.mubr.f32.gmra.mrb[0].mxu0 %v2976
    %v3115 = vpop.f32.mrb[0].mxu0
    %v3116 = vadd.f32 %v2950, %v3115
    %v3117 = vpop.f32.mrb[0].mxu0
    %v3118 = vadd.f32 %v2952, %v3117
    %3119 = vdwg.mxu0
    %v3120 = vadd.f32 %v3045, %v112
    %v3121 = vadd.f32 %v3047, %v116
    %v3122 = vadd.f32 %v3116, %v120
    %v3123 = vadd.f32 %v3118, %v124
    %v3124 = vxor.u32 %v3120, 2147483648
    %v3125 = vmul.f32 %v3124, 1.442695
    %v3126 = vpow.pop %v3125
    %v3127 = vadd.f32 %v3126, 1.0
    %v3128 = vrcp.pop %v3127
    %v3129 = vmul.f32 1.0, %v3128
    %v3130 = vxor.u32 %v3121, 2147483648
    %v3131 = vmul.f32 %v3130, 1.442695
    %v3132 = vpow.pop %v3131
    %v3133 = vadd.f32 %v3132, 1.0
    %v3134 = vrcp.pop %v3133
    %v3135 = vmul.f32 1.0, %v3134
    %v3136 = vxor.u32 %v3122, 2147483648
    %v3137 = vmul.f32 %v3136, 1.442695
    %v3138 = vpow.pop %v3137
    %v3139 = vadd.f32 %v3138, 1.0
    %v3140 = vrcp.pop %v3139
    %v3141 = vmul.f32 1.0, %v3140
    %v3142 = vtanh.pop %v3123
    %v3143 = vmul.f32 %v3129, %v3142
    %v3144 = vmul.f32 %v3141, %v2703
    %v3145 = vadd.f32 %v3143, %v3144
    %v3146 = vtanh.pop %v3145
    %v3147 = vmul.f32 %v3135, %v3146
    %v3148 = vld [vmem:[%s1 + $0x6] sm:$0x1]
    %v3149 = vld [vmem:[%s1 + $0xe] sm:$0x1]
    %v3150 = vld [vmem:[%s1 + $0x16] sm:$0x1]
    %v3151 = vld [vmem:[%s1 + $0x1e] sm:$0x1]
    %v3152 = vld [vmem:[%s1 + $0x26] sm:$0x1]
    %v3153 = vld [vmem:[%s1 + $0x2e] sm:$0x1]
    %v3154 = vld [vmem:[%s1 + $0x36] sm:$0x1]
    %v3155 = vld [vmem:[%s1 + $0x3e] sm:$0x1]
    %v3164 = vrot.slane %v3149, 7
    %v3165 = vsel %vm290, %v3164, %v3148
    %v3166 = vrot.slane %v3150, 6
    %v3167 = vsel %vm293, %v3166, %v3165
    %v3168 = vrot.slane %v3151, 5
    %v3169 = vsel %vm296, %v3168, %v3167
    %v3170 = vrot.slane %v3152, 4
    %v3171 = vsel %vm299, %v3170, %v3169
    %v3172 = vrot.slane %v3153, 3
    %v3173 = vsel %vm302, %v3172, %v3171
    %v3174 = vrot.slane %v3154, 2
    %v3175 = vsel %vm305, %v3174, %v3173
    %v3176 = vrot.slane %v3155, 1
    %v3177 = vsel %vm308, %v3176, %v3175
    %v3179 = vadd.f32 %v3147, %v3177
    %v3181 = vcombine.high %v3179, %v3179
    %v3183 = vunpack.c.l.s4 1966171168
    %v3184 = vunpack.c.0.s8 %v3183
    %v3185 = vlaneseq
    %v3186 = vshrl.u32 %v3185, 7
    %v3187 = vsub.s32 %v3184, %v3186
    %v3188 = vrot.slane %v3179, %v3187
    %v3190 = vunpack.c.l.s4 1966171168
    %v3191 = vunpack.c.0.s8 %v3190
    %v3192 = vlaneseq
    %v3193 = vshrl.u32 %v3192, 7
    %v3194 = vsub.s32 %v3191, %v3193
    %v3195 = vrot.slane %v3181, %v3194
    %v3196 = vcombine.high %v3188, %v3188
    %v3197 = vcombine.high %v3195, %v3195
    %v3199 = vunpack.c.l.s4 1966171168
    %v3200 = vunpack.c.0.s8 %v3199
    %v3201 = vlaneseq
    %v3202 = vshrl.u32 %v3201, 7
    %v3203 = vsub.s32 %v3200, %v3202
    %v3204 = vrot.slane %v3188, %v3203
    %v3206 = vunpack.c.l.s4 1966171168
    %v3207 = vunpack.c.0.s8 %v3206
    %v3208 = vlaneseq
    %v3209 = vshrl.u32 %v3208, 7
    %v3210 = vsub.s32 %v3207, %v3209
    %v3211 = vrot.slane %v3195, %v3210
    %v3213 = vunpack.c.l.s4 1966171168
    %v3214 = vunpack.c.0.s8 %v3213
    %v3215 = vlaneseq
    %v3216 = vshrl.u32 %v3215, 7
    %v3217 = vsub.s32 %v3214, %v3216
    %v3218 = vrot.slane %v3196, %v3217
    %v3220 = vunpack.c.l.s4 1966171168
    %v3221 = vunpack.c.0.s8 %v3220
    %v3222 = vlaneseq
    %v3223 = vshrl.u32 %v3222, 7
    %v3224 = vsub.s32 %v3221, %v3223
    %v3225 = vrot.slane %v3197, %v3224
    %v3226 = vcombine.high %v3204, %v3204
    %v3227 = vcombine.high %v3211, %v3211
    %v3228 = vcombine.high %v3218, %v3218
    %v3229 = vcombine.high %v3225, %v3225
    %3238 = vst [vmem:[#allocation7 + $0x6] sm:$0x1] %v3204
    %3239 = vst [vmem:[#allocation7 + $0xe] sm:$0x1] %v3218
    %3240 = vst [vmem:[#allocation7 + $0x16] sm:$0x1] %v3226
    %3241 = vst [vmem:[#allocation7 + $0x1e] sm:$0x1] %v3228
    %3242 = vst [vmem:[#allocation7 + $0x26] sm:$0x1] %v3211
    %3243 = vst [vmem:[#allocation7 + $0x2e] sm:$0x1] %v3225
    %3244 = vst [vmem:[#allocation7 + $0x36] sm:$0x1] %v3227
    %3245 = vst [vmem:[#allocation7 + $0x3e] sm:$0x1] %v3229
    %v3246 = vld [vmem:[%s0 + $0x7] sm:$0x1]
    %v3247 = vld [vmem:[%s0 + $0xf] sm:$0x1]
    %v3248 = vld [vmem:[%s0 + $0x17] sm:$0x1]
    %v3249 = vld [vmem:[%s0 + $0x1f] sm:$0x1]
    %v3250 = vld [vmem:[%s0 + $0x27] sm:$0x1]
    %v3251 = vld [vmem:[%s0 + $0x2f] sm:$0x1]
    %v3252 = vld [vmem:[%s0 + $0x37] sm:$0x1]
    %v3253 = vld [vmem:[%s0 + $0x3f] sm:$0x1]
    %3254 = vmatprep.subr.mxu0 %v44
    %3255 = vmatpush1.msra.mxu0 %v43
    %3256 = vmatprep.subr.mxu0 %v48
    %3257 = vmatpush1.msra.mxu0 %v47
    %3258 = vmatprep.subr.mxu0 %v52
    %3259 = vmatpush1.msra.mxu0 %v51
    %3260 = vmatprep.subr.mxu0 %v56
    %3261 = vmatpush1.msra.mxu0 %v55
    %3262 = vmatprep.subr.mxu0 %v60
    %3263 = vmatpush1.msra.mxu0 %v59
    %3264 = vmatprep.subr.mxu0 %v64
    %3265 = vmatpush1.msra.mxu0 %v63
    %3266 = vmatprep.subr.mxu0 %v68
    %3267 = vmatpush1.msra.mxu0 %v67
    %3268 = vmatprep.subr.mxu0 %v72
    %3269 = vmatpush1.msra.mxu0 %v71
    %3270 = vmatprep.subr.mxu0 %v76
    %3271 = vmatpush1.msra.mxu0 %v75
    %3272 = vmatprep.subr.mxu0 %v80
    %3273 = vmatpush1.msra.mxu0 %v79
    %3274 = vmatprep.subr.mxu0 %v84
    %3275 = vmatpush1.msra.mxu0 %v83
    %3276 = vmatprep.subr.mxu0 %v88
    %3277 = vmatpush1.msra.mxu0 %v87
    %3278 = vmatprep.subr.mxu0 %v92
    %3279 = vmatpush1.msra.mxu0 %v91
    %3280 = vmatprep.subr.mxu0 %v96
    %3281 = vmatpush1.msra.mxu0 %v95
    %3282 = vmatprep.subr.mxu0 %v100
    %3283 = vmatpush1.msra.mxu0 %v99
    %3284 = vmatprep.subr.mxu0 %v104
    %3285 = vmatpush1.msra.mxu0 %v103
    %3286 = vmatprep.subr.mxu0 0.0
    %3287 = vmatpush1.msra.mxu0 0.0
    %3288 = vmatprep.subr.mxu0 0.0
    %3289 = vmatpush1.msra.mxu0 0.0
    %3290 = vmatprep.subr.mxu0 0.0
    %3291 = vmatpush1.msra.mxu0 0.0
    %3292 = vmatprep.subr.mxu0 0.0
    %3293 = vmatpush1.msra.mxu0 0.0
    %3294 = vmatprep.subr.mxu0 0.0
    %3295 = vmatpush1.msra.mxu0 0.0
    %3296 = vmatprep.subr.mxu0 0.0
    %3297 = vmatpush1.msra.mxu0 0.0
    %3298 = vmatprep.subr.mxu0 0.0
    %3299 = vmatpush1.msra.mxu0 0.0
    %3300 = vmatprep.subr.mxu0 0.0
    %3301 = vmatpush1.msra.mxu0 0.0
    %3302 = vmatprep.subr.mxu0 0.0
    %3303 = vmatpush1.msra.mxu0 0.0
    %3304 = vmatprep.subr.mxu0 0.0
    %3305 = vmatpush1.msra.mxu0 0.0
    %3306 = vmatprep.subr.mxu0 0.0
    %3307 = vmatpush1.msra.mxu0 0.0
    %3308 = vmatprep.subr.mxu0 0.0
    %3309 = vmatpush1.msra.mxu0 0.0
    %3310 = vmatprep.subr.mxu0 0.0
    %3311 = vmatpush1.msra.mxu0 0.0
    %3312 = vmatprep.subr.mxu0 0.0
    %3313 = vmatpush1.msra.mxu0 0.0
    %3314 = vmatprep.subr.mxu0 0.0
    %3315 = vmatpush1.msra.mxu0 0.0
    %3316 = vmatprep.subr.mxu0 0.0
    %3317 = vmatpush1.msra.mxu0 0.0
    %3318 = vmatprep.mubr.f32.mxu0 0.0
    %3319 = vmatmul.mubr.f32.gmra.mrb[0].mxu0 %v3179
    %v3320 = vpop.f32.mrb[0].mxu0
    %v3321 = vadd.f32 0.0, %v3320
    %v3322 = vpop.f32.mrb[0].mxu0
    %v3323 = vadd.f32 0.0, %v3322
    %3324 = vdwg.mxu0
    %3325 = vmatprep.subr.mxu0 %v46
    %3326 = vmatpush1.msra.mxu0 %v45
    %3327 = vmatprep.subr.mxu0 %v50
    %3328 = vmatpush1.msra.mxu0 %v49
    %3329 = vmatprep.subr.mxu0 %v54
    %3330 = vmatpush1.msra.mxu0 %v53
    %3331 = vmatprep.subr.mxu0 %v58
    %3332 = vmatpush1.msra.mxu0 %v57
    %3333 = vmatprep.subr.mxu0 %v62
    %3334 = vmatpush1.msra.mxu0 %v61
    %3335 = vmatprep.subr.mxu0 %v66
    %3336 = vmatpush1.msra.mxu0 %v65
    %3337 = vmatprep.subr.mxu0 %v70
    %3338 = vmatpush1.msra.mxu0 %v69
    %3339 = vmatprep.subr.mxu0 %v74
    %3340 = vmatpush1.msra.mxu0 %v73
    %3341 = vmatprep.subr.mxu0 %v78
    %3342 = vmatpush1.msra.mxu0 %v77
    %3343 = vmatprep.subr.mxu0 %v82
    %3344 = vmatpush1.msra.mxu0 %v81
    %3345 = vmatprep.subr.mxu0 %v86
    %3346 = vmatpush1.msra.mxu0 %v85
    %3347 = vmatprep.subr.mxu0 %v90
    %3348 = vmatpush1.msra.mxu0 %v89
    %3349 = vmatprep.subr.mxu0 %v94
    %3350 = vmatpush1.msra.mxu0 %v93
    %3351 = vmatprep.subr.mxu0 %v98
    %3352 = vmatpush1.msra.mxu0 %v97
    %3353 = vmatprep.subr.mxu0 %v102
    %3354 = vmatpush1.msra.mxu0 %v101
    %3355 = vmatprep.subr.mxu0 %v106
    %3356 = vmatpush1.msra.mxu0 %v105
    %3357 = vmatprep.subr.mxu0 0.0
    %3358 = vmatpush1.msra.mxu0 0.0
    %3359 = vmatprep.subr.mxu0 0.0
    %3360 = vmatpush1.msra.mxu0 0.0
    %3361 = vmatprep.subr.mxu0 0.0
    %3362 = vmatpush1.msra.mxu0 0.0
    %3363 = vmatprep.subr.mxu0 0.0
    %3364 = vmatpush1.msra.mxu0 0.0
    %3365 = vmatprep.subr.mxu0 0.0
    %3366 = vmatpush1.msra.mxu0 0.0
    %3367 = vmatprep.subr.mxu0 0.0
    %3368 = vmatpush1.msra.mxu0 0.0
    %3369 = vmatprep.subr.mxu0 0.0
    %3370 = vmatpush1.msra.mxu0 0.0
    %3371 = vmatprep.subr.mxu0 0.0
    %3372 = vmatpush1.msra.mxu0 0.0
    %3373 = vmatprep.subr.mxu0 0.0
    %3374 = vmatpush1.msra.mxu0 0.0
    %3375 = vmatprep.subr.mxu0 0.0
    %3376 = vmatpush1.msra.mxu0 0.0
    %3377 = vmatprep.subr.mxu0 0.0
    %3378 = vmatpush1.msra.mxu0 0.0
    %3379 = vmatprep.subr.mxu0 0.0
    %3380 = vmatpush1.msra.mxu0 0.0
    %3381 = vmatprep.subr.mxu0 0.0
    %3382 = vmatpush1.msra.mxu0 0.0
    %3383 = vmatprep.subr.mxu0 0.0
    %3384 = vmatpush1.msra.mxu0 0.0
    %3385 = vmatprep.subr.mxu0 0.0
    %3386 = vmatpush1.msra.mxu0 0.0
    %3387 = vmatprep.subr.mxu0 0.0
    %3388 = vmatpush1.msra.mxu0 0.0
    %3389 = vmatprep.mubr.f32.mxu0 0.0
    %3390 = vmatmul.mubr.f32.gmra.mrb[0].mxu0 %v3179
    %v3391 = vpop.f32.mrb[0].mxu0
    %v3392 = vadd.f32 0.0, %v3391
    %v3393 = vpop.f32.mrb[0].mxu0
    %v3394 = vadd.f32 0.0, %v3393
    %3395 = vdwg.mxu0
    %v3404 = vrot.slane %v3247, 7
    %v3405 = vsel %vm290, %v3404, %v3246
    %v3406 = vrot.slane %v3248, 6
    %v3407 = vsel %vm293, %v3406, %v3405
    %v3408 = vrot.slane %v3249, 5
    %v3409 = vsel %vm296, %v3408, %v3407
    %v3410 = vrot.slane %v3250, 4
    %v3411 = vsel %vm299, %v3410, %v3409
    %v3412 = vrot.slane %v3251, 3
    %v3413 = vsel %vm302, %v3412, %v3411
    %v3414 = vrot.slane %v3252, 2
    %v3415 = vsel %vm305, %v3414, %v3413
    %v3416 = vrot.slane %v3253, 1
    %v3417 = vsel %vm308, %v3416, %v3415
    %v3418 = vsel %vm314, %v3417, 0
    %3420 = vmatprep.subr.mxu0 %v320
    %3421 = vmatpush1.msra.mxu0 %v318
    %3422 = vmatprep.subr.mxu0 0.0
    %3423 = vmatpush1.msra.mxu0 0.0
    %3424 = vmatprep.subr.mxu0 0.0
    %3425 = vmatpush1.msra.mxu0 0.0
    %3426 = vmatprep.subr.mxu0 0.0
    %3427 = vmatpush1.msra.mxu0 0.0
    %3428 = vmatprep.subr.mxu0 0.0
    %3429 = vmatpush1.msra.mxu0 0.0
    %3430 = vmatprep.subr.mxu0 0.0
    %3431 = vmatpush1.msra.mxu0 0.0
    %3432 = vmatprep.subr.mxu0 0.0
    %3433 = vmatpush1.msra.mxu0 0.0
    %3434 = vmatprep.subr.mxu0 0.0
    %3435 = vmatpush1.msra.mxu0 0.0
    %3436 = vmatprep.subr.mxu0 0.0
    %3437 = vmatpush1.msra.mxu0 0.0
    %3438 = vmatprep.subr.mxu0 0.0
    %3439 = vmatpush1.msra.mxu0 0.0
    %3440 = vmatprep.subr.mxu0 0.0
    %3441 = vmatpush1.msra.mxu0 0.0
    %3442 = vmatprep.subr.mxu0 0.0
    %3443 = vmatpush1.msra.mxu0 0.0
    %3444 = vmatprep.subr.mxu0 0.0
    %3445 = vmatpush1.msra.mxu0 0.0
    %3446 = vmatprep.subr.mxu0 0.0
    %3447 = vmatpush1.msra.mxu0 0.0
    %3448 = vmatprep.subr.mxu0 0.0
    %3449 = vmatpush1.msra.mxu0 0.0
    %3450 = vmatprep.subr.mxu0 0.0
    %3451 = vmatpush1.msra.mxu0 0.0
    %3452 = vmatprep.subr.mxu0 0.0
    %3453 = vmatpush1.msra.mxu0 0.0
    %3454 = vmatprep.subr.mxu0 0.0
    %3455 = vmatpush1.msra.mxu0 0.0
    %3456 = vmatprep.subr.mxu0 0.0
    %3457 = vmatpush1.msra.mxu0 0.0
    %3458 = vmatprep.subr.mxu0 0.0
    %3459 = vmatpush1.msra.mxu0 0.0
    %3460 = vmatprep.subr.mxu0 0.0
    %3461 = vmatpush1.msra.mxu0 0.0
    %3462 = vmatprep.subr.mxu0 0.0
    %3463 = vmatpush1.msra.mxu0 0.0
    %3464 = vmatprep.subr.mxu0 0.0
    %3465 = vmatpush1.msra.mxu0 0.0
    %3466 = vmatprep.subr.mxu0 0.0
    %3467 = vmatpush1.msra.mxu0 0.0
    %3468 = vmatprep.subr.mxu0 0.0
    %3469 = vmatpush1.msra.mxu0 0.0
    %3470 = vmatprep.subr.mxu0 0.0
    %3471 = vmatpush1.msra.mxu0 0.0
    %3472 = vmatprep.subr.mxu0 0.0
    %3473 = vmatpush1.msra.mxu0 0.0
    %3474 = vmatprep.subr.mxu0 0.0
    %3475 = vmatpush1.msra.mxu0 0.0
    %3476 = vmatprep.subr.mxu0 0.0
    %3477 = vmatpush1.msra.mxu0 0.0
    %3478 = vmatprep.subr.mxu0 0.0
    %3479 = vmatpush1.msra.mxu0 0.0
    %3480 = vmatprep.subr.mxu0 0.0
    %3481 = vmatpush1.msra.mxu0 0.0
    %3482 = vmatprep.subr.mxu0 0.0
    %3483 = vmatpush1.msra.mxu0 0.0
    %3484 = vmatprep.mubr.f32.mxu0 0.0
    %3485 = vmatmul.mubr.f32.gmra.mrb[0].mxu0 %v3418
    %v3486 = vpop.f32.mrb[0].mxu0
    %v3487 = vadd.f32 %v3321, %v3486
    %v3488 = vpop.f32.mrb[0].mxu0
    %v3489 = vadd.f32 %v3323, %v3488
    %3490 = vdwg.mxu0
    %3491 = vmatprep.subr.mxu0 %v324
    %3492 = vmatpush1.msra.mxu0 %v322
    %3493 = vmatprep.subr.mxu0 0.0
    %3494 = vmatpush1.msra.mxu0 0.0
    %3495 = vmatprep.subr.mxu0 0.0
    %3496 = vmatpush1.msra.mxu0 0.0
    %3497 = vmatprep.subr.mxu0 0.0
    %3498 = vmatpush1.msra.mxu0 0.0
    %3499 = vmatprep.subr.mxu0 0.0
    %3500 = vmatpush1.msra.mxu0 0.0
    %3501 = vmatprep.subr.mxu0 0.0
    %3502 = vmatpush1.msra.mxu0 0.0
    %3503 = vmatprep.subr.mxu0 0.0
    %3504 = vmatpush1.msra.mxu0 0.0
    %3505 = vmatprep.subr.mxu0 0.0
    %3506 = vmatpush1.msra.mxu0 0.0
    %3507 = vmatprep.subr.mxu0 0.0
    %3508 = vmatpush1.msra.mxu0 0.0
    %3509 = vmatprep.subr.mxu0 0.0
    %3510 = vmatpush1.msra.mxu0 0.0
    %3511 = vmatprep.subr.mxu0 0.0
    %3512 = vmatpush1.msra.mxu0 0.0
    %3513 = vmatprep.subr.mxu0 0.0
    %3514 = vmatpush1.msra.mxu0 0.0
    %3515 = vmatprep.subr.mxu0 0.0
    %3516 = vmatpush1.msra.mxu0 0.0
    %3517 = vmatprep.subr.mxu0 0.0
    %3518 = vmatpush1.msra.mxu0 0.0
    %3519 = vmatprep.subr.mxu0 0.0
    %3520 = vmatpush1.msra.mxu0 0.0
    %3521 = vmatprep.subr.mxu0 0.0
    %3522 = vmatpush1.msra.mxu0 0.0
    %3523 = vmatprep.subr.mxu0 0.0
    %3524 = vmatpush1.msra.mxu0 0.0
    %3525 = vmatprep.subr.mxu0 0.0
    %3526 = vmatpush1.msra.mxu0 0.0
    %3527 = vmatprep.subr.mxu0 0.0
    %3528 = vmatpush1.msra.mxu0 0.0
    %3529 = vmatprep.subr.mxu0 0.0
    %3530 = vmatpush1.msra.mxu0 0.0
    %3531 = vmatprep.subr.mxu0 0.0
    %3532 = vmatpush1.msra.mxu0 0.0
    %3533 = vmatprep.subr.mxu0 0.0
    %3534 = vmatpush1.msra.mxu0 0.0
    %3535 = vmatprep.subr.mxu0 0.0
    %3536 = vmatpush1.msra.mxu0 0.0
    %3537 = vmatprep.subr.mxu0 0.0
    %3538 = vmatpush1.msra.mxu0 0.0
    %3539 = vmatprep.subr.mxu0 0.0
    %3540 = vmatpush1.msra.mxu0 0.0
    %3541 = vmatprep.subr.mxu0 0.0
    %3542 = vmatpush1.msra.mxu0 0.0
    %3543 = vmatprep.subr.mxu0 0.0
    %3544 = vmatpush1.msra.mxu0 0.0
    %3545 = vmatprep.subr.mxu0 0.0
    %3546 = vmatpush1.msra.mxu0 0.0
    %3547 = vmatprep.subr.mxu0 0.0
    %3548 = vmatpush1.msra.mxu0 0.0
    %3549 = vmatprep.subr.mxu0 0.0
    %3550 = vmatpush1.msra.mxu0 0.0
    %3551 = vmatprep.subr.mxu0 0.0
    %3552 = vmatpush1.msra.mxu0 0.0
    %3553 = vmatprep.subr.mxu0 0.0
    %3554 = vmatpush1.msra.mxu0 0.0
    %3555 = vmatprep.mubr.f32.mxu0 0.0
    %3556 = vmatmul.mubr.f32.gmra.mrb[0].mxu0 %v3418
    %v3557 = vpop.f32.mrb[0].mxu0
    %v3558 = vadd.f32 %v3392, %v3557
    %v3559 = vpop.f32.mrb[0].mxu0
    %v3560 = vadd.f32 %v3394, %v3559
    %3561 = vdwg.mxu0
    %v3562 = vadd.f32 %v3487, %v112
    %v3563 = vadd.f32 %v3489, %v116
    %v3564 = vadd.f32 %v3558, %v120
    %v3565 = vadd.f32 %v3560, %v124
    %v3566 = vxor.u32 %v3562, 2147483648
    %v3567 = vmul.f32 %v3566, 1.442695
    %v3568 = vpow.pop %v3567
    %v3569 = vadd.f32 %v3568, 1.0
    %v3570 = vrcp.pop %v3569
    %v3571 = vmul.f32 1.0, %v3570
    %v3572 = vxor.u32 %v3563, 2147483648
    %v3573 = vmul.f32 %v3572, 1.442695
    %v3574 = vpow.pop %v3573
    %v3575 = vadd.f32 %v3574, 1.0
    %v3576 = vrcp.pop %v3575
    %v3577 = vmul.f32 1.0, %v3576
    %v3578 = vxor.u32 %v3564, 2147483648
    %v3579 = vmul.f32 %v3578, 1.442695
    %v3580 = vpow.pop %v3579
    %v3581 = vadd.f32 %v3580, 1.0
    %v3582 = vrcp.pop %v3581
    %v3583 = vmul.f32 1.0, %v3582
    %v3584 = vtanh.pop %v3565
    %v3585 = vmul.f32 %v3571, %v3584
    %v3586 = vmul.f32 %v3583, %v3145
    %v3587 = vadd.f32 %v3585, %v3586
    %v3588 = vtanh.pop %v3587
    %v3589 = vmul.f32 %v3577, %v3588
    %v3590 = vld [vmem:[%s1 + $0x7] sm:$0x1]
    %v3591 = vld [vmem:[%s1 + $0xf] sm:$0x1]
    %v3592 = vld [vmem:[%s1 + $0x17] sm:$0x1]
    %v3593 = vld [vmem:[%s1 + $0x1f] sm:$0x1]
    %v3594 = vld [vmem:[%s1 + $0x27] sm:$0x1]
    %v3595 = vld [vmem:[%s1 + $0x2f] sm:$0x1]
    %v3596 = vld [vmem:[%s1 + $0x37] sm:$0x1]
    %v3597 = vld [vmem:[%s1 + $0x3f] sm:$0x1]
    %v3606 = vrot.slane %v3591, 7
    %v3607 = vsel %vm290, %v3606, %v3590
    %v3608 = vrot.slane %v3592, 6
    %v3609 = vsel %vm293, %v3608, %v3607
    %v3610 = vrot.slane %v3593, 5
    %v3611 = vsel %vm296, %v3610, %v3609
    %v3612 = vrot.slane %v3594, 4
    %v3613 = vsel %vm299, %v3612, %v3611
    %v3614 = vrot.slane %v3595, 3
    %v3615 = vsel %vm302, %v3614, %v3613
    %v3616 = vrot.slane %v3596, 2
    %v3617 = vsel %vm305, %v3616, %v3615
    %v3618 = vrot.slane %v3597, 1
    %v3619 = vsel %vm308, %v3618, %v3617
    %v3621 = vadd.f32 %v3589, %v3619
    %v3623 = vcombine.high %v3621, %v3621
    %v3625 = vunpack.c.l.s4 1966171168
    %v3626 = vunpack.c.0.s8 %v3625
    %v3627 = vlaneseq
    %v3628 = vshrl.u32 %v3627, 7
    %v3629 = vsub.s32 %v3626, %v3628
    %v3630 = vrot.slane %v3621, %v3629
    %v3632 = vunpack.c.l.s4 1966171168
    %v3633 = vunpack.c.0.s8 %v3632
    %v3634 = vlaneseq
    %v3635 = vshrl.u32 %v3634, 7
    %v3636 = vsub.s32 %v3633, %v3635
    %v3637 = vrot.slane %v3623, %v3636
    %v3638 = vcombine.high %v3630, %v3630
    %v3639 = vcombine.high %v3637, %v3637
    %v3641 = vunpack.c.l.s4 1966171168
    %v3642 = vunpack.c.0.s8 %v3641
    %v3643 = vlaneseq
    %v3644 = vshrl.u32 %v3643, 7
    %v3645 = vsub.s32 %v3642, %v3644
    %v3646 = vrot.slane %v3630, %v3645
    %v3648 = vunpack.c.l.s4 1966171168
    %v3649 = vunpack.c.0.s8 %v3648
    %v3650 = vlaneseq
    %v3651 = vshrl.u32 %v3650, 7
    %v3652 = vsub.s32 %v3649, %v3651
    %v3653 = vrot.slane %v3637, %v3652
    %v3655 = vunpack.c.l.s4 1966171168
    %v3656 = vunpack.c.0.s8 %v3655
    %v3657 = vlaneseq
    %v3658 = vshrl.u32 %v3657, 7
    %v3659 = vsub.s32 %v3656, %v3658
    %v3660 = vrot.slane %v3638, %v3659
    %v3662 = vunpack.c.l.s4 1966171168
    %v3663 = vunpack.c.0.s8 %v3662
    %v3664 = vlaneseq
    %v3665 = vshrl.u32 %v3664, 7
    %v3666 = vsub.s32 %v3663, %v3665
    %v3667 = vrot.slane %v3639, %v3666
    %v3668 = vcombine.high %v3646, %v3646
    %v3669 = vcombine.high %v3653, %v3653
    %v3670 = vcombine.high %v3660, %v3660
    %v3671 = vcombine.high %v3667, %v3667
    %3680 = vst [vmem:[#allocation7 + $0x7] sm:$0x1] %v3646
    %3681 = vst [vmem:[#allocation7 + $0xf] sm:$0x1] %v3660
    %3682 = vst [vmem:[#allocation7 + $0x17] sm:$0x1] %v3668
    %3683 = vst [vmem:[#allocation7 + $0x1f] sm:$0x1] %v3670
    %3684 = vst [vmem:[#allocation7 + $0x27] sm:$0x1] %v3653
    %3685 = vst [vmem:[#allocation7 + $0x2f] sm:$0x1] %v3667
    %3686 = vst [vmem:[#allocation7 + $0x37] sm:$0x1] %v3669
    %3687 = vst [vmem:[#allocation7 + $0x3f] sm:$0x1] %v3671
    %3688 = vst [vmem:[#allocation2] sm:$0xff] %v3587
    %3689 = vst [vmem:[#allocation3] sm:$0xff] %v3621
    // Predicated region
    $region30: #{tpu_custom_call.1} parent=1 // pred_check
      _
    $region31: #{tpu_custom_call.1} parent=1 // pred_check_branch
      %3691 = sbr.rel (0) target = $region33
    $region32: #{tpu_custom_call.1} parent=1 // pred_region
      %s3693 = ssub.s32 1024, 1024
      %3694 = vsyncadd [#allocation6], %s3693
      %s3695 = sshll.u32 [#allocation7], 4
      %s3696 = int_to_ptr.vmem [resolvable:$true] %s3695
      %3701 = dma.vmem_to_hbm [thread:$0]  %s3696, 1024, %s5, [#allocation6], 128, 128, 8
    $region33: #{tpu_custom_call.1} parent=1 // pred_fallthru
      _
    // Predicated region
    $region34: #{tpu_custom_call.1} parent=1 // pred_check
      _
    $region35: #{tpu_custom_call.1} parent=1 // pred_check_branch
      %3703 = sbr.rel (0) target = $region37
    $region36: #{tpu_custom_call.1} parent=1 // pred_region
      %3704 = dma.done [#allocation6], 1024
    $region37: #{tpu_custom_call.1} parent=1 // pred_fallthru
      _
    %3705 = vsyncpa [#allocation5], 1
    %3706 = vsyncpa [#allocation6], 1

// kernel: tpu_custom_call.1
$region0: #{tpu_custom_call.1}
  #allocation0 [shape = 'u32[]', space=smem, size = 0x4, offset = 0x4, fixed_abs, tag = 'smem constant byte address 0x4 - core index']
  #allocation1 [shape = 'u32[144,128]{1,0:T(1,128)}', space=vmem, size = 0x12000, scoped, tag = 'internal scratch']
  #allocation2 [shape = 'f32[8,128]{1,0:T(8,128)}', space=vmem, size = 0x1000, scoped, tag = 'scratch operand']
  #allocation3 [shape = 'f32[8,128]{1,0:T(8,128)}', space=vmem, size = 0x1000, scoped, tag = 'scratch operand']
  %s0 = inlined_call_operand.vmem [shape: f32[8,8,4], index: 0, kind: input, shape index: {}]
  %s1 = inlined_call_operand.vmem [shape: f32[8,8,128], index: 1, kind: input, shape index: {}]
  %s2 = inlined_call_operand.vmem [shape: f32[4,512], index: 2, kind: input, shape index: {}]
  %s3 = inlined_call_operand.hbm [shape: f32[128,512], index: 3, kind: input, shape index: {}]
  %s4 = inlined_call_operand.vmem [shape: f32[1,512], index: 4, kind: input, shape index: {}]
  %s5 = inlined_call_operand.hbm [shape: f32[8,8,128], index: 5, kind: output, shape index: {}]
  %s6 = sld [smem:[#allocation0]]
  $region38: #{tpu_custom_call.1} parent=0
    _
  %s8 = ssub.s32 1, %s6
  %s9 = scalar_select 0, %s8, %s6
  $region1: #{tpu_custom_call.1} parent=0
    #allocation4 [shape = 'u8[262144]{0}', space=vmem, size = 0x40000, scoped, tag = 'input window, operand 3, single buffered']
    #allocation5 [shape = 's32[1]{0}', space=sflag, size = 0x4, scoped, tag = 'scoped memory for tpu_custom_call.1']
    #allocation6 [shape = 's32[1]{0}', space=sflag, size = 0x4, scoped, tag = 'scoped memory for tpu_custom_call.1']
    #allocation7 [shape = 'u8[32768]{0}', space=vmem, size = 0x8000, scoped, tag = 'output window, operand 0, single buffered']
    %10 = vsyncpa [#allocation5], 0
    %11 = vsyncpa [#allocation6], 0
    // Predicated region
    $region2: #{tpu_custom_call.1} parent=1 // pred_check
      _
    $region3: #{tpu_custom_call.1} parent=1 // pred_check_branch
      %13 = sbr.rel (0) target = $region5
    $region4: #{tpu_custom_call.1} parent=1 // pred_region
      _
    $region5: #{tpu_custom_call.1} parent=1 // pred_fallthru
      _
    // Predicated region
    $region6: #{tpu_custom_call.1} parent=1 // pred_check
      _
    $region7: #{tpu_custom_call.1} parent=1 // pred_check_branch
      %15 = sbr.rel (0) target = $region9
    $region8: #{tpu_custom_call.1} parent=1 // pred_region
      _
    $region9: #{tpu_custom_call.1} parent=1 // pred_fallthru
      _
    // Predicated region
    $region10: #{tpu_custom_call.1} parent=1 // pred_check
      _
    $region11: #{tpu_custom_call.1} parent=1 // pred_check_branch
      %17 = sbr.rel (0) target = $region13
    $region12: #{tpu_custom_call.1} parent=1 // pred_region
      _
    $region13: #{tpu_custom_call.1} parent=1 // pred_fallthru
      _
    // Predicated region
    $region14: #{tpu_custom_call.1} parent=1 // pred_check
      _
    $region15: #{tpu_custom_call.1} parent=1 // pred_check_branch
      %19 = sbr.rel (0) target = $region17
    $region16: #{tpu_custom_call.1} parent=1 // pred_region
      %s21 = ssub.s32 8192, 8192
      %22 = vsyncadd [#allocation5], %s21
      %s23 = sshll.u32 [#allocation4], 4
      %s24 = int_to_ptr.vmem [resolvable:$true] %s23
      %29 = dma.hbm_to_vmem [thread:$0]  %s3, 8192, %s24, [#allocation5], 512, 512, 32
    $region17: #{tpu_custom_call.1} parent=1 // pred_fallthru
      _
    // Predicated region
    $region18: #{tpu_custom_call.1} parent=1 // pred_check
      _
    $region19: #{tpu_custom_call.1} parent=1 // pred_check_branch
      %31 = sbr.rel (0) target = $region21
    $region20: #{tpu_custom_call.1} parent=1 // pred_region
      _
    $region21: #{tpu_custom_call.1} parent=1 // pred_fallthru
      _
    // Predicated region
    $region22: #{tpu_custom_call.1} parent=1 // pred_check
      _
    $region23: #{tpu_custom_call.1} parent=1 // pred_check_branch
      %33 = sbr.rel (0) target = $region25
    $region24: #{tpu_custom_call.1} parent=1 // pred_region
      %34 = dma.done [#allocation5], 8192
    $region25: #{tpu_custom_call.1} parent=1 // pred_fallthru
      _
    %p35 = scmp.eq.s32.totalorder 0, 0
    // Predicated region
    $region26: #{tpu_custom_call.1} parent=1 // pred_check
      %p36 = pneg %p35
    $region27: #{tpu_custom_call.1} parent=1 // pred_check_branch
      %38 = sbr.rel (%p36) target = $region29
    $region28: #{tpu_custom_call.1} parent=1 // pred_region
      %39 = vst [vmem:[#allocation2] sm:$0xff] 0.0
      %40 = vst [vmem:[#allocation3] sm:$0xff] 0.0
    $region29: #{tpu_custom_call.1} parent=1 // pred_fallthru
      _
    %v41 = vld [vmem:[%s2] sm:$0xff]
    %v42 = vld [vmem:[%s2 + $0x8] sm:$0xff]
    %v43 = vld [vmem:[#allocation4] sm:$0xff]
    %v44 = vld [vmem:[#allocation4 + $0x8] sm:$0xff]
    %v45 = vld [vmem:[#allocation4 + $0x10] sm:$0xff]
    %v46 = vld [vmem:[#allocation4 + $0x18] sm:$0xff]
    %v47 = vld [vmem:[#allocation4 + $0x20] sm:$0xff]
    %v48 = vld [vmem:[#allocation4 + $0x28] sm:$0xff]
    %v49 = vld [vmem:[#allocation4 + $0x30] sm:$0xff]
    %v50 = vld [vmem:[#allocation4 + $0x38] sm:$0xff]
    %v51 = vld [vmem:[#allocation4 + $0x40] sm:$0xff]
    %v52 = vld [vmem:[#allocation4 + $0x48] sm:$0xff]
    %v53 = vld [vmem:[#allocation4 + $0x50] sm:$0xff]
    %v54 = vld [vmem:[#allocation4 + $0x58] sm:$0xff]
    %v55 = vld [vmem:[#allocation4 + $0x60] sm:$0xff]
    %v56 = vld [vmem:[#allocation4 + $0x68] sm:$0xff]
    %v57 = vld [vmem:[#allocation4 + $0x70] sm:$0xff]
    %v58 = vld [vmem:[#allocation4 + $0x78] sm:$0xff]
    %v59 = vld [vmem:[#allocation4 + $0x80] sm:$0xff]
    %v60 = vld [vmem:[#allocation4 + $0x88] sm:$0xff]
    %v61 = vld [vmem:[#allocation4 + $0x90] sm:$0xff]
    %v62 = vld [vmem:[#allocation4 + $0x98] sm:$0xff]
    %v63 = vld [vmem:[#allocation4 + $0xa0] sm:$0xff]
    %v64 = vld [vmem:[#allocation4 + $0xa8] sm:$0xff]
    %v65 = vld [vmem:[#allocation4 + $0xb0] sm:$0xff]
    %v66 = vld [vmem:[#allocation4 + $0xb8] sm:$0xff]
    %v67 = vld [vmem:[#allocation4 + $0xc0] sm:$0xff]
    %v68 = vld [vmem:[#allocation4 + $0xc8] sm:$0xff]
    %v69 = vld [vmem:[#allocation4 + $0xd0] sm:$0xff]
    %v70 = vld [vmem:[#allocation4 + $0xd8] sm:$0xff]
    %v71 = vld [vmem:[#allocation4 + $0xe0] sm:$0xff]
    %v72 = vld [vmem:[#allocation4 + $0xe8] sm:$0xff]
    %v73 = vld [vmem:[#allocation4 + $0xf0] sm:$0xff]
    %v74 = vld [vmem:[#allocation4 + $0xf8] sm:$0xff]
    %v75 = vld [vmem:[#allocation4 + $0x100] sm:$0xff]
    %v76 = vld [vmem:[#allocation4 + $0x108] sm:$0xff]
    %v77 = vld [vmem:[#allocation4 + $0x110] sm:$0xff]
    %v78 = vld [vmem:[#allocation4 + $0x118] sm:$0xff]
    %v79 = vld [vmem:[#allocation4 + $0x120] sm:$0xff]
    %v80 = vld [vmem:[#allocation4 + $0x128] sm:$0xff]
    %v81 = vld [vmem:[#allocation4 + $0x130] sm:$0xff]
    %v82 = vld [vmem:[#allocation4 + $0x138] sm:$0xff]
    %v83 = vld [vmem:[#allocation4 + $0x140] sm:$0xff]
    %v84 = vld [vmem:[#allocation4 + $0x148] sm:$0xff]
    %v85 = vld [vmem:[#allocation4 + $0x150] sm:$0xff]
    %v86 = vld [vmem:[#allocation4 + $0x158] sm:$0xff]
    %v87 = vld [vmem:[#allocation4 + $0x160] sm:$0xff]
    %v88 = vld [vmem:[#allocation4 + $0x168] sm:$0xff]
    %v89 = vld [vmem:[#allocation4 + $0x170] sm:$0xff]
    %v90 = vld [vmem:[#allocation4 + $0x178] sm:$0xff]
    %v91 = vld [vmem:[#allocation4 + $0x180] sm:$0xff]
    %v92 = vld [vmem:[#allocation4 + $0x188] sm:$0xff]
    %v93 = vld [vmem:[#allocation4 + $0x190] sm:$0xff]
    %v94 = vld [vmem:[#allocation4 + $0x198] sm:$0xff]
    %v95 = vld [vmem:[#allocation4 + $0x1a0] sm:$0xff]
    %v96 = vld [vmem:[#allocation4 + $0x1a8] sm:$0xff]
    %v97 = vld [vmem:[#allocation4 + $0x1b0] sm:$0xff]
    %v98 = vld [vmem:[#allocation4 + $0x1b8] sm:$0xff]
    %v99 = vld [vmem:[#allocation4 + $0x1c0] sm:$0xff]
    %v100 = vld [vmem:[#allocation4 + $0x1c8] sm:$0xff]
    %v101 = vld [vmem:[#allocation4 + $0x1d0] sm:$0xff]
    %v102 = vld [vmem:[#allocation4 + $0x1d8] sm:$0xff]
    %v103 = vld [vmem:[#allocation4 + $0x1e0] sm:$0xff]
    %v104 = vld [vmem:[#allocation4 + $0x1e8] sm:$0xff]
    %v105 = vld [vmem:[#allocation4 + $0x1f0] sm:$0xff]
    %v106 = vld [vmem:[#allocation4 + $0x1f8] sm:$0xff]
    %v107 = vld [vmem:[%s4] sm:$0xf]
    %v109 = vlaneseq
    %v110 = vshrl.u32 %v109, 7
    %v111 = vsub.s32 0, %v110
    %v112 = vrot.slane %v107, %v111
    %v113 = vlaneseq
    %v114 = vshrl.u32 %v113, 7
    %v115 = vsub.s32 1, %v114
    %v116 = vrot.slane %v107, %v115
    %v117 = vlaneseq
    %v118 = vshrl.u32 %v117, 7
    %v119 = vsub.s32 2, %v118
    %v120 = vrot.slane %v107, %v119
    %v121 = vlaneseq
    %v122 = vshrl.u32 %v121, 7
    %v123 = vsub.s32 3, %v122
    %v124 = vrot.slane %v107, %v123
    %v129 = vld [vmem:[#allocation2] sm:$0xff]
    %v130 = vld [vmem:[#allocation3] sm:$0xff]
    %v131 = vld [vmem:[%s0] sm:$0x1]
    %v132 = vld [vmem:[%s0 + $0x8] sm:$0x1]
    %v133 = vld [vmem:[%s0 + $0x10] sm:$0x1]
    %v134 = vld [vmem:[%s0 + $0x18] sm:$0x1]
    %v135 = vld [vmem:[%s0 + $0x20] sm:$0x1]
    %v136 = vld [vmem:[%s0 + $0x28] sm:$0x1]
    %v137 = vld [vmem:[%s0 + $0x30] sm:$0x1]
    %v138 = vld [vmem:[%s0 + $0x38] sm:$0x1]
    %139 = vmatprep.subr.mxu0 %v44
    %140 = vmatpush1.msra.mxu0 %v43
    %141 = vmatprep.subr.mxu0 %v48
    %142 = vmatpush1.msra.mxu0 %v47
    %143 = vmatprep.subr.mxu0 %v52
    %144 = vmatpush1.msra.mxu0 %v51
    %145 = vmatprep.subr.mxu0 %v56
    %146 = vmatpush1.msra.mxu0 %v55
    %147 = vmatprep.subr.mxu0 %v60
    %148 = vmatpush1.msra.mxu0 %v59
    %149 = vmatprep.subr.mxu0 %v64
    %150 = vmatpush1.msra.mxu0 %v63
    %151 = vmatprep.subr.mxu0 %v68
    %152 = vmatpush1.msra.mxu0 %v67
    %153 = vmatprep.subr.mxu0 %v72
    %154 = vmatpush1.msra.mxu0 %v71
    %155 = vmatprep.subr.mxu0 %v76
    %156 = vmatpush1.msra.mxu0 %v75
    %157 = vmatprep.subr.mxu0 %v80
    %158 = vmatpush1.msra.mxu0 %v79
    %159 = vmatprep.subr.mxu0 %v84
    %160 = vmatpush1.msra.mxu0 %v83
    %161 = vmatprep.subr.mxu0 %v88
    %162 = vmatpush1.msra.mxu0 %v87
    %163 = vmatprep.subr.mxu0 %v92
    %164 = vmatpush1.msra.mxu0 %v91
    %165 = vmatprep.subr.mxu0 %v96
    %166 = vmatpush1.msra.mxu0 %v95
    %167 = vmatprep.subr.mxu0 %v100
    %168 = vmatpush1.msra.mxu0 %v99
    %169 = vmatprep.subr.mxu0 %v104
    %170 = vmatpush1.msra.mxu0 %v103
    %171 = vmatprep.subr.mxu0 0.0
    %172 = vmatpush1.msra.mxu0 0.0
    %173 = vmatprep.subr.mxu0 0.0
    %174 = vmatpush1.msra.mxu0 0.0
    %175 = vmatprep.subr.mxu0 0.0
    %176 = vmatpush1.msra.mxu0 0.0
    %177 = vmatprep.subr.mxu0 0.0
    %178 = vmatpush1.msra.mxu0 0.0
    %179 = vmatprep.subr.mxu0 0.0
    %180 = vmatpush1.msra.mxu0 0.0
    %181 = vmatprep.subr.mxu0 0.0
    %182 = vmatpush1.msra.mxu0 0.0
    %183 = vmatprep.subr.mxu0 0.0
    %184 = vmatpush1.msra.mxu0 0.0
    %185 = vmatprep.subr.mxu0 0.0
    %186 = vmatpush1.msra.mxu0 0.0
    %187 = vmatprep.subr.mxu0 0.0
    %188 = vmatpush1.msra.mxu0 0.0
    %189 = vmatprep.subr.mxu0 0.0
    %190 = vmatpush1.msra.mxu0 0.0
    %191 = vmatprep.subr.mxu0 0.0
    %192 = vmatpush1.msra.mxu0 0.0
    %193 = vmatprep.subr.mxu0 0.0
    %194 = vmatpush1.msra.mxu0 0.0
    %195 = vmatprep.subr.mxu0 0.0
    %196 = vmatpush1.msra.mxu0 0.0
    %197 = vmatprep.subr.mxu0 0.0
    %198 = vmatpush1.msra.mxu0 0.0
    %199 = vmatprep.subr.mxu0 0.0
    %200 = vmatpush1.msra.mxu0 0.0
    %201 = vmatprep.subr.mxu0 0.0
    %202 = vmatpush1.msra.mxu0 0.0
    %203 = vmatprep.mubr.f32.mxu0 0.0
    %204 = vmatmul.mubr.f32.gmra.mrb[0].mxu0 %v130
    %v205 = vpop.f32.mrb[0].mxu0
    %v206 = vadd.f32 0.0, %v205
    %v207 = vpop.f32.mrb[0].mxu0
    %v208 = vadd.f32 0.0, %v207
    %209 = vdwg.mxu0
    %210 = vmatprep.subr.mxu0 %v46
    %211 = vmatpush1.msra.mxu0 %v45
    %212 = vmatprep.subr.mxu0 %v50
    %213 = vmatpush1.msra.mxu0 %v49
    %214 = vmatprep.subr.mxu0 %v54
    %215 = vmatpush1.msra.mxu0 %v53
    %216 = vmatprep.subr.mxu0 %v58
    %217 = vmatpush1.msra.mxu0 %v57
    %218 = vmatprep.subr.mxu0 %v62
    %219 = vmatpush1.msra.mxu0 %v61
    %220 = vmatprep.subr.mxu0 %v66
    %221 = vmatpush1.msra.mxu0 %v65
    %222 = vmatprep.subr.mxu0 %v70
    %223 = vmatpush1.msra.mxu0 %v69
    %224 = vmatprep.subr.mxu0 %v74
    %225 = vmatpush1.msra.mxu0 %v73
    %226 = vmatprep.subr.mxu0 %v78
    %227 = vmatpush1.msra.mxu0 %v77
    %228 = vmatprep.subr.mxu0 %v82
    %229 = vmatpush1.msra.mxu0 %v81
    %230 = vmatprep.subr.mxu0 %v86
    %231 = vmatpush1.msra.mxu0 %v85
    %232 = vmatprep.subr.mxu0 %v90
    %233 = vmatpush1.msra.mxu0 %v89
    %234 = vmatprep.subr.mxu0 %v94
    %235 = vmatpush1.msra.mxu0 %v93
    %236 = vmatprep.subr.mxu0 %v98
    %237 = vmatpush1.msra.mxu0 %v97
    %238 = vmatprep.subr.mxu0 %v102
    %239 = vmatpush1.msra.mxu0 %v101
    %240 = vmatprep.subr.mxu0 %v106
    %241 = vmatpush1.msra.mxu0 %v105
    %242 = vmatprep.subr.mxu0 0.0
    %243 = vmatpush1.msra.mxu0 0.0
    %244 = vmatprep.subr.mxu0 0.0
    %245 = vmatpush1.msra.mxu0 0.0
    %246 = vmatprep.subr.mxu0 0.0
    %247 = vmatpush1.msra.mxu0 0.0
    %248 = vmatprep.subr.mxu0 0.0
    %249 = vmatpush1.msra.mxu0 0.0
    %250 = vmatprep.subr.mxu0 0.0
    %251 = vmatpush1.msra.mxu0 0.0
    %252 = vmatprep.subr.mxu0 0.0
    %253 = vmatpush1.msra.mxu0 0.0
    %254 = vmatprep.subr.mxu0 0.0
    %255 = vmatpush1.msra.mxu0 0.0
    %256 = vmatprep.subr.mxu0 0.0
    %257 = vmatpush1.msra.mxu0 0.0
    %258 = vmatprep.subr.mxu0 0.0
    %259 = vmatpush1.msra.mxu0 0.0
    %260 = vmatprep.subr.mxu0 0.0
    %261 = vmatpush1.msra.mxu0 0.0
    %262 = vmatprep.subr.mxu0 0.0
    %263 = vmatpush1.msra.mxu0 0.0
    %264 = vmatprep.subr.mxu0 0.0
    %265 = vmatpush1.msra.mxu0 0.0
    %266 = vmatprep.subr.mxu0 0.0
    %267 = vmatpush1.msra.mxu0 0.0
    %268 = vmatprep.subr.mxu0 0.0
    %269 = vmatpush1.msra.mxu0 0.0
    %270 = vmatprep.subr.mxu0 0.0
    %271 = vmatpush1.msra.mxu0 0.0
    %272 = vmatprep.subr.mxu0 0.0
    %273 = vmatpush1.msra.mxu0 0.0
    %274 = vmatprep.mubr.f32.mxu0 0.0
    %275 = vmatmul.mubr.f32.gmra.mrb[0].mxu0 %v130
    %v276 = vpop.f32.mrb[0].mxu0
    %v277 = vadd.f32 0.0, %v276
    %v278 = vpop.f32.mrb[0].mxu0
    %v279 = vadd.f32 0.0, %v278
    %280 = vdwg.mxu0
    %v289 = vrot.slane %v132, 7
    %vm290 = vcmask 1041409
    %v291 = vsel %vm290, %v289, %v131
    %v292 = vrot.slane %v133, 6
    %vm293 = vcmask 1042434
    %v294 = vsel %vm293, %v292, %v291
    %v295 = vrot.slane %v134, 5
    %vm296 = vcmask 1043459
    %v297 = vsel %vm296, %v295, %v294
    %v298 = vrot.slane %v135, 4
    %vm299 = vcmask 1044484
    %v300 = vsel %vm299, %v298, %v297
    %v301 = vrot.slane %v136, 3
    %vm302 = vcmask 1045509
    %v303 = vsel %vm302, %v301, %v300
    %v304 = vrot.slane %v137, 2
    %vm305 = vcmask 1046534
    %v306 = vsel %vm305, %v304, %v303
    %v307 = vrot.slane %v138, 1
    %vm308 = vcmask 1047559
    %v309 = vsel %vm308, %v307, %v306
    %v312 = vcombine.high %v41, %v41
    %v313 = vcombine.high %v42, %v42
    %vm314 = vcmask 31744
    %v315 = vsel %vm314, %v309, 0
    %vm317 = vcmask 1043456
    %v318 = vsel %vm317, %v41, 0
    %v320 = vsel %vm317, %v312, 0
    %v322 = vsel %vm317, %v42, 0
    %v324 = vsel %vm317, %v313, 0
    %326 = vmatprep.subr.mxu0 %v320
    %327 = vmatpush1.msra.mxu0 %v318
    %328 = vmatprep.subr.mxu0 0.0
    %329 = vmatpush1.msra.mxu0 0.0
    %330 = vmatprep.subr.mxu0 0.0
    %331 = vmatpush1.msra.mxu0 0.0
    %332 = vmatprep.subr.mxu0 0.0
    %333 = vmatpush1.msra.mxu0 0.0
    %334 = vmatprep.subr.mxu0 0.0
    %335 = vmatpush1.msra.mxu0 0.0
    %336 = vmatprep.subr.mxu0 0.0
    %337 = vmatpush1.msra.mxu0 0.0
    %338 = vmatprep.subr.mxu0 0.0
    %339 = vmatpush1.msra.mxu0 0.0
    %340 = vmatprep.subr.mxu0 0.0
    %341 = vmatpush1.msra.mxu0 0.0
    %342 = vmatprep.subr.mxu0 0.0
    %343 = vmatpush1.msra.mxu0 0.0
    %344 = vmatprep.subr.mxu0 0.0
    %345 = vmatpush1.msra.mxu0 0.0
    %346 = vmatprep.subr.mxu0 0.0
    %347 = vmatpush1.msra.mxu0 0.0
    %348 = vmatprep.subr.mxu0 0.0
    %349 = vmatpush1.msra.mxu0 0.0
    %350 = vmatprep.subr.mxu0 0.0
    %351 = vmatpush1.msra.mxu0 0.0
    %352 = vmatprep.subr.mxu0 0.0
    %353 = vmatpush1.msra.mxu0 0.0
    %354 = vmatprep.subr.mxu0 0.0
    %355 = vmatpush1.msra.mxu0 0.0
    %356 = vmatprep.subr.mxu0 0.0
    %357 = vmatpush1.msra.mxu0 0.0
    %358 = vmatprep.subr.mxu0 0.0
    %359 = vmatpush1.msra.mxu0 0.0
    %360 = vmatprep.subr.mxu0 0.0
    %361 = vmatpush1.msra.mxu0 0.0
    %362 = vmatprep.subr.mxu0 0.0
    %363 = vmatpush1.msra.mxu0 0.0
    %364 = vmatprep.subr.mxu0 0.0
    %365 = vmatpush1.msra.mxu0 0.0
    %366 = vmatprep.subr.mxu0 0.0
    %367 = vmatpush1.msra.mxu0 0.0
    %368 = vmatprep.subr.mxu0 0.0
    %369 = vmatpush1.msra.mxu0 0.0
    %370 = vmatprep.subr.mxu0 0.0
    %371 = vmatpush1.msra.mxu0 0.0
    %372 = vmatprep.subr.mxu0 0.0
    %373 = vmatpush1.msra.mxu0 0.0
    %374 = vmatprep.subr.mxu0 0.0
    %375 = vmatpush1.msra.mxu0 0.0
    %376 = vmatprep.subr.mxu0 0.0
    %377 = vmatpush1.msra.mxu0 0.0
    %378 = vmatprep.subr.mxu0 0.0
    %379 = vmatpush1.msra.mxu0 0.0
    %380 = vmatprep.subr.mxu0 0.0
    %381 = vmatpush1.msra.mxu0 0.0
    %382 = vmatprep.subr.mxu0 0.0
    %383 = vmatpush1.msra.mxu0 0.0
    %384 = vmatprep.subr.mxu0 0.0
    %385 = vmatpush1.msra.mxu0 0.0
    %386 = vmatprep.subr.mxu0 0.0
    %387 = vmatpush1.msra.mxu0 0.0
    %388 = vmatprep.subr.mxu0 0.0
    %389 = vmatpush1.msra.mxu0 0.0
    %390 = vmatprep.mubr.f32.mxu0 0.0
    %391 = vmatmul.mubr.f32.gmra.mrb[0].mxu0 %v315
    %v392 = vpop.f32.mrb[0].mxu0
    %v393 = vadd.f32 %v206, %v392
    %v394 = vpop.f32.mrb[0].mxu0
    %v395 = vadd.f32 %v208, %v394
    %396 = vdwg.mxu0
    %397 = vmatprep.subr.mxu0 %v324
    %398 = vmatpush1.msra.mxu0 %v322
    %399 = vmatprep.subr.mxu0 0.0
    %400 = vmatpush1.msra.mxu0 0.0
    %401 = vmatprep.subr.mxu0 0.0
    %402 = vmatpush1.msra.mxu0 0.0
    %403 = vmatprep.subr.mxu0 0.0
    %404 = vmatpush1.msra.mxu0 0.0
    %405 = vmatprep.subr.mxu0 0.0
    %406 = vmatpush1.msra.mxu0 0.0
    %407 = vmatprep.subr.mxu0 0.0
    %408 = vmatpush1.msra.mxu0 0.0
    %409 = vmatprep.subr.mxu0 0.0
    %410 = vmatpush1.msra.mxu0 0.0
    %411 = vmatprep.subr.mxu0 0.0
    %412 = vmatpush1.msra.mxu0 0.0
    %413 = vmatprep.subr.mxu0 0.0
    %414 = vmatpush1.msra.mxu0 0.0
    %415 = vmatprep.subr.mxu0 0.0
    %416 = vmatpush1.msra.mxu0 0.0
    %417 = vmatprep.subr.mxu0 0.0
    %418 = vmatpush1.msra.mxu0 0.0
    %419 = vmatprep.subr.mxu0 0.0
    %420 = vmatpush1.msra.mxu0 0.0
    %421 = vmatprep.subr.mxu0 0.0
    %422 = vmatpush1.msra.mxu0 0.0
    %423 = vmatprep.subr.mxu0 0.0
    %424 = vmatpush1.msra.mxu0 0.0
    %425 = vmatprep.subr.mxu0 0.0
    %426 = vmatpush1.msra.mxu0 0.0
    %427 = vmatprep.subr.mxu0 0.0
    %428 = vmatpush1.msra.mxu0 0.0
    %429 = vmatprep.subr.mxu0 0.0
    %430 = vmatpush1.msra.mxu0 0.0
    %431 = vmatprep.subr.mxu0 0.0
    %432 = vmatpush1.msra.mxu0 0.0
    %433 = vmatprep.subr.mxu0 0.0
    %434 = vmatpush1.msra.mxu0 0.0
    %435 = vmatprep.subr.mxu0 0.0
    %436 = vmatpush1.msra.mxu0 0.0
    %437 = vmatprep.subr.mxu0 0.0
    %438 = vmatpush1.msra.mxu0 0.0
    %439 = vmatprep.subr.mxu0 0.0
    %440 = vmatpush1.msra.mxu0 0.0
    %441 = vmatprep.subr.mxu0 0.0
    %442 = vmatpush1.msra.mxu0 0.0
    %443 = vmatprep.subr.mxu0 0.0
    %444 = vmatpush1.msra.mxu0 0.0
    %445 = vmatprep.subr.mxu0 0.0
    %446 = vmatpush1.msra.mxu0 0.0
    %447 = vmatprep.subr.mxu0 0.0
    %448 = vmatpush1.msra.mxu0 0.0
    %449 = vmatprep.subr.mxu0 0.0
    %450 = vmatpush1.msra.mxu0 0.0
    %451 = vmatprep.subr.mxu0 0.0
    %452 = vmatpush1.msra.mxu0 0.0
    %453 = vmatprep.subr.mxu0 0.0
    %454 = vmatpush1.msra.mxu0 0.0
    %455 = vmatprep.subr.mxu0 0.0
    %456 = vmatpush1.msra.mxu0 0.0
    %457 = vmatprep.subr.mxu0 0.0
    %458 = vmatpush1.msra.mxu0 0.0
    %459 = vmatprep.subr.mxu0 0.0
    %460 = vmatpush1.msra.mxu0 0.0
    %461 = vmatprep.mubr.f32.mxu0 0.0
    %462 = vmatmul.mubr.f32.gmra.mrb[0].mxu0 %v315
    %v463 = vpop.f32.mrb[0].mxu0
    %v464 = vadd.f32 %v277, %v463
    %v465 = vpop.f32.mrb[0].mxu0
    %v466 = vadd.f32 %v279, %v465
    %467 = vdwg.mxu0
    %v468 = vadd.f32 %v393, %v112
    %v469 = vadd.f32 %v395, %v116
    %v470 = vadd.f32 %v464, %v120
    %v471 = vadd.f32 %v466, %v124
    %v472 = vxor.u32 %v468, 2147483648
    %v473 = vmul.f32 %v472, 1.442695
    %v474 = vpow.pop %v473
    %v475 = vadd.f32 %v474, 1.0
    %v476 = vrcp.pop %v475
    %v477 = vmul.f32 1.0, %v476
    %v478 = vxor.u32 %v469, 2147483648
    %v479 = vmul.f32 %v478, 1.442695
    %v480 = vpow.pop %v479
    %v481 = vadd.f32 %v480, 1.0
    %v482 = vrcp.pop %v481
    %v483 = vmul.f32 1.0, %v482
    %v484 = vxor.u32 %v470, 2147483648
    %v485 = vmul.f32 %v484, 1.442695
    %v486 = vpow.pop %v485
    %v487 = vadd.f32 %v486, 1.0
    %v488 = vrcp.pop %v487
    %v489 = vmul.f32 1.0, %v488
    %v490 = vtanh.pop %v471
    %v491 = vmul.f32 %v477, %v490
    %v492 = vmul.f32 %v489, %v129
    %v493 = vadd.f32 %v491, %v492
    %v494 = vtanh.pop %v493
    %v495 = vmul.f32 %v483, %v494
    %v496 = vld [vmem:[%s1] sm:$0x1]
    %v497 = vld [vmem:[%s1 + $0x8] sm:$0x1]
    %v498 = vld [vmem:[%s1 + $0x10] sm:$0x1]
    %v499 = vld [vmem:[%s1 + $0x18] sm:$0x1]
    %v500 = vld [vmem:[%s1 + $0x20] sm:$0x1]
    %v501 = vld [vmem:[%s1 + $0x28] sm:$0x1]
    %v502 = vld [vmem:[%s1 + $0x30] sm:$0x1]
    %v503 = vld [vmem:[%s1 + $0x38] sm:$0x1]
    %v512 = vrot.slane %v497, 7
    %v513 = vsel %vm290, %v512, %v496
    %v514 = vrot.slane %v498, 6
    %v515 = vsel %vm293, %v514, %v513
    %v516 = vrot.slane %v499, 5
    %v517 = vsel %vm296, %v516, %v515
    %v518 = vrot.slane %v500, 4
    %v519 = vsel %vm299, %v518, %v517
    %v520 = vrot.slane %v501, 3
    %v521 = vsel %vm302, %v520, %v519
    %v522 = vrot.slane %v502, 2
    %v523 = vsel %vm305, %v522, %v521
    %v524 = vrot.slane %v503, 1
    %v525 = vsel %vm308, %v524, %v523
    %v527 = vadd.f32 %v495, %v525
    %v529 = vcombine.high %v527, %v527
    %v531 = vunpack.c.l.s4 1966171168
    %v532 = vunpack.c.0.s8 %v531
    %v533 = vlaneseq
    %v534 = vshrl.u32 %v533, 7
    %v535 = vsub.s32 %v532, %v534
    %v536 = vrot.slane %v527, %v535
    %v538 = vunpack.c.l.s4 1966171168
    %v539 = vunpack.c.0.s8 %v538
    %v540 = vlaneseq
    %v541 = vshrl.u32 %v540, 7
    %v542 = vsub.s32 %v539, %v541
    %v543 = vrot.slane %v529, %v542
    %v544 = vcombine.high %v536, %v536
    %v545 = vcombine.high %v543, %v543
    %v547 = vunpack.c.l.s4 1966171168
    %v548 = vunpack.c.0.s8 %v547
    %v549 = vlaneseq
    %v550 = vshrl.u32 %v549, 7
    %v551 = vsub.s32 %v548, %v550
    %v552 = vrot.slane %v536, %v551
    %v554 = vunpack.c.l.s4 1966171168
    %v555 = vunpack.c.0.s8 %v554
    %v556 = vlaneseq
    %v557 = vshrl.u32 %v556, 7
    %v558 = vsub.s32 %v555, %v557
    %v559 = vrot.slane %v543, %v558
    %v561 = vunpack.c.l.s4 1966171168
    %v562 = vunpack.c.0.s8 %v561
    %v563 = vlaneseq
    %v564 = vshrl.u32 %v563, 7
    %v565 = vsub.s32 %v562, %v564
    %v566 = vrot.slane %v544, %v565
    %v568 = vunpack.c.l.s4 1966171168
    %v569 = vunpack.c.0.s8 %v568
    %v570 = vlaneseq
    %v571 = vshrl.u32 %v570, 7
    %v572 = vsub.s32 %v569, %v571
    %v573 = vrot.slane %v545, %v572
    %v574 = vcombine.high %v552, %v552
    %v575 = vcombine.high %v559, %v559
    %v576 = vcombine.high %v566, %v566
    %v577 = vcombine.high %v573, %v573
    %586 = vst [vmem:[#allocation7] sm:$0x1] %v552
    %587 = vst [vmem:[#allocation7 + $0x8] sm:$0x1] %v566
    %588 = vst [vmem:[#allocation7 + $0x10] sm:$0x1] %v574
    %589 = vst [vmem:[#allocation7 + $0x18] sm:$0x1] %v576
    %590 = vst [vmem:[#allocation7 + $0x20] sm:$0x1] %v559
    %591 = vst [vmem:[#allocation7 + $0x28] sm:$0x1] %v573
    %592 = vst [vmem:[#allocation7 + $0x30] sm:$0x1] %v575
    %593 = vst [vmem:[#allocation7 + $0x38] sm:$0x1] %v577
    %v594 = vld [vmem:[%s0 + $0x1] sm:$0x1]
    %v595 = vld [vmem:[%s0 + $0x9] sm:$0x1]
    %v596 = vld [vmem:[%s0 + $0x11] sm:$0x1]
    %v597 = vld [vmem:[%s0 + $0x19] sm:$0x1]
    %v598 = vld [vmem:[%s0 + $0x21] sm:$0x1]
    %v599 = vld [vmem:[%s0 + $0x29] sm:$0x1]
    %v600 = vld [vmem:[%s0 + $0x31] sm:$0x1]
    %v601 = vld [vmem:[%s0 + $0x39] sm:$0x1]
    %602 = vmatprep.subr.mxu0 %v44
    %603 = vmatpush1.msra.mxu0 %v43
    %604 = vmatprep.subr.mxu0 %v48
    %605 = vmatpush1.msra.mxu0 %v47
    %606 = vmatprep.subr.mxu0 %v52
    %607 = vmatpush1.msra.mxu0 %v51
    %608 = vmatprep.subr.mxu0 %v56
    %609 = vmatpush1.msra.mxu0 %v55
    %610 = vmatprep.subr.mxu0 %v60
    %611 = vmatpush1.msra.mxu0 %v59
    %612 = vmatprep.subr.mxu0 %v64
    %613 = vmatpush1.msra.mxu0 %v63
    %614 = vmatprep.subr.mxu0 %v68
    %615 = vmatpush1.msra.mxu0 %v67
    %616 = vmatprep.subr.mxu0 %v72
    %617 = vmatpush1.msra.mxu0 %v71
    %618 = vmatprep.subr.mxu0 %v76
    %619 = vmatpush1.msra.mxu0 %v75
    %620 = vmatprep.subr.mxu0 %v80
    %621 = vmatpush1.msra.mxu0 %v79
    %622 = vmatprep.subr.mxu0 %v84
    %623 = vmatpush1.msra.mxu0 %v83
    %624 = vmatprep.subr.mxu0 %v88
    %625 = vmatpush1.msra.mxu0 %v87
    %626 = vmatprep.subr.mxu0 %v92
    %627 = vmatpush1.msra.mxu0 %v91
    %628 = vmatprep.subr.mxu0 %v96
    %629 = vmatpush1.msra.mxu0 %v95
    %630 = vmatprep.subr.mxu0 %v100
    %631 = vmatpush1.msra.mxu0 %v99
    %632 = vmatprep.subr.mxu0 %v104
    %633 = vmatpush1.msra.mxu0 %v103
    %634 = vmatprep.subr.mxu0 0.0
    %635 = vmatpush1.msra.mxu0 0.0
    %636 = vmatprep.subr.mxu0 0.0
    %637 = vmatpush1.msra.mxu0 0.0
    %638 = vmatprep.subr.mxu0 0.0
    %639 = vmatpush1.msra.mxu0 0.0
    %640 = vmatprep.subr.mxu0 0.0
    %641 = vmatpush1.msra.mxu0 0.0
    %642 = vmatprep.subr.mxu0 0.0
    %643 = vmatpush1.msra.mxu0 0.0
    %644 = vmatprep.subr.mxu0 0.0
    %645 = vmatpush1.msra.mxu0 0.0
    %646 = vmatprep.subr.mxu0 0.0
    %647 = vmatpush1.msra.mxu0 0.0
    %648 = vmatprep.subr.mxu0 0.0
    %649 = vmatpush1.msra.mxu0 0.0
    %650 = vmatprep.subr.mxu0 0.0
    %651 = vmatpush1.msra.mxu0 0.0
    %652 = vmatprep.subr.mxu0 0.0
    %653 = vmatpush1.msra.mxu0 0.0
    %654 = vmatprep.subr.mxu0 0.0
    %655 = vmatpush1.msra.mxu0 0.0
    %656 = vmatprep.subr.mxu0 0.0
    %657 = vmatpush1.msra.mxu0 0.0
    %658 = vmatprep.subr.mxu0 0.0
    %659 = vmatpush1.msra.mxu0 0.0
    %660 = vmatprep.subr.mxu0 0.0
    %661 = vmatpush1.msra.mxu0 0.0
    %662 = vmatprep.subr.mxu0 0.0
    %663 = vmatpush1.msra.mxu0 0.0
    %664 = vmatprep.subr.mxu0 0.0
    %665 = vmatpush1.msra.mxu0 0.0
    %666 = vmatprep.mubr.f32.mxu0 0.0
    %667 = vmatmul.mubr.f32.gmra.mrb[0].mxu0 %v527
    %v668 = vpop.f32.mrb[0].mxu0
    %v669 = vadd.f32 0.0, %v668
    %v670 = vpop.f32.mrb[0].mxu0
    %v671 = vadd.f32 0.0, %v670
    %672 = vdwg.mxu0
    %673 = vmatprep.subr.mxu0 %v46
    %674 = vmatpush1.msra.mxu0 %v45
    %675 = vmatprep.subr.mxu0 %v50
    %676 = vmatpush1.msra.mxu0 %v49
    %677 = vmatprep.subr.mxu0 %v54
    %678 = vmatpush1.msra.mxu0 %v53
    %679 = vmatprep.subr.mxu0 %v58
    %680 = vmatpush1.msra.mxu0 %v57
    %681 = vmatprep.subr.mxu0 %v62
    %682 = vmatpush1.msra.mxu0 %v61
    %683 = vmatprep.subr.mxu0 %v66
    %684 = vmatpush1.msra.mxu0 %v65
    %685 = vmatprep.subr.mxu0 %v70
    %686 = vmatpush1.msra.mxu0 %v69
    %687 = vmatprep.subr.mxu0 %v74
    %688 = vmatpush1.msra.mxu0 %v73
    %689 = vmatprep.subr.mxu0 %v78
    %690 = vmatpush1.msra.mxu0 %v77
    %691 = vmatprep.subr.mxu0 %v82
    %692 = vmatpush1.msra.mxu0 %v81
    %693 = vmatprep.subr.mxu0 %v86
    %694 = vmatpush1.msra.mxu0 %v85
    %695 = vmatprep.subr.mxu0 %v90
    %696 = vmatpush1.msra.mxu0 %v89
    %697 = vmatprep.subr.mxu0 %v94
    %698 = vmatpush1.msra.mxu0 %v93
    %699 = vmatprep.subr.mxu0 %v98
    %700 = vmatpush1.msra.mxu0 %v97
    %701 = vmatprep.subr.mxu0 %v102
    %702 = vmatpush1.msra.mxu0 %v101
    %703 = vmatprep.subr.mxu0 %v106
    %704 = vmatpush1.msra.mxu0 %v105
    %705 = vmatprep.subr.mxu0 0.0
    %706 = vmatpush1.msra.mxu0 0.0
    %707 = vmatprep.subr.mxu0 0.0
    %708 = vmatpush1.msra.mxu0 0.0
    %709 = vmatprep.subr.mxu0 0.0
    %710 = vmatpush1.msra.mxu0 0.0
    %711 = vmatprep.subr.mxu0 0.0
    %712 = vmatpush1.msra.mxu0 0.0
    %713 = vmatprep.subr.mxu0 0.0
    %714 = vmatpush1.msra.mxu0 0.0
    %715 = vmatprep.subr.mxu0 0.0
    %716 = vmatpush1.msra.mxu0 0.0
    %717 = vmatprep.subr.mxu0 0.0
    %718 = vmatpush1.msra.mxu0 0.0
    %719 = vmatprep.subr.mxu0 0.0
    %720 = vmatpush1.msra.mxu0 0.0
    %721 = vmatprep.subr.mxu0 0.0
    %722 = vmatpush1.msra.mxu0 0.0
    %723 = vmatprep.subr.mxu0 0.0
    %724 = vmatpush1.msra.mxu0 0.0
    %725 = vmatprep.subr.mxu0 0.0
    %726 = vmatpush1.msra.mxu0 0.0
    %727 = vmatprep.subr.mxu0 0.0
    %728 = vmatpush1.msra.mxu0 0.0
    %729 = vmatprep.subr.mxu0 0.0
    %730 = vmatpush1.msra.mxu0 0.0
    %731 = vmatprep.subr.mxu0 0.0
    %732 = vmatpush1.msra.mxu0 0.0
    %733 = vmatprep.subr.mxu0 0.0
    %734 = vmatpush1.msra.mxu0 0.0
    %735 = vmatprep.subr.mxu0 0.0
    %736 = vmatpush1.msra.mxu0 0.0
    %737 = vmatprep.mubr.f32.mxu0 0.0
    %738 = vmatmul.mubr.f32.gmra.mrb[0].mxu0 %v527
    %v739 = vpop.f32.mrb[0].mxu0
    %v740 = vadd.f32 0.0, %v739
    %v741 = vpop.f32.mrb[0].mxu0
    %v742 = vadd.f32 0.0, %v741
    %743 = vdwg.mxu0
    %v752 = vrot.slane %v595, 7
    %v753 = vsel %vm290, %v752, %v594
    %v754 = vrot.slane %v596, 6
    %v755 = vsel %vm293, %v754, %v753
    %v756 = vrot.slane %v597, 5
    %v757 = vsel %vm296, %v756, %v755
    %v758 = vrot.slane %v598, 4
    %v759 = vsel %vm299, %v758, %v757
    %v760 = vrot.slane %v599, 3
    %v761 = vsel %vm302, %v760, %v759
    %v762 = vrot.slane %v600, 2
    %v763 = vsel %vm305, %v762, %v761
    %v764 = vrot.slane %v601, 1
    %v765 = vsel %vm308, %v764, %v763
    %v766 = vsel %vm314, %v765, 0
    %768 = vmatprep.subr.mxu0 %v320
    %769 = vmatpush1.msra.mxu0 %v318
    %770 = vmatprep.subr.mxu0 0.0
    %771 = vmatpush1.msra.mxu0 0.0
    %772 = vmatprep.subr.mxu0 0.0
    %773 = vmatpush1.msra.mxu0 0.0
    %774 = vmatprep.subr.mxu0 0.0
    %775 = vmatpush1.msra.mxu0 0.0
    %776 = vmatprep.subr.mxu0 0.0
    %777 = vmatpush1.msra.mxu0 0.0
    %778 = vmatprep.subr.mxu0 0.0
    %779 = vmatpush1.msra.mxu0 0.0
    %780 = vmatprep.subr.mxu0 0.0
    %781 = vmatpush1.msra.mxu0 0.0
    %782 = vmatprep.subr.mxu0 0.0
    %783 = vmatpush1.msra.mxu0 0.0
    %784 = vmatprep.subr.mxu0 0.0
    %785 = vmatpush1.msra.mxu0 0.0
    %786 = vmatprep.subr.mxu0 0.0
    %787 = vmatpush1.msra.mxu0 0.0
    %788 = vmatprep.subr.mxu0 0.0
    %789 = vmatpush1.msra.mxu0 0.0
    %790 = vmatprep.subr.mxu0 0.0
    %791 = vmatpush1.msra.mxu0 0.0
    %792 = vmatprep.subr.mxu0 0.0
    %793 = vmatpush1.msra.mxu0 0.0
    %794 = vmatprep.subr.mxu0 0.0
    %795 = vmatpush1.msra.mxu0 0.0
    %796 = vmatprep.subr.mxu0 0.0
    %797 = vmatpush1.msra.mxu0 0.0
    %798 = vmatprep.subr.mxu0 0.0
    %799 = vmatpush1.msra.mxu0 0.0
    %800 = vmatprep.subr.mxu0 0.0
    %801 = vmatpush1.msra.mxu0 0.0
    %802 = vmatprep.subr.mxu0 0.0
    %803 = vmatpush1.msra.mxu0 0.0
    %804 = vmatprep.subr.mxu0 0.0
    %805 = vmatpush1.msra.mxu0 0.0
    %806 = vmatprep.subr.mxu0 0.0
    %807 = vmatpush1.msra.mxu0 0.0
    %808 = vmatprep.subr.mxu0 0.0
    %809 = vmatpush1.msra.mxu0 0.0
    %810 = vmatprep.subr.mxu0 0.0
    %811 = vmatpush1.msra.mxu0 0.0
    %812 = vmatprep.subr.mxu0 0.0
    %813 = vmatpush1.msra.mxu0 0.0
    %814 = vmatprep.subr.mxu0 0.0
    %815 = vmatpush1.msra.mxu0 0.0
    %816 = vmatprep.subr.mxu0 0.0
    %817 = vmatpush1.msra.mxu0 0.0
    %818 = vmatprep.subr.mxu0 0.0
    %819 = vmatpush1.msra.mxu0 0.0
    %820 = vmatprep.subr.mxu0 0.0
    %821 = vmatpush1.msra.mxu0 0.0
    %822 = vmatprep.subr.mxu0 0.0
    %823 = vmatpush1.msra.mxu0 0.0
    %824 = vmatprep.subr.mxu0 0.0
    %825 = vmatpush1.msra.mxu0 0.0
    %826 = vmatprep.subr.mxu0 0.0
    %827 = vmatpush1.msra.mxu0 0.0
    %828 = vmatprep.subr.mxu0 0.0
    %829 = vmatpush1.msra.mxu0 0.0
    %830 = vmatprep.subr.mxu0 0.0
    %831 = vmatpush1.msra.mxu0 0.0
    %832 = vmatprep.mubr.f32.mxu0 0.0
    %833 = vmatmul.mubr.f32.gmra.mrb[0].mxu0 %v766
    %v834 = vpop.f32.mrb[0].mxu0
    %v835 = vadd.f32 %v669, %v834
    %v836 = vpop.f32.mrb[0].mxu0
    %v837 = vadd.f32 %v671, %v836
    %838 = vdwg.mxu0
    %839 = vmatprep.subr.mxu0 %v324
    %840 = vmatpush1.msra.mxu0 %v322
    %841 = vmatprep.subr.mxu0 0.0
    %842 = vmatpush1.msra.mxu0 0.0
    %843 = vmatprep.subr.mxu0 0.0
    %844 = vmatpush1.msra.mxu0 0.0
    %845 = vmatprep.subr.mxu0 0.0
    %846 = vmatpush1.msra.mxu0 0.0
    %847 = vmatprep.subr.mxu0 0.0
    %848 = vmatpush1.msra.mxu0 0.0
    %849 = vmatprep.subr.mxu0 0.0
    %850 = vmatpush1.msra.mxu0 0.0
    %851 = vmatprep.subr.mxu0 0.0
    %852 = vmatpush1.msra.mxu0 0.0
    %853 = vmatprep.subr.mxu0 0.0
    %854 = vmatpush1.msra.mxu0 0.0
    %855 = vmatprep.subr.mxu0 0.0
    %856 = vmatpush1.msra.mxu0 0.0
    %857 = vmatprep.subr.mxu0 0.0
    %858 = vmatpush1.msra.mxu0 0.0
    %859 = vmatprep.subr.mxu0 0.0
    %860 = vmatpush1.msra.mxu0 0.0
    %861 = vmatprep.subr.mxu0 0.0
    %862 = vmatpush1.msra.mxu0 0.0
    %863 = vmatprep.subr.mxu0 0.0
    %864 = vmatpush1.msra.mxu0 0.0
    %865 = vmatprep.subr.mxu0 0.0
    %866 = vmatpush1.msra.mxu0 0.0
    %867 = vmatprep.subr.mxu0 0.0
    %868 = vmatpush1.msra.mxu0 0.0
    %869 = vmatprep.subr.mxu0 0.0
    %870 = vmatpush1.msra.mxu0 0.0
    %871 = vmatprep.subr.mxu0 0.0
    %872 = vmatpush1.msra.mxu0 0.0
    %873 = vmatprep.subr.mxu0 0.0
    %874 = vmatpush1.msra.mxu0 0.0
    %875 = vmatprep.subr.mxu0 0.0
    %876 = vmatpush1.msra.mxu0 0.0
    %877 = vmatprep.subr.mxu0 0.0
    %878 = vmatpush1.msra.mxu0 0.0
    %879 = vmatprep.subr.mxu0 0.0
    %880 = vmatpush1.msra.mxu0 0.0
    %881 = vmatprep.subr.mxu0 0.0
    %882 = vmatpush1.msra.mxu0 0.0
    %883 = vmatprep.subr.mxu0 0.0
    %884 = vmatpush1.msra.mxu0 0.0
    %885 = vmatprep.subr.mxu0 0.0
    %886 = vmatpush1.msra.mxu0 0.0
    %887 = vmatprep.subr.mxu0 0.0
    %888 = vmatpush1.msra.mxu0 0.0
    %889 = vmatprep.subr.mxu0 0.0
    %890 = vmatpush1.msra.mxu0 0.0
    %891 = vmatprep.subr.mxu0 0.0
    %892 = vmatpush1.msra.mxu0 0.0
    %893 = vmatprep.subr.mxu0 0.0
    %894 = vmatpush1.msra.mxu0 0.0
    %895 = vmatprep.subr.mxu0 0.0
    %896 = vmatpush1.msra.mxu0 0.0
    %897 = vmatprep.subr.mxu0 0.0
    %898 = vmatpush1.msra.mxu0 0.0
    %899 = vmatprep.subr.mxu0 0.0
    %900 = vmatpush1.msra.mxu0 0.0
    %901 = vmatprep.subr.mxu0 0.0
    %902 = vmatpush1.msra.mxu0 0.0
    %903 = vmatprep.mubr.f32.mxu0 0.0
    %904 = vmatmul.mubr.f32.gmra.mrb[0].mxu0 %v766
    %v905 = vpop.f32.mrb[0].mxu0
    %v906 = vadd.f32 %v740, %v905
    %v907 = vpop.f32.mrb[0].mxu0
    %v908 = vadd.f32 %v742, %v907
    %909 = vdwg.mxu0
    %v910 = vadd.f32 %v835, %v112
    %v911 = vadd.f32 %v837, %v116
    %v912 = vadd.f32 %v906, %v120
    %v913 = vadd.f32 %v908, %v124
    %v914 = vxor.u32 %v910, 2147483648
    %v915 = vmul.f32 %v914, 1.442695
    %v916 = vpow.pop %v915
    %v917 = vadd.f32 %v916, 1.0
    %v918 = vrcp.pop %v917
    %v919 = vmul.f32 1.0, %v918
    %v920 = vxor.u32 %v911, 2147483648
    %v921 = vmul.f32 %v920, 1.442695
    %v922 = vpow.pop %v921
    %v923 = vadd.f32 %v922, 1.0
    %v924 = vrcp.pop %v923
    %v925 = vmul.f32 1.0, %v924
    %v926 = vxor.u32 %v912, 2147483648
    %v927 = vmul.f32 %v926, 1.442695
    %v928 = vpow.pop %v927
    %v929 = vadd.f32 %v928, 1.0
    %v930 = vrcp.pop %v929
    %v931 = vmul.f32 1.0, %v930
    %v932 = vtanh.pop %v913
    %v933 = vmul.f32 %v919, %v932
    %v934 = vmul.f32 %v931, %v493
    %v935 = vadd.f32 %v933, %v934
    %v936 = vtanh.pop %v935
    %v937 = vmul.f32 %v925, %v936
    %v938 = vld [vmem:[%s1 + $0x1] sm:$0x1]
    %v939 = vld [vmem:[%s1 + $0x9] sm:$0x1]
    %v940 = vld [vmem:[%s1 + $0x11] sm:$0x1]
    %v941 = vld [vmem:[%s1 + $0x19] sm:$0x1]
    %v942 = vld [vmem:[%s1 + $0x21] sm:$0x1]
    %v943 = vld [vmem:[%s1 + $0x29] sm:$0x1]
    %v944 = vld [vmem:[%s1 + $0x31] sm:$0x1]
    %v945 = vld [vmem:[%s1 + $0x39] sm:$0x1]
    %v954 = vrot.slane %v939, 7
    %v955 = vsel %vm290, %v954, %v938
    %v956 = vrot.slane %v940, 6
    %v957 = vsel %vm293, %v956, %v955
    %v958 = vrot.slane %v941, 5
    %v959 = vsel %vm296, %v958, %v957
    %v960 = vrot.slane %v942, 4
    %v961 = vsel %vm299, %v960, %v959
    %v962 = vrot.slane %v943, 3
    %v963 = vsel %vm302, %v962, %v961
    %v964 = vrot.slane %v944, 2
    %v965 = vsel %vm305, %v964, %v963
    %v966 = vrot.slane %v945, 1
    %v967 = vsel %vm308, %v966, %v965
    %v969 = vadd.f32 %v937, %v967
    %v971 = vcombine.high %v969, %v969
    %v973 = vunpack.c.l.s4 1966171168
    %v974 = vunpack.c.0.s8 %v973
    %v975 = vlaneseq
    %v976 = vshrl.u32 %v975, 7
    %v977 = vsub.s32 %v974, %v976
    %v978 = vrot.slane %v969, %v977
    %v980 = vunpack.c.l.s4 1966171168
    %v981 = vunpack.c.0.s8 %v980
    %v982 = vlaneseq
    %v983 = vshrl.u32 %v982, 7
    %v984 = vsub.s32 %v981, %v983
    %v985 = vrot.slane %v971, %v984
    %v986 = vcombine.high %v978, %v978
    %v987 = vcombine.high %v985, %v985
    %v989 = vunpack.c.l.s4 1966171168
    %v990 = vunpack.c.0.s8 %v989
    %v991 = vlaneseq
    %v992 = vshrl.u32 %v991, 7
    %v993 = vsub.s32 %v990, %v992
    %v994 = vrot.slane %v978, %v993
    %v996 = vunpack.c.l.s4 1966171168
    %v997 = vunpack.c.0.s8 %v996
    %v998 = vlaneseq
    %v999 = vshrl.u32 %v998, 7
    %v1000 = vsub.s32 %v997, %v999
    %v1001 = vrot.slane %v985, %v1000
    %v1003 = vunpack.c.l.s4 1966171168
    %v1004 = vunpack.c.0.s8 %v1003
    %v1005 = vlaneseq
    %v1006 = vshrl.u32 %v1005, 7
    %v1007 = vsub.s32 %v1004, %v1006
    %v1008 = vrot.slane %v986, %v1007
    %v1010 = vunpack.c.l.s4 1966171168
    %v1011 = vunpack.c.0.s8 %v1010
    %v1012 = vlaneseq
    %v1013 = vshrl.u32 %v1012, 7
    %v1014 = vsub.s32 %v1011, %v1013
    %v1015 = vrot.slane %v987, %v1014
    %v1016 = vcombine.high %v994, %v994
    %v1017 = vcombine.high %v1001, %v1001
    %v1018 = vcombine.high %v1008, %v1008
    %v1019 = vcombine.high %v1015, %v1015
    %1028 = vst [vmem:[#allocation7 + $0x1] sm:$0x1] %v994
    %1029 = vst [vmem:[#allocation7 + $0x9] sm:$0x1] %v1008
    %1030 = vst [vmem:[#allocation7 + $0x11] sm:$0x1] %v1016
    %1031 = vst [vmem:[#allocation7 + $0x19] sm:$0x1] %v1018
    %1032 = vst [vmem:[#allocation7 + $0x21] sm:$0x1] %v1001
    %1033 = vst [vmem:[#allocation7 + $0x29] sm:$0x1] %v1015
    %1034 = vst [vmem:[#allocation7 + $0x31] sm:$0x1] %v1017
    %1035 = vst [vmem:[#allocation7 + $0x39] sm:$0x1] %v1019
    %v1036 = vld [vmem:[%s0 + $0x2] sm:$0x1]
    %v1037 = vld [vmem:[%s0 + $0xa] sm:$0x1]
    %v1038 = vld [vmem:[%s0 + $0x12] sm:$0x1]
    %v1039 = vld [vmem:[%s0 + $0x1a] sm:$0x1]
    %v1040 = vld [vmem:[%s0 + $0x22] sm:$0x1]
    %v1041 = vld [vmem:[%s0 + $0x2a] sm:$0x1]
    %v1042 = vld [vmem:[%s0 + $0x32] sm:$0x1]
    %v1043 = vld [vmem:[%s0 + $0x3a] sm:$0x1]
    %1044 = vmatprep.subr.mxu0 %v44
    %1045 = vmatpush1.msra.mxu0 %v43
    %1046 = vmatprep.subr.mxu0 %v48
    %1047 = vmatpush1.msra.mxu0 %v47
    %1048 = vmatprep.subr.mxu0 %v52
    %1049 = vmatpush1.msra.mxu0 %v51
    %1050 = vmatprep.subr.mxu0 %v56
    %1051 = vmatpush1.msra.mxu0 %v55
    %1052 = vmatprep.subr.mxu0 %v60
    %1053 = vmatpush1.msra.mxu0 %v59
    %1054 = vmatprep.subr.mxu0 %v64
    %1055 = vmatpush1.msra.mxu0 %v63
    %1056 = vmatprep.subr.mxu0 %v68
    %1057 = vmatpush1.msra.mxu0 %v67
    %1058 = vmatprep.subr.mxu0 %v72
    %1059 = vmatpush1.msra.mxu0 %v71
    %1060 = vmatprep.subr.mxu0 %v76
    %1061 = vmatpush1.msra.mxu0 %v75
    %1062 = vmatprep.subr.mxu0 %v80
    %1063 = vmatpush1.msra.mxu0 %v79
    %1064 = vmatprep.subr.mxu0 %v84
    %1065 = vmatpush1.msra.mxu0 %v83
    %1066 = vmatprep.subr.mxu0 %v88
    %1067 = vmatpush1.msra.mxu0 %v87
    %1068 = vmatprep.subr.mxu0 %v92
    %1069 = vmatpush1.msra.mxu0 %v91
    %1070 = vmatprep.subr.mxu0 %v96
    %1071 = vmatpush1.msra.mxu0 %v95
    %1072 = vmatprep.subr.mxu0 %v100
    %1073 = vmatpush1.msra.mxu0 %v99
    %1074 = vmatprep.subr.mxu0 %v104
    %1075 = vmatpush1.msra.mxu0 %v103
    %1076 = vmatprep.subr.mxu0 0.0
    %1077 = vmatpush1.msra.mxu0 0.0
    %1078 = vmatprep.subr.mxu0 0.0
    %1079 = vmatpush1.msra.mxu0 0.0
    %1080 = vmatprep.subr.mxu0 0.0
    %1081 = vmatpush1.msra.mxu0 0.0
    %1082 = vmatprep.subr.mxu0 0.0
    %1083 = vmatpush1.msra.mxu0 0.0
    %1084 = vmatprep.subr.mxu0 0.0
    %1085 = vmatpush1.msra.mxu0 0.0
    %1086 = vmatprep.subr.mxu0 0.0
    %1087 = vmatpush1.msra.mxu0 0.0
    %1088 = vmatprep.subr.mxu0 0.0
    %1089 = vmatpush1.msra.mxu0 0.0
    %1090 = vmatprep.subr.mxu0 0.0
    %1091 = vmatpush1.msra.mxu0 0.0
    %1092 = vmatprep.subr.mxu0 0.0
    %1093 = vmatpush1.msra.mxu0 0.0
    %1094 = vmatprep.subr.mxu0 0.0
    %1095 = vmatpush1.msra.mxu0 0.0
    %1096 = vmatprep.subr.mxu0 0.0
    %1097 = vmatpush1.msra.mxu0 0.0
    %1098 = vmatprep.subr.mxu0 0.0
    %1099 = vmatpush1.msra.mxu0 0.0
    %1100 = vmatprep.subr.mxu0 0.0
    %1101 = vmatpush1.msra.mxu0 0.0
    %1102 = vmatprep.subr.mxu0 0.0
    %1103 = vmatpush1.msra.mxu0 0.0
    %1104 = vmatprep.subr.mxu0 0.0
    %1105 = vmatpush1.msra.mxu0 0.0
    %1106 = vmatprep.subr.mxu0 0.0
    %1107 = vmatpush1.msra.mxu0 0.0
    %1108 = vmatprep.mubr.f32.mxu0 0.0
    %1109 = vmatmul.mubr.f32.gmra.mrb[0].mxu0 %v969
    %v1110 = vpop.f32.mrb[0].mxu0
    %v1111 = vadd.f32 0.0, %v1110
    %v1112 = vpop.f32.mrb[0].mxu0
    %v1113 = vadd.f32 0.0, %v1112
    %1114 = vdwg.mxu0
    %1115 = vmatprep.subr.mxu0 %v46
    %1116 = vmatpush1.msra.mxu0 %v45
    %1117 = vmatprep.subr.mxu0 %v50
    %1118 = vmatpush1.msra.mxu0 %v49
    %1119 = vmatprep.subr.mxu0 %v54
    %1120 = vmatpush1.msra.mxu0 %v53
    %1121 = vmatprep.subr.mxu0 %v58
    %1122 = vmatpush1.msra.mxu0 %v57
    %1123 = vmatprep.subr.mxu0 %v62
    %1124 = vmatpush1.msra.mxu0 %v61
    %1125 = vmatprep.subr.mxu0 %v66
    %1126 = vmatpush1.msra.mxu0 %v65
    %1127 = vmatprep.subr.mxu0 %v70
    %1128 = vmatpush1.msra.mxu0 %v69
    %1129 = vmatprep.subr.mxu0 %v74
    %1130 = vmatpush1.msra.mxu0 %v73
    %1131 = vmatprep.subr.mxu0 %v78
    %1132 = vmatpush1.msra.mxu0 %v77
    %1133 = vmatprep.subr.mxu0 %v82
    %1134 = vmatpush1.msra.mxu0 %v81
    %1135 = vmatprep.subr.mxu0 %v86
    %1136 = vmatpush1.msra.mxu0 %v85
    %1137 = vmatprep.subr.mxu0 %v90
    %1138 = vmatpush1.msra.mxu0 %v89
    %1139 = vmatprep.subr.mxu0 %v94
    %1140 = vmatpush1.msra.mxu0 %v93
    %1141 = vmatprep.subr.mxu0 %v98
    %1142 = vmatpush1.msra.mxu0 %v97
    %1143 = vmatprep.subr.mxu0 %v102
    %1144 = vmatpush1.msra.mxu0 %v101
    %1145 = vmatprep.subr.mxu0 %v106
    %1146 = vmatpush1.msra.mxu0 %v105
    %1147 = vmatprep.subr.mxu0 0.0
    %1148 = vmatpush1.msra.mxu0 0.0
    %1149 = vmatprep.subr.mxu0 0.0
    %1150 = vmatpush1.msra.mxu0 0.0
    %1151 = vmatprep.subr.mxu0 0.0
    %1152 = vmatpush1.msra.mxu0 0.0
    %1153 = vmatprep.subr.mxu0 0.0
    %1154 = vmatpush1.msra.mxu0 0.0
    %1155 = vmatprep.subr.mxu0 0.0
    %1156 = vmatpush1.msra.mxu0 0.0
    %1157 = vmatprep.subr.mxu0 0.0
    %1158 = vmatpush1.msra.mxu0 0.0
    %1159 = vmatprep.subr.mxu0 0.0
    %1160 = vmatpush1.msra.mxu0 0.0
    %1161 = vmatprep.subr.mxu0 0.0
    %1162 = vmatpush1.msra.mxu0 0.0
    %1163 = vmatprep.subr.mxu0 0.0
    %1164 = vmatpush1.msra.mxu0 0.0
    %1165 = vmatprep.subr.mxu0 0.0
    %1166 = vmatpush1.msra.mxu0 0.0
    %1167 = vmatprep.subr.mxu0 0.0
    %1168 = vmatpush1.msra.mxu0 0.0
    %1169 = vmatprep.subr.mxu0 0.0
    %1170 = vmatpush1.msra.mxu0 0.0
    %1171 = vmatprep.subr.mxu0 0.0
    %1172 = vmatpush1.msra.mxu0 0.0
    %1173 = vmatprep.subr.mxu0 0.0
    %1174 = vmatpush1.msra.mxu0 0.0
    %1175 = vmatprep.subr.mxu0 0.0
    %1176 = vmatpush1.msra.mxu0 0.0
    %1177 = vmatprep.subr.mxu0 0.0
    %1178 = vmatpush1.msra.mxu0 0.0
    %1179 = vmatprep.mubr.f32.mxu0 0.0
    %1180 = vmatmul.mubr.f32.gmra.mrb[0].mxu0 %v969
    %v1181 = vpop.f32.mrb[0].mxu0
    %v1182 = vadd.f32 0.0, %v1181
    %v1183 = vpop.f32.mrb[0].mxu0
    %v1184 = vadd.f32 0.0, %v1183
    %1185 = vdwg.mxu0
    %v1194 = vrot.slane %v1037, 7
    %v1195 = vsel %vm290, %v1194, %v1036
    %v1196 = vrot.slane %v1038, 6
    %v1197 = vsel %vm293, %v1196, %v1195
    %v1198 = vrot.slane %v1039, 5
    %v1199 = vsel %vm296, %v1198, %v1197
    %v1200 = vrot.slane %v1040, 4
    %v1201 = vsel %vm299, %v1200, %v1199
    %v1202 = vrot.slane %v1041, 3
    %v1203 = vsel %vm302, %v1202, %v1201
    %v1204 = vrot.slane %v1042, 2
    %v1205 = vsel %vm305, %v1204, %v1203
    %v1206 = vrot.slane %v1043, 1
    %v1207 = vsel %vm308, %v1206, %v1205
    %v1208 = vsel %vm314, %v1207, 0
    %1210 = vmatprep.subr.mxu0 %v320
    %1211 = vmatpush1.msra.mxu0 %v318
    %1212 = vmatprep.subr.mxu0 0.0
    %1213 = vmatpush1.msra.mxu0 0.0
    %1214 = vmatprep.subr.mxu0 0.0
    %1215 = vmatpush1.msra.mxu0 0.0
    %1216 = vmatprep.subr.mxu0 0.0
    %1217 = vmatpush1.msra.mxu0 0.0
    %1218 = vmatprep.subr.mxu0 0.0
    %1219 = vmatpush1.msra.mxu0 0.0
    %1220 = vmatprep.subr.mxu0 0.0
    %1221 = vmatpush1.msra.mxu0 0.0
    %1222 = vmatprep.subr.mxu0 0.0
    %1223 = vmatpush1.msra.mxu0 0.0
    %1224 = vmatprep.subr.mxu0 0.0
    %1225 = vmatpush1.msra.mxu0 0.0
    %1226 = vmatprep.subr.mxu0 0.0
    %1227 = vmatpush1.msra.mxu0 0.0
    %1228 = vmatprep.subr.mxu0 0.0
    %1229 = vmatpush1.msra.mxu0 0.0
    %1230 = vmatprep.subr.mxu0 0.0
    %1231 = vmatpush1.msra.mxu0 0.0
    %1232 = vmatprep.subr.mxu0 0.0
    %1233 = vmatpush1.msra.mxu0 0.0
    %1234 = vmatprep.subr.mxu0 0.0
    %1235 = vmatpush1.msra.mxu0 0.0
    %1236 = vmatprep.subr.mxu0 0.0
    %1237 = vmatpush1.msra.mxu0 0.0
    %1238 = vmatprep.subr.mxu0 0.0
    %1239 = vmatpush1.msra.mxu0 0.0
    %1240 = vmatprep.subr.mxu0 0.0
    %1241 = vmatpush1.msra.mxu0 0.0
    %1242 = vmatprep.subr.mxu0 0.0
    %1243 = vmatpush1.msra.mxu0 0.0
    %1244 = vmatprep.subr.mxu0 0.0
    %1245 = vmatpush1.msra.mxu0 0.0
    %1246 = vmatprep.subr.mxu0 0.0
    %1247 = vmatpush1.msra.mxu0 0.0
    %1248 = vmatprep.subr.mxu0 0.0
    %1249 = vmatpush1.msra.mxu0 0.0
    %1250 = vmatprep.subr.mxu0 0.0
    %1251 = vmatpush1.msra.mxu0 0.0
    %1252 = vmatprep.subr.mxu0 0.0
    %1253 = vmatpush1.msra.mxu0 0.0
    %1254 = vmatprep.subr.mxu0 0.0
    %1255 = vmatpush1.msra.mxu0 0.0
    %1256 = vmatprep.subr.mxu0 0.0
    %1257 = vmatpush1.msra.mxu0 0.0
    %1258 = vmatprep.subr.mxu0 0.0
    %1259 = vmatpush1.msra.mxu0 0.0
    %1260 = vmatprep.subr.mxu0 0.0
    %1261 = vmatpush1.msra.mxu0 0.0
    %1262 = vmatprep.subr.mxu0 0.0
    %1263 = vmatpush1.msra.mxu0 0.0
    %1264 = vmatprep.subr.mxu0 0.0
    %1265 = vmatpush1.msra.mxu0 0.0
    %1266 = vmatprep.subr.mxu0 0.0
    %1267 = vmatpush1.msra.mxu0 0.0
    %1268 = vmatprep.subr.mxu0 0.0
    %1269 = vmatpush1.msra.mxu0 0.0
    %1270 = vmatprep.subr.mxu0 0.0
    %1271 = vmatpush1.msra.mxu0 0.0
    %1272 = vmatprep.subr.mxu0 0.0
    %1273 = vmatpush1.msra.mxu0 0.0
    %1274 = vmatprep.mubr.f32.mxu0 0.0
    %1275 = vmatmul.mubr.f32.gmra.mrb[0].mxu0 %v1208
    %v1276 = vpop.f32.mrb[0].mxu0
    %v1277 = vadd.f32 %v1111, %v1276
    %v1278 = vpop.f32.mrb[0].mxu0
    %v1279 = vadd.f32 %v1113, %v1278
    %1280 = vdwg.mxu0
    %1281 = vmatprep.subr.mxu0 %v324
    %1282 = vmatpush1.msra.mxu0 %v322
    %1283 = vmatprep.subr.mxu0 0.0
    %1284 = vmatpush1.msra.mxu0 0.0
    %1285 = vmatprep.subr.mxu0 0.0
    %1286 = vmatpush1.msra.mxu0 0.0
    %1287 = vmatprep.subr.mxu0 0.0
    %1288 = vmatpush1.msra.mxu0 0.0
    %1289 = vmatprep.subr.mxu0 0.0
    %1290 = vmatpush1.msra.mxu0 0.0
    %1291 = vmatprep.subr.mxu0 0.0
    %1292 = vmatpush1.msra.mxu0 0.0
    %1293 = vmatprep.subr.mxu0 0.0
    %1294 = vmatpush1.msra.mxu0 0.0
    %1295 = vmatprep.subr.mxu0 0.0
    %1296 = vmatpush1.msra.mxu0 0.0
    %1297 = vmatprep.subr.mxu0 0.0
    %1298 = vmatpush1.msra.mxu0 0.0
    %1299 = vmatprep.subr.mxu0 0.0
    %1300 = vmatpush1.msra.mxu0 0.0
    %1301 = vmatprep.subr.mxu0 0.0
    %1302 = vmatpush1.msra.mxu0 0.0
    %1303 = vmatprep.subr.mxu0 0.0
    %1304 = vmatpush1.msra.mxu0 0.0
    %1305 = vmatprep.subr.mxu0 0.0
    %1306 = vmatpush1.msra.mxu0 0.0
    %1307 = vmatprep.subr.mxu0 0.0
    %1308 = vmatpush1.msra.mxu0 0.0
    %1309 = vmatprep.subr.mxu0 0.0
    %1310 = vmatpush1.msra.mxu0 0.0
    %1311 = vmatprep.subr.mxu0 0.0
    %1312 = vmatpush1.msra.mxu0 0.0
    %1313 = vmatprep.subr.mxu0 0.0
    %1314 = vmatpush1.msra.mxu0 0.0
    %1315 = vmatprep.subr.mxu0 0.0
    %1316 = vmatpush1.msra.mxu0 0.0
    %1317 = vmatprep.subr.mxu0 0.0
    %1318 = vmatpush1.msra.mxu0 0.0
    %1319 = vmatprep.subr.mxu0 0.0
    %1320 = vmatpush1.msra.mxu0 0.0
    %1321 = vmatprep.subr.mxu0 0.0
    %1322 = vmatpush1.msra.mxu0 0.0
    %1323 = vmatprep.subr.mxu0 0.0
    %1324 = vmatpush1.msra.mxu0 0.0
    %1325 = vmatprep.subr.mxu0 0.0
    %1326 = vmatpush1.msra.mxu0 0.0
    %1327 = vmatprep.subr.mxu0 0.0
    %1328 = vmatpush1.msra.mxu0 0.0
    %1329 = vmatprep.subr.mxu0 0.0
    %1330 = vmatpush1.msra.mxu0 0.0
    %1331 = vmatprep.subr.mxu0 0.0
    %1332 = vmatpush1.msra.mxu0 0.0
    %1333 = vmatprep.subr.mxu0 0.0
    %1334 = vmatpush1.msra.mxu0 0.0
    %1335 = vmatprep.subr.mxu0 0.0
    %1336 = vmatpush1.msra.mxu0 0.0
    %1337 = vmatprep.subr.mxu0 0.0
    %1338 = vmatpush1.msra.mxu0 0.0
    %1339 = vmatprep.subr.mxu0 0.0
    %1340 = vmatpush1.msra.mxu0 0.0
    %1341 = vmatprep.subr.mxu0 0.0
    %1342 = vmatpush1.msra.mxu0 0.0
    %1343 = vmatprep.subr.mxu0 0.0
    %1344 = vmatpush1.msra.mxu0 0.0
    %1345 = vmatprep.mubr.f32.mxu0 0.0
    %1346 = vmatmul.mubr.f32.gmra.mrb[0].mxu0 %v1208
    %v1347 = vpop.f32.mrb[0].mxu0
    %v1348 = vadd.f32 %v1182, %v1347
    %v1349 = vpop.f32.mrb[0].mxu0
    %v1350 = vadd.f32 %v1184, %v1349
    %1351 = vdwg.mxu0
    %v1352 = vadd.f32 %v1277, %v112
    %v1353 = vadd.f32 %v1279, %v116
    %v1354 = vadd.f32 %v1348, %v120
    %v1355 = vadd.f32 %v1350, %v124
    %v1356 = vxor.u32 %v1352, 2147483648
    %v1357 = vmul.f32 %v1356, 1.442695
    %v1358 = vpow.pop %v1357
    %v1359 = vadd.f32 %v1358, 1.0
    %v1360 = vrcp.pop %v1359
    %v1361 = vmul.f32 1.0, %v1360
    %v1362 = vxor.u32 %v1353, 2147483648
    %v1363 = vmul.f32 %v1362, 1.442695
    %v1364 = vpow.pop %v1363
    %v1365 = vadd.f32 %v1364, 1.0
    %v1366 = vrcp.pop %v1365
    %v1367 = vmul.f32 1.0, %v1366
    %v1368 = vxor.u32 %v1354, 2147483648
    %v1369 = vmul.f32 %v1368, 1.442695
    %v1370 = vpow.pop %v1369
    %v1371 = vadd.f32 %v1370, 1.0
    %v1372 = vrcp.pop %v1371
    %v1373 = vmul.f32 1.0, %v1372
    %v1374 = vtanh.pop %v1355
    %v1375 = vmul.f32 %v1361, %v1374
    %v1376 = vmul.f32 %v1373, %v935
    %v1377 = vadd.f32 %v1375, %v1376
    %v1378 = vtanh.pop %v1377
    %v1379 = vmul.f32 %v1367, %v1378
    %v1380 = vld [vmem:[%s1 + $0x2] sm:$0x1]
    %v1381 = vld [vmem:[%s1 + $0xa] sm:$0x1]
    %v1382 = vld [vmem:[%s1 + $0x12] sm:$0x1]
    %v1383 = vld [vmem:[%s1 + $0x1a] sm:$0x1]
    %v1384 = vld [vmem:[%s1 + $0x22] sm:$0x1]
    %v1385 = vld [vmem:[%s1 + $0x2a] sm:$0x1]
    %v1386 = vld [vmem:[%s1 + $0x32] sm:$0x1]
    %v1387 = vld [vmem:[%s1 + $0x3a] sm:$0x1]
    %v1396 = vrot.slane %v1381, 7
    %v1397 = vsel %vm290, %v1396, %v1380
    %v1398 = vrot.slane %v1382, 6
    %v1399 = vsel %vm293, %v1398, %v1397
    %v1400 = vrot.slane %v1383, 5
    %v1401 = vsel %vm296, %v1400, %v1399
    %v1402 = vrot.slane %v1384, 4
    %v1403 = vsel %vm299, %v1402, %v1401
    %v1404 = vrot.slane %v1385, 3
    %v1405 = vsel %vm302, %v1404, %v1403
    %v1406 = vrot.slane %v1386, 2
    %v1407 = vsel %vm305, %v1406, %v1405
    %v1408 = vrot.slane %v1387, 1
    %v1409 = vsel %vm308, %v1408, %v1407
    %v1411 = vadd.f32 %v1379, %v1409
    %v1413 = vcombine.high %v1411, %v1411
    %v1415 = vunpack.c.l.s4 1966171168
    %v1416 = vunpack.c.0.s8 %v1415
    %v1417 = vlaneseq
    %v1418 = vshrl.u32 %v1417, 7
    %v1419 = vsub.s32 %v1416, %v1418
    %v1420 = vrot.slane %v1411, %v1419
    %v1422 = vunpack.c.l.s4 1966171168
    %v1423 = vunpack.c.0.s8 %v1422
    %v1424 = vlaneseq
    %v1425 = vshrl.u32 %v1424, 7
    %v1426 = vsub.s32 %v1423, %v1425
    %v1427 = vrot.slane %v1413, %v1426
    %v1428 = vcombine.high %v1420, %v1420
    %v1429 = vcombine.high %v1427, %v1427
    %v1431 = vunpack.c.l.s4 1966171168
    %v1432 = vunpack.c.0.s8 %v1431
    %v1433 = vlaneseq
    %v1434 = vshrl.u32 %v1433, 7
    %v1435 = vsub.s32 %v1432, %v1434
    %v1436 = vrot.slane %v1420, %v1435
    %v1438 = vunpack.c.l.s4 1966171168
    %v1439 = vunpack.c.0.s8 %v1438
    %v1440 = vlaneseq
    %v1441 = vshrl.u32 %v1440, 7
    %v1442 = vsub.s32 %v1439, %v1441
    %v1443 = vrot.slane %v1427, %v1442
    %v1445 = vunpack.c.l.s4 1966171168
    %v1446 = vunpack.c.0.s8 %v1445
    %v1447 = vlaneseq
    %v1448 = vshrl.u32 %v1447, 7
    %v1449 = vsub.s32 %v1446, %v1448
    %v1450 = vrot.slane %v1428, %v1449
    %v1452 = vunpack.c.l.s4 1966171168
    %v1453 = vunpack.c.0.s8 %v1452
    %v1454 = vlaneseq
    %v1455 = vshrl.u32 %v1454, 7
    %v1456 = vsub.s32 %v1453, %v1455
    %v1457 = vrot.slane %v1429, %v1456
    %v1458 = vcombine.high %v1436, %v1436
    %v1459 = vcombine.high %v1443, %v1443
    %v1460 = vcombine.high %v1450, %v1450
    %v1461 = vcombine.high %v1457, %v1457
    %1470 = vst [vmem:[#allocation7 + $0x2] sm:$0x1] %v1436
    %1471 = vst [vmem:[#allocation7 + $0xa] sm:$0x1] %v1450
    %1472 = vst [vmem:[#allocation7 + $0x12] sm:$0x1] %v1458
    %1473 = vst [vmem:[#allocation7 + $0x1a] sm:$0x1] %v1460
    %1474 = vst [vmem:[#allocation7 + $0x22] sm:$0x1] %v1443
    %1475 = vst [vmem:[#allocation7 + $0x2a] sm:$0x1] %v1457
    %1476 = vst [vmem:[#allocation7 + $0x32] sm:$0x1] %v1459
    %1477 = vst [vmem:[#allocation7 + $0x3a] sm:$0x1] %v1461
    %v1478 = vld [vmem:[%s0 + $0x3] sm:$0x1]
    %v1479 = vld [vmem:[%s0 + $0xb] sm:$0x1]
    %v1480 = vld [vmem:[%s0 + $0x13] sm:$0x1]
    %v1481 = vld [vmem:[%s0 + $0x1b] sm:$0x1]
    %v1482 = vld [vmem:[%s0 + $0x23] sm:$0x1]
    %v1483 = vld [vmem:[%s0 + $0x2b] sm:$0x1]
    %v1484 = vld [vmem:[%s0 + $0x33] sm:$0x1]
    %v1485 = vld [vmem:[%s0 + $0x3b] sm:$0x1]
    %1486 = vmatprep.subr.mxu0 %v44
    %1487 = vmatpush1.msra.mxu0 %v43
    %1488 = vmatprep.subr.mxu0 %v48
    %1489 = vmatpush1.msra.mxu0 %v47
    %1490 = vmatprep.subr.mxu0 %v52
    %1491 = vmatpush1.msra.mxu0 %v51
    %1492 = vmatprep.subr.mxu0 %v56
    %1493 = vmatpush1.msra.mxu0 %v55
    %1494 = vmatprep.subr.mxu0 %v60
    %1495 = vmatpush1.msra.mxu0 %v59
    %1496 = vmatprep.subr.mxu0 %v64
    %1497 = vmatpush1.msra.mxu0 %v63
    %1498 = vmatprep.subr.mxu0 %v68
    %1499 = vmatpush1.msra.mxu0 %v67
    %1500 = vmatprep.subr.mxu0 %v72
    %1501 = vmatpush1.msra.mxu0 %v71
    %1502 = vmatprep.subr.mxu0 %v76
    %1503 = vmatpush1.msra.mxu0 %v75
    %1504 = vmatprep.subr.mxu0 %v80
    %1505 = vmatpush1.msra.mxu0 %v79
    %1506 = vmatprep.subr.mxu0 %v84
    %1507 = vmatpush1.msra.mxu0 %v83
    %1508 = vmatprep.subr.mxu0 %v88
    %1509 = vmatpush1.msra.mxu0 %v87
    %1510 = vmatprep.subr.mxu0 %v92
    %1511 = vmatpush1.msra.mxu0 %v91
    %1512 = vmatprep.subr.mxu0 %v96
    %1513 = vmatpush1.msra.mxu0 %v95
    %1514 = vmatprep.subr.mxu0 %v100
    %1515 = vmatpush1.msra.mxu0 %v99
    %1516 = vmatprep.subr.mxu0 %v104
    %1517 = vmatpush1.msra.mxu0 %v103
    %1518 = vmatprep.subr.mxu0 0.0
    %1519 = vmatpush1.msra.mxu0 0.0
    %1520 = vmatprep.subr.mxu0 0.0
    %1521 = vmatpush1.msra.mxu0 0.0
    %1522 = vmatprep.subr.mxu0 0.0
    %1523 = vmatpush1.msra.mxu0 0.0
    %1524 = vmatprep.subr.mxu0 0.0
    %1525 = vmatpush1.msra.mxu0 0.0
    %1526 = vmatprep.subr.mxu0 0.0
    %1527 = vmatpush1.msra.mxu0 0.0
    %1528 = vmatprep.subr.mxu0 0.0
    %1529 = vmatpush1.msra.mxu0 0.0
    %1530 = vmatprep.subr.mxu0 0.0
    %1531 = vmatpush1.msra.mxu0 0.0
    %1532 = vmatprep.subr.mxu0 0.0
    %1533 = vmatpush1.msra.mxu0 0.0
    %1534 = vmatprep.subr.mxu0 0.0
    %1535 = vmatpush1.msra.mxu0 0.0
    %1536 = vmatprep.subr.mxu0 0.0
    %1537 = vmatpush1.msra.mxu0 0.0
    %1538 = vmatprep.subr.mxu0 0.0
    %1539 = vmatpush1.msra.mxu0 0.0
    %1540 = vmatprep.subr.mxu0 0.0
    %1541 = vmatpush1.msra.mxu0 0.0
    %1542 = vmatprep.subr.mxu0 0.0
    %1543 = vmatpush1.msra.mxu0 0.0
    %1544 = vmatprep.subr.mxu0 0.0
    %1545 = vmatpush1.msra.mxu0 0.0
    %1546 = vmatprep.subr.mxu0 0.0
    %1547 = vmatpush1.msra.mxu0 0.0
    %1548 = vmatprep.subr.mxu0 0.0
    %1549 = vmatpush1.msra.mxu0 0.0
    %1550 = vmatprep.mubr.f32.mxu0 0.0
    %1551 = vmatmul.mubr.f32.gmra.mrb[0].mxu0 %v1411
    %v1552 = vpop.f32.mrb[0].mxu0
    %v1553 = vadd.f32 0.0, %v1552
    %v1554 = vpop.f32.mrb[0].mxu0
    %v1555 = vadd.f32 0.0, %v1554
    %1556 = vdwg.mxu0
    %1557 = vmatprep.subr.mxu0 %v46
    %1558 = vmatpush1.msra.mxu0 %v45
    %1559 = vmatprep.subr.mxu0 %v50
    %1560 = vmatpush1.msra.mxu0 %v49
    %1561 = vmatprep.subr.mxu0 %v54
    %1562 = vmatpush1.msra.mxu0 %v53
    %1563 = vmatprep.subr.mxu0 %v58
    %1564 = vmatpush1.msra.mxu0 %v57
    %1565 = vmatprep.subr.mxu0 %v62
    %1566 = vmatpush1.msra.mxu0 %v61
    %1567 = vmatprep.subr.mxu0 %v66
    %1568 = vmatpush1.msra.mxu0 %v65
    %1569 = vmatprep.subr.mxu0 %v70
    %1570 = vmatpush1.msra.mxu0 %v69
    %1571 = vmatprep.subr.mxu0 %v74
    %1572 = vmatpush1.msra.mxu0 %v73
    %1573 = vmatprep.subr.mxu0 %v78
    %1574 = vmatpush1.msra.mxu0 %v77
    %1575 = vmatprep.subr.mxu0 %v82
    %1576 = vmatpush1.msra.mxu0 %v81
    %1577 = vmatprep.subr.mxu0 %v86
    %1578 = vmatpush1.msra.mxu0 %v85
    %1579 = vmatprep.subr.mxu0 %v90
    %1580 = vmatpush1.msra.mxu0 %v89
    %1581 = vmatprep.subr.mxu0 %v94
    %1582 = vmatpush1.msra.mxu0 %v93
    %1583 = vmatprep.subr.mxu0 %v98
    %1584 = vmatpush1.msra.mxu0 %v97
    %1585 = vmatprep.subr.mxu0 %v102
    %1586 = vmatpush1.msra.mxu0 %v101
    %1587 = vmatprep.subr.mxu0 %v106
    %1588 = vmatpush1.msra.mxu0 %v105
    %1589 = vmatprep.subr.mxu0 0.0
    %1590 = vmatpush1.msra.mxu0 0.0
    %1591 = vmatprep.subr.mxu0 0.0
    %1592 = vmatpush1.msra.mxu0 0.0
    %1593 = vmatprep.subr.mxu0 0.0
    %1594 = vmatpush1.msra.mxu0 0.0
    %1595 = vmatprep.subr.mxu0 0.0
    %1596 = vmatpush1.msra.mxu0 0.0
    %1597 = vmatprep.subr.mxu0 0.0
    %1598 = vmatpush1.msra.mxu0 0.0
    %1599 = vmatprep.subr.mxu0 0.0
    %1600 = vmatpush1.msra.mxu0 0.0
    %1601 = vmatprep.subr.mxu0 0.0
    %1602 = vmatpush1.msra.mxu0 0.0
    %1603 = vmatprep.subr.mxu0 0.0
    %1604 = vmatpush1.msra.mxu0 0.0
    %1605 = vmatprep.subr.mxu0 0.0
    %1606 = vmatpush1.msra.mxu0 0.0
    %1607 = vmatprep.subr.mxu0 0.0
    %1608 = vmatpush1.msra.mxu0 0.0
    %1609 = vmatprep.subr.mxu0 0.0
    %1610 = vmatpush1.msra.mxu0 0.0
    %1611 = vmatprep.subr.mxu0 0.0
    %1612 = vmatpush1.msra.mxu0 0.0
    %1613 = vmatprep.subr.mxu0 0.0
    %1614 = vmatpush1.msra.mxu0 0.0
    %1615 = vmatprep.subr.mxu0 0.0
    %1616 = vmatpush1.msra.mxu0 0.0
    %1617 = vmatprep.subr.mxu0 0.0
    %1618 = vmatpush1.msra.mxu0 0.0
    %1619 = vmatprep.subr.mxu0 0.0
    %1620 = vmatpush1.msra.mxu0 0.0
    %1621 = vmatprep.mubr.f32.mxu0 0.0
    %1622 = vmatmul.mubr.f32.gmra.mrb[0].mxu0 %v1411
    %v1623 = vpop.f32.mrb[0].mxu0
    %v1624 = vadd.f32 0.0, %v1623
    %v1625 = vpop.f32.mrb[0].mxu0
    %v1626 = vadd.f32 0.0, %v1625
    %1627 = vdwg.mxu0
    %v1636 = vrot.slane %v1479, 7
    %v1637 = vsel %vm290, %v1636, %v1478
    %v1638 = vrot.slane %v1480, 6
    %v1639 = vsel %vm293, %v1638, %v1637
    %v1640 = vrot.slane %v1481, 5
    %v1641 = vsel %vm296, %v1640, %v1639
    %v1642 = vrot.slane %v1482, 4
    %v1643 = vsel %vm299, %v1642, %v1641
    %v1644 = vrot.slane %v1483, 3
    %v1645 = vsel %vm302, %v1644, %v1643
    %v1646 = vrot.slane %v1484, 2
    %v1647 = vsel %vm305, %v1646, %v1645
    %v1648 = vrot.slane %v1485, 1
    %v1649 = vsel %vm308, %v1648, %v1647
    %v1650 = vsel %vm314, %v1649, 0
    %1652 = vmatprep.subr.mxu0 %v320
    %1653 = vmatpush1.msra.mxu0 %v318
    %1654 = vmatprep.subr.mxu0 0.0
    %1655 = vmatpush1.msra.mxu0 0.0
    %1656 = vmatprep.subr.mxu0 0.0
    %1657 = vmatpush1.msra.mxu0 0.0
    %1658 = vmatprep.subr.mxu0 0.0
    %1659 = vmatpush1.msra.mxu0 0.0
    %1660 = vmatprep.subr.mxu0 0.0
    %1661 = vmatpush1.msra.mxu0 0.0
    %1662 = vmatprep.subr.mxu0 0.0
    %1663 = vmatpush1.msra.mxu0 0.0
    %1664 = vmatprep.subr.mxu0 0.0
    %1665 = vmatpush1.msra.mxu0 0.0
    %1666 = vmatprep.subr.mxu0 0.0
    %1667 = vmatpush1.msra.mxu0 0.0
    %1668 = vmatprep.subr.mxu0 0.0
    %1669 = vmatpush1.msra.mxu0 0.0
    %1670 = vmatprep.subr.mxu0 0.0
    %1671 = vmatpush1.msra.mxu0 0.0
    %1672 = vmatprep.subr.mxu0 0.0
    %1673 = vmatpush1.msra.mxu0 0.0
    %1674 = vmatprep.subr.mxu0 0.0
    %1675 = vmatpush1.msra.mxu0 0.0
    %1676 = vmatprep.subr.mxu0 0.0
    %1677 = vmatpush1.msra.mxu0 0.0
    %1678 = vmatprep.subr.mxu0 0.0
    %1679 = vmatpush1.msra.mxu0 0.0
    %1680 = vmatprep.subr.mxu0 0.0
    %1681 = vmatpush1.msra.mxu0 0.0
    %1682 = vmatprep.subr.mxu0 0.0
    %1683 = vmatpush1.msra.mxu0 0.0
    %1684 = vmatprep.subr.mxu0 0.0
    %1685 = vmatpush1.msra.mxu0 0.0
    %1686 = vmatprep.subr.mxu0 0.0
    %1687 = vmatpush1.msra.mxu0 0.0
    %1688 = vmatprep.subr.mxu0 0.0
    %1689 = vmatpush1.msra.mxu0 0.0
    %1690 = vmatprep.subr.mxu0 0.0
    %1691 = vmatpush1.msra.mxu0 0.0
    %1692 = vmatprep.subr.mxu0 0.0
    %1693 = vmatpush1.msra.mxu0 0.0
    %1694 = vmatprep.subr.mxu0 0.0
    %1695 = vmatpush1.msra.mxu0 0.0
    %1696 = vmatprep.subr.mxu0 0.0
    %1697 = vmatpush1.msra.mxu0 0.0
    %1698 = vmatprep.subr.mxu0 0.0
    %1699 = vmatpush1.msra.mxu0 0.0
    %1700 = vmatprep.subr.mxu0 0.0
    %1701 = vmatpush1.msra.mxu0 0.0
    %1702 = vmatprep.subr.mxu0 0.0
    %1703 = vmatpush1.msra.mxu0 0.0
    %1704 = vmatprep.subr.mxu0 0.0
    %1705 = vmatpush1.msra.mxu0 0.0
    %1706 = vmatprep.subr.mxu0 0.0
    %1707 = vmatpush1.msra.mxu0 0.0
    %1708 = vmatprep.subr.mxu0 0.0
    %1709 = vmatpush1.msra.mxu0 0.0
    %1710 = vmatprep.subr.mxu0 0.0
    %1711 = vmatpush1.msra.mxu0 0.0
    %1712 = vmatprep.subr.mxu0 0.0
    %1713 = vmatpush1.msra.mxu0 0.0
    %1714 = vmatprep.subr.mxu0 0.0
    %1715 = vmatpush1.msra.mxu0 0.0
    %1716 = vmatprep.mubr.f32.mxu0 0.0
    %1717 = vmatmul.mubr.f32.gmra.mrb[0].mxu0 %v1650
    %v1718 = vpop.f32.mrb[0].mxu0
    %v1719 = vadd.f32 %v1553, %v1718
    %v1720 = vpop.f32.mrb[0].mxu0
    %v1721 = vadd.f32 %v1555, %v1720
    %1722 = vdwg.mxu0
    %1723 = vmatprep.subr.mxu0 %v324
    %1724 = vmatpush1.msra.mxu0 %v322
    %1725 = vmatprep.subr.mxu0 0.0
    %1726 = vmatpush1.msra.mxu0 0.0
    %1727 = vmatprep.subr.mxu0 0.0
    %1728 = vmatpush1.msra.mxu0 0.0
    %1729 = vmatprep.subr.mxu0 0.0
    %1730 = vmatpush1.msra.mxu0 0.0
    %1731 = vmatprep.subr.mxu0 0.0
    %1732 = vmatpush1.msra.mxu0 0.0
    %1733 = vmatprep.subr.mxu0 0.0
    %1734 = vmatpush1.msra.mxu0 0.0
    %1735 = vmatprep.subr.mxu0 0.0
    %1736 = vmatpush1.msra.mxu0 0.0
    %1737 = vmatprep.subr.mxu0 0.0
    %1738 = vmatpush1.msra.mxu0 0.0
    %1739 = vmatprep.subr.mxu0 0.0
    %1740 = vmatpush1.msra.mxu0 0.0
    %1741 = vmatprep.subr.mxu0 0.0
    %1742 = vmatpush1.msra.mxu0 0.0
    %1743 = vmatprep.subr.mxu0 0.0
    %1744 = vmatpush1.msra.mxu0 0.0
    %1745 = vmatprep.subr.mxu0 0.0
    %1746 = vmatpush1.msra.mxu0 0.0
    %1747 = vmatprep.subr.mxu0 0.0
    %1748 = vmatpush1.msra.mxu0 0.0
    %1749 = vmatprep.subr.mxu0 0.0
    %1750 = vmatpush1.msra.mxu0 0.0
    %1751 = vmatprep.subr.mxu0 0.0
    %1752 = vmatpush1.msra.mxu0 0.0
    %1753 = vmatprep.subr.mxu0 0.0
    %1754 = vmatpush1.msra.mxu0 0.0
    %1755 = vmatprep.subr.mxu0 0.0
    %1756 = vmatpush1.msra.mxu0 0.0
    %1757 = vmatprep.subr.mxu0 0.0
    %1758 = vmatpush1.msra.mxu0 0.0
    %1759 = vmatprep.subr.mxu0 0.0
    %1760 = vmatpush1.msra.mxu0 0.0
    %1761 = vmatprep.subr.mxu0 0.0
    %1762 = vmatpush1.msra.mxu0 0.0
    %1763 = vmatprep.subr.mxu0 0.0
    %1764 = vmatpush1.msra.mxu0 0.0
    %1765 = vmatprep.subr.mxu0 0.0
    %1766 = vmatpush1.msra.mxu0 0.0
    %1767 = vmatprep.subr.mxu0 0.0
    %1768 = vmatpush1.msra.mxu0 0.0
    %1769 = vmatprep.subr.mxu0 0.0
    %1770 = vmatpush1.msra.mxu0 0.0
    %1771 = vmatprep.subr.mxu0 0.0
    %1772 = vmatpush1.msra.mxu0 0.0
    %1773 = vmatprep.subr.mxu0 0.0
    %1774 = vmatpush1.msra.mxu0 0.0
    %1775 = vmatprep.subr.mxu0 0.0
    %1776 = vmatpush1.msra.mxu0 0.0
    %1777 = vmatprep.subr.mxu0 0.0
    %1778 = vmatpush1.msra.mxu0 0.0
    %1779 = vmatprep.subr.mxu0 0.0
    %1780 = vmatpush1.msra.mxu0 0.0
    %1781 = vmatprep.subr.mxu0 0.0
    %1782 = vmatpush1.msra.mxu0 0.0
    %1783 = vmatprep.subr.mxu0 0.0
    %1784 = vmatpush1.msra.mxu0 0.0
    %1785 = vmatprep.subr.mxu0 0.0
    %1786 = vmatpush1.msra.mxu0 0.0
    %1787 = vmatprep.mubr.f32.mxu0 0.0
    %1788 = vmatmul.mubr.f32.gmra.mrb[0].mxu0 %v1650
    %v1789 = vpop.f32.mrb[0].mxu0
    %v1790 = vadd.f32 %v1624, %v1789
    %v1791 = vpop.f32.mrb[0].mxu0
    %v1792 = vadd.f32 %v1626, %v1791
    %1793 = vdwg.mxu0
    %v1794 = vadd.f32 %v1719, %v112
    %v1795 = vadd.f32 %v1721, %v116
    %v1796 = vadd.f32 %v1790, %v120
    %v1797 = vadd.f32 %v1792, %v124
    %v1798 = vxor.u32 %v1794, 2147483648
    %v1799 = vmul.f32 %v1798, 1.442695
    %v1800 = vpow.pop %v1799
    %v1801 = vadd.f32 %v1800, 1.0
    %v1802 = vrcp.pop %v1801
    %v1803 = vmul.f32 1.0, %v1802
    %v1804 = vxor.u32 %v1795, 2147483648
    %v1805 = vmul.f32 %v1804, 1.442695
    %v1806 = vpow.pop %v1805
    %v1807 = vadd.f32 %v1806, 1.0
    %v1808 = vrcp.pop %v1807
    %v1809 = vmul.f32 1.0, %v1808
    %v1810 = vxor.u32 %v1796, 2147483648
    %v1811 = vmul.f32 %v1810, 1.442695
    %v1812 = vpow.pop %v1811
    %v1813 = vadd.f32 %v1812, 1.0
    %v1814 = vrcp.pop %v1813
    %v1815 = vmul.f32 1.0, %v1814
    %v1816 = vtanh.pop %v1797
    %v1817 = vmul.f32 %v1803, %v1816
    %v1818 = vmul.f32 %v1815, %v1377
    %v1819 = vadd.f32 %v1817, %v1818
    %v1820 = vtanh.pop %v1819
    %v1821 = vmul.f32 %v1809, %v1820
    %v1822 = vld [vmem:[%s1 + $0x3] sm:$0x1]
    %v1823 = vld [vmem:[%s1 + $0xb] sm:$0x1]
    %v1824 = vld [vmem:[%s1 + $0x13] sm:$0x1]
    %v1825 = vld [vmem:[%s1 + $0x1b] sm:$0x1]
    %v1826 = vld [vmem:[%s1 + $0x23] sm:$0x1]
    %v1827 = vld [vmem:[%s1 + $0x2b] sm:$0x1]
    %v1828 = vld [vmem:[%s1 + $0x33] sm:$0x1]
    %v1829 = vld [vmem:[%s1 + $0x3b] sm:$0x1]
    %v1838 = vrot.slane %v1823, 7
    %v1839 = vsel %vm290, %v1838, %v1822
    %v1840 = vrot.slane %v1824, 6
    %v1841 = vsel %vm293, %v1840, %v1839
    %v1842 = vrot.slane %v1825, 5
    %v1843 = vsel %vm296, %v1842, %v1841
    %v1844 = vrot.slane %v1826, 4
    %v1845 = vsel %vm299, %v1844, %v1843
    %v1846 = vrot.slane %v1827, 3
    %v1847 = vsel %vm302, %v1846, %v1845
    %v1848 = vrot.slane %v1828, 2
    %v1849 = vsel %vm305, %v1848, %v1847
    %v1850 = vrot.slane %v1829, 1
    %v1851 = vsel %vm308, %v1850, %v1849
    %v1853 = vadd.f32 %v1821, %v1851
    %v1855 = vcombine.high %v1853, %v1853
    %v1857 = vunpack.c.l.s4 1966171168
    %v1858 = vunpack.c.0.s8 %v1857
    %v1859 = vlaneseq
    %v1860 = vshrl.u32 %v1859, 7
    %v1861 = vsub.s32 %v1858, %v1860
    %v1862 = vrot.slane %v1853, %v1861
    %v1864 = vunpack.c.l.s4 1966171168
    %v1865 = vunpack.c.0.s8 %v1864
    %v1866 = vlaneseq
    %v1867 = vshrl.u32 %v1866, 7
    %v1868 = vsub.s32 %v1865, %v1867
    %v1869 = vrot.slane %v1855, %v1868
    %v1870 = vcombine.high %v1862, %v1862
    %v1871 = vcombine.high %v1869, %v1869
    %v1873 = vunpack.c.l.s4 1966171168
    %v1874 = vunpack.c.0.s8 %v1873
    %v1875 = vlaneseq
    %v1876 = vshrl.u32 %v1875, 7
    %v1877 = vsub.s32 %v1874, %v1876
    %v1878 = vrot.slane %v1862, %v1877
    %v1880 = vunpack.c.l.s4 1966171168
    %v1881 = vunpack.c.0.s8 %v1880
    %v1882 = vlaneseq
    %v1883 = vshrl.u32 %v1882, 7
    %v1884 = vsub.s32 %v1881, %v1883
    %v1885 = vrot.slane %v1869, %v1884
    %v1887 = vunpack.c.l.s4 1966171168
    %v1888 = vunpack.c.0.s8 %v1887
    %v1889 = vlaneseq
    %v1890 = vshrl.u32 %v1889, 7
    %v1891 = vsub.s32 %v1888, %v1890
    %v1892 = vrot.slane %v1870, %v1891
    %v1894 = vunpack.c.l.s4 1966171168
    %v1895 = vunpack.c.0.s8 %v1894
    %v1896 = vlaneseq
    %v1897 = vshrl.u32 %v1896, 7
    %v1898 = vsub.s32 %v1895, %v1897
    %v1899 = vrot.slane %v1871, %v1898
    %v1900 = vcombine.high %v1878, %v1878
    %v1901 = vcombine.high %v1885, %v1885
    %v1902 = vcombine.high %v1892, %v1892
    %v1903 = vcombine.high %v1899, %v1899
    %1912 = vst [vmem:[#allocation7 + $0x3] sm:$0x1] %v1878
    %1913 = vst [vmem:[#allocation7 + $0xb] sm:$0x1] %v1892
    %1914 = vst [vmem:[#allocation7 + $0x13] sm:$0x1] %v1900
    %1915 = vst [vmem:[#allocation7 + $0x1b] sm:$0x1] %v1902
    %1916 = vst [vmem:[#allocation7 + $0x23] sm:$0x1] %v1885
    %1917 = vst [vmem:[#allocation7 + $0x2b] sm:$0x1] %v1899
    %1918 = vst [vmem:[#allocation7 + $0x33] sm:$0x1] %v1901
    %1919 = vst [vmem:[#allocation7 + $0x3b] sm:$0x1] %v1903
    %v1920 = vld [vmem:[%s0 + $0x4] sm:$0x1]
    %v1921 = vld [vmem:[%s0 + $0xc] sm:$0x1]
    %v1922 = vld [vmem:[%s0 + $0x14] sm:$0x1]
    %v1923 = vld [vmem:[%s0 + $0x1c] sm:$0x1]
    %v1924 = vld [vmem:[%s0 + $0x24] sm:$0x1]
    %v1925 = vld [vmem:[%s0 + $0x2c] sm:$0x1]
    %v1926 = vld [vmem:[%s0 + $0x34] sm:$0x1]
    %v1927 = vld [vmem:[%s0 + $0x3c] sm:$0x1]
    %1928 = vmatprep.subr.mxu0 %v44
    %1929 = vmatpush1.msra.mxu0 %v43
    %1930 = vmatprep.subr.mxu0 %v48
    %1931 = vmatpush1.msra.mxu0 %v47
    %1932 = vmatprep.subr.mxu0 %v52
    %1933 = vmatpush1.msra.mxu0 %v51
    %1934 = vmatprep.subr.mxu0 %v56
    %1935 = vmatpush1.msra.mxu0 %v55
    %1936 = vmatprep.subr.mxu0 %v60
    %1937 = vmatpush1.msra.mxu0 %v59
    %1938 = vmatprep.subr.mxu0 %v64
    %1939 = vmatpush1.msra.mxu0 %v63
    %1940 = vmatprep.subr.mxu0 %v68
    %1941 = vmatpush1.msra.mxu0 %v67
    %1942 = vmatprep.subr.mxu0 %v72
    %1943 = vmatpush1.msra.mxu0 %v71
    %1944 = vmatprep.subr.mxu0 %v76
    %1945 = vmatpush1.msra.mxu0 %v75
    %1946 = vmatprep.subr.mxu0 %v80
    %1947 = vmatpush1.msra.mxu0 %v79
    %1948 = vmatprep.subr.mxu0 %v84
    %1949 = vmatpush1.msra.mxu0 %v83
    %1950 = vmatprep.subr.mxu0 %v88
    %1951 = vmatpush1.msra.mxu0 %v87
    %1952 = vmatprep.subr.mxu0 %v92
    %1953 = vmatpush1.msra.mxu0 %v91
    %1954 = vmatprep.subr.mxu0 %v96
    %1955 = vmatpush1.msra.mxu0 %v95
    %1956 = vmatprep.subr.mxu0 %v100
    %1957 = vmatpush1.msra.mxu0 %v99
    %1958 = vmatprep.subr.mxu0 %v104
    %1959 = vmatpush1.msra.mxu0 %v103
    %1960 = vmatprep.subr.mxu0 0.0
    %1961 = vmatpush1.msra.mxu0 0.0
    %1962 = vmatprep.subr.mxu0 0.0
    %1963 = vmatpush1.msra.mxu0 0.0
    %1964 = vmatprep.subr.mxu0 0.0
    %1965 = vmatpush1.msra.mxu0 0.0
    %1966 = vmatprep.subr.mxu0 0.0
    %1967 = vmatpush1.msra.mxu0 0.0
    %1968 = vmatprep.subr.mxu0 0.0
    %1969 = vmatpush1.msra.mxu0 0.0
    %1970 = vmatprep.subr.mxu0 0.0
    %1971 = vmatpush1.msra.mxu0 0.0
    %1972 = vmatprep.subr.mxu0 0.0
    %1973 = vmatpush1.msra.mxu0 0.0
    %1974 = vmatprep.subr.mxu0 0.0
    %1975 = vmatpush1.msra.mxu0 0.0
    %1976 = vmatprep.subr.mxu0 0.0
    %1977 = vmatpush1.msra.mxu0 0.0
    %1978 = vmatprep.subr.mxu0 0.0
    %1979 = vmatpush1.msra.mxu0 0.0
    %1980 = vmatprep.subr.mxu0 0.0
    %1981 = vmatpush1.msra.mxu0 0.0
    %1982 = vmatprep.subr.mxu0 0.0
    %1983 = vmatpush1.msra.mxu0 0.0
    %1984 = vmatprep.subr.mxu0 0.0
    %1985 = vmatpush1.msra.mxu0 0.0
    %1986 = vmatprep.subr.mxu0 0.0
    %1987 = vmatpush1.msra.mxu0 0.0
    %1988 = vmatprep.subr.mxu0 0.0
    %1989 = vmatpush1.msra.mxu0 0.0
    %1990 = vmatprep.subr.mxu0 0.0
    %1991 = vmatpush1.msra.mxu0 0.0
    %1992 = vmatprep.mubr.f32.mxu0 0.0
    %1993 = vmatmul.mubr.f32.gmra.mrb[0].mxu0 %v1853
    %v1994 = vpop.f32.mrb[0].mxu0
    %v1995 = vadd.f32 0.0, %v1994
    %v1996 = vpop.f32.mrb[0].mxu0
    %v1997 = vadd.f32 0.0, %v1996
    %1998 = vdwg.mxu0
    %1999 = vmatprep.subr.mxu0 %v46
    %2000 = vmatpush1.msra.mxu0 %v45
    %2001 = vmatprep.subr.mxu0 %v50
    %2002 = vmatpush1.msra.mxu0 %v49
    %2003 = vmatprep.subr.mxu0 %v54
    %2004 = vmatpush1.msra.mxu0 %v53
    %2005 = vmatprep.subr.mxu0 %v58
    %2006 = vmatpush1.msra.mxu0 %v57
    %2007 = vmatprep.subr.mxu0 %v62
    %2008 = vmatpush1.msra.mxu0 %v61
    %2009 = vmatprep.subr.mxu0 %v66
    %2010 = vmatpush1.msra.mxu0 %v65
    %2011 = vmatprep.subr.mxu0 %v70
    %2012 = vmatpush1.msra.mxu0 %v69
    %2013 = vmatprep.subr.mxu0 %v74
    %2014 = vmatpush1.msra.mxu0 %v73
    %2015 = vmatprep.subr.mxu0 %v78
    %2016 = vmatpush1.msra.mxu0 %v77
    %2017 = vmatprep.subr.mxu0 %v82
    %2018 = vmatpush1.msra.mxu0 %v81
    %2019 = vmatprep.subr.mxu0 %v86
    %2020 = vmatpush1.msra.mxu0 %v85
    %2021 = vmatprep.subr.mxu0 %v90
    %2022 = vmatpush1.msra.mxu0 %v89
    %2023 = vmatprep.subr.mxu0 %v94
    %2024 = vmatpush1.msra.mxu0 %v93
    %2025 = vmatprep.subr.mxu0 %v98
    %2026 = vmatpush1.msra.mxu0 %v97
    %2027 = vmatprep.subr.mxu0 %v102
    %2028 = vmatpush1.msra.mxu0 %v101
    %2029 = vmatprep.subr.mxu0 %v106
    %2030 = vmatpush1.msra.mxu0 %v105
    %2031 = vmatprep.subr.mxu0 0.0
    %2032 = vmatpush1.msra.mxu0 0.0
    %2033 = vmatprep.subr.mxu0 0.0
    %2034 = vmatpush1.msra.mxu0 0.0
    %2035 = vmatprep.subr.mxu0 0.0
    %2036 = vmatpush1.msra.mxu0 0.0
    %2037 = vmatprep.subr.mxu0 0.0
    %2038 = vmatpush1.msra.mxu0 0.0
    %2039 = vmatprep.subr.mxu0 0.0
    %2040 = vmatpush1.msra.mxu0 0.0
    %2041 = vmatprep.subr.mxu0 0.0
    %2042 = vmatpush1.msra.mxu0 0.0
    %2043 = vmatprep.subr.mxu0 0.0
    %2044 = vmatpush1.msra.mxu0 0.0
    %2045 = vmatprep.subr.mxu0 0.0
    %2046 = vmatpush1.msra.mxu0 0.0
    %2047 = vmatprep.subr.mxu0 0.0
    %2048 = vmatpush1.msra.mxu0 0.0
    %2049 = vmatprep.subr.mxu0 0.0
    %2050 = vmatpush1.msra.mxu0 0.0
    %2051 = vmatprep.subr.mxu0 0.0
    %2052 = vmatpush1.msra.mxu0 0.0
    %2053 = vmatprep.subr.mxu0 0.0
    %2054 = vmatpush1.msra.mxu0 0.0
    %2055 = vmatprep.subr.mxu0 0.0
    %2056 = vmatpush1.msra.mxu0 0.0
    %2057 = vmatprep.subr.mxu0 0.0
    %2058 = vmatpush1.msra.mxu0 0.0
    %2059 = vmatprep.subr.mxu0 0.0
    %2060 = vmatpush1.msra.mxu0 0.0
    %2061 = vmatprep.subr.mxu0 0.0
    %2062 = vmatpush1.msra.mxu0 0.0
    %2063 = vmatprep.mubr.f32.mxu0 0.0
    %2064 = vmatmul.mubr.f32.gmra.mrb[0].mxu0 %v1853
    %v2065 = vpop.f32.mrb[0].mxu0
    %v2066 = vadd.f32 0.0, %v2065
    %v2067 = vpop.f32.mrb[0].mxu0
    %v2068 = vadd.f32 0.0, %v2067
    %2069 = vdwg.mxu0
    %v2078 = vrot.slane %v1921, 7
    %v2079 = vsel %vm290, %v2078, %v1920
    %v2080 = vrot.slane %v1922, 6
    %v2081 = vsel %vm293, %v2080, %v2079
    %v2082 = vrot.slane %v1923, 5
    %v2083 = vsel %vm296, %v2082, %v2081
    %v2084 = vrot.slane %v1924, 4
    %v2085 = vsel %vm299, %v2084, %v2083
    %v2086 = vrot.slane %v1925, 3
    %v2087 = vsel %vm302, %v2086, %v2085
    %v2088 = vrot.slane %v1926, 2
    %v2089 = vsel %vm305, %v2088, %v2087
    %v2090 = vrot.slane %v1927, 1
    %v2091 = vsel %vm308, %v2090, %v2089
    %v2092 = vsel %vm314, %v2091, 0
    %2094 = vmatprep.subr.mxu0 %v320
    %2095 = vmatpush1.msra.mxu0 %v318
    %2096 = vmatprep.subr.mxu0 0.0
    %2097 = vmatpush1.msra.mxu0 0.0
    %2098 = vmatprep.subr.mxu0 0.0
    %2099 = vmatpush1.msra.mxu0 0.0
    %2100 = vmatprep.subr.mxu0 0.0
    %2101 = vmatpush1.msra.mxu0 0.0
    %2102 = vmatprep.subr.mxu0 0.0
    %2103 = vmatpush1.msra.mxu0 0.0
    %2104 = vmatprep.subr.mxu0 0.0
    %2105 = vmatpush1.msra.mxu0 0.0
    %2106 = vmatprep.subr.mxu0 0.0
    %2107 = vmatpush1.msra.mxu0 0.0
    %2108 = vmatprep.subr.mxu0 0.0
    %2109 = vmatpush1.msra.mxu0 0.0
    %2110 = vmatprep.subr.mxu0 0.0
    %2111 = vmatpush1.msra.mxu0 0.0
    %2112 = vmatprep.subr.mxu0 0.0
    %2113 = vmatpush1.msra.mxu0 0.0
    %2114 = vmatprep.subr.mxu0 0.0
    %2115 = vmatpush1.msra.mxu0 0.0
    %2116 = vmatprep.subr.mxu0 0.0
    %2117 = vmatpush1.msra.mxu0 0.0
    %2118 = vmatprep.subr.mxu0 0.0
    %2119 = vmatpush1.msra.mxu0 0.0
    %2120 = vmatprep.subr.mxu0 0.0
    %2121 = vmatpush1.msra.mxu0 0.0
    %2122 = vmatprep.subr.mxu0 0.0
    %2123 = vmatpush1.msra.mxu0 0.0
    %2124 = vmatprep.subr.mxu0 0.0
    %2125 = vmatpush1.msra.mxu0 0.0
    %2126 = vmatprep.subr.mxu0 0.0
    %2127 = vmatpush1.msra.mxu0 0.0
    %2128 = vmatprep.subr.mxu0 0.0
    %2129 = vmatpush1.msra.mxu0 0.0
    %2130 = vmatprep.subr.mxu0 0.0
    %2131 = vmatpush1.msra.mxu0 0.0
    %2132 = vmatprep.subr.mxu0 0.0
    %2133 = vmatpush1.msra.mxu0 0.0
    %2134 = vmatprep.subr.mxu0 0.0
    %2135 = vmatpush1.msra.mxu0 0.0
    %2136 = vmatprep.subr.mxu0 0.0
    %2137 = vmatpush1.msra.mxu0 0.0
    %2138 = vmatprep.subr.mxu0 0.0
    %2139 = vmatpush1.msra.mxu0 0.0
    %2140 = vmatprep.subr.mxu0 0.0
    %2141 = vmatpush1.msra.mxu0 0.0
    %2142 = vmatprep.subr.mxu0 0.0
    %2143 = vmatpush1.msra.mxu0 0.0
    %2144 = vmatprep.subr.mxu0 0.0
    %2145 = vmatpush1.msra.mxu0 0.0
    %2146 = vmatprep.subr.mxu0 0.0
    %2147 = vmatpush1.msra.mxu0 0.0
    %2148 = vmatprep.subr.mxu0 0.0
    %2149 = vmatpush1.msra.mxu0 0.0
    %2150 = vmatprep.subr.mxu0 0.0
    %2151 = vmatpush1.msra.mxu0 0.0
    %2152 = vmatprep.subr.mxu0 0.0
    %2153 = vmatpush1.msra.mxu0 0.0
    %2154 = vmatprep.subr.mxu0 0.0
    %2155 = vmatpush1.msra.mxu0 0.0
    %2156 = vmatprep.subr.mxu0 0.0
    %2157 = vmatpush1.msra.mxu0 0.0
    %2158 = vmatprep.mubr.f32.mxu0 0.0
    %2159 = vmatmul.mubr.f32.gmra.mrb[0].mxu0 %v2092
    %v2160 = vpop.f32.mrb[0].mxu0
    %v2161 = vadd.f32 %v1995, %v2160
    %v2162 = vpop.f32.mrb[0].mxu0
    %v2163 = vadd.f32 %v1997, %v2162
    %2164 = vdwg.mxu0
    %2165 = vmatprep.subr.mxu0 %v324
    %2166 = vmatpush1.msra.mxu0 %v322
    %2167 = vmatprep.subr.mxu0 0.0
    %2168 = vmatpush1.msra.mxu0 0.0
    %2169 = vmatprep.subr.mxu0 0.0
    %2170 = vmatpush1.msra.mxu0 0.0
    %2171 = vmatprep.subr.mxu0 0.0
    %2172 = vmatpush1.msra.mxu0 0.0
    %2173 = vmatprep.subr.mxu0 0.0
    %2174 = vmatpush1.msra.mxu0 0.0
    %2175 = vmatprep.subr.mxu0 0.0
    %2176 = vmatpush1.msra.mxu0 0.0
    %2177 = vmatprep.subr.mxu0 0.0
    %2178 = vmatpush1.msra.mxu0 0.0
    %2179 = vmatprep.subr.mxu0 0.0
    %2180 = vmatpush1.msra.mxu0 0.0
    %2181 = vmatprep.subr.mxu0 0.0
    %2182 = vmatpush1.msra.mxu0 0.0
    %2183 = vmatprep.subr.mxu0 0.0
    %2184 = vmatpush1.msra.mxu0 0.0
    %2185 = vmatprep.subr.mxu0 0.0
    %2186 = vmatpush1.msra.mxu0 0.0
    %2187 = vmatprep.subr.mxu0 0.0
    %2188 = vmatpush1.msra.mxu0 0.0
    %2189 = vmatprep.subr.mxu0 0.0
    %2190 = vmatpush1.msra.mxu0 0.0
    %2191 = vmatprep.subr.mxu0 0.0
    %2192 = vmatpush1.msra.mxu0 0.0
    %2193 = vmatprep.subr.mxu0 0.0
    %2194 = vmatpush1.msra.mxu0 0.0
    %2195 = vmatprep.subr.mxu0 0.0
    %2196 = vmatpush1.msra.mxu0 0.0
    %2197 = vmatprep.subr.mxu0 0.0
    %2198 = vmatpush1.msra.mxu0 0.0
    %2199 = vmatprep.subr.mxu0 0.0
    %2200 = vmatpush1.msra.mxu0 0.0
    %2201 = vmatprep.subr.mxu0 0.0
    %2202 = vmatpush1.msra.mxu0 0.0
    %2203 = vmatprep.subr.mxu0 0.0
    %2204 = vmatpush1.msra.mxu0 0.0
    %2205 = vmatprep.subr.mxu0 0.0
    %2206 = vmatpush1.msra.mxu0 0.0
    %2207 = vmatprep.subr.mxu0 0.0
    %2208 = vmatpush1.msra.mxu0 0.0
    %2209 = vmatprep.subr.mxu0 0.0
    %2210 = vmatpush1.msra.mxu0 0.0
    %2211 = vmatprep.subr.mxu0 0.0
    %2212 = vmatpush1.msra.mxu0 0.0
    %2213 = vmatprep.subr.mxu0 0.0
    %2214 = vmatpush1.msra.mxu0 0.0
    %2215 = vmatprep.subr.mxu0 0.0
    %2216 = vmatpush1.msra.mxu0 0.0
    %2217 = vmatprep.subr.mxu0 0.0
    %2218 = vmatpush1.msra.mxu0 0.0
    %2219 = vmatprep.subr.mxu0 0.0
    %2220 = vmatpush1.msra.mxu0 0.0
    %2221 = vmatprep.subr.mxu0 0.0
    %2222 = vmatpush1.msra.mxu0 0.0
    %2223 = vmatprep.subr.mxu0 0.0
    %2224 = vmatpush1.msra.mxu0 0.0
    %2225 = vmatprep.subr.mxu0 0.0
    %2226 = vmatpush1.msra.mxu0 0.0
    %2227 = vmatprep.subr.mxu0 0.0
    %2228 = vmatpush1.msra.mxu0 0.0
    %2229 = vmatprep.mubr.f32.mxu0 0.0
    %2230 = vmatmul.mubr.f32.gmra.mrb[0].mxu0 %v2092
    %v2231 = vpop.f32.mrb[0].mxu0
    %v2232 = vadd.f32 %v2066, %v2231
    %v2233 = vpop.f32.mrb[0].mxu0
    %v2234 = vadd.f32 %v2068, %v2233
    %2235 = vdwg.mxu0
    %v2236 = vadd.f32 %v2161, %v112
    %v2237 = vadd.f32 %v2163, %v116
    %v2238 = vadd.f32 %v2232, %v120
    %v2239 = vadd.f32 %v2234, %v124
    %v2240 = vxor.u32 %v2236, 2147483648
    %v2241 = vmul.f32 %v2240, 1.442695
    %v2242 = vpow.pop %v2241
    %v2243 = vadd.f32 %v2242, 1.0
    %v2244 = vrcp.pop %v2243
    %v2245 = vmul.f32 1.0, %v2244
    %v2246 = vxor.u32 %v2237, 2147483648
    %v2247 = vmul.f32 %v2246, 1.442695
    %v2248 = vpow.pop %v2247
    %v2249 = vadd.f32 %v2248, 1.0
    %v2250 = vrcp.pop %v2249
    %v2251 = vmul.f32 1.0, %v2250
    %v2252 = vxor.u32 %v2238, 2147483648
    %v2253 = vmul.f32 %v2252, 1.442695
    %v2254 = vpow.pop %v2253
    %v2255 = vadd.f32 %v2254, 1.0
    %v2256 = vrcp.pop %v2255
    %v2257 = vmul.f32 1.0, %v2256
    %v2258 = vtanh.pop %v2239
    %v2259 = vmul.f32 %v2245, %v2258
    %v2260 = vmul.f32 %v2257, %v1819
    %v2261 = vadd.f32 %v2259, %v2260
    %v2262 = vtanh.pop %v2261
    %v2263 = vmul.f32 %v2251, %v2262
    %v2264 = vld [vmem:[%s1 + $0x4] sm:$0x1]
    %v2265 = vld [vmem:[%s1 + $0xc] sm:$0x1]
    %v2266 = vld [vmem:[%s1 + $0x14] sm:$0x1]
    %v2267 = vld [vmem:[%s1 + $0x1c] sm:$0x1]
    %v2268 = vld [vmem:[%s1 + $0x24] sm:$0x1]
    %v2269 = vld [vmem:[%s1 + $0x2c] sm:$0x1]
    %v2270 = vld [vmem:[%s1 + $0x34] sm:$0x1]
    %v2271 = vld [vmem:[%s1 + $0x3c] sm:$0x1]
    %v2280 = vrot.slane %v2265, 7
    %v2281 = vsel %vm290, %v2280, %v2264
    %v2282 = vrot.slane %v2266, 6
    %v2283 = vsel %vm293, %v2282, %v2281
    %v2284 = vrot.slane %v2267, 5
    %v2285 = vsel %vm296, %v2284, %v2283
    %v2286 = vrot.slane %v2268, 4
    %v2287 = vsel %vm299, %v2286, %v2285
    %v2288 = vrot.slane %v2269, 3
    %v2289 = vsel %vm302, %v2288, %v2287
    %v2290 = vrot.slane %v2270, 2
    %v2291 = vsel %vm305, %v2290, %v2289
    %v2292 = vrot.slane %v2271, 1
    %v2293 = vsel %vm308, %v2292, %v2291
    %v2295 = vadd.f32 %v2263, %v2293
    %v2297 = vcombine.high %v2295, %v2295
    %v2299 = vunpack.c.l.s4 1966171168
    %v2300 = vunpack.c.0.s8 %v2299
    %v2301 = vlaneseq
    %v2302 = vshrl.u32 %v2301, 7
    %v2303 = vsub.s32 %v2300, %v2302
    %v2304 = vrot.slane %v2295, %v2303
    %v2306 = vunpack.c.l.s4 1966171168
    %v2307 = vunpack.c.0.s8 %v2306
    %v2308 = vlaneseq
    %v2309 = vshrl.u32 %v2308, 7
    %v2310 = vsub.s32 %v2307, %v2309
    %v2311 = vrot.slane %v2297, %v2310
    %v2312 = vcombine.high %v2304, %v2304
    %v2313 = vcombine.high %v2311, %v2311
    %v2315 = vunpack.c.l.s4 1966171168
    %v2316 = vunpack.c.0.s8 %v2315
    %v2317 = vlaneseq
    %v2318 = vshrl.u32 %v2317, 7
    %v2319 = vsub.s32 %v2316, %v2318
    %v2320 = vrot.slane %v2304, %v2319
    %v2322 = vunpack.c.l.s4 1966171168
    %v2323 = vunpack.c.0.s8 %v2322
    %v2324 = vlaneseq
    %v2325 = vshrl.u32 %v2324, 7
    %v2326 = vsub.s32 %v2323, %v2325
    %v2327 = vrot.slane %v2311, %v2326
    %v2329 = vunpack.c.l.s4 1966171168
    %v2330 = vunpack.c.0.s8 %v2329
    %v2331 = vlaneseq
    %v2332 = vshrl.u32 %v2331, 7
    %v2333 = vsub.s32 %v2330, %v2332
    %v2334 = vrot.slane %v2312, %v2333
    %v2336 = vunpack.c.l.s4 1966171168
    %v2337 = vunpack.c.0.s8 %v2336
    %v2338 = vlaneseq
    %v2339 = vshrl.u32 %v2338, 7
    %v2340 = vsub.s32 %v2337, %v2339
    %v2341 = vrot.slane %v2313, %v2340
    %v2342 = vcombine.high %v2320, %v2320
    %v2343 = vcombine.high %v2327, %v2327
    %v2344 = vcombine.high %v2334, %v2334
    %v2345 = vcombine.high %v2341, %v2341
    %2354 = vst [vmem:[#allocation7 + $0x4] sm:$0x1] %v2320
    %2355 = vst [vmem:[#allocation7 + $0xc] sm:$0x1] %v2334
    %2356 = vst [vmem:[#allocation7 + $0x14] sm:$0x1] %v2342
    %2357 = vst [vmem:[#allocation7 + $0x1c] sm:$0x1] %v2344
    %2358 = vst [vmem:[#allocation7 + $0x24] sm:$0x1] %v2327
    %2359 = vst [vmem:[#allocation7 + $0x2c] sm:$0x1] %v2341
    %2360 = vst [vmem:[#allocation7 + $0x34] sm:$0x1] %v2343
    %2361 = vst [vmem:[#allocation7 + $0x3c] sm:$0x1] %v2345
    %v2362 = vld [vmem:[%s0 + $0x5] sm:$0x1]
    %v2363 = vld [vmem:[%s0 + $0xd] sm:$0x1]
    %v2364 = vld [vmem:[%s0 + $0x15] sm:$0x1]
    %v2365 = vld [vmem:[%s0 + $0x1d] sm:$0x1]
    %v2366 = vld [vmem:[%s0 + $0x25] sm:$0x1]
    %v2367 = vld [vmem:[%s0 + $0x2d] sm:$0x1]
    %v2368 = vld [vmem:[%s0 + $0x35] sm:$0x1]
    %v2369 = vld [vmem:[%s0 + $0x3d] sm:$0x1]
    %2370 = vmatprep.subr.mxu0 %v44
    %2371 = vmatpush1.msra.mxu0 %v43
    %2372 = vmatprep.subr.mxu0 %v48
    %2373 = vmatpush1.msra.mxu0 %v47
    %2374 = vmatprep.subr.mxu0 %v52
    %2375 = vmatpush1.msra.mxu0 %v51
    %2376 = vmatprep.subr.mxu0 %v56
    %2377 = vmatpush1.msra.mxu0 %v55
    %2378 = vmatprep.subr.mxu0 %v60
    %2379 = vmatpush1.msra.mxu0 %v59
    %2380 = vmatprep.subr.mxu0 %v64
    %2381 = vmatpush1.msra.mxu0 %v63
    %2382 = vmatprep.subr.mxu0 %v68
    %2383 = vmatpush1.msra.mxu0 %v67
    %2384 = vmatprep.subr.mxu0 %v72
    %2385 = vmatpush1.msra.mxu0 %v71
    %2386 = vmatprep.subr.mxu0 %v76
    %2387 = vmatpush1.msra.mxu0 %v75
    %2388 = vmatprep.subr.mxu0 %v80
    %2389 = vmatpush1.msra.mxu0 %v79
    %2390 = vmatprep.subr.mxu0 %v84
    %2391 = vmatpush1.msra.mxu0 %v83
    %2392 = vmatprep.subr.mxu0 %v88
    %2393 = vmatpush1.msra.mxu0 %v87
    %2394 = vmatprep.subr.mxu0 %v92
    %2395 = vmatpush1.msra.mxu0 %v91
    %2396 = vmatprep.subr.mxu0 %v96
    %2397 = vmatpush1.msra.mxu0 %v95
    %2398 = vmatprep.subr.mxu0 %v100
    %2399 = vmatpush1.msra.mxu0 %v99
    %2400 = vmatprep.subr.mxu0 %v104
    %2401 = vmatpush1.msra.mxu0 %v103
    %2402 = vmatprep.subr.mxu0 0.0
    %2403 = vmatpush1.msra.mxu0 0.0
    %2404 = vmatprep.subr.mxu0 0.0
    %2405 = vmatpush1.msra.mxu0 0.0
    %2406 = vmatprep.subr.mxu0 0.0
    %2407 = vmatpush1.msra.mxu0 0.0
    %2408 = vmatprep.subr.mxu0 0.0
    %2409 = vmatpush1.msra.mxu0 0.0
    %2410 = vmatprep.subr.mxu0 0.0
    %2411 = vmatpush1.msra.mxu0 0.0
    %2412 = vmatprep.subr.mxu0 0.0
    %2413 = vmatpush1.msra.mxu0 0.0
    %2414 = vmatprep.subr.mxu0 0.0
    %2415 = vmatpush1.msra.mxu0 0.0
    %2416 = vmatprep.subr.mxu0 0.0
    %2417 = vmatpush1.msra.mxu0 0.0
    %2418 = vmatprep.subr.mxu0 0.0
    %2419 = vmatpush1.msra.mxu0 0.0
    %2420 = vmatprep.subr.mxu0 0.0
    %2421 = vmatpush1.msra.mxu0 0.0
    %2422 = vmatprep.subr.mxu0 0.0
    %2423 = vmatpush1.msra.mxu0 0.0
    %2424 = vmatprep.subr.mxu0 0.0
    %2425 = vmatpush1.msra.mxu0 0.0
    %2426 = vmatprep.subr.mxu0 0.0
    %2427 = vmatpush1.msra.mxu0 0.0
    %2428 = vmatprep.subr.mxu0 0.0
    %2429 = vmatpush1.msra.mxu0 0.0
    %2430 = vmatprep.subr.mxu0 0.0
    %2431 = vmatpush1.msra.mxu0 0.0
    %2432 = vmatprep.subr.mxu0 0.0
    %2433 = vmatpush1.msra.mxu0 0.0
    %2434 = vmatprep.mubr.f32.mxu0 0.0
    %2435 = vmatmul.mubr.f32.gmra.mrb[0].mxu0 %v2295
    %v2436 = vpop.f32.mrb[0].mxu0
    %v2437 = vadd.f32 0.0, %v2436
    %v2438 = vpop.f32.mrb[0].mxu0
    %v2439 = vadd.f32 0.0, %v2438
    %2440 = vdwg.mxu0
    %2441 = vmatprep.subr.mxu0 %v46
    %2442 = vmatpush1.msra.mxu0 %v45
    %2443 = vmatprep.subr.mxu0 %v50
    %2444 = vmatpush1.msra.mxu0 %v49
    %2445 = vmatprep.subr.mxu0 %v54
    %2446 = vmatpush1.msra.mxu0 %v53
    %2447 = vmatprep.subr.mxu0 %v58
    %2448 = vmatpush1.msra.mxu0 %v57
    %2449 = vmatprep.subr.mxu0 %v62
    %2450 = vmatpush1.msra.mxu0 %v61
    %2451 = vmatprep.subr.mxu0 %v66
    %2452 = vmatpush1.msra.mxu0 %v65
    %2453 = vmatprep.subr.mxu0 %v70
    %2454 = vmatpush1.msra.mxu0 %v69
    %2455 = vmatprep.subr.mxu0 %v74
    %2456 = vmatpush1.msra.mxu0 %v73
    %2457 = vmatprep.subr.mxu0 %v78
    %2458 = vmatpush1.msra.mxu0 %v77
    %2459 = vmatprep.subr.mxu0 %v82
    %2460 = vmatpush1.msra.mxu0 %v81
    %2461 = vmatprep.subr.mxu0 %v86
    %2462 = vmatpush1.msra.mxu0 %v85
    %2463 = vmatprep.subr.mxu0 %v90
    %2464 = vmatpush1.msra.mxu0 %v89
    %2465 = vmatprep.subr.mxu0 %v94
    %2466 = vmatpush1.msra.mxu0 %v93
    %2467 = vmatprep.subr.mxu0 %v98
    %2468 = vmatpush1.msra.mxu0 %v97
    %2469 = vmatprep.subr.mxu0 %v102
    %2470 = vmatpush1.msra.mxu0 %v101
    %2471 = vmatprep.subr.mxu0 %v106
    %2472 = vmatpush1.msra.mxu0 %v105
    %2473 = vmatprep.subr.mxu0 0.0
    %2474 = vmatpush1.msra.mxu0 0.0
    %2475 = vmatprep.subr.mxu0 0.0
    %2476 = vmatpush1.msra.mxu0 0.0
    %2477 = vmatprep.subr.mxu0 0.0
    %2478 = vmatpush1.msra.mxu0 0.0
    %2479 = vmatprep.subr.mxu0 0.0
    %2480 = vmatpush1.msra.mxu0 0.0
    %2481 = vmatprep.subr.mxu0 0.0
    %2482 = vmatpush1.msra.mxu0 0.0
    %2483 = vmatprep.subr.mxu0 0.0
    %2484 = vmatpush1.msra.mxu0 0.0
    %2485 = vmatprep.subr.mxu0 0.0
    %2486 = vmatpush1.msra.mxu0 0.0
    %2487 = vmatprep.subr.mxu0 0.0
    %2488 = vmatpush1.msra.mxu0 0.0
    %2489 = vmatprep.subr.mxu0 0.0
    %2490 = vmatpush1.msra.mxu0 0.0
    %2491 = vmatprep.subr.mxu0 0.0
    %2492 = vmatpush1.msra.mxu0 0.0
    %2493 = vmatprep.subr.mxu0 0.0
    %2494 = vmatpush1.msra.mxu0 0.0
    %2495 = vmatprep.subr.mxu0 0.0
    %2496 = vmatpush1.msra.mxu0 0.0
    %2497 = vmatprep.subr.mxu0 0.0
    %2498 = vmatpush1.msra.mxu0 0.0
    %2499 = vmatprep.subr.mxu0 0.0
    %2500 = vmatpush1.msra.mxu0 0.0
    %2501 = vmatprep.subr.mxu0 0.0
    %2502 = vmatpush1.msra.mxu0 0.0
    %2503 = vmatprep.subr.mxu0 0.0
    %2504 = vmatpush1.msra.mxu0 0.0
    %2505 = vmatprep.mubr.f32.mxu0 0.0
    %2506 = vmatmul.mubr.f32.gmra.mrb[0].mxu0 %v2295
    %v2507 = vpop.f32.mrb[0].mxu0
    %v2508 = vadd.f32 0.0, %v2507
    %v2509 = vpop.f32.mrb[0].mxu0
    %v2510 = vadd.f32 0.0, %v2509
    %2511 = vdwg.mxu0
    %v2520 = vrot.slane %v2363, 7
    %v2521 = vsel %vm290, %v2520, %v2362
    %v2522 = vrot.slane %v2364, 6
    %v2523 = vsel %vm293, %v2522, %v2521
    %v2524 = vrot.slane %v2365, 5
    %v2525 = vsel %vm296, %v2524, %v2523
    %v2526 = vrot.slane %v2366, 4
    %v2527 = vsel %vm299, %v2526, %v2525
    %v2528 = vrot.slane %v2367, 3
    %v2529 = vsel %vm302, %v2528, %v2527
    %v2530 = vrot.slane %v2368, 2
    %v2531 = vsel %vm305, %v2530, %v2529
    %v2532 = vrot.slane %v2369, 1
    %v2533 = vsel %vm308, %v2532, %v2531
    %v2534 = vsel %vm314, %v2533, 0
    %2536 = vmatprep.subr.mxu0 %v320
    %2537 = vmatpush1.msra.mxu0 %v318
    %2538 = vmatprep.subr.mxu0 0.0
    %2539 = vmatpush1.msra.mxu0 0.0
    %2540 = vmatprep.subr.mxu0 0.0
    %2541 = vmatpush1.msra.mxu0 0.0
    %2542 = vmatprep.subr.mxu0 0.0
    %2543 = vmatpush1.msra.mxu0 0.0
    %2544 = vmatprep.subr.mxu0 0.0
    %2545 = vmatpush1.msra.mxu0 0.0
    %2546 = vmatprep.subr.mxu0 0.0
    %2547 = vmatpush1.msra.mxu0 0.0
    %2548 = vmatprep.subr.mxu0 0.0
    %2549 = vmatpush1.msra.mxu0 0.0
    %2550 = vmatprep.subr.mxu0 0.0
    %2551 = vmatpush1.msra.mxu0 0.0
    %2552 = vmatprep.subr.mxu0 0.0
    %2553 = vmatpush1.msra.mxu0 0.0
    %2554 = vmatprep.subr.mxu0 0.0
    %2555 = vmatpush1.msra.mxu0 0.0
    %2556 = vmatprep.subr.mxu0 0.0
    %2557 = vmatpush1.msra.mxu0 0.0
    %2558 = vmatprep.subr.mxu0 0.0
    %2559 = vmatpush1.msra.mxu0 0.0
    %2560 = vmatprep.subr.mxu0 0.0
    %2561 = vmatpush1.msra.mxu0 0.0
    %2562 = vmatprep.subr.mxu0 0.0
    %2563 = vmatpush1.msra.mxu0 0.0
    %2564 = vmatprep.subr.mxu0 0.0
    %2565 = vmatpush1.msra.mxu0 0.0
    %2566 = vmatprep.subr.mxu0 0.0
    %2567 = vmatpush1.msra.mxu0 0.0
    %2568 = vmatprep.subr.mxu0 0.0
    %2569 = vmatpush1.msra.mxu0 0.0
    %2570 = vmatprep.subr.mxu0 0.0
    %2571 = vmatpush1.msra.mxu0 0.0
    %2572 = vmatprep.subr.mxu0 0.0
    %2573 = vmatpush1.msra.mxu0 0.0
    %2574 = vmatprep.subr.mxu0 0.0
    %2575 = vmatpush1.msra.mxu0 0.0
    %2576 = vmatprep.subr.mxu0 0.0
    %2577 = vmatpush1.msra.mxu0 0.0
    %2578 = vmatprep.subr.mxu0 0.0
    %2579 = vmatpush1.msra.mxu0 0.0
    %2580 = vmatprep.subr.mxu0 0.0
    %2581 = vmatpush1.msra.mxu0 0.0
    %2582 = vmatprep.subr.mxu0 0.0
    %2583 = vmatpush1.msra.mxu0 0.0
    %2584 = vmatprep.subr.mxu0 0.0
    %2585 = vmatpush1.msra.mxu0 0.0
    %2586 = vmatprep.subr.mxu0 0.0
    %2587 = vmatpush1.msra.mxu0 0.0
    %2588 = vmatprep.subr.mxu0 0.0
    %2589 = vmatpush1.msra.mxu0 0.0
    %2590 = vmatprep.subr.mxu0 0.0
    %2591 = vmatpush1.msra.mxu0 0.0
    %2592 = vmatprep.subr.mxu0 0.0
    %2593 = vmatpush1.msra.mxu0 0.0
    %2594 = vmatprep.subr.mxu0 0.0
    %2595 = vmatpush1.msra.mxu0 0.0
    %2596 = vmatprep.subr.mxu0 0.0
    %2597 = vmatpush1.msra.mxu0 0.0
    %2598 = vmatprep.subr.mxu0 0.0
    %2599 = vmatpush1.msra.mxu0 0.0
    %2600 = vmatprep.mubr.f32.mxu0 0.0
    %2601 = vmatmul.mubr.f32.gmra.mrb[0].mxu0 %v2534
    %v2602 = vpop.f32.mrb[0].mxu0
    %v2603 = vadd.f32 %v2437, %v2602
    %v2604 = vpop.f32.mrb[0].mxu0
    %v2605 = vadd.f32 %v2439, %v2604
    %2606 = vdwg.mxu0
    %2607 = vmatprep.subr.mxu0 %v324
    %2608 = vmatpush1.msra.mxu0 %v322
    %2609 = vmatprep.subr.mxu0 0.0
    %2610 = vmatpush1.msra.mxu0 0.0
    %2611 = vmatprep.subr.mxu0 0.0
    %2612 = vmatpush1.msra.mxu0 0.0
    %2613 = vmatprep.subr.mxu0 0.0
    %2614 = vmatpush1.msra.mxu0 0.0
    %2615 = vmatprep.subr.mxu0 0.0
    %2616 = vmatpush1.msra.mxu0 0.0
    %2617 = vmatprep.subr.mxu0 0.0
    %2618 = vmatpush1.msra.mxu0 0.0
    %2619 = vmatprep.subr.mxu0 0.0
    %2620 = vmatpush1.msra.mxu0 0.0
    %2621 = vmatprep.subr.mxu0 0.0
    %2622 = vmatpush1.msra.mxu0 0.0
    %2623 = vmatprep.subr.mxu0 0.0
    %2624 = vmatpush1.msra.mxu0 0.0
    %2625 = vmatprep.subr.mxu0 0.0
    %2626 = vmatpush1.msra.mxu0 0.0
    %2627 = vmatprep.subr.mxu0 0.0
    %2628 = vmatpush1.msra.mxu0 0.0
    %2629 = vmatprep.subr.mxu0 0.0
    %2630 = vmatpush1.msra.mxu0 0.0
    %2631 = vmatprep.subr.mxu0 0.0
    %2632 = vmatpush1.msra.mxu0 0.0
    %2633 = vmatprep.subr.mxu0 0.0
    %2634 = vmatpush1.msra.mxu0 0.0
    %2635 = vmatprep.subr.mxu0 0.0
    %2636 = vmatpush1.msra.mxu0 0.0
    %2637 = vmatprep.subr.mxu0 0.0
    %2638 = vmatpush1.msra.mxu0 0.0
    %2639 = vmatprep.subr.mxu0 0.0
    %2640 = vmatpush1.msra.mxu0 0.0
    %2641 = vmatprep.subr.mxu0 0.0
    %2642 = vmatpush1.msra.mxu0 0.0
    %2643 = vmatprep.subr.mxu0 0.0
    %2644 = vmatpush1.msra.mxu0 0.0
    %2645 = vmatprep.subr.mxu0 0.0
    %2646 = vmatpush1.msra.mxu0 0.0
    %2647 = vmatprep.subr.mxu0 0.0
    %2648 = vmatpush1.msra.mxu0 0.0
    %2649 = vmatprep.subr.mxu0 0.0
    %2650 = vmatpush1.msra.mxu0 0.0
    %2651 = vmatprep.subr.mxu0 0.0
    %2652 = vmatpush1.msra.mxu0 0.0
    %2653 = vmatprep.subr.mxu0 0.0
    %2654 = vmatpush1.msra.mxu0 0.0
    %2655 = vmatprep.subr.mxu0 0.0
    %2656 = vmatpush1.msra.mxu0 0.0
    %2657 = vmatprep.subr.mxu0 0.0
    %2658 = vmatpush1.msra.mxu0 0.0
    %2659 = vmatprep.subr.mxu0 0.0
    %2660 = vmatpush1.msra.mxu0 0.0
    %2661 = vmatprep.subr.mxu0 0.0
    %2662 = vmatpush1.msra.mxu0 0.0
    %2663 = vmatprep.subr.mxu0 0.0
    %2664 = vmatpush1.msra.mxu0 0.0
    %2665 = vmatprep.subr.mxu0 0.0
    %2666 = vmatpush1.msra.mxu0 0.0
    %2667 = vmatprep.subr.mxu0 0.0
    %2668 = vmatpush1.msra.mxu0 0.0
    %2669 = vmatprep.subr.mxu0 0.0
    %2670 = vmatpush1.msra.mxu0 0.0
    %2671 = vmatprep.mubr.f32.mxu0 0.0
    %2672 = vmatmul.mubr.f32.gmra.mrb[0].mxu0 %v2534
    %v2673 = vpop.f32.mrb[0].mxu0
    %v2674 = vadd.f32 %v2508, %v2673
    %v2675 = vpop.f32.mrb[0].mxu0
    %v2676 = vadd.f32 %v2510, %v2675
    %2677 = vdwg.mxu0
    %v2678 = vadd.f32 %v2603, %v112
    %v2679 = vadd.f32 %v2605, %v116
    %v2680 = vadd.f32 %v2674, %v120
    %v2681 = vadd.f32 %v2676, %v124
    %v2682 = vxor.u32 %v2678, 2147483648
    %v2683 = vmul.f32 %v2682, 1.442695
    %v2684 = vpow.pop %v2683
    %v2685 = vadd.f32 %v2684, 1.0
    %v2686 = vrcp.pop %v2685
    %v2687 = vmul.f32 1.0, %v2686
    %v2688 = vxor.u32 %v2679, 2147483648
    %v2689 = vmul.f32 %v2688, 1.442695
    %v2690 = vpow.pop %v2689
    %v2691 = vadd.f32 %v2690, 1.0
    %v2692 = vrcp.pop %v2691
    %v2693 = vmul.f32 1.0, %v2692
    %v2694 = vxor.u32 %v2680, 2147483648
    %v2695 = vmul.f32 %v2694, 1.442695
    %v2696 = vpow.pop %v2695
    %v2697 = vadd.f32 %v2696, 1.0
    %v2698 = vrcp.pop %v2697
    %v2699 = vmul.f32 1.0, %v2698
    %v2700 = vtanh.pop %v2681
    %v2701 = vmul.f32 %v2687, %v2700
    %v2702 = vmul.f32 %v2699, %v2261
    %v2703 = vadd.f32 %v2701, %v2702
    %v2704 = vtanh.pop %v2703
    %v2705 = vmul.f32 %v2693, %v2704
    %v2706 = vld [vmem:[%s1 + $0x5] sm:$0x1]
    %v2707 = vld [vmem:[%s1 + $0xd] sm:$0x1]
    %v2708 = vld [vmem:[%s1 + $0x15] sm:$0x1]
    %v2709 = vld [vmem:[%s1 + $0x1d] sm:$0x1]
    %v2710 = vld [vmem:[%s1 + $0x25] sm:$0x1]
    %v2711 = vld [vmem:[%s1 + $0x2d] sm:$0x1]
    %v2712 = vld [vmem:[%s1 + $0x35] sm:$0x1]
    %v2713 = vld [vmem:[%s1 + $0x3d] sm:$0x1]
    %v2722 = vrot.slane %v2707, 7
    %v2723 = vsel %vm290, %v2722, %v2706
    %v2724 = vrot.slane %v2708, 6
    %v2725 = vsel %vm293, %v2724, %v2723
    %v2726 = vrot.slane %v2709, 5
    %v2727 = vsel %vm296, %v2726, %v2725
    %v2728 = vrot.slane %v2710, 4
    %v2729 = vsel %vm299, %v2728, %v2727
    %v2730 = vrot.slane %v2711, 3
    %v2731 = vsel %vm302, %v2730, %v2729
    %v2732 = vrot.slane %v2712, 2
    %v2733 = vsel %vm305, %v2732, %v2731
    %v2734 = vrot.slane %v2713, 1
    %v2735 = vsel %vm308, %v2734, %v2733
    %v2737 = vadd.f32 %v2705, %v2735
    %v2739 = vcombine.high %v2737, %v2737
    %v2741 = vunpack.c.l.s4 1966171168
    %v2742 = vunpack.c.0.s8 %v2741
    %v2743 = vlaneseq
    %v2744 = vshrl.u32 %v2743, 7
    %v2745 = vsub.s32 %v2742, %v2744
    %v2746 = vrot.slane %v2737, %v2745
    %v2748 = vunpack.c.l.s4 1966171168
    %v2749 = vunpack.c.0.s8 %v2748
    %v2750 = vlaneseq
    %v2751 = vshrl.u32 %v2750, 7
    %v2752 = vsub.s32 %v2749, %v2751
    %v2753 = vrot.slane %v2739, %v2752
    %v2754 = vcombine.high %v2746, %v2746
    %v2755 = vcombine.high %v2753, %v2753
    %v2757 = vunpack.c.l.s4 1966171168
    %v2758 = vunpack.c.0.s8 %v2757
    %v2759 = vlaneseq
    %v2760 = vshrl.u32 %v2759, 7
    %v2761 = vsub.s32 %v2758, %v2760
    %v2762 = vrot.slane %v2746, %v2761
    %v2764 = vunpack.c.l.s4 1966171168
    %v2765 = vunpack.c.0.s8 %v2764
    %v2766 = vlaneseq
    %v2767 = vshrl.u32 %v2766, 7
    %v2768 = vsub.s32 %v2765, %v2767
    %v2769 = vrot.slane %v2753, %v2768
    %v2771 = vunpack.c.l.s4 1966171168
    %v2772 = vunpack.c.0.s8 %v2771
    %v2773 = vlaneseq
    %v2774 = vshrl.u32 %v2773, 7
    %v2775 = vsub.s32 %v2772, %v2774
    %v2776 = vrot.slane %v2754, %v2775
    %v2778 = vunpack.c.l.s4 1966171168
    %v2779 = vunpack.c.0.s8 %v2778
    %v2780 = vlaneseq
    %v2781 = vshrl.u32 %v2780, 7
    %v2782 = vsub.s32 %v2779, %v2781
    %v2783 = vrot.slane %v2755, %v2782
    %v2784 = vcombine.high %v2762, %v2762
    %v2785 = vcombine.high %v2769, %v2769
    %v2786 = vcombine.high %v2776, %v2776
    %v2787 = vcombine.high %v2783, %v2783
    %2796 = vst [vmem:[#allocation7 + $0x5] sm:$0x1] %v2762
    %2797 = vst [vmem:[#allocation7 + $0xd] sm:$0x1] %v2776
    %2798 = vst [vmem:[#allocation7 + $0x15] sm:$0x1] %v2784
    %2799 = vst [vmem:[#allocation7 + $0x1d] sm:$0x1] %v2786
    %2800 = vst [vmem:[#allocation7 + $0x25] sm:$0x1] %v2769
    %2801 = vst [vmem:[#allocation7 + $0x2d] sm:$0x1] %v2783
    %2802 = vst [vmem:[#allocation7 + $0x35] sm:$0x1] %v2785
    %2803 = vst [vmem:[#allocation7 + $0x3d] sm:$0x1] %v2787
    %v2804 = vld [vmem:[%s0 + $0x6] sm:$0x1]
    %v2805 = vld [vmem:[%s0 + $0xe] sm:$0x1]
    %v2806 = vld [vmem:[%s0 + $0x16] sm:$0x1]
    %v2807 = vld [vmem:[%s0 + $0x1e] sm:$0x1]
    %v2808 = vld [vmem:[%s0 + $0x26] sm:$0x1]
    %v2809 = vld [vmem:[%s0 + $0x2e] sm:$0x1]
    %v2810 = vld [vmem:[%s0 + $0x36] sm:$0x1]
    %v2811 = vld [vmem:[%s0 + $0x3e] sm:$0x1]
    %2812 = vmatprep.subr.mxu0 %v44
    %2813 = vmatpush1.msra.mxu0 %v43
    %2814 = vmatprep.subr.mxu0 %v48
    %2815 = vmatpush1.msra.mxu0 %v47
    %2816 = vmatprep.subr.mxu0 %v52
    %2817 = vmatpush1.msra.mxu0 %v51
    %2818 = vmatprep.subr.mxu0 %v56
    %2819 = vmatpush1.msra.mxu0 %v55
    %2820 = vmatprep.subr.mxu0 %v60
    %2821 = vmatpush1.msra.mxu0 %v59
    %2822 = vmatprep.subr.mxu0 %v64
    %2823 = vmatpush1.msra.mxu0 %v63
    %2824 = vmatprep.subr.mxu0 %v68
    %2825 = vmatpush1.msra.mxu0 %v67
    %2826 = vmatprep.subr.mxu0 %v72
    %2827 = vmatpush1.msra.mxu0 %v71
    %2828 = vmatprep.subr.mxu0 %v76
    %2829 = vmatpush1.msra.mxu0 %v75
    %2830 = vmatprep.subr.mxu0 %v80
    %2831 = vmatpush1.msra.mxu0 %v79
    %2832 = vmatprep.subr.mxu0 %v84
    %2833 = vmatpush1.msra.mxu0 %v83
    %2834 = vmatprep.subr.mxu0 %v88
    %2835 = vmatpush1.msra.mxu0 %v87
    %2836 = vmatprep.subr.mxu0 %v92
    %2837 = vmatpush1.msra.mxu0 %v91
    %2838 = vmatprep.subr.mxu0 %v96
    %2839 = vmatpush1.msra.mxu0 %v95
    %2840 = vmatprep.subr.mxu0 %v100
    %2841 = vmatpush1.msra.mxu0 %v99
    %2842 = vmatprep.subr.mxu0 %v104
    %2843 = vmatpush1.msra.mxu0 %v103
    %2844 = vmatprep.subr.mxu0 0.0
    %2845 = vmatpush1.msra.mxu0 0.0
    %2846 = vmatprep.subr.mxu0 0.0
    %2847 = vmatpush1.msra.mxu0 0.0
    %2848 = vmatprep.subr.mxu0 0.0
    %2849 = vmatpush1.msra.mxu0 0.0
    %2850 = vmatprep.subr.mxu0 0.0
    %2851 = vmatpush1.msra.mxu0 0.0
    %2852 = vmatprep.subr.mxu0 0.0
    %2853 = vmatpush1.msra.mxu0 0.0
    %2854 = vmatprep.subr.mxu0 0.0
    %2855 = vmatpush1.msra.mxu0 0.0
    %2856 = vmatprep.subr.mxu0 0.0
    %2857 = vmatpush1.msra.mxu0 0.0
    %2858 = vmatprep.subr.mxu0 0.0
    %2859 = vmatpush1.msra.mxu0 0.0
    %2860 = vmatprep.subr.mxu0 0.0
    %2861 = vmatpush1.msra.mxu0 0.0
    %2862 = vmatprep.subr.mxu0 0.0
    %2863 = vmatpush1.msra.mxu0 0.0
    %2864 = vmatprep.subr.mxu0 0.0
    %2865 = vmatpush1.msra.mxu0 0.0
    %2866 = vmatprep.subr.mxu0 0.0
    %2867 = vmatpush1.msra.mxu0 0.0
    %2868 = vmatprep.subr.mxu0 0.0
    %2869 = vmatpush1.msra.mxu0 0.0
    %2870 = vmatprep.subr.mxu0 0.0
    %2871 = vmatpush1.msra.mxu0 0.0
    %2872 = vmatprep.subr.mxu0 0.0
    %2873 = vmatpush1.msra.mxu0 0.0
    %2874 = vmatprep.subr.mxu0 0.0
    %2875 = vmatpush1.msra.mxu0 0.0
    %2876 = vmatprep.mubr.f32.mxu0 0.0
    %2877 = vmatmul.mubr.f32.gmra.mrb[0].mxu0 %v2737
    %v2878 = vpop.f32.mrb[0].mxu0
    %v2879 = vadd.f32 0.0, %v2878
    %v2880 = vpop.f32.mrb[0].mxu0
    %v2881 = vadd.f32 0.0, %v2880
    %2882 = vdwg.mxu0
    %2883 = vmatprep.subr.mxu0 %v46
    %2884 = vmatpush1.msra.mxu0 %v45
    %2885 = vmatprep.subr.mxu0 %v50
    %2886 = vmatpush1.msra.mxu0 %v49
    %2887 = vmatprep.subr.mxu0 %v54
    %2888 = vmatpush1.msra.mxu0 %v53
    %2889 = vmatprep.subr.mxu0 %v58
    %2890 = vmatpush1.msra.mxu0 %v57
    %2891 = vmatprep.subr.mxu0 %v62
    %2892 = vmatpush1.msra.mxu0 %v61
    %2893 = vmatprep.subr.mxu0 %v66
    %2894 = vmatpush1.msra.mxu0 %v65
    %2895 = vmatprep.subr.mxu0 %v70
    %2896 = vmatpush1.msra.mxu0 %v69
    %2897 = vmatprep.subr.mxu0 %v74
    %2898 = vmatpush1.msra.mxu0 %v73
    %2899 = vmatprep.subr.mxu0 %v78
    %2900 = vmatpush1.msra.mxu0 %v77
    %2901 = vmatprep.subr.mxu0 %v82
    %2902 = vmatpush1.msra.mxu0 %v81
    %2903 = vmatprep.subr.mxu0 %v86
    %2904 = vmatpush1.msra.mxu0 %v85
    %2905 = vmatprep.subr.mxu0 %v90
    %2906 = vmatpush1.msra.mxu0 %v89
    %2907 = vmatprep.subr.mxu0 %v94
    %2908 = vmatpush1.msra.mxu0 %v93
    %2909 = vmatprep.subr.mxu0 %v98
    %2910 = vmatpush1.msra.mxu0 %v97
    %2911 = vmatprep.subr.mxu0 %v102
    %2912 = vmatpush1.msra.mxu0 %v101
    %2913 = vmatprep.subr.mxu0 %v106
    %2914 = vmatpush1.msra.mxu0 %v105
    %2915 = vmatprep.subr.mxu0 0.0
    %2916 = vmatpush1.msra.mxu0 0.0
    %2917 = vmatprep.subr.mxu0 0.0
    %2918 = vmatpush1.msra.mxu0 0.0
    %2919 = vmatprep.subr.mxu0 0.0
    %2920 = vmatpush1.msra.mxu0 0.0
    %2921 = vmatprep.subr.mxu0 0.0
    %2922 = vmatpush1.msra.mxu0 0.0
    %2923 = vmatprep.subr.mxu0 0.0
    %2924 = vmatpush1.msra.mxu0 0.0
    %2925 = vmatprep.subr.mxu0 0.0
    %2926 = vmatpush1.msra.mxu0 0.0
    %2927 = vmatprep.subr.mxu0 0.0
    %2928 = vmatpush1.msra.mxu0 0.0
    %2929 = vmatprep.subr.mxu0 0.0
    %2930 = vmatpush1.msra.mxu0 0.0
    %2931 = vmatprep.subr.mxu0 0.0
    %2932 = vmatpush1.msra.mxu0 0.0
    %2933 = vmatprep.subr.mxu0 0.0
    %2934 = vmatpush1.msra.mxu0 0.0
    %2935 = vmatprep.subr.mxu0 0.0
    %2936 = vmatpush1.msra.mxu0 0.0
    %2937 = vmatprep.subr.mxu0 0.0
    %2938 = vmatpush1.msra.mxu0 0.0
    %2939 = vmatprep.subr.mxu0 0.0
    %2940 = vmatpush1.msra.mxu0 0.0
    %2941 = vmatprep.subr.mxu0 0.0
    %2942 = vmatpush1.msra.mxu0 0.0
    %2943 = vmatprep.subr.mxu0 0.0
    %2944 = vmatpush1.msra.mxu0 0.0
    %2945 = vmatprep.subr.mxu0 0.0
    %2946 = vmatpush1.msra.mxu0 0.0
    %2947 = vmatprep.mubr.f32.mxu0 0.0
    %2948 = vmatmul.mubr.f32.gmra.mrb[0].mxu0 %v2737
    %v2949 = vpop.f32.mrb[0].mxu0
    %v2950 = vadd.f32 0.0, %v2949
    %v2951 = vpop.f32.mrb[0].mxu0
    %v2952 = vadd.f32 0.0, %v2951
    %2953 = vdwg.mxu0
    %v2962 = vrot.slane %v2805, 7
    %v2963 = vsel %vm290, %v2962, %v2804
    %v2964 = vrot.slane %v2806, 6
    %v2965 = vsel %vm293, %v2964, %v2963
    %v2966 = vrot.slane %v2807, 5
    %v2967 = vsel %vm296, %v2966, %v2965
    %v2968 = vrot.slane %v2808, 4
    %v2969 = vsel %vm299, %v2968, %v2967
    %v2970 = vrot.slane %v2809, 3
    %v2971 = vsel %vm302, %v2970, %v2969
    %v2972 = vrot.slane %v2810, 2
    %v2973 = vsel %vm305, %v2972, %v2971
    %v2974 = vrot.slane %v2811, 1
    %v2975 = vsel %vm308, %v2974, %v2973
    %v2976 = vsel %vm314, %v2975, 0
    %2978 = vmatprep.subr.mxu0 %v320
    %2979 = vmatpush1.msra.mxu0 %v318
    %2980 = vmatprep.subr.mxu0 0.0
    %2981 = vmatpush1.msra.mxu0 0.0
    %2982 = vmatprep.subr.mxu0 0.0
    %2983 = vmatpush1.msra.mxu0 0.0
    %2984 = vmatprep.subr.mxu0 0.0
    %2985 = vmatpush1.msra.mxu0 0.0
    %2986 = vmatprep.subr.mxu0 0.0
    %2987 = vmatpush1.msra.mxu0 0.0
    %2988 = vmatprep.subr.mxu0 0.0
    %2989 = vmatpush1.msra.mxu0 0.0
    %2990 = vmatprep.subr.mxu0 0.0
    %2991 = vmatpush1.msra.mxu0 0.0
    %2992 = vmatprep.subr.mxu0 0.0
    %2993 = vmatpush1.msra.mxu0 0.0
    %2994 = vmatprep.subr.mxu0 0.0
    %2995 = vmatpush1.msra.mxu0 0.0
    %2996 = vmatprep.subr.mxu0 0.0
    %2997 = vmatpush1.msra.mxu0 0.0
    %2998 = vmatprep.subr.mxu0 0.0
    %2999 = vmatpush1.msra.mxu0 0.0
    %3000 = vmatprep.subr.mxu0 0.0
    %3001 = vmatpush1.msra.mxu0 0.0
    %3002 = vmatprep.subr.mxu0 0.0
    %3003 = vmatpush1.msra.mxu0 0.0
    %3004 = vmatprep.subr.mxu0 0.0
    %3005 = vmatpush1.msra.mxu0 0.0
    %3006 = vmatprep.subr.mxu0 0.0
    %3007 = vmatpush1.msra.mxu0 0.0
    %3008 = vmatprep.subr.mxu0 0.0
    %3009 = vmatpush1.msra.mxu0 0.0
    %3010 = vmatprep.subr.mxu0 0.0
    %3011 = vmatpush1.msra.mxu0 0.0
    %3012 = vmatprep.subr.mxu0 0.0
    %3013 = vmatpush1.msra.mxu0 0.0
    %3014 = vmatprep.subr.mxu0 0.0
    %3015 = vmatpush1.msra.mxu0 0.0
    %3016 = vmatprep.subr.mxu0 0.0
    %3017 = vmatpush1.msra.mxu0 0.0
    %3018 = vmatprep.subr.mxu0 0.0
    %3019 = vmatpush1.msra.mxu0 0.0
    %3020 = vmatprep.subr.mxu0 0.0
    %3021 = vmatpush1.msra.mxu0 0.0
    %3022 = vmatprep.subr.mxu0 0.0
    %3023 = vmatpush1.msra.mxu0 0.0
    %3024 = vmatprep.subr.mxu0 0.0
    %3025 = vmatpush1.msra.mxu0 0.0
    %3026 = vmatprep.subr.mxu0 0.0
    %3027 = vmatpush1.msra.mxu0 0.0
    %3028 = vmatprep.subr.mxu0 0.0
    %3029 = vmatpush1.msra.mxu0 0.0
    %3030 = vmatprep.subr.mxu0 0.0
    %3031 = vmatpush1.msra.mxu0 0.0
    %3032 = vmatprep.subr.mxu0 0.0
    %3033 = vmatpush1.msra.mxu0 0.0
    %3034 = vmatprep.subr.mxu0 0.0
    %3035 = vmatpush1.msra.mxu0 0.0
    %3036 = vmatprep.subr.mxu0 0.0
    %3037 = vmatpush1.msra.mxu0 0.0
    %3038 = vmatprep.subr.mxu0 0.0
    %3039 = vmatpush1.msra.mxu0 0.0
    %3040 = vmatprep.subr.mxu0 0.0
    %3041 = vmatpush1.msra.mxu0 0.0
    %3042 = vmatprep.mubr.f32.mxu0 0.0
    %3043 = vmatmul.mubr.f32.gmra.mrb[0].mxu0 %v2976
    %v3044 = vpop.f32.mrb[0].mxu0
    %v3045 = vadd.f32 %v2879, %v3044
    %v3046 = vpop.f32.mrb[0].mxu0
    %v3047 = vadd.f32 %v2881, %v3046
    %3048 = vdwg.mxu0
    %3049 = vmatprep.subr.mxu0 %v324
    %3050 = vmatpush1.msra.mxu0 %v322
    %3051 = vmatprep.subr.mxu0 0.0
    %3052 = vmatpush1.msra.mxu0 0.0
    %3053 = vmatprep.subr.mxu0 0.0
    %3054 = vmatpush1.msra.mxu0 0.0
    %3055 = vmatprep.subr.mxu0 0.0
    %3056 = vmatpush1.msra.mxu0 0.0
    %3057 = vmatprep.subr.mxu0 0.0
    %3058 = vmatpush1.msra.mxu0 0.0
    %3059 = vmatprep.subr.mxu0 0.0
    %3060 = vmatpush1.msra.mxu0 0.0
    %3061 = vmatprep.subr.mxu0 0.0
    %3062 = vmatpush1.msra.mxu0 0.0
    %3063 = vmatprep.subr.mxu0 0.0
    %3064 = vmatpush1.msra.mxu0 0.0
    %3065 = vmatprep.subr.mxu0 0.0
    %3066 = vmatpush1.msra.mxu0 0.0
    %3067 = vmatprep.subr.mxu0 0.0
    %3068 = vmatpush1.msra.mxu0 0.0
    %3069 = vmatprep.subr.mxu0 0.0
    %3070 = vmatpush1.msra.mxu0 0.0
    %3071 = vmatprep.subr.mxu0 0.0
    %3072 = vmatpush1.msra.mxu0 0.0
    %3073 = vmatprep.subr.mxu0 0.0
    %3074 = vmatpush1.msra.mxu0 0.0
    %3075 = vmatprep.subr.mxu0 0.0
    %3076 = vmatpush1.msra.mxu0 0.0
    %3077 = vmatprep.subr.mxu0 0.0
    %3078 = vmatpush1.msra.mxu0 0.0
    %3079 = vmatprep.subr.mxu0 0.0
    %3080 = vmatpush1.msra.mxu0 0.0
    %3081 = vmatprep.subr.mxu0 0.0
    %3082 = vmatpush1.msra.mxu0 0.0
    %3083 = vmatprep.subr.mxu0 0.0
    %3084 = vmatpush1.msra.mxu0 0.0
    %3085 = vmatprep.subr.mxu0 0.0
    %3086 = vmatpush1.msra.mxu0 0.0
    %3087 = vmatprep.subr.mxu0 0.0
    %3088 = vmatpush1.msra.mxu0 0.0
    %3089 = vmatprep.subr.mxu0 0.0
    %3090 = vmatpush1.msra.mxu0 0.0
    %3091 = vmatprep.subr.mxu0 0.0
    %3092 = vmatpush1.msra.mxu0 0.0
    %3093 = vmatprep.subr.mxu0 0.0
    %3094 = vmatpush1.msra.mxu0 0.0
    %3095 = vmatprep.subr.mxu0 0.0
    %3096 = vmatpush1.msra.mxu0 0.0
    %3097 = vmatprep.subr.mxu0 0.0
    %3098 = vmatpush1.msra.mxu0 0.0
    %3099 = vmatprep.subr.mxu0 0.0
    %3100 = vmatpush1.msra.mxu0 0.0
    %3101 = vmatprep.subr.mxu0 0.0
    %3102 = vmatpush1.msra.mxu0 0.0
    %3103 = vmatprep.subr.mxu0 0.0
    %3104 = vmatpush1.msra.mxu0 0.0
    %3105 = vmatprep.subr.mxu0 0.0
    %3106 = vmatpush1.msra.mxu0 0.0
    %3107 = vmatprep.subr.mxu0 0.0
    %3108 = vmatpush1.msra.mxu0 0.0
    %3109 = vmatprep.subr.mxu0 0.0
    %3110 = vmatpush1.msra.mxu0 0.0
    %3111 = vmatprep.subr.mxu0 0.0
    %3112 = vmatpush1.msra.mxu0 0.0
    %3113 = vmatprep.mubr.f32.mxu0 0.0
    %3114 = vmatmul.mubr.f32.gmra.mrb[0].mxu0 %v2976
    %v3115 = vpop.f32.mrb[0].mxu0
    %v3116 = vadd.f32 %v2950, %v3115
    %v3117 = vpop.f32.mrb[0].mxu0
    %v3118 = vadd.f32 %v2952, %v3117
    %3119 = vdwg.mxu0
    %v3120 = vadd.f32 %v3045, %v112
    %v3121 = vadd.f32 %v3047, %v116
    %v3122 = vadd.f32 %v3116, %v120
    %v3123 = vadd.f32 %v3118, %v124
    %v3124 = vxor.u32 %v3120, 2147483648
    %v3125 = vmul.f32 %v3124, 1.442695
    %v3126 = vpow.pop %v3125
    %v3127 = vadd.f32 %v3126, 1.0
    %v3128 = vrcp.pop %v3127
    %v3129 = vmul.f32 1.0, %v3128
    %v3130 = vxor.u32 %v3121, 2147483648
    %v3131 = vmul.f32 %v3130, 1.442695
    %v3132 = vpow.pop %v3131
    %v3133 = vadd.f32 %v3132, 1.0
    %v3134 = vrcp.pop %v3133
    %v3135 = vmul.f32 1.0, %v3134
    %v3136 = vxor.u32 %v3122, 2147483648
    %v3137 = vmul.f32 %v3136, 1.442695
    %v3138 = vpow.pop %v3137
    %v3139 = vadd.f32 %v3138, 1.0
    %v3140 = vrcp.pop %v3139
    %v3141 = vmul.f32 1.0, %v3140
    %v3142 = vtanh.pop %v3123
    %v3143 = vmul.f32 %v3129, %v3142
    %v3144 = vmul.f32 %v3141, %v2703
    %v3145 = vadd.f32 %v3143, %v3144
    %v3146 = vtanh.pop %v3145
    %v3147 = vmul.f32 %v3135, %v3146
    %v3148 = vld [vmem:[%s1 + $0x6] sm:$0x1]
    %v3149 = vld [vmem:[%s1 + $0xe] sm:$0x1]
    %v3150 = vld [vmem:[%s1 + $0x16] sm:$0x1]
    %v3151 = vld [vmem:[%s1 + $0x1e] sm:$0x1]
    %v3152 = vld [vmem:[%s1 + $0x26] sm:$0x1]
    %v3153 = vld [vmem:[%s1 + $0x2e] sm:$0x1]
    %v3154 = vld [vmem:[%s1 + $0x36] sm:$0x1]
    %v3155 = vld [vmem:[%s1 + $0x3e] sm:$0x1]
    %v3164 = vrot.slane %v3149, 7
    %v3165 = vsel %vm290, %v3164, %v3148
    %v3166 = vrot.slane %v3150, 6
    %v3167 = vsel %vm293, %v3166, %v3165
    %v3168 = vrot.slane %v3151, 5
    %v3169 = vsel %vm296, %v3168, %v3167
    %v3170 = vrot.slane %v3152, 4
    %v3171 = vsel %vm299, %v3170, %v3169
    %v3172 = vrot.slane %v3153, 3
    %v3173 = vsel %vm302, %v3172, %v3171
    %v3174 = vrot.slane %v3154, 2
    %v3175 = vsel %vm305, %v3174, %v3173
    %v3176 = vrot.slane %v3155, 1
    %v3177 = vsel %vm308, %v3176, %v3175
    %v3179 = vadd.f32 %v3147, %v3177
    %v3181 = vcombine.high %v3179, %v3179
    %v3183 = vunpack.c.l.s4 1966171168
    %v3184 = vunpack.c.0.s8 %v3183
    %v3185 = vlaneseq
    %v3186 = vshrl.u32 %v3185, 7
    %v3187 = vsub.s32 %v3184, %v3186
    %v3188 = vrot.slane %v3179, %v3187
    %v3190 = vunpack.c.l.s4 1966171168
    %v3191 = vunpack.c.0.s8 %v3190
    %v3192 = vlaneseq
    %v3193 = vshrl.u32 %v3192, 7
    %v3194 = vsub.s32 %v3191, %v3193
    %v3195 = vrot.slane %v3181, %v3194
    %v3196 = vcombine.high %v3188, %v3188
    %v3197 = vcombine.high %v3195, %v3195
    %v3199 = vunpack.c.l.s4 1966171168
    %v3200 = vunpack.c.0.s8 %v3199
    %v3201 = vlaneseq
    %v3202 = vshrl.u32 %v3201, 7
    %v3203 = vsub.s32 %v3200, %v3202
    %v3204 = vrot.slane %v3188, %v3203
    %v3206 = vunpack.c.l.s4 1966171168
    %v3207 = vunpack.c.0.s8 %v3206
    %v3208 = vlaneseq
    %v3209 = vshrl.u32 %v3208, 7
    %v3210 = vsub.s32 %v3207, %v3209
    %v3211 = vrot.slane %v3195, %v3210
    %v3213 = vunpack.c.l.s4 1966171168
    %v3214 = vunpack.c.0.s8 %v3213
    %v3215 = vlaneseq
    %v3216 = vshrl.u32 %v3215, 7
    %v3217 = vsub.s32 %v3214, %v3216
    %v3218 = vrot.slane %v3196, %v3217
    %v3220 = vunpack.c.l.s4 1966171168
    %v3221 = vunpack.c.0.s8 %v3220
    %v3222 = vlaneseq
    %v3223 = vshrl.u32 %v3222, 7
    %v3224 = vsub.s32 %v3221, %v3223
    %v3225 = vrot.slane %v3197, %v3224
    %v3226 = vcombine.high %v3204, %v3204
    %v3227 = vcombine.high %v3211, %v3211
    %v3228 = vcombine.high %v3218, %v3218
    %v3229 = vcombine.high %v3225, %v3225
    %3238 = vst [vmem:[#allocation7 + $0x6] sm:$0x1] %v3204
    %3239 = vst [vmem:[#allocation7 + $0xe] sm:$0x1] %v3218
    %3240 = vst [vmem:[#allocation7 + $0x16] sm:$0x1] %v3226
    %3241 = vst [vmem:[#allocation7 + $0x1e] sm:$0x1] %v3228
    %3242 = vst [vmem:[#allocation7 + $0x26] sm:$0x1] %v3211
    %3243 = vst [vmem:[#allocation7 + $0x2e] sm:$0x1] %v3225
    %3244 = vst [vmem:[#allocation7 + $0x36] sm:$0x1] %v3227
    %3245 = vst [vmem:[#allocation7 + $0x3e] sm:$0x1] %v3229
    %v3246 = vld [vmem:[%s0 + $0x7] sm:$0x1]
    %v3247 = vld [vmem:[%s0 + $0xf] sm:$0x1]
    %v3248 = vld [vmem:[%s0 + $0x17] sm:$0x1]
    %v3249 = vld [vmem:[%s0 + $0x1f] sm:$0x1]
    %v3250 = vld [vmem:[%s0 + $0x27] sm:$0x1]
    %v3251 = vld [vmem:[%s0 + $0x2f] sm:$0x1]
    %v3252 = vld [vmem:[%s0 + $0x37] sm:$0x1]
    %v3253 = vld [vmem:[%s0 + $0x3f] sm:$0x1]
    %3254 = vmatprep.subr.mxu0 %v44
    %3255 = vmatpush1.msra.mxu0 %v43
    %3256 = vmatprep.subr.mxu0 %v48
    %3257 = vmatpush1.msra.mxu0 %v47
    %3258 = vmatprep.subr.mxu0 %v52
    %3259 = vmatpush1.msra.mxu0 %v51
    %3260 = vmatprep.subr.mxu0 %v56
    %3261 = vmatpush1.msra.mxu0 %v55
    %3262 = vmatprep.subr.mxu0 %v60
    %3263 = vmatpush1.msra.mxu0 %v59
    %3264 = vmatprep.subr.mxu0 %v64
    %3265 = vmatpush1.msra.mxu0 %v63
    %3266 = vmatprep.subr.mxu0 %v68
    %3267 = vmatpush1.msra.mxu0 %v67
    %3268 = vmatprep.subr.mxu0 %v72
    %3269 = vmatpush1.msra.mxu0 %v71
    %3270 = vmatprep.subr.mxu0 %v76
    %3271 = vmatpush1.msra.mxu0 %v75
    %3272 = vmatprep.subr.mxu0 %v80
    %3273 = vmatpush1.msra.mxu0 %v79
    %3274 = vmatprep.subr.mxu0 %v84
    %3275 = vmatpush1.msra.mxu0 %v83
    %3276 = vmatprep.subr.mxu0 %v88
    %3277 = vmatpush1.msra.mxu0 %v87
    %3278 = vmatprep.subr.mxu0 %v92
    %3279 = vmatpush1.msra.mxu0 %v91
    %3280 = vmatprep.subr.mxu0 %v96
    %3281 = vmatpush1.msra.mxu0 %v95
    %3282 = vmatprep.subr.mxu0 %v100
    %3283 = vmatpush1.msra.mxu0 %v99
    %3284 = vmatprep.subr.mxu0 %v104
    %3285 = vmatpush1.msra.mxu0 %v103
    %3286 = vmatprep.subr.mxu0 0.0
    %3287 = vmatpush1.msra.mxu0 0.0
    %3288 = vmatprep.subr.mxu0 0.0
    %3289 = vmatpush1.msra.mxu0 0.0
    %3290 = vmatprep.subr.mxu0 0.0
    %3291 = vmatpush1.msra.mxu0 0.0
    %3292 = vmatprep.subr.mxu0 0.0
    %3293 = vmatpush1.msra.mxu0 0.0
    %3294 = vmatprep.subr.mxu0 0.0
    %3295 = vmatpush1.msra.mxu0 0.0
    %3296 = vmatprep.subr.mxu0 0.0
    %3297 = vmatpush1.msra.mxu0 0.0
    %3298 = vmatprep.subr.mxu0 0.0
    %3299 = vmatpush1.msra.mxu0 0.0
    %3300 = vmatprep.subr.mxu0 0.0
    %3301 = vmatpush1.msra.mxu0 0.0
    %3302 = vmatprep.subr.mxu0 0.0
    %3303 = vmatpush1.msra.mxu0 0.0
    %3304 = vmatprep.subr.mxu0 0.0
    %3305 = vmatpush1.msra.mxu0 0.0
    %3306 = vmatprep.subr.mxu0 0.0
    %3307 = vmatpush1.msra.mxu0 0.0
    %3308 = vmatprep.subr.mxu0 0.0
    %3309 = vmatpush1.msra.mxu0 0.0
    %3310 = vmatprep.subr.mxu0 0.0
    %3311 = vmatpush1.msra.mxu0 0.0
    %3312 = vmatprep.subr.mxu0 0.0
    %3313 = vmatpush1.msra.mxu0 0.0
    %3314 = vmatprep.subr.mxu0 0.0
    %3315 = vmatpush1.msra.mxu0 0.0
    %3316 = vmatprep.subr.mxu0 0.0
    %3317 = vmatpush1.msra.mxu0 0.0
    %3318 = vmatprep.mubr.f32.mxu0 0.0
    %3319 = vmatmul.mubr.f32.gmra.mrb[0].mxu0 %v3179
    %v3320 = vpop.f32.mrb[0].mxu0
    %v3321 = vadd.f32 0.0, %v3320
    %v3322 = vpop.f32.mrb[0].mxu0
    %v3323 = vadd.f32 0.0, %v3322
    %3324 = vdwg.mxu0
    %3325 = vmatprep.subr.mxu0 %v46
    %3326 = vmatpush1.msra.mxu0 %v45
    %3327 = vmatprep.subr.mxu0 %v50
    %3328 = vmatpush1.msra.mxu0 %v49
    %3329 = vmatprep.subr.mxu0 %v54
    %3330 = vmatpush1.msra.mxu0 %v53
    %3331 = vmatprep.subr.mxu0 %v58
    %3332 = vmatpush1.msra.mxu0 %v57
    %3333 = vmatprep.subr.mxu0 %v62
    %3334 = vmatpush1.msra.mxu0 %v61
    %3335 = vmatprep.subr.mxu0 %v66
    %3336 = vmatpush1.msra.mxu0 %v65
    %3337 = vmatprep.subr.mxu0 %v70
    %3338 = vmatpush1.msra.mxu0 %v69
    %3339 = vmatprep.subr.mxu0 %v74
    %3340 = vmatpush1.msra.mxu0 %v73
    %3341 = vmatprep.subr.mxu0 %v78
    %3342 = vmatpush1.msra.mxu0 %v77
    %3343 = vmatprep.subr.mxu0 %v82
    %3344 = vmatpush1.msra.mxu0 %v81
    %3345 = vmatprep.subr.mxu0 %v86
    %3346 = vmatpush1.msra.mxu0 %v85
    %3347 = vmatprep.subr.mxu0 %v90
    %3348 = vmatpush1.msra.mxu0 %v89
    %3349 = vmatprep.subr.mxu0 %v94
    %3350 = vmatpush1.msra.mxu0 %v93
    %3351 = vmatprep.subr.mxu0 %v98
    %3352 = vmatpush1.msra.mxu0 %v97
    %3353 = vmatprep.subr.mxu0 %v102
    %3354 = vmatpush1.msra.mxu0 %v101
    %3355 = vmatprep.subr.mxu0 %v106
    %3356 = vmatpush1.msra.mxu0 %v105
    %3357 = vmatprep.subr.mxu0 0.0
    %3358 = vmatpush1.msra.mxu0 0.0
    %3359 = vmatprep.subr.mxu0 0.0
    %3360 = vmatpush1.msra.mxu0 0.0
    %3361 = vmatprep.subr.mxu0 0.0
    %3362 = vmatpush1.msra.mxu0 0.0
    %3363 = vmatprep.subr.mxu0 0.0
    %3364 = vmatpush1.msra.mxu0 0.0
    %3365 = vmatprep.subr.mxu0 0.0
    %3366 = vmatpush1.msra.mxu0 0.0
    %3367 = vmatprep.subr.mxu0 0.0
    %3368 = vmatpush1.msra.mxu0 0.0
    %3369 = vmatprep.subr.mxu0 0.0
    %3370 = vmatpush1.msra.mxu0 0.0
    %3371 = vmatprep.subr.mxu0 0.0
    %3372 = vmatpush1.msra.mxu0 0.0
    %3373 = vmatprep.subr.mxu0 0.0
    %3374 = vmatpush1.msra.mxu0 0.0
    %3375 = vmatprep.subr.mxu0 0.0
    %3376 = vmatpush1.msra.mxu0 0.0
    %3377 = vmatprep.subr.mxu0 0.0
    %3378 = vmatpush1.msra.mxu0 0.0
    %3379 = vmatprep.subr.mxu0 0.0
    %3380 = vmatpush1.msra.mxu0 0.0
    %3381 = vmatprep.subr.mxu0 0.0
    %3382 = vmatpush1.msra.mxu0 0.0
    %3383 = vmatprep.subr.mxu0 0.0
    %3384 = vmatpush1.msra.mxu0 0.0
    %3385 = vmatprep.subr.mxu0 0.0
    %3386 = vmatpush1.msra.mxu0 0.0
    %3387 = vmatprep.subr.mxu0 0.0
    %3388 = vmatpush1.msra.mxu0 0.0
    %3389 = vmatprep.mubr.f32.mxu0 0.0
    %3390 = vmatmul.mubr.f32.gmra.mrb[0].mxu0 %v3179
    %v3391 = vpop.f32.mrb[0].mxu0
    %v3392 = vadd.f32 0.0, %v3391
    %v3393 = vpop.f32.mrb[0].mxu0
    %v3394 = vadd.f32 0.0, %v3393
    %3395 = vdwg.mxu0
    %v3404 = vrot.slane %v3247, 7
    %v3405 = vsel %vm290, %v3404, %v3246
    %v3406 = vrot.slane %v3248, 6
    %v3407 = vsel %vm293, %v3406, %v3405
    %v3408 = vrot.slane %v3249, 5
    %v3409 = vsel %vm296, %v3408, %v3407
    %v3410 = vrot.slane %v3250, 4
    %v3411 = vsel %vm299, %v3410, %v3409
    %v3412 = vrot.slane %v3251, 3
    %v3413 = vsel %vm302, %v3412, %v3411
    %v3414 = vrot.slane %v3252, 2
    %v3415 = vsel %vm305, %v3414, %v3413
    %v3416 = vrot.slane %v3253, 1
    %v3417 = vsel %vm308, %v3416, %v3415
    %v3418 = vsel %vm314, %v3417, 0
    %3420 = vmatprep.subr.mxu0 %v320
    %3421 = vmatpush1.msra.mxu0 %v318
    %3422 = vmatprep.subr.mxu0 0.0
    %3423 = vmatpush1.msra.mxu0 0.0
    %3424 = vmatprep.subr.mxu0 0.0
    %3425 = vmatpush1.msra.mxu0 0.0
    %3426 = vmatprep.subr.mxu0 0.0
    %3427 = vmatpush1.msra.mxu0 0.0
    %3428 = vmatprep.subr.mxu0 0.0
    %3429 = vmatpush1.msra.mxu0 0.0
    %3430 = vmatprep.subr.mxu0 0.0
    %3431 = vmatpush1.msra.mxu0 0.0
    %3432 = vmatprep.subr.mxu0 0.0
    %3433 = vmatpush1.msra.mxu0 0.0
    %3434 = vmatprep.subr.mxu0 0.0
    %3435 = vmatpush1.msra.mxu0 0.0
    %3436 = vmatprep.subr.mxu0 0.0
    %3437 = vmatpush1.msra.mxu0 0.0
    %3438 = vmatprep.subr.mxu0 0.0
    %3439 = vmatpush1.msra.mxu0 0.0
    %3440 = vmatprep.subr.mxu0 0.0
    %3441 = vmatpush1.msra.mxu0 0.0
    %3442 = vmatprep.subr.mxu0 0.0
    %3443 = vmatpush1.msra.mxu0 0.0
    %3444 = vmatprep.subr.mxu0 0.0
    %3445 = vmatpush1.msra.mxu0 0.0
    %3446 = vmatprep.subr.mxu0 0.0
    %3447 = vmatpush1.msra.mxu0 0.0
    %3448 = vmatprep.subr.mxu0 0.0
    %3449 = vmatpush1.msra.mxu0 0.0
    %3450 = vmatprep.subr.mxu0 0.0
    %3451 = vmatpush1.msra.mxu0 0.0
    %3452 = vmatprep.subr.mxu0 0.0
    %3453 = vmatpush1.msra.mxu0 0.0
    %3454 = vmatprep.subr.mxu0 0.0
    %3455 = vmatpush1.msra.mxu0 0.0
    %3456 = vmatprep.subr.mxu0 0.0
    %3457 = vmatpush1.msra.mxu0 0.0
    %3458 = vmatprep.subr.mxu0 0.0
    %3459 = vmatpush1.msra.mxu0 0.0
    %3460 = vmatprep.subr.mxu0 0.0
    %3461 = vmatpush1.msra.mxu0 0.0
    %3462 = vmatprep.subr.mxu0 0.0
    %3463 = vmatpush1.msra.mxu0 0.0
    %3464 = vmatprep.subr.mxu0 0.0
    %3465 = vmatpush1.msra.mxu0 0.0
    %3466 = vmatprep.subr.mxu0 0.0
    %3467 = vmatpush1.msra.mxu0 0.0
    %3468 = vmatprep.subr.mxu0 0.0
    %3469 = vmatpush1.msra.mxu0 0.0
    %3470 = vmatprep.subr.mxu0 0.0
    %3471 = vmatpush1.msra.mxu0 0.0
    %3472 = vmatprep.subr.mxu0 0.0
    %3473 = vmatpush1.msra.mxu0 0.0
    %3474 = vmatprep.subr.mxu0 0.0
    %3475 = vmatpush1.msra.mxu0 0.0
    %3476 = vmatprep.subr.mxu0 0.0
    %3477 = vmatpush1.msra.mxu0 0.0
    %3478 = vmatprep.subr.mxu0 0.0
    %3479 = vmatpush1.msra.mxu0 0.0
    %3480 = vmatprep.subr.mxu0 0.0
    %3481 = vmatpush1.msra.mxu0 0.0
    %3482 = vmatprep.subr.mxu0 0.0
    %3483 = vmatpush1.msra.mxu0 0.0
    %3484 = vmatprep.mubr.f32.mxu0 0.0
    %3485 = vmatmul.mubr.f32.gmra.mrb[0].mxu0 %v3418
    %v3486 = vpop.f32.mrb[0].mxu0
    %v3487 = vadd.f32 %v3321, %v3486
    %v3488 = vpop.f32.mrb[0].mxu0
    %v3489 = vadd.f32 %v3323, %v3488
    %3490 = vdwg.mxu0
    %3491 = vmatprep.subr.mxu0 %v324
    %3492 = vmatpush1.msra.mxu0 %v322
    %3493 = vmatprep.subr.mxu0 0.0
    %3494 = vmatpush1.msra.mxu0 0.0
    %3495 = vmatprep.subr.mxu0 0.0
    %3496 = vmatpush1.msra.mxu0 0.0
    %3497 = vmatprep.subr.mxu0 0.0
    %3498 = vmatpush1.msra.mxu0 0.0
    %3499 = vmatprep.subr.mxu0 0.0
    %3500 = vmatpush1.msra.mxu0 0.0
    %3501 = vmatprep.subr.mxu0 0.0
    %3502 = vmatpush1.msra.mxu0 0.0
    %3503 = vmatprep.subr.mxu0 0.0
    %3504 = vmatpush1.msra.mxu0 0.0
    %3505 = vmatprep.subr.mxu0 0.0
    %3506 = vmatpush1.msra.mxu0 0.0
    %3507 = vmatprep.subr.mxu0 0.0
    %3508 = vmatpush1.msra.mxu0 0.0
    %3509 = vmatprep.subr.mxu0 0.0
    %3510 = vmatpush1.msra.mxu0 0.0
    %3511 = vmatprep.subr.mxu0 0.0
    %3512 = vmatpush1.msra.mxu0 0.0
    %3513 = vmatprep.subr.mxu0 0.0
    %3514 = vmatpush1.msra.mxu0 0.0
    %3515 = vmatprep.subr.mxu0 0.0
    %3516 = vmatpush1.msra.mxu0 0.0
    %3517 = vmatprep.subr.mxu0 0.0
    %3518 = vmatpush1.msra.mxu0 0.0
    %3519 = vmatprep.subr.mxu0 0.0
    %3520 = vmatpush1.msra.mxu0 0.0
    %3521 = vmatprep.subr.mxu0 0.0
    %3522 = vmatpush1.msra.mxu0 0.0
    %3523 = vmatprep.subr.mxu0 0.0
    %3524 = vmatpush1.msra.mxu0 0.0
    %3525 = vmatprep.subr.mxu0 0.0
    %3526 = vmatpush1.msra.mxu0 0.0
    %3527 = vmatprep.subr.mxu0 0.0
    %3528 = vmatpush1.msra.mxu0 0.0
    %3529 = vmatprep.subr.mxu0 0.0
    %3530 = vmatpush1.msra.mxu0 0.0
    %3531 = vmatprep.subr.mxu0 0.0
    %3532 = vmatpush1.msra.mxu0 0.0
    %3533 = vmatprep.subr.mxu0 0.0
    %3534 = vmatpush1.msra.mxu0 0.0
    %3535 = vmatprep.subr.mxu0 0.0
    %3536 = vmatpush1.msra.mxu0 0.0
    %3537 = vmatprep.subr.mxu0 0.0
    %3538 = vmatpush1.msra.mxu0 0.0
    %3539 = vmatprep.subr.mxu0 0.0
    %3540 = vmatpush1.msra.mxu0 0.0
    %3541 = vmatprep.subr.mxu0 0.0
    %3542 = vmatpush1.msra.mxu0 0.0
    %3543 = vmatprep.subr.mxu0 0.0
    %3544 = vmatpush1.msra.mxu0 0.0
    %3545 = vmatprep.subr.mxu0 0.0
    %3546 = vmatpush1.msra.mxu0 0.0
    %3547 = vmatprep.subr.mxu0 0.0
    %3548 = vmatpush1.msra.mxu0 0.0
    %3549 = vmatprep.subr.mxu0 0.0
    %3550 = vmatpush1.msra.mxu0 0.0
    %3551 = vmatprep.subr.mxu0 0.0
    %3552 = vmatpush1.msra.mxu0 0.0
    %3553 = vmatprep.subr.mxu0 0.0
    %3554 = vmatpush1.msra.mxu0 0.0
    %3555 = vmatprep.mubr.f32.mxu0 0.0
    %3556 = vmatmul.mubr.f32.gmra.mrb[0].mxu0 %v3418
    %v3557 = vpop.f32.mrb[0].mxu0
    %v3558 = vadd.f32 %v3392, %v3557
    %v3559 = vpop.f32.mrb[0].mxu0
    %v3560 = vadd.f32 %v3394, %v3559
    %3561 = vdwg.mxu0
    %v3562 = vadd.f32 %v3487, %v112
    %v3563 = vadd.f32 %v3489, %v116
    %v3564 = vadd.f32 %v3558, %v120
    %v3565 = vadd.f32 %v3560, %v124
    %v3566 = vxor.u32 %v3562, 2147483648
    %v3567 = vmul.f32 %v3566, 1.442695
    %v3568 = vpow.pop %v3567
    %v3569 = vadd.f32 %v3568, 1.0
    %v3570 = vrcp.pop %v3569
    %v3571 = vmul.f32 1.0, %v3570
    %v3572 = vxor.u32 %v3563, 2147483648
    %v3573 = vmul.f32 %v3572, 1.442695
    %v3574 = vpow.pop %v3573
    %v3575 = vadd.f32 %v3574, 1.0
    %v3576 = vrcp.pop %v3575
    %v3577 = vmul.f32 1.0, %v3576
    %v3578 = vxor.u32 %v3564, 2147483648
    %v3579 = vmul.f32 %v3578, 1.442695
    %v3580 = vpow.pop %v3579
    %v3581 = vadd.f32 %v3580, 1.0
    %v3582 = vrcp.pop %v3581
    %v3583 = vmul.f32 1.0, %v3582
    %v3584 = vtanh.pop %v3565
    %v3585 = vmul.f32 %v3571, %v3584
    %v3586 = vmul.f32 %v3583, %v3145
    %v3587 = vadd.f32 %v3585, %v3586
    %v3588 = vtanh.pop %v3587
    %v3589 = vmul.f32 %v3577, %v3588
    %v3590 = vld [vmem:[%s1 + $0x7] sm:$0x1]
    %v3591 = vld [vmem:[%s1 + $0xf] sm:$0x1]
    %v3592 = vld [vmem:[%s1 + $0x17] sm:$0x1]
    %v3593 = vld [vmem:[%s1 + $0x1f] sm:$0x1]
    %v3594 = vld [vmem:[%s1 + $0x27] sm:$0x1]
    %v3595 = vld [vmem:[%s1 + $0x2f] sm:$0x1]
    %v3596 = vld [vmem:[%s1 + $0x37] sm:$0x1]
    %v3597 = vld [vmem:[%s1 + $0x3f] sm:$0x1]
    %v3606 = vrot.slane %v3591, 7
    %v3607 = vsel %vm290, %v3606, %v3590
    %v3608 = vrot.slane %v3592, 6
    %v3609 = vsel %vm293, %v3608, %v3607
    %v3610 = vrot.slane %v3593, 5
    %v3611 = vsel %vm296, %v3610, %v3609
    %v3612 = vrot.slane %v3594, 4
    %v3613 = vsel %vm299, %v3612, %v3611
    %v3614 = vrot.slane %v3595, 3
    %v3615 = vsel %vm302, %v3614, %v3613
    %v3616 = vrot.slane %v3596, 2
    %v3617 = vsel %vm305, %v3616, %v3615
    %v3618 = vrot.slane %v3597, 1
    %v3619 = vsel %vm308, %v3618, %v3617
    %v3621 = vadd.f32 %v3589, %v3619
    %v3623 = vcombine.high %v3621, %v3621
    %v3625 = vunpack.c.l.s4 1966171168
    %v3626 = vunpack.c.0.s8 %v3625
    %v3627 = vlaneseq
    %v3628 = vshrl.u32 %v3627, 7
    %v3629 = vsub.s32 %v3626, %v3628
    %v3630 = vrot.slane %v3621, %v3629
    %v3632 = vunpack.c.l.s4 1966171168
    %v3633 = vunpack.c.0.s8 %v3632
    %v3634 = vlaneseq
    %v3635 = vshrl.u32 %v3634, 7
    %v3636 = vsub.s32 %v3633, %v3635
    %v3637 = vrot.slane %v3623, %v3636
    %v3638 = vcombine.high %v3630, %v3630
    %v3639 = vcombine.high %v3637, %v3637
    %v3641 = vunpack.c.l.s4 1966171168
    %v3642 = vunpack.c.0.s8 %v3641
    %v3643 = vlaneseq
    %v3644 = vshrl.u32 %v3643, 7
    %v3645 = vsub.s32 %v3642, %v3644
    %v3646 = vrot.slane %v3630, %v3645
    %v3648 = vunpack.c.l.s4 1966171168
    %v3649 = vunpack.c.0.s8 %v3648
    %v3650 = vlaneseq
    %v3651 = vshrl.u32 %v3650, 7
    %v3652 = vsub.s32 %v3649, %v3651
    %v3653 = vrot.slane %v3637, %v3652
    %v3655 = vunpack.c.l.s4 1966171168
    %v3656 = vunpack.c.0.s8 %v3655
    %v3657 = vlaneseq
    %v3658 = vshrl.u32 %v3657, 7
    %v3659 = vsub.s32 %v3656, %v3658
    %v3660 = vrot.slane %v3638, %v3659
    %v3662 = vunpack.c.l.s4 1966171168
    %v3663 = vunpack.c.0.s8 %v3662
    %v3664 = vlaneseq
    %v3665 = vshrl.u32 %v3664, 7
    %v3666 = vsub.s32 %v3663, %v3665
    %v3667 = vrot.slane %v3639, %v3666
    %v3668 = vcombine.high %v3646, %v3646
    %v3669 = vcombine.high %v3653, %v3653
    %v3670 = vcombine.high %v3660, %v3660
    %v3671 = vcombine.high %v3667, %v3667
    %3680 = vst [vmem:[#allocation7 + $0x7] sm:$0x1] %v3646
    %3681 = vst [vmem:[#allocation7 + $0xf] sm:$0x1] %v3660
    %3682 = vst [vmem:[#allocation7 + $0x17] sm:$0x1] %v3668
    %3683 = vst [vmem:[#allocation7 + $0x1f] sm:$0x1] %v3670
    %3684 = vst [vmem:[#allocation7 + $0x27] sm:$0x1] %v3653
    %3685 = vst [vmem:[#allocation7 + $0x2f] sm:$0x1] %v3667
    %3686 = vst [vmem:[#allocation7 + $0x37] sm:$0x1] %v3669
    %3687 = vst [vmem:[#allocation7 + $0x3f] sm:$0x1] %v3671
    %3688 = vst [vmem:[#allocation2] sm:$0xff] %v3587
    %3689 = vst [vmem:[#allocation3] sm:$0xff] %v3621
    // Predicated region
    $region30: #{tpu_custom_call.1} parent=1 // pred_check
      _
    $region31: #{tpu_custom_call.1} parent=1 // pred_check_branch
      %3691 = sbr.rel (0) target = $region33
    $region32: #{tpu_custom_call.1} parent=1 // pred_region
      %s3693 = ssub.s32 1024, 1024
      %3694 = vsyncadd [#allocation6], %s3693
      %s3695 = sshll.u32 [#allocation7], 4
      %s3696 = int_to_ptr.vmem [resolvable:$true] %s3695
      %3701 = dma.vmem_to_hbm [thread:$0]  %s3696, 1024, %s5, [#allocation6], 128, 128, 8
    $region33: #{tpu_custom_call.1} parent=1 // pred_fallthru
      _
    // Predicated region
    $region34: #{tpu_custom_call.1} parent=1 // pred_check
      _
    $region35: #{tpu_custom_call.1} parent=1 // pred_check_branch
      %3703 = sbr.rel (0) target = $region37
    $region36: #{tpu_custom_call.1} parent=1 // pred_region
      %3704 = dma.done [#allocation6], 1024
    $region37: #{tpu_custom_call.1} parent=1 // pred_fallthru
      _
    %3705 = vsyncpa [#allocation5], 1
    %3706 = vsyncpa [#allocation6], 1

</llo_original>
